<compile_context>
chip_gen: v7x
topology: tpu7x:2x2x1
jax: 0.10.0
libtpu: 0.0.40
codegen_flags: <defaults>
</compile_context>

<pallas_src>
import functools

import jax
import jax.numpy as jnp
from jax.experimental import pallas as pl
from jax.experimental.pallas import tpu as pltpu

# ----------------------------- small model config --------------------------
C_IN = 3           # RGB input (matches FeatureExtractor normalizer)
C_STEM = 16        # stem conv channels (B4: 48)
C_HEAD = 32        # conv_head channels (B4: 1792)
ATT_BLOCK_IDX = 1  # attention tap block (B4: 9, 56 ch)
ATT_WIDTH = 1      # attconv width (exercises conv3x3+relu and conv1x1 paths)
BLOCKS = [
    dict(cin=16, cout=16, expand=1, skip=True),
    dict(cin=16, cout=24, expand=2, skip=False),
    dict(cin=24, cout=24, expand=2, skip=True),
]
CP = 128           # lane-dense padded channel width (all channel dims -> 128 lanes)
ROW_ALIGN = 16     # flat-row pitch / guard alignment (bf16 sublane packing = 16 rows)


def _round_up(v, m):
    return ((v + m - 1) // m) * m


def _tap_offsets(wp):
    """Flat-row offsets of the 3x3 neighbourhood in the zero-haloed flat layout."""
    return tuple((di - 1) * wp + (dj - 1) for di in range(3) for dj in range(3))


# ----------------------------- fused Pallas kernel --------------------------


def _fused_forward_kernel(*refs, mp1, guard, taps, hw_count, att_idx, att_width,
                          block_cfgs):
    """One image: stem -> MBConv x3 (+att gate) -> head -> pool -> classifier."""
    it = iter(refs)
    p_ref = next(it)                       # (mp1, CP) bf16 flat-ordered stem patches
    m_ref = next(it)                       # (mp1, 1) f32 interior-pixel mask
    sw_ref, ss_ref, sb_ref = next(it), next(it), next(it)
    blk = []
    for cfg in block_cfgs:
        d = {}
        if cfg["expand"] != 1:
            d["ew"], d["es"], d["eb"] = next(it), next(it), next(it)
        d["dw"], d["ds"], d["db"] = next(it), next(it), next(it)
        d["pw"], d["ps"], d["pb"] = next(it), next(it), next(it)
        blk.append(d)
    att_layers = [(next(it), next(it)) for _ in range(att_width)]
    aw_ref, ab_ref = next(it), next(it)
    hw_ref, hs_ref, hb_ref = next(it), next(it), next(it)
    cw_ref, cb_ref = next(it), next(it)
    o_ref = next(it)
    src32, src16 = next(it), next(it)      # guarded tap-source scratches (f32 / bf16)

    mask = m_ref[...]

    # Zero the tap-source guard rows ONCE per image (hoisted out of all inner loops).
    src32[0:guard, :] = jnp.zeros((guard, CP), jnp.float32)
    src32[guard + mp1:2 * guard + mp1, :] = jnp.zeros((guard, CP), jnp.float32)
    src16[0:guard, :] = jnp.zeros((guard, CP), jnp.bfloat16)
    src16[guard + mp1:2 * guard + mp1, :] = jnp.zeros((guard, CP), jnp.bfloat16)

    # ---- _conv_stem (im2col matmul) + _bn0 + swish; halo/pad rows re-zeroed --------
    y = jnp.dot(p_ref[...], sw_ref[...], preferred_element_type=jnp.float32)
    y = y * ss_ref[...] + sb_ref[...]
    y = y * jax.nn.sigmoid(y)
    x = y * mask                            # (mp1, CP) f32, zero-haloed flat layout

    # ---- MBConv stack with auto-attention gate --------------------------------------
    for idx, (cfg, d) in enumerate(zip(block_cfgs, blk)):
        # expand 1x1 + BN + swish (optional)
        if cfg["expand"] != 1:
            ye = jnp.dot(x.astype(jnp.bfloat16), d["ew"][...],
                         preferred_element_type=jnp.float32)
            ye = ye * d["es"][...] + d["eb"][...]
            ye = ye * jax.nn.sigmoid(ye)
            ye = ye * mask                  # keep tap-source halo exactly zero
        else:
            ye = x                          # input halo already zero

        # depthwise 3x3 + BN + swish via 9 row-shifted slices of the guarded scratch
        src32[guard:guard + mp1, :] = ye
        acc = None
        for t, off in enumerate(taps):
            term = src32[guard + off:guard + off + mp1, :] * d["dw"][t:t + 1, :]
            acc = term if acc is None else acc + term
        yd = acc * d["ds"][...] + d["db"][...]
        yd = yd * jax.nn.sigmoid(yd)

        # project 1x1 + BN (+ identity skip); re-zero halo rows for the next stage
        z = jnp.dot(yd.astype(jnp.bfloat16), d["pw"][...],
                    preferred_element_type=jnp.float32)
        z = z * d["ps"][...] + d["pb"][...]
        if cfg["skip"]:
            z = z + x
        x = z * mask

        # auto-attention: width x (conv3x3 + ReLU) -> conv1x1 (C->1) -> sigmoid -> gate
        if idx == att_idx:
            hcur = x
            for cw3_ref, cb3_ref in att_layers:
                src16[guard:guard + mp1, :] = hcur.astype(jnp.bfloat16)  # 1 cast/layer
                acc = None
                for t, off in enumerate(taps):
                    term = jnp.dot(src16[guard + off:guard + off + mp1, :],
                                   cw3_ref[t], preferred_element_type=jnp.float32)
                    acc = term if acc is None else acc + term
                hcur = jnp.maximum(acc + cb3_ref[...], 0.0) * mask
            att = jax.nn.sigmoid(
                jnp.sum(hcur * aw_ref[...], axis=-1, keepdims=True) + ab_ref[...])
            x = x * att                     # halo stays zero (x halo is zero)

    # ---- _conv_head 1x1 + _bn1 + swish -> avg-pool -> (eval) dropout -> Linear ------
    yh = jnp.dot(x.astype(jnp.bfloat16), hw_ref[...],
                 preferred_element_type=jnp.float32)
    yh = yh * hs_ref[...] + hb_ref[...]
    yh = yh * jax.nn.sigmoid(yh)
    yh = yh * mask                          # halo rows would otherwise be swish(shift)
    pooled = jnp.sum(yh, axis=0, keepdims=True) * (1.0 / hw_count)      # (1, CP)
    logit = jnp.sum(pooled * cw_ref[...], axis=-1, keepdims=True) + cb_ref[...]
    o_ref[...] = jnp.broadcast_to(logit, (1, CP))   # lane-dense store; lane 0 = logit


def fused_forward(params, patches, mask, n, mp1, guard, taps, hw_count):
    args = [patches, mask,
            params["stem"]["w"], params["stem"]["scale"], params["stem"]["shift"]]
    for cfg, bp in zip(BLOCKS, params["blocks"]):
        if cfg["expand"] != 1:
            args += [bp["expand_w"], bp["expand_scale"], bp["expand_shift"]]
        args += [bp["dw_w"], bp["dw_scale"], bp["dw_shift"],
                 bp["proj_w"], bp["proj_scale"], bp["proj_shift"]]
    for cw3, cb in params["attconv"]["convs"]:
        args += [cw3, cb]
    args += [params["attconv"]["out_w"], params["attconv"]["out_b"],
             params["head"]["w"], params["head"]["scale"], params["head"]["shift"],
             params["cls"]["w"], params["cls"]["b"]]

    def const_spec(a):
        # full-array block, same index every step -> stays resident in VMEM
        return pl.BlockSpec(a.shape, lambda i, _nd=a.ndim: (0,) * _nd)

    in_specs = ([pl.BlockSpec((None, mp1, CP), lambda i: (i, 0, 0))]
                + [const_spec(a) for a in args[1:]])

    kernel = functools.partial(
        _fused_forward_kernel, mp1=mp1, guard=guard, taps=taps, hw_count=hw_count,
        att_idx=ATT_BLOCK_IDX, att_width=ATT_WIDTH, block_cfgs=BLOCKS)

    out = pl.pallas_call(
        kernel,
        grid_spec=pltpu.PrefetchScalarGridSpec(
            num_scalar_prefetch=0,
            grid=(n,),
            in_specs=in_specs,
            out_specs=pl.BlockSpec((None, 1, CP), lambda i: (i, 0, 0)),
            scratch_shapes=[pltpu.VMEM((mp1 + 2 * guard, CP), jnp.float32),
                            pltpu.VMEM((mp1 + 2 * guard, CP), jnp.bfloat16)]),
        out_shape=jax.ShapeDtypeStruct((n, 1, CP), jnp.float32),
        compiler_params=pltpu.CompilerParams(dimension_semantics=("parallel",)),
    )(*args)
    return out[:, 0, :1]


# ----------------------------- plain-JAX glue -------------------------------


def _pad2(a, rows, cols):
    return jnp.pad(a, ((0, rows - a.shape[0]), (0, cols - a.shape[1])))


def make_params(key):
    keys = iter(jax.random.split(key, 64))

    def nk():
        return next(keys)

    def conv_w(k, kdim, cout):
        w = 0.1 * jax.random.normal(k, (kdim, cout), jnp.float32)
        return _pad2(w, CP, CP).astype(jnp.bfloat16)   # zero-pad to 128 lanes, bf16 MXU

    def bn_fold(k, c, eps=1e-3):
        k1, k2, k3, k4 = jax.random.split(k, 4)
        gamma = 1.0 + 0.1 * jax.random.normal(k1, (c,), jnp.float32)
        beta = 0.1 * jax.random.normal(k2, (c,), jnp.float32)
        mean = 0.1 * jax.random.normal(k3, (c,), jnp.float32)
        var = 1.0 + 0.1 * jax.random.uniform(k4, (c,), jnp.float32)
        scale = gamma / jnp.sqrt(var + eps)
        shift = beta - mean * scale
        return (_pad2(scale.reshape(1, c), 1, CP),
                _pad2(shift.reshape(1, c), 1, CP))

    params = {"stem": {"w": conv_w(nk(), 9 * C_IN, C_STEM)}}
    params["stem"]["scale"], params["stem"]["shift"] = bn_fold(nk(), C_STEM)

    blocks = []
    for cfg in BLOCKS:
        cin, cout, exp = cfg["cin"], cfg["cout"], cfg["expand"]
        cmid = cin * exp
        bp = {}
        if exp != 1:
            bp["expand_w"] = conv_w(nk(), cin, cmid)
            bp["expand_scale"], bp["expand_shift"] = bn_fold(nk(), cmid)
        dw = 0.1 * jax.random.normal(nk(), (9, cmid), jnp.float32)
        bp["dw_w"] = jnp.pad(dw, ((0, 0), (0, CP - cmid)))          # f32 (VPU path)
        bp["dw_scale"], bp["dw_shift"] = bn_fold(nk(), cmid)
        bp["proj_w"] = conv_w(nk(), cmid, cout)
        bp["proj_scale"], bp["proj_shift"] = bn_fold(nk(), cout)
        blocks.append(bp)
    params["blocks"] = blocks

    catt = BLOCKS[ATT_BLOCK_IDX]["cout"]
    att_convs = []
    for _ in range(ATT_WIDTH):
        w3 = 0.1 * jax.random.normal(nk(), (9, catt, catt), jnp.float32)
        w3 = jnp.pad(w3, ((0, 0), (0, CP - catt), (0, CP - catt))).astype(jnp.bfloat16)
        cb = _pad2(0.1 * jax.random.normal(nk(), (1, catt), jnp.float32), 1, CP)
        att_convs.append((w3, cb))
    params["attconv"] = dict(
        convs=att_convs,
        out_w=_pad2(0.1 * jax.random.normal(nk(), (1, catt), jnp.float32), 1, CP),
        out_b=0.1 * jax.random.normal(nk(), (1, 1), jnp.float32),
    )

    params["head"] = {"w": conv_w(nk(), BLOCKS[-1]["cout"], C_HEAD)}
    params["head"]["scale"], params["head"]["shift"] = bn_fold(nk(), C_HEAD)

    params["cls"] = dict(
        w=_pad2(0.1 * jax.random.normal(nk(), (1, C_HEAD), jnp.float32), 1, CP),
        b=0.1 * jax.random.normal(nk(), (1, 1), jnp.float32),
    )
    return params


def forward(params, x_nchw):
    """EfficientNetGenAutoAtt.forward (eval mode), fused into one pallas_call."""
    x = jnp.transpose(x_nchw, (0, 2, 3, 1)).astype(jnp.float32)   # NCHW -> NHWC
    n, hin, win, cin = x.shape

    # stride-2, 3x3, pad-1 stem output spatial size
    h = (hin + 2 - 3) // 2 + 1
    w = (win + 2 - 3) // 2 + 1
    hp = h + 2
    wp = _round_up(w + 2, ROW_ALIGN)         # sublane/packing-aligned flat row pitch
    mp1 = hp * wp                            # flat rows per image (halo + pad included)
    guard = _round_up(wp + 1, ROW_ALIGN)     # guard rows each side of tap scratch
    taps = _tap_offsets(wp)

    # stride-2 3x3 stem patches laid out directly in the zero-haloed flat layout
    xp = jnp.pad(x, ((0, 0), (1, 1), (1, 1), (0, 0)))
    cols = []
    for di in range(3):
        for dj in range(3):
            cols.append(xp[:, di:di + 2 * h:2, dj:dj + 2 * w:2, :])
    patches = jnp.concatenate(cols, axis=-1)                        # (n, h, w, 9*cin)
    patches = jnp.pad(patches,
                      ((0, 0), (1, 1), (1, wp - 1 - w), (0, CP - 9 * cin)))
    patches = patches.reshape(n, mp1, CP).astype(jnp.bfloat16)

    # interior-pixel mask in the same flat layout (halo + pad rows are zero)
    mask = jnp.pad(jnp.ones((h, w, 1), jnp.float32),
                   ((1, 1), (1, wp - 1 - w), (0, 0))).reshape(mp1, 1)

    return fused_forward(params, patches, mask, n, mp1, guard, taps, float(h * w))


if __name__ == "__main__":
    key = jax.random.PRNGKey(0)
    pkey, xkey = jax.random.split(key)
    params = make_params(pkey)
    x = jax.random.normal(xkey, (2, 3, 16, 16), jnp.float32)   # NCHW like PyTorch

    out = jax.jit(forward)(params, x)
    out = jax.block_until_ready(out)
    assert out.shape == (2, 1) and out.dtype == jnp.float32
    print("KERNEL_OK")
</pallas_src>

<mosaic_0001>
module attributes {stable_mosaic.version = 11 : i64} {
  func.func @_fused_forward_kernel(%arg0: i32, %arg1: memref<1x160x128xbf16, #tpu.memory_space<vmem>>, %arg2: memref<160x1xf32, #tpu.memory_space<vmem>>, %arg3: memref<128x128xbf16, #tpu.memory_space<vmem>>, %arg4: memref<1x128xf32, #tpu.memory_space<vmem>>, %arg5: memref<1x128xf32, #tpu.memory_space<vmem>>, %arg6: memref<9x128xf32, #tpu.memory_space<vmem>>, %arg7: memref<1x128xf32, #tpu.memory_space<vmem>>, %arg8: memref<1x128xf32, #tpu.memory_space<vmem>>, %arg9: memref<128x128xbf16, #tpu.memory_space<vmem>>, %arg10: memref<1x128xf32, #tpu.memory_space<vmem>>, %arg11: memref<1x128xf32, #tpu.memory_space<vmem>>, %arg12: memref<128x128xbf16, #tpu.memory_space<vmem>>, %arg13: memref<1x128xf32, #tpu.memory_space<vmem>>, %arg14: memref<1x128xf32, #tpu.memory_space<vmem>>, %arg15: memref<9x128xf32, #tpu.memory_space<vmem>>, %arg16: memref<1x128xf32, #tpu.memory_space<vmem>>, %arg17: memref<1x128xf32, #tpu.memory_space<vmem>>, %arg18: memref<128x128xbf16, #tpu.memory_space<vmem>>, %arg19: memref<1x128xf32, #tpu.memory_space<vmem>>, %arg20: memref<1x128xf32, #tpu.memory_space<vmem>>, %arg21: memref<128x128xbf16, #tpu.memory_space<vmem>>, %arg22: memref<1x128xf32, #tpu.memory_space<vmem>>, %arg23: memref<1x128xf32, #tpu.memory_space<vmem>>, %arg24: memref<9x128xf32, #tpu.memory_space<vmem>>, %arg25: memref<1x128xf32, #tpu.memory_space<vmem>>, %arg26: memref<1x128xf32, #tpu.memory_space<vmem>>, %arg27: memref<128x128xbf16, #tpu.memory_space<vmem>>, %arg28: memref<1x128xf32, #tpu.memory_space<vmem>>, %arg29: memref<1x128xf32, #tpu.memory_space<vmem>>, %arg30: memref<9x128x128xbf16, #tpu.memory_space<vmem>>, %arg31: memref<1x128xf32, #tpu.memory_space<vmem>>, %arg32: memref<1x128xf32, #tpu.memory_space<vmem>>, %arg33: memref<1x1xf32, #tpu.memory_space<vmem>>, %arg34: memref<128x128xbf16, #tpu.memory_space<vmem>>, %arg35: memref<1x128xf32, #tpu.memory_space<vmem>>, %arg36: memref<1x128xf32, #tpu.memory_space<vmem>>, %arg37: memref<1x128xf32, #tpu.memory_space<vmem>>, %arg38: memref<1x1xf32, #tpu.memory_space<vmem>>, %arg39: memref<1x1x128xf32, #tpu.memory_space<vmem>>, %arg40: memref<224x128xf32, #tpu.memory_space<vmem>>, %arg41: memref<224x128xbf16, #tpu.memory_space<vmem>>) attributes {dimension_semantics = [#tpu.dimension_semantics<parallel>], iteration_bounds = array<i64: 2>, scalar_prefetch = 0 : i64, scratch_operands = 2 : i64, tpu.core_type = #tpu.core_type<tc>, window_params = [{transform_indices = @transform_0, window_bounds = array<i64: 1, 160, 128>}, {pipeline_mode = #tpu.pipeline_mode<synchronous>, transform_indices = @transform_1, window_bounds = array<i64: 160, 1>}, {pipeline_mode = #tpu.pipeline_mode<synchronous>, transform_indices = @transform_2, window_bounds = array<i64: 128, 128>}, {pipeline_mode = #tpu.pipeline_mode<synchronous>, transform_indices = @transform_3, window_bounds = array<i64: 1, 128>}, {pipeline_mode = #tpu.pipeline_mode<synchronous>, transform_indices = @transform_4, window_bounds = array<i64: 1, 128>}, {pipeline_mode = #tpu.pipeline_mode<synchronous>, transform_indices = @transform_5, window_bounds = array<i64: 9, 128>}, {pipeline_mode = #tpu.pipeline_mode<synchronous>, transform_indices = @transform_6, window_bounds = array<i64: 1, 128>}, {pipeline_mode = #tpu.pipeline_mode<synchronous>, transform_indices = @transform_7, window_bounds = array<i64: 1, 128>}, {pipeline_mode = #tpu.pipeline_mode<synchronous>, transform_indices = @transform_8, window_bounds = array<i64: 128, 128>}, {pipeline_mode = #tpu.pipeline_mode<synchronous>, transform_indices = @transform_9, window_bounds = array<i64: 1, 128>}, {pipeline_mode = #tpu.pipeline_mode<synchronous>, transform_indices = @transform_10, window_bounds = array<i64: 1, 128>}, {pipeline_mode = #tpu.pipeline_mode<synchronous>, transform_indices = @transform_11, window_bounds = array<i64: 128, 128>}, {pipeline_mode = #tpu.pipeline_mode<synchronous>, transform_indices = @transform_12, window_bounds = array<i64: 1, 128>}, {pipeline_mode = #tpu.pipeline_mode<synchronous>, transform_indices = @transform_13, window_bounds = array<i64: 1, 128>}, {pipeline_mode = #tpu.pipeline_mode<synchronous>, transform_indices = @transform_14, window_bounds = array<i64: 9, 128>}, {pipeline_mode = #tpu.pipeline_mode<synchronous>, transform_indices = @transform_15, window_bounds = array<i64: 1, 128>}, {pipeline_mode = #tpu.pipeline_mode<synchronous>, transform_indices = @transform_16, window_bounds = array<i64: 1, 128>}, {pipeline_mode = #tpu.pipeline_mode<synchronous>, transform_indices = @transform_17, window_bounds = array<i64: 128, 128>}, {pipeline_mode = #tpu.pipeline_mode<synchronous>, transform_indices = @transform_18, window_bounds = array<i64: 1, 128>}, {pipeline_mode = #tpu.pipeline_mode<synchronous>, transform_indices = @transform_19, window_bounds = array<i64: 1, 128>}, {pipeline_mode = #tpu.pipeline_mode<synchronous>, transform_indices = @transform_20, window_bounds = array<i64: 128, 128>}, {pipeline_mode = #tpu.pipeline_mode<synchronous>, transform_indices = @transform_21, window_bounds = array<i64: 1, 128>}, {pipeline_mode = #tpu.pipeline_mode<synchronous>, transform_indices = @transform_22, window_bounds = array<i64: 1, 128>}, {pipeline_mode = #tpu.pipeline_mode<synchronous>, transform_indices = @transform_23, window_bounds = array<i64: 9, 128>}, {pipeline_mode = #tpu.pipeline_mode<synchronous>, transform_indices = @transform_24, window_bounds = array<i64: 1, 128>}, {pipeline_mode = #tpu.pipeline_mode<synchronous>, transform_indices = @transform_25, window_bounds = array<i64: 1, 128>}, {pipeline_mode = #tpu.pipeline_mode<synchronous>, transform_indices = @transform_26, window_bounds = array<i64: 128, 128>}, {pipeline_mode = #tpu.pipeline_mode<synchronous>, transform_indices = @transform_27, window_bounds = array<i64: 1, 128>}, {pipeline_mode = #tpu.pipeline_mode<synchronous>, transform_indices = @transform_28, window_bounds = array<i64: 1, 128>}, {pipeline_mode = #tpu.pipeline_mode<synchronous>, transform_indices = @transform_29, window_bounds = array<i64: 9, 128, 128>}, {pipeline_mode = #tpu.pipeline_mode<synchronous>, transform_indices = @transform_30, window_bounds = array<i64: 1, 128>}, {pipeline_mode = #tpu.pipeline_mode<synchronous>, transform_indices = @transform_31, window_bounds = array<i64: 1, 128>}, {pipeline_mode = #tpu.pipeline_mode<synchronous>, transform_indices = @transform_32, window_bounds = array<i64: 1, 1>}, {pipeline_mode = #tpu.pipeline_mode<synchronous>, transform_indices = @transform_33, window_bounds = array<i64: 128, 128>}, {pipeline_mode = #tpu.pipeline_mode<synchronous>, transform_indices = @transform_34, window_bounds = array<i64: 1, 128>}, {pipeline_mode = #tpu.pipeline_mode<synchronous>, transform_indices = @transform_35, window_bounds = array<i64: 1, 128>}, {pipeline_mode = #tpu.pipeline_mode<synchronous>, transform_indices = @transform_36, window_bounds = array<i64: 1, 128>}, {pipeline_mode = #tpu.pipeline_mode<synchronous>, transform_indices = @transform_37, window_bounds = array<i64: 1, 1>}, {transform_indices = @transform_38, window_bounds = array<i64: 1, 1, 128>}]} {
    %c0 = arith.constant 0 : index
    %c0_0 = arith.constant 0 : index
    %0 = vector.load %arg2[%c0, %c0_0] : memref<160x1xf32, #tpu.memory_space<vmem>>, vector<160x1xf32>
    %cst = arith.constant 0.000000e+00 : f32
    %1 = vector.broadcast %cst : f32 to vector<32x128xf32>
    %c0_1 = arith.constant 0 : index
    %c0_2 = arith.constant 0 : index
    %2 = vector.load %arg40[%c0_1, %c0_2] : memref<224x128xf32, #tpu.memory_space<vmem>>, vector<32x128xf32>
    tpu.vector_store %arg40[%c0_1, %c0_2], %1 {strides = array<i32>} : memref<224x128xf32, #tpu.memory_space<vmem>>, vector<32x128xf32>,
    %cst_3 = arith.constant 0.000000e+00 : f32
    %3 = vector.broadcast %cst_3 : f32 to vector<32x128xf32>
    %c192 = arith.constant 192 : index
    %c0_4 = arith.constant 0 : index
    %4 = vector.load %arg40[%c192, %c0_4] : memref<224x128xf32, #tpu.memory_space<vmem>>, vector<32x128xf32>
    tpu.vector_store %arg40[%c192, %c0_4], %3 {strides = array<i32>} : memref<224x128xf32, #tpu.memory_space<vmem>>, vector<32x128xf32>,
    %cst_5 = arith.constant 0.000000e+00 : bf16
    %5 = vector.broadcast %cst_5 : bf16 to vector<32x128xbf16>
    %c0_6 = arith.constant 0 : index
    %c0_7 = arith.constant 0 : index
    %6 = vector.load %arg41[%c0_6, %c0_7] : memref<224x128xbf16, #tpu.memory_space<vmem>>, vector<32x128xbf16>
    tpu.vector_store %arg41[%c0_6, %c0_7], %5 {strides = array<i32>} : memref<224x128xbf16, #tpu.memory_space<vmem>>, vector<32x128xbf16>,
    %cst_8 = arith.constant 0.000000e+00 : bf16
    %7 = vector.broadcast %cst_8 : bf16 to vector<32x128xbf16>
    %c192_9 = arith.constant 192 : index
    %c0_10 = arith.constant 0 : index
    %8 = vector.load %arg41[%c192_9, %c0_10] : memref<224x128xbf16, #tpu.memory_space<vmem>>, vector<32x128xbf16>
    tpu.vector_store %arg41[%c192_9, %c0_10], %7 {strides = array<i32>} : memref<224x128xbf16, #tpu.memory_space<vmem>>, vector<32x128xbf16>,
    %c0_11 = arith.constant 0 : index
    %c0_12 = arith.constant 0 : index
    %c0_13 = arith.constant 0 : index
    %9 = vector.load %arg1[%c0_11, %c0_12, %c0_13] : memref<1x160x128xbf16, #tpu.memory_space<vmem>>, vector<1x160x128xbf16>
    %10 = vector.shape_cast %9 : vector<1x160x128xbf16> to vector<160x128xbf16>
    %c0_14 = arith.constant 0 : index
    %c0_15 = arith.constant 0 : index
    %11 = vector.load %arg3[%c0_14, %c0_15] : memref<128x128xbf16, #tpu.memory_space<vmem>>, vector<128x128xbf16>
    %cst_16 = arith.constant dense<0.000000e+00> : vector<160x128xf32>
    %12 = tpu.matmul %10, %11, %cst_16 {dimension_numbers = #tpu.dot_dimension_numbers<[1], [0], [0], [1], [0, 0, 1, 1], [], []>} : vector<160x128xbf16>, vector<128x128xbf16>, vector<160x128xf32> -> vector<160x128xf32>
    %c0_17 = arith.constant 0 : index
    %c0_18 = arith.constant 0 : index
    %13 = vector.load %arg4[%c0_17, %c0_18] : memref<1x128xf32, #tpu.memory_space<vmem>>, vector<1x128xf32>
    %14 = vector.broadcast %13 : vector<1x128xf32> to vector<160x128xf32>
    %15 = arith.mulf %12, %14 : vector<160x128xf32>
    %c0_19 = arith.constant 0 : index
    %c0_20 = arith.constant 0 : index
    %16 = vector.load %arg5[%c0_19, %c0_20] : memref<1x128xf32, #tpu.memory_space<vmem>>, vector<1x128xf32>
    %17 = vector.broadcast %16 : vector<1x128xf32> to vector<160x128xf32>
    %18 = arith.addf %15, %17 : vector<160x128xf32>
    %19 = arith.negf %18 : vector<160x128xf32>
    %20 = math.exp %19 : vector<160x128xf32>
    %cst_21 = arith.constant 1.000000e+00 : f32
    %21 = vector.broadcast %cst_21 : f32 to vector<160x128xf32>
    %22 = arith.addf %21, %20 : vector<160x128xf32>
    %23 = arith.divf %21, %22 : vector<160x128xf32>
    %24 = arith.mulf %18, %23 : vector<160x128xf32>
    %25 = vector.broadcast %0 : vector<160x1xf32> to vector<160x128xf32>
    %26 = arith.mulf %24, %25 : vector<160x128xf32>
    %c32 = arith.constant 32 : index
    %c0_22 = arith.constant 0 : index
    %27 = vector.load %arg40[%c32, %c0_22] : memref<224x128xf32, #tpu.memory_space<vmem>>, vector<160x128xf32>
    tpu.vector_store %arg40[%c32, %c0_22], %26 {strides = array<i32>} : memref<224x128xf32, #tpu.memory_space<vmem>>, vector<160x128xf32>,
    %c15 = arith.constant 15 : index
    %c0_23 = arith.constant 0 : index
    %28 = vector.load %arg40[%c15, %c0_23] : memref<224x128xf32, #tpu.memory_space<vmem>>, vector<160x128xf32>
    %c0_24 = arith.constant 0 : index
    %c0_25 = arith.constant 0 : index
    %29 = vector.load %arg6[%c0_24, %c0_25] : memref<9x128xf32, #tpu.memory_space<vmem>>, vector<1x128xf32>
    %30 = vector.broadcast %29 : vector<1x128xf32> to vector<160x128xf32>
    %31 = arith.mulf %28, %30 : vector<160x128xf32>
    %c16 = arith.constant 16 : index
    %c0_26 = arith.constant 0 : index
    %32 = vector.load %arg40[%c16, %c0_26] : memref<224x128xf32, #tpu.memory_space<vmem>>, vector<160x128xf32>
    %c1 = arith.constant 1 : index
    %c0_27 = arith.constant 0 : index
    %33 = vector.load %arg6[%c1, %c0_27] : memref<9x128xf32, #tpu.memory_space<vmem>>, vector<1x128xf32>
    %34 = vector.broadcast %33 : vector<1x128xf32> to vector<160x128xf32>
    %35 = arith.mulf %32, %34 : vector<160x128xf32>
    %36 = arith.addf %31, %35 : vector<160x128xf32>
    %c17 = arith.constant 17 : index
    %c0_28 = arith.constant 0 : index
    %37 = vector.load %arg40[%c17, %c0_28] : memref<224x128xf32, #tpu.memory_space<vmem>>, vector<160x128xf32>
    %c2 = arith.constant 2 : index
    %c0_29 = arith.constant 0 : index
    %38 = vector.load %arg6[%c2, %c0_29] : memref<9x128xf32, #tpu.memory_space<vmem>>, vector<1x128xf32>
    %39 = vector.broadcast %38 : vector<1x128xf32> to vector<160x128xf32>
    %40 = arith.mulf %37, %39 : vector<160x128xf32>
    %41 = arith.addf %36, %40 : vector<160x128xf32>
    %c31 = arith.constant 31 : index
    %c0_30 = arith.constant 0 : index
    %42 = vector.load %arg40[%c31, %c0_30] : memref<224x128xf32, #tpu.memory_space<vmem>>, vector<160x128xf32>
    %c3 = arith.constant 3 : index
    %c0_31 = arith.constant 0 : index
    %43 = vector.load %arg6[%c3, %c0_31] : memref<9x128xf32, #tpu.memory_space<vmem>>, vector<1x128xf32>
    %44 = vector.broadcast %43 : vector<1x128xf32> to vector<160x128xf32>
    %45 = arith.mulf %42, %44 : vector<160x128xf32>
    %46 = arith.addf %41, %45 : vector<160x128xf32>
    %c32_32 = arith.constant 32 : index
    %c0_33 = arith.constant 0 : index
    %47 = vector.load %arg40[%c32_32, %c0_33] : memref<224x128xf32, #tpu.memory_space<vmem>>, vector<160x128xf32>
    %c4 = arith.constant 4 : index
    %c0_34 = arith.constant 0 : index
    %48 = vector.load %arg6[%c4, %c0_34] : memref<9x128xf32, #tpu.memory_space<vmem>>, vector<1x128xf32>
    %49 = vector.broadcast %48 : vector<1x128xf32> to vector<160x128xf32>
    %50 = arith.mulf %47, %49 : vector<160x128xf32>
    %51 = arith.addf %46, %50 : vector<160x128xf32>
    %c33 = arith.constant 33 : index
    %c0_35 = arith.constant 0 : index
    %52 = vector.load %arg40[%c33, %c0_35] : memref<224x128xf32, #tpu.memory_space<vmem>>, vector<160x128xf32>
    %c5 = arith.constant 5 : index
    %c0_36 = arith.constant 0 : index
    %53 = vector.load %arg6[%c5, %c0_36] : memref<9x128xf32, #tpu.memory_space<vmem>>, vector<1x128xf32>
    %54 = vector.broadcast %53 : vector<1x128xf32> to vector<160x128xf32>
    %55 = arith.mulf %52, %54 : vector<160x128xf32>
    %56 = arith.addf %51, %55 : vector<160x128xf32>
    %c47 = arith.constant 47 : index
    %c0_37 = arith.constant 0 : index
    %57 = vector.load %arg40[%c47, %c0_37] : memref<224x128xf32, #tpu.memory_space<vmem>>, vector<160x128xf32>
    %c6 = arith.constant 6 : index
    %c0_38 = arith.constant 0 : index
    %58 = vector.load %arg6[%c6, %c0_38] : memref<9x128xf32, #tpu.memory_space<vmem>>, vector<1x128xf32>
    %59 = vector.broadcast %58 : vector<1x128xf32> to vector<160x128xf32>
    %60 = arith.mulf %57, %59 : vector<160x128xf32>
    %61 = arith.addf %56, %60 : vector<160x128xf32>
    %c48 = arith.constant 48 : index
    %c0_39 = arith.constant 0 : index
    %62 = vector.load %arg40[%c48, %c0_39] : memref<224x128xf32, #tpu.memory_space<vmem>>, vector<160x128xf32>
    %c7 = arith.constant 7 : index
    %c0_40 = arith.constant 0 : index
    %63 = vector.load %arg6[%c7, %c0_40] : memref<9x128xf32, #tpu.memory_space<vmem>>, vector<1x128xf32>
    %64 = vector.broadcast %63 : vector<1x128xf32> to vector<160x128xf32>
    %65 = arith.mulf %62, %64 : vector<160x128xf32>
    %66 = arith.addf %61, %65 : vector<160x128xf32>
    %c49 = arith.constant 49 : index
    %c0_41 = arith.constant 0 : index
    %67 = vector.load %arg40[%c49, %c0_41] : memref<224x128xf32, #tpu.memory_space<vmem>>, vector<160x128xf32>
    %c8 = arith.constant 8 : index
    %c0_42 = arith.constant 0 : index
    %68 = vector.load %arg6[%c8, %c0_42] : memref<9x128xf32, #tpu.memory_space<vmem>>, vector<1x128xf32>
    %69 = vector.broadcast %68 : vector<1x128xf32> to vector<160x128xf32>
    %70 = arith.mulf %67, %69 : vector<160x128xf32>
    %71 = arith.addf %66, %70 : vector<160x128xf32>
    %c0_43 = arith.constant 0 : index
    %c0_44 = arith.constant 0 : index
    %72 = vector.load %arg7[%c0_43, %c0_44] : memref<1x128xf32, #tpu.memory_space<vmem>>, vector<1x128xf32>
    %73 = vector.broadcast %72 : vector<1x128xf32> to vector<160x128xf32>
    %74 = arith.mulf %71, %73 : vector<160x128xf32>
    %c0_45 = arith.constant 0 : index
    %c0_46 = arith.constant 0 : index
    %75 = vector.load %arg8[%c0_45, %c0_46] : memref<1x128xf32, #tpu.memory_space<vmem>>, vector<1x128xf32>
    %76 = vector.broadcast %75 : vector<1x128xf32> to vector<160x128xf32>
    %77 = arith.addf %74, %76 : vector<160x128xf32>
    %78 = arith.negf %77 : vector<160x128xf32>
    %79 = math.exp %78 : vector<160x128xf32>
    %cst_47 = arith.constant 1.000000e+00 : f32
    %80 = vector.broadcast %cst_47 : f32 to vector<160x128xf32>
    %81 = arith.addf %80, %79 : vector<160x128xf32>
    %82 = arith.divf %80, %81 : vector<160x128xf32>
    %83 = arith.mulf %77, %82 : vector<160x128xf32>
    %84 = arith.truncf %83 : vector<160x128xf32> to vector<160x128xbf16>
    %c0_48 = arith.constant 0 : index
    %c0_49 = arith.constant 0 : index
    %85 = vector.load %arg9[%c0_48, %c0_49] : memref<128x128xbf16, #tpu.memory_space<vmem>>, vector<128x128xbf16>
    %cst_50 = arith.constant dense<0.000000e+00> : vector<160x128xf32>
    %86 = tpu.matmul %84, %85, %cst_50 {dimension_numbers = #tpu.dot_dimension_numbers<[1], [0], [0], [1], [0, 0, 1, 1], [], []>} : vector<160x128xbf16>, vector<128x128xbf16>, vector<160x128xf32> -> vector<160x128xf32>
    %c0_51 = arith.constant 0 : index
    %c0_52 = arith.constant 0 : index
    %87 = vector.load %arg10[%c0_51, %c0_52] : memref<1x128xf32, #tpu.memory_space<vmem>>, vector<1x128xf32>
    %88 = vector.broadcast %87 : vector<1x128xf32> to vector<160x128xf32>
    %89 = arith.mulf %86, %88 : vector<160x128xf32>
    %c0_53 = arith.constant 0 : index
    %c0_54 = arith.constant 0 : index
    %90 = vector.load %arg11[%c0_53, %c0_54] : memref<1x128xf32, #tpu.memory_space<vmem>>, vector<1x128xf32>
    %91 = vector.broadcast %90 : vector<1x128xf32> to vector<160x128xf32>
    %92 = arith.addf %89, %91 : vector<160x128xf32>
    %93 = arith.addf %92, %26 : vector<160x128xf32>
    %94 = vector.broadcast %0 : vector<160x1xf32> to vector<160x128xf32>
    %95 = arith.mulf %93, %94 : vector<160x128xf32>
    %96 = arith.truncf %95 : vector<160x128xf32> to vector<160x128xbf16>
    %c0_55 = arith.constant 0 : index
    %c0_56 = arith.constant 0 : index
    %97 = vector.load %arg12[%c0_55, %c0_56] : memref<128x128xbf16, #tpu.memory_space<vmem>>, vector<128x128xbf16>
    %cst_57 = arith.constant dense<0.000000e+00> : vector<160x128xf32>
    %98 = tpu.matmul %96, %97, %cst_57 {dimension_numbers = #tpu.dot_dimension_numbers<[1], [0], [0], [1], [0, 0, 1, 1], [], []>} : vector<160x128xbf16>, vector<128x128xbf16>, vector<160x128xf32> -> vector<160x128xf32>
    %c0_58 = arith.constant 0 : index
    %c0_59 = arith.constant 0 : index
    %99 = vector.load %arg13[%c0_58, %c0_59] : memref<1x128xf32, #tpu.memory_space<vmem>>, vector<1x128xf32>
    %100 = vector.broadcast %99 : vector<1x128xf32> to vector<160x128xf32>
    %101 = arith.mulf %98, %100 : vector<160x128xf32>
    %c0_60 = arith.constant 0 : index
    %c0_61 = arith.constant 0 : index
    %102 = vector.load %arg14[%c0_60, %c0_61] : memref<1x128xf32, #tpu.memory_space<vmem>>, vector<1x128xf32>
    %103 = vector.broadcast %102 : vector<1x128xf32> to vector<160x128xf32>
    %104 = arith.addf %101, %103 : vector<160x128xf32>
    %105 = arith.negf %104 : vector<160x128xf32>
    %106 = math.exp %105 : vector<160x128xf32>
    %cst_62 = arith.constant 1.000000e+00 : f32
    %107 = vector.broadcast %cst_62 : f32 to vector<160x128xf32>
    %108 = arith.addf %107, %106 : vector<160x128xf32>
    %109 = arith.divf %107, %108 : vector<160x128xf32>
    %110 = arith.mulf %104, %109 : vector<160x128xf32>
    %111 = vector.broadcast %0 : vector<160x1xf32> to vector<160x128xf32>
    %112 = arith.mulf %110, %111 : vector<160x128xf32>
    %c32_63 = arith.constant 32 : index
    %c0_64 = arith.constant 0 : index
    %113 = vector.load %arg40[%c32_63, %c0_64] : memref<224x128xf32, #tpu.memory_space<vmem>>, vector<160x128xf32>
    tpu.vector_store %arg40[%c32_63, %c0_64], %112 {strides = array<i32>} : memref<224x128xf32, #tpu.memory_space<vmem>>, vector<160x128xf32>,
    %c15_65 = arith.constant 15 : index
    %c0_66 = arith.constant 0 : index
    %114 = vector.load %arg40[%c15_65, %c0_66] : memref<224x128xf32, #tpu.memory_space<vmem>>, vector<160x128xf32>
    %c0_67 = arith.constant 0 : index
    %c0_68 = arith.constant 0 : index
    %115 = vector.load %arg15[%c0_67, %c0_68] : memref<9x128xf32, #tpu.memory_space<vmem>>, vector<1x128xf32>
    %116 = vector.broadcast %115 : vector<1x128xf32> to vector<160x128xf32>
    %117 = arith.mulf %114, %116 : vector<160x128xf32>
    %c16_69 = arith.constant 16 : index
    %c0_70 = arith.constant 0 : index
    %118 = vector.load %arg40[%c16_69, %c0_70] : memref<224x128xf32, #tpu.memory_space<vmem>>, vector<160x128xf32>
    %c1_71 = arith.constant 1 : index
    %c0_72 = arith.constant 0 : index
    %119 = vector.load %arg15[%c1_71, %c0_72] : memref<9x128xf32, #tpu.memory_space<vmem>>, vector<1x128xf32>
    %120 = vector.broadcast %119 : vector<1x128xf32> to vector<160x128xf32>
    %121 = arith.mulf %118, %120 : vector<160x128xf32>
    %122 = arith.addf %117, %121 : vector<160x128xf32>
    %c17_73 = arith.constant 17 : index
    %c0_74 = arith.constant 0 : index
    %123 = vector.load %arg40[%c17_73, %c0_74] : memref<224x128xf32, #tpu.memory_space<vmem>>, vector<160x128xf32>
    %c2_75 = arith.constant 2 : index
    %c0_76 = arith.constant 0 : index
    %124 = vector.load %arg15[%c2_75, %c0_76] : memref<9x128xf32, #tpu.memory_space<vmem>>, vector<1x128xf32>
    %125 = vector.broadcast %124 : vector<1x128xf32> to vector<160x128xf32>
    %126 = arith.mulf %123, %125 : vector<160x128xf32>
    %127 = arith.addf %122, %126 : vector<160x128xf32>
    %c31_77 = arith.constant 31 : index
    %c0_78 = arith.constant 0 : index
    %128 = vector.load %arg40[%c31_77, %c0_78] : memref<224x128xf32, #tpu.memory_space<vmem>>, vector<160x128xf32>
    %c3_79 = arith.constant 3 : index
    %c0_80 = arith.constant 0 : index
    %129 = vector.load %arg15[%c3_79, %c0_80] : memref<9x128xf32, #tpu.memory_space<vmem>>, vector<1x128xf32>
    %130 = vector.broadcast %129 : vector<1x128xf32> to vector<160x128xf32>
    %131 = arith.mulf %128, %130 : vector<160x128xf32>
    %132 = arith.addf %127, %131 : vector<160x128xf32>
    %c32_81 = arith.constant 32 : index
    %c0_82 = arith.constant 0 : index
    %133 = vector.load %arg40[%c32_81, %c0_82] : memref<224x128xf32, #tpu.memory_space<vmem>>, vector<160x128xf32>
    %c4_83 = arith.constant 4 : index
    %c0_84 = arith.constant 0 : index
    %134 = vector.load %arg15[%c4_83, %c0_84] : memref<9x128xf32, #tpu.memory_space<vmem>>, vector<1x128xf32>
    %135 = vector.broadcast %134 : vector<1x128xf32> to vector<160x128xf32>
    %136 = arith.mulf %133, %135 : vector<160x128xf32>
    %137 = arith.addf %132, %136 : vector<160x128xf32>
    %c33_85 = arith.constant 33 : index
    %c0_86 = arith.constant 0 : index
    %138 = vector.load %arg40[%c33_85, %c0_86] : memref<224x128xf32, #tpu.memory_space<vmem>>, vector<160x128xf32>
    %c5_87 = arith.constant 5 : index
    %c0_88 = arith.constant 0 : index
    %139 = vector.load %arg15[%c5_87, %c0_88] : memref<9x128xf32, #tpu.memory_space<vmem>>, vector<1x128xf32>
    %140 = vector.broadcast %139 : vector<1x128xf32> to vector<160x128xf32>
    %141 = arith.mulf %138, %140 : vector<160x128xf32>
    %142 = arith.addf %137, %141 : vector<160x128xf32>
    %c47_89 = arith.constant 47 : index
    %c0_90 = arith.constant 0 : index
    %143 = vector.load %arg40[%c47_89, %c0_90] : memref<224x128xf32, #tpu.memory_space<vmem>>, vector<160x128xf32>
    %c6_91 = arith.constant 6 : index
    %c0_92 = arith.constant 0 : index
    %144 = vector.load %arg15[%c6_91, %c0_92] : memref<9x128xf32, #tpu.memory_space<vmem>>, vector<1x128xf32>
    %145 = vector.broadcast %144 : vector<1x128xf32> to vector<160x128xf32>
    %146 = arith.mulf %143, %145 : vector<160x128xf32>
    %147 = arith.addf %142, %146 : vector<160x128xf32>
    %c48_93 = arith.constant 48 : index
    %c0_94 = arith.constant 0 : index
    %148 = vector.load %arg40[%c48_93, %c0_94] : memref<224x128xf32, #tpu.memory_space<vmem>>, vector<160x128xf32>
    %c7_95 = arith.constant 7 : index
    %c0_96 = arith.constant 0 : index
    %149 = vector.load %arg15[%c7_95, %c0_96] : memref<9x128xf32, #tpu.memory_space<vmem>>, vector<1x128xf32>
    %150 = vector.broadcast %149 : vector<1x128xf32> to vector<160x128xf32>
    %151 = arith.mulf %148, %150 : vector<160x128xf32>
    %152 = arith.addf %147, %151 : vector<160x128xf32>
    %c49_97 = arith.constant 49 : index
    %c0_98 = arith.constant 0 : index
    %153 = vector.load %arg40[%c49_97, %c0_98] : memref<224x128xf32, #tpu.memory_space<vmem>>, vector<160x128xf32>
    %c8_99 = arith.constant 8 : index
    %c0_100 = arith.constant 0 : index
    %154 = vector.load %arg15[%c8_99, %c0_100] : memref<9x128xf32, #tpu.memory_space<vmem>>, vector<1x128xf32>
    %155 = vector.broadcast %154 : vector<1x128xf32> to vector<160x128xf32>
    %156 = arith.mulf %153, %155 : vector<160x128xf32>
    %157 = arith.addf %152, %156 : vector<160x128xf32>
    %c0_101 = arith.constant 0 : index
    %c0_102 = arith.constant 0 : index
    %158 = vector.load %arg16[%c0_101, %c0_102] : memref<1x128xf32, #tpu.memory_space<vmem>>, vector<1x128xf32>
    %159 = vector.broadcast %158 : vector<1x128xf32> to vector<160x128xf32>
    %160 = arith.mulf %157, %159 : vector<160x128xf32>
    %c0_103 = arith.constant 0 : index
    %c0_104 = arith.constant 0 : index
    %161 = vector.load %arg17[%c0_103, %c0_104] : memref<1x128xf32, #tpu.memory_space<vmem>>, vector<1x128xf32>
    %162 = vector.broadcast %161 : vector<1x128xf32> to vector<160x128xf32>
    %163 = arith.addf %160, %162 : vector<160x128xf32>
    %164 = arith.negf %163 : vector<160x128xf32>
    %165 = math.exp %164 : vector<160x128xf32>
    %cst_105 = arith.constant 1.000000e+00 : f32
    %166 = vector.broadcast %cst_105 : f32 to vector<160x128xf32>
    %167 = arith.addf %166, %165 : vector<160x128xf32>
    %168 = arith.divf %166, %167 : vector<160x128xf32>
    %169 = arith.mulf %163, %168 : vector<160x128xf32>
    %170 = arith.truncf %169 : vector<160x128xf32> to vector<160x128xbf16>
    %c0_106 = arith.constant 0 : index
    %c0_107 = arith.constant 0 : index
    %171 = vector.load %arg18[%c0_106, %c0_107] : memref<128x128xbf16, #tpu.memory_space<vmem>>, vector<128x128xbf16>
    %cst_108 = arith.constant dense<0.000000e+00> : vector<160x128xf32>
    %172 = tpu.matmul %170, %171, %cst_108 {dimension_numbers = #tpu.dot_dimension_numbers<[1], [0], [0], [1], [0, 0, 1, 1], [], []>} : vector<160x128xbf16>, vector<128x128xbf16>, vector<160x128xf32> -> vector<160x128xf32>
    %c0_109 = arith.constant 0 : index
    %c0_110 = arith.constant 0 : index
    %173 = vector.load %arg19[%c0_109, %c0_110] : memref<1x128xf32, #tpu.memory_space<vmem>>, vector<1x128xf32>
    %174 = vector.broadcast %173 : vector<1x128xf32> to vector<160x128xf32>
    %175 = arith.mulf %172, %174 : vector<160x128xf32>
    %c0_111 = arith.constant 0 : index
    %c0_112 = arith.constant 0 : index
    %176 = vector.load %arg20[%c0_111, %c0_112] : memref<1x128xf32, #tpu.memory_space<vmem>>, vector<1x128xf32>
    %177 = vector.broadcast %176 : vector<1x128xf32> to vector<160x128xf32>
    %178 = arith.addf %175, %177 : vector<160x128xf32>
    %179 = vector.broadcast %0 : vector<160x1xf32> to vector<160x128xf32>
    %180 = arith.mulf %178, %179 : vector<160x128xf32>
    %181 = arith.truncf %180 : vector<160x128xf32> to vector<160x128xbf16>
    %c32_113 = arith.constant 32 : index
    %c0_114 = arith.constant 0 : index
    %182 = vector.load %arg41[%c32_113, %c0_114] : memref<224x128xbf16, #tpu.memory_space<vmem>>, vector<160x128xbf16>
    tpu.vector_store %arg41[%c32_113, %c0_114], %181 {strides = array<i32>} : memref<224x128xbf16, #tpu.memory_space<vmem>>, vector<160x128xbf16>,
    %c15_115 = arith.constant 15 : index
    %c0_116 = arith.constant 0 : index
    %183 = vector.load %arg41[%c15_115, %c0_116] : memref<224x128xbf16, #tpu.memory_space<vmem>>, vector<160x128xbf16>
    %c0_117 = arith.constant 0 : index
    %c0_118 = arith.constant 0 : index
    %c0_119 = arith.constant 0 : index
    %184 = vector.load %arg30[%c0_117, %c0_118, %c0_119] : memref<9x128x128xbf16, #tpu.memory_space<vmem>>, vector<1x128x128xbf16>
    %185 = vector.shape_cast %184 : vector<1x128x128xbf16> to vector<128x128xbf16>
    %cst_120 = arith.constant dense<0.000000e+00> : vector<160x128xf32>
    %186 = tpu.matmul %183, %185, %cst_120 {dimension_numbers = #tpu.dot_dimension_numbers<[1], [0], [0], [1], [0, 0, 1, 1], [], []>} : vector<160x128xbf16>, vector<128x128xbf16>, vector<160x128xf32> -> vector<160x128xf32>
    %c16_121 = arith.constant 16 : index
    %c0_122 = arith.constant 0 : index
    %187 = vector.load %arg41[%c16_121, %c0_122] : memref<224x128xbf16, #tpu.memory_space<vmem>>, vector<160x128xbf16>
    %c1_123 = arith.constant 1 : index
    %c0_124 = arith.constant 0 : index
    %c0_125 = arith.constant 0 : index
    %188 = vector.load %arg30[%c1_123, %c0_124, %c0_125] : memref<9x128x128xbf16, #tpu.memory_space<vmem>>, vector<1x128x128xbf16>
    %189 = vector.shape_cast %188 : vector<1x128x128xbf16> to vector<128x128xbf16>
    %cst_126 = arith.constant dense<0.000000e+00> : vector<160x128xf32>
    %190 = tpu.matmul %187, %189, %cst_126 {dimension_numbers = #tpu.dot_dimension_numbers<[1], [0], [0], [1], [0, 0, 1, 1], [], []>} : vector<160x128xbf16>, vector<128x128xbf16>, vector<160x128xf32> -> vector<160x128xf32>
    %191 = arith.addf %186, %190 : vector<160x128xf32>
    %c17_127 = arith.constant 17 : index
    %c0_128 = arith.constant 0 : index
    %192 = vector.load %arg41[%c17_127, %c0_128] : memref<224x128xbf16, #tpu.memory_space<vmem>>, vector<160x128xbf16>
    %c2_129 = arith.constant 2 : index
    %c0_130 = arith.constant 0 : index
    %c0_131 = arith.constant 0 : index
    %193 = vector.load %arg30[%c2_129, %c0_130, %c0_131] : memref<9x128x128xbf16, #tpu.memory_space<vmem>>, vector<1x128x128xbf16>
    %194 = vector.shape_cast %193 : vector<1x128x128xbf16> to vector<128x128xbf16>
    %cst_132 = arith.constant dense<0.000000e+00> : vector<160x128xf32>
    %195 = tpu.matmul %192, %194, %cst_132 {dimension_numbers = #tpu.dot_dimension_numbers<[1], [0], [0], [1], [0, 0, 1, 1], [], []>} : vector<160x128xbf16>, vector<128x128xbf16>, vector<160x128xf32> -> vector<160x128xf32>
    %196 = arith.addf %191, %195 : vector<160x128xf32>
    %c31_133 = arith.constant 31 : index
    %c0_134 = arith.constant 0 : index
    %197 = vector.load %arg41[%c31_133, %c0_134] : memref<224x128xbf16, #tpu.memory_space<vmem>>, vector<160x128xbf16>
    %c3_135 = arith.constant 3 : index
    %c0_136 = arith.constant 0 : index
    %c0_137 = arith.constant 0 : index
    %198 = vector.load %arg30[%c3_135, %c0_136, %c0_137] : memref<9x128x128xbf16, #tpu.memory_space<vmem>>, vector<1x128x128xbf16>
    %199 = vector.shape_cast %198 : vector<1x128x128xbf16> to vector<128x128xbf16>
    %cst_138 = arith.constant dense<0.000000e+00> : vector<160x128xf32>
    %200 = tpu.matmul %197, %199, %cst_138 {dimension_numbers = #tpu.dot_dimension_numbers<[1], [0], [0], [1], [0, 0, 1, 1], [], []>} : vector<160x128xbf16>, vector<128x128xbf16>, vector<160x128xf32> -> vector<160x128xf32>
    %201 = arith.addf %196, %200 : vector<160x128xf32>
    %c32_139 = arith.constant 32 : index
    %c0_140 = arith.constant 0 : index
    %202 = vector.load %arg41[%c32_139, %c0_140] : memref<224x128xbf16, #tpu.memory_space<vmem>>, vector<160x128xbf16>
    %c4_141 = arith.constant 4 : index
    %c0_142 = arith.constant 0 : index
    %c0_143 = arith.constant 0 : index
    %203 = vector.load %arg30[%c4_141, %c0_142, %c0_143] : memref<9x128x128xbf16, #tpu.memory_space<vmem>>, vector<1x128x128xbf16>
    %204 = vector.shape_cast %203 : vector<1x128x128xbf16> to vector<128x128xbf16>
    %cst_144 = arith.constant dense<0.000000e+00> : vector<160x128xf32>
    %205 = tpu.matmul %202, %204, %cst_144 {dimension_numbers = #tpu.dot_dimension_numbers<[1], [0], [0], [1], [0, 0, 1, 1], [], []>} : vector<160x128xbf16>, vector<128x128xbf16>, vector<160x128xf32> -> vector<160x128xf32>
    %206 = arith.addf %201, %205 : vector<160x128xf32>
    %c33_145 = arith.constant 33 : index
    %c0_146 = arith.constant 0 : index
    %207 = vector.load %arg41[%c33_145, %c0_146] : memref<224x128xbf16, #tpu.memory_space<vmem>>, vector<160x128xbf16>
    %c5_147 = arith.constant 5 : index
    %c0_148 = arith.constant 0 : index
    %c0_149 = arith.constant 0 : index
    %208 = vector.load %arg30[%c5_147, %c0_148, %c0_149] : memref<9x128x128xbf16, #tpu.memory_space<vmem>>, vector<1x128x128xbf16>
    %209 = vector.shape_cast %208 : vector<1x128x128xbf16> to vector<128x128xbf16>
    %cst_150 = arith.constant dense<0.000000e+00> : vector<160x128xf32>
    %210 = tpu.matmul %207, %209, %cst_150 {dimension_numbers = #tpu.dot_dimension_numbers<[1], [0], [0], [1], [0, 0, 1, 1], [], []>} : vector<160x128xbf16>, vector<128x128xbf16>, vector<160x128xf32> -> vector<160x128xf32>
    %211 = arith.addf %206, %210 : vector<160x128xf32>
    %c47_151 = arith.constant 47 : index
    %c0_152 = arith.constant 0 : index
    %212 = vector.load %arg41[%c47_151, %c0_152] : memref<224x128xbf16, #tpu.memory_space<vmem>>, vector<160x128xbf16>
    %c6_153 = arith.constant 6 : index
    %c0_154 = arith.constant 0 : index
    %c0_155 = arith.constant 0 : index
    %213 = vector.load %arg30[%c6_153, %c0_154, %c0_155] : memref<9x128x128xbf16, #tpu.memory_space<vmem>>, vector<1x128x128xbf16>
    %214 = vector.shape_cast %213 : vector<1x128x128xbf16> to vector<128x128xbf16>
    %cst_156 = arith.constant dense<0.000000e+00> : vector<160x128xf32>
    %215 = tpu.matmul %212, %214, %cst_156 {dimension_numbers = #tpu.dot_dimension_numbers<[1], [0], [0], [1], [0, 0, 1, 1], [], []>} : vector<160x128xbf16>, vector<128x128xbf16>, vector<160x128xf32> -> vector<160x128xf32>
    %216 = arith.addf %211, %215 : vector<160x128xf32>
    %c48_157 = arith.constant 48 : index
    %c0_158 = arith.constant 0 : index
    %217 = vector.load %arg41[%c48_157, %c0_158] : memref<224x128xbf16, #tpu.memory_space<vmem>>, vector<160x128xbf16>
    %c7_159 = arith.constant 7 : index
    %c0_160 = arith.constant 0 : index
    %c0_161 = arith.constant 0 : index
    %218 = vector.load %arg30[%c7_159, %c0_160, %c0_161] : memref<9x128x128xbf16, #tpu.memory_space<vmem>>, vector<1x128x128xbf16>
    %219 = vector.shape_cast %218 : vector<1x128x128xbf16> to vector<128x128xbf16>
    %cst_162 = arith.constant dense<0.000000e+00> : vector<160x128xf32>
    %220 = tpu.matmul %217, %219, %cst_162 {dimension_numbers = #tpu.dot_dimension_numbers<[1], [0], [0], [1], [0, 0, 1, 1], [], []>} : vector<160x128xbf16>, vector<128x128xbf16>, vector<160x128xf32> -> vector<160x128xf32>
    %221 = arith.addf %216, %220 : vector<160x128xf32>
    %c49_163 = arith.constant 49 : index
    %c0_164 = arith.constant 0 : index
    %222 = vector.load %arg41[%c49_163, %c0_164] : memref<224x128xbf16, #tpu.memory_space<vmem>>, vector<160x128xbf16>
    %c8_165 = arith.constant 8 : index
    %c0_166 = arith.constant 0 : index
    %c0_167 = arith.constant 0 : index
    %223 = vector.load %arg30[%c8_165, %c0_166, %c0_167] : memref<9x128x128xbf16, #tpu.memory_space<vmem>>, vector<1x128x128xbf16>
    %224 = vector.shape_cast %223 : vector<1x128x128xbf16> to vector<128x128xbf16>
    %cst_168 = arith.constant dense<0.000000e+00> : vector<160x128xf32>
    %225 = tpu.matmul %222, %224, %cst_168 {dimension_numbers = #tpu.dot_dimension_numbers<[1], [0], [0], [1], [0, 0, 1, 1], [], []>} : vector<160x128xbf16>, vector<128x128xbf16>, vector<160x128xf32> -> vector<160x128xf32>
    %226 = arith.addf %221, %225 : vector<160x128xf32>
    %c0_169 = arith.constant 0 : index
    %c0_170 = arith.constant 0 : index
    %227 = vector.load %arg31[%c0_169, %c0_170] : memref<1x128xf32, #tpu.memory_space<vmem>>, vector<1x128xf32>
    %228 = vector.broadcast %227 : vector<1x128xf32> to vector<160x128xf32>
    %229 = arith.addf %226, %228 : vector<160x128xf32>
    %cst_171 = arith.constant 0.000000e+00 : f32
    %230 = vector.broadcast %cst_171 : f32 to vector<160x128xf32>
    %231 = arith.maximumf %229, %230 : vector<160x128xf32>
    %232 = vector.broadcast %0 : vector<160x1xf32> to vector<160x128xf32>
    %233 = arith.mulf %231, %232 : vector<160x128xf32>
    %c0_172 = arith.constant 0 : index
    %c0_173 = arith.constant 0 : index
    %234 = vector.load %arg32[%c0_172, %c0_173] : memref<1x128xf32, #tpu.memory_space<vmem>>, vector<1x128xf32>
    %235 = vector.broadcast %234 : vector<1x128xf32> to vector<160x128xf32>
    %236 = arith.mulf %233, %235 : vector<160x128xf32>
    %cst_174 = arith.constant dense<0.000000e+00> : vector<160xf32>
    %237 = vector.multi_reduction <add>, %236, %cst_174 [1] : vector<160x128xf32> to vector<160xf32>
    %238 = vector.shape_cast %237 : vector<160xf32> to vector<160x1xf32>
    %c0_175 = arith.constant 0 : index
    %c0_176 = arith.constant 0 : index
    %239 = vector.load %arg33[%c0_175, %c0_176] : memref<1x1xf32, #tpu.memory_space<vmem>>, vector<1x1xf32>
    %240 = vector.broadcast %239 : vector<1x1xf32> to vector<160x1xf32>
    %241 = arith.addf %238, %240 : vector<160x1xf32>
    %242 = arith.negf %241 : vector<160x1xf32>
    %243 = math.exp %242 : vector<160x1xf32>
    %cst_177 = arith.constant 1.000000e+00 : f32
    %244 = vector.broadcast %cst_177 : f32 to vector<160x1xf32>
    %245 = arith.addf %244, %243 : vector<160x1xf32>
    %246 = arith.divf %244, %245 : vector<160x1xf32>
    %247 = vector.broadcast %246 : vector<160x1xf32> to vector<160x128xf32>
    %248 = arith.mulf %180, %247 : vector<160x128xf32>
    %249 = arith.truncf %248 : vector<160x128xf32> to vector<160x128xbf16>
    %c0_178 = arith.constant 0 : index
    %c0_179 = arith.constant 0 : index
    %250 = vector.load %arg21[%c0_178, %c0_179] : memref<128x128xbf16, #tpu.memory_space<vmem>>, vector<128x128xbf16>
    %cst_180 = arith.constant dense<0.000000e+00> : vector<160x128xf32>
    %251 = tpu.matmul %249, %250, %cst_180 {dimension_numbers = #tpu.dot_dimension_numbers<[1], [0], [0], [1], [0, 0, 1, 1], [], []>} : vector<160x128xbf16>, vector<128x128xbf16>, vector<160x128xf32> -> vector<160x128xf32>
    %c0_181 = arith.constant 0 : index
    %c0_182 = arith.constant 0 : index
    %252 = vector.load %arg22[%c0_181, %c0_182] : memref<1x128xf32, #tpu.memory_space<vmem>>, vector<1x128xf32>
    %253 = vector.broadcast %252 : vector<1x128xf32> to vector<160x128xf32>
    %254 = arith.mulf %251, %253 : vector<160x128xf32>
    %c0_183 = arith.constant 0 : index
    %c0_184 = arith.constant 0 : index
    %255 = vector.load %arg23[%c0_183, %c0_184] : memref<1x128xf32, #tpu.memory_space<vmem>>, vector<1x128xf32>
    %256 = vector.broadcast %255 : vector<1x128xf32> to vector<160x128xf32>
    %257 = arith.addf %254, %256 : vector<160x128xf32>
    %258 = arith.negf %257 : vector<160x128xf32>
    %259 = math.exp %258 : vector<160x128xf32>
    %cst_185 = arith.constant 1.000000e+00 : f32
    %260 = vector.broadcast %cst_185 : f32 to vector<160x128xf32>
    %261 = arith.addf %260, %259 : vector<160x128xf32>
    %262 = arith.divf %260, %261 : vector<160x128xf32>
    %263 = arith.mulf %257, %262 : vector<160x128xf32>
    %264 = vector.broadcast %0 : vector<160x1xf32> to vector<160x128xf32>
    %265 = arith.mulf %263, %264 : vector<160x128xf32>
    %c32_186 = arith.constant 32 : index
    %c0_187 = arith.constant 0 : index
    %266 = vector.load %arg40[%c32_186, %c0_187] : memref<224x128xf32, #tpu.memory_space<vmem>>, vector<160x128xf32>
    tpu.vector_store %arg40[%c32_186, %c0_187], %265 {strides = array<i32>} : memref<224x128xf32, #tpu.memory_space<vmem>>, vector<160x128xf32>,
    %c15_188 = arith.constant 15 : index
    %c0_189 = arith.constant 0 : index
    %267 = vector.load %arg40[%c15_188, %c0_189] : memref<224x128xf32, #tpu.memory_space<vmem>>, vector<160x128xf32>
    %c0_190 = arith.constant 0 : index
    %c0_191 = arith.constant 0 : index
    %268 = vector.load %arg24[%c0_190, %c0_191] : memref<9x128xf32, #tpu.memory_space<vmem>>, vector<1x128xf32>
    %269 = vector.broadcast %268 : vector<1x128xf32> to vector<160x128xf32>
    %270 = arith.mulf %267, %269 : vector<160x128xf32>
    %c16_192 = arith.constant 16 : index
    %c0_193 = arith.constant 0 : index
    %271 = vector.load %arg40[%c16_192, %c0_193] : memref<224x128xf32, #tpu.memory_space<vmem>>, vector<160x128xf32>
    %c1_194 = arith.constant 1 : index
    %c0_195 = arith.constant 0 : index
    %272 = vector.load %arg24[%c1_194, %c0_195] : memref<9x128xf32, #tpu.memory_space<vmem>>, vector<1x128xf32>
    %273 = vector.broadcast %272 : vector<1x128xf32> to vector<160x128xf32>
    %274 = arith.mulf %271, %273 : vector<160x128xf32>
    %275 = arith.addf %270, %274 : vector<160x128xf32>
    %c17_196 = arith.constant 17 : index
    %c0_197 = arith.constant 0 : index
    %276 = vector.load %arg40[%c17_196, %c0_197] : memref<224x128xf32, #tpu.memory_space<vmem>>, vector<160x128xf32>
    %c2_198 = arith.constant 2 : index
    %c0_199 = arith.constant 0 : index
    %277 = vector.load %arg24[%c2_198, %c0_199] : memref<9x128xf32, #tpu.memory_space<vmem>>, vector<1x128xf32>
    %278 = vector.broadcast %277 : vector<1x128xf32> to vector<160x128xf32>
    %279 = arith.mulf %276, %278 : vector<160x128xf32>
    %280 = arith.addf %275, %279 : vector<160x128xf32>
    %c31_200 = arith.constant 31 : index
    %c0_201 = arith.constant 0 : index
    %281 = vector.load %arg40[%c31_200, %c0_201] : memref<224x128xf32, #tpu.memory_space<vmem>>, vector<160x128xf32>
    %c3_202 = arith.constant 3 : index
    %c0_203 = arith.constant 0 : index
    %282 = vector.load %arg24[%c3_202, %c0_203] : memref<9x128xf32, #tpu.memory_space<vmem>>, vector<1x128xf32>
    %283 = vector.broadcast %282 : vector<1x128xf32> to vector<160x128xf32>
    %284 = arith.mulf %281, %283 : vector<160x128xf32>
    %285 = arith.addf %280, %284 : vector<160x128xf32>
    %c32_204 = arith.constant 32 : index
    %c0_205 = arith.constant 0 : index
    %286 = vector.load %arg40[%c32_204, %c0_205] : memref<224x128xf32, #tpu.memory_space<vmem>>, vector<160x128xf32>
    %c4_206 = arith.constant 4 : index
    %c0_207 = arith.constant 0 : index
    %287 = vector.load %arg24[%c4_206, %c0_207] : memref<9x128xf32, #tpu.memory_space<vmem>>, vector<1x128xf32>
    %288 = vector.broadcast %287 : vector<1x128xf32> to vector<160x128xf32>
    %289 = arith.mulf %286, %288 : vector<160x128xf32>
    %290 = arith.addf %285, %289 : vector<160x128xf32>
    %c33_208 = arith.constant 33 : index
    %c0_209 = arith.constant 0 : index
    %291 = vector.load %arg40[%c33_208, %c0_209] : memref<224x128xf32, #tpu.memory_space<vmem>>, vector<160x128xf32>
    %c5_210 = arith.constant 5 : index
    %c0_211 = arith.constant 0 : index
    %292 = vector.load %arg24[%c5_210, %c0_211] : memref<9x128xf32, #tpu.memory_space<vmem>>, vector<1x128xf32>
    %293 = vector.broadcast %292 : vector<1x128xf32> to vector<160x128xf32>
    %294 = arith.mulf %291, %293 : vector<160x128xf32>
    %295 = arith.addf %290, %294 : vector<160x128xf32>
    %c47_212 = arith.constant 47 : index
    %c0_213 = arith.constant 0 : index
    %296 = vector.load %arg40[%c47_212, %c0_213] : memref<224x128xf32, #tpu.memory_space<vmem>>, vector<160x128xf32>
    %c6_214 = arith.constant 6 : index
    %c0_215 = arith.constant 0 : index
    %297 = vector.load %arg24[%c6_214, %c0_215] : memref<9x128xf32, #tpu.memory_space<vmem>>, vector<1x128xf32>
    %298 = vector.broadcast %297 : vector<1x128xf32> to vector<160x128xf32>
    %299 = arith.mulf %296, %298 : vector<160x128xf32>
    %300 = arith.addf %295, %299 : vector<160x128xf32>
    %c48_216 = arith.constant 48 : index
    %c0_217 = arith.constant 0 : index
    %301 = vector.load %arg40[%c48_216, %c0_217] : memref<224x128xf32, #tpu.memory_space<vmem>>, vector<160x128xf32>
    %c7_218 = arith.constant 7 : index
    %c0_219 = arith.constant 0 : index
    %302 = vector.load %arg24[%c7_218, %c0_219] : memref<9x128xf32, #tpu.memory_space<vmem>>, vector<1x128xf32>
    %303 = vector.broadcast %302 : vector<1x128xf32> to vector<160x128xf32>
    %304 = arith.mulf %301, %303 : vector<160x128xf32>
    %305 = arith.addf %300, %304 : vector<160x128xf32>
    %c49_220 = arith.constant 49 : index
    %c0_221 = arith.constant 0 : index
    %306 = vector.load %arg40[%c49_220, %c0_221] : memref<224x128xf32, #tpu.memory_space<vmem>>, vector<160x128xf32>
    %c8_222 = arith.constant 8 : index
    %c0_223 = arith.constant 0 : index
    %307 = vector.load %arg24[%c8_222, %c0_223] : memref<9x128xf32, #tpu.memory_space<vmem>>, vector<1x128xf32>
    %308 = vector.broadcast %307 : vector<1x128xf32> to vector<160x128xf32>
    %309 = arith.mulf %306, %308 : vector<160x128xf32>
    %310 = arith.addf %305, %309 : vector<160x128xf32>
    %c0_224 = arith.constant 0 : index
    %c0_225 = arith.constant 0 : index
    %311 = vector.load %arg25[%c0_224, %c0_225] : memref<1x128xf32, #tpu.memory_space<vmem>>, vector<1x128xf32>
    %312 = vector.broadcast %311 : vector<1x128xf32> to vector<160x128xf32>
    %313 = arith.mulf %310, %312 : vector<160x128xf32>
    %c0_226 = arith.constant 0 : index
    %c0_227 = arith.constant 0 : index
    %314 = vector.load %arg26[%c0_226, %c0_227] : memref<1x128xf32, #tpu.memory_space<vmem>>, vector<1x128xf32>
    %315 = vector.broadcast %314 : vector<1x128xf32> to vector<160x128xf32>
    %316 = arith.addf %313, %315 : vector<160x128xf32>
    %317 = arith.negf %316 : vector<160x128xf32>
    %318 = math.exp %317 : vector<160x128xf32>
    %cst_228 = arith.constant 1.000000e+00 : f32
    %319 = vector.broadcast %cst_228 : f32 to vector<160x128xf32>
    %320 = arith.addf %319, %318 : vector<160x128xf32>
    %321 = arith.divf %319, %320 : vector<160x128xf32>
    %322 = arith.mulf %316, %321 : vector<160x128xf32>
    %323 = arith.truncf %322 : vector<160x128xf32> to vector<160x128xbf16>
    %c0_229 = arith.constant 0 : index
    %c0_230 = arith.constant 0 : index
    %324 = vector.load %arg27[%c0_229, %c0_230] : memref<128x128xbf16, #tpu.memory_space<vmem>>, vector<128x128xbf16>
    %cst_231 = arith.constant dense<0.000000e+00> : vector<160x128xf32>
    %325 = tpu.matmul %323, %324, %cst_231 {dimension_numbers = #tpu.dot_dimension_numbers<[1], [0], [0], [1], [0, 0, 1, 1], [], []>} : vector<160x128xbf16>, vector<128x128xbf16>, vector<160x128xf32> -> vector<160x128xf32>
    %c0_232 = arith.constant 0 : index
    %c0_233 = arith.constant 0 : index
    %326 = vector.load %arg28[%c0_232, %c0_233] : memref<1x128xf32, #tpu.memory_space<vmem>>, vector<1x128xf32>
    %327 = vector.broadcast %326 : vector<1x128xf32> to vector<160x128xf32>
    %328 = arith.mulf %325, %327 : vector<160x128xf32>
    %c0_234 = arith.constant 0 : index
    %c0_235 = arith.constant 0 : index
    %329 = vector.load %arg29[%c0_234, %c0_235] : memref<1x128xf32, #tpu.memory_space<vmem>>, vector<1x128xf32>
    %330 = vector.broadcast %329 : vector<1x128xf32> to vector<160x128xf32>
    %331 = arith.addf %328, %330 : vector<160x128xf32>
    %332 = arith.addf %331, %248 : vector<160x128xf32>
    %333 = vector.broadcast %0 : vector<160x1xf32> to vector<160x128xf32>
    %334 = arith.mulf %332, %333 : vector<160x128xf32>
    %335 = arith.truncf %334 : vector<160x128xf32> to vector<160x128xbf16>
    %c0_236 = arith.constant 0 : index
    %c0_237 = arith.constant 0 : index
    %336 = vector.load %arg34[%c0_236, %c0_237] : memref<128x128xbf16, #tpu.memory_space<vmem>>, vector<128x128xbf16>
    %cst_238 = arith.constant dense<0.000000e+00> : vector<160x128xf32>
    %337 = tpu.matmul %335, %336, %cst_238 {dimension_numbers = #tpu.dot_dimension_numbers<[1], [0], [0], [1], [0, 0, 1, 1], [], []>} : vector<160x128xbf16>, vector<128x128xbf16>, vector<160x128xf32> -> vector<160x128xf32>
    %c0_239 = arith.constant 0 : index
    %c0_240 = arith.constant 0 : index
    %338 = vector.load %arg35[%c0_239, %c0_240] : memref<1x128xf32, #tpu.memory_space<vmem>>, vector<1x128xf32>
    %339 = vector.broadcast %338 : vector<1x128xf32> to vector<160x128xf32>
    %340 = arith.mulf %337, %339 : vector<160x128xf32>
    %c0_241 = arith.constant 0 : index
    %c0_242 = arith.constant 0 : index
    %341 = vector.load %arg36[%c0_241, %c0_242] : memref<1x128xf32, #tpu.memory_space<vmem>>, vector<1x128xf32>
    %342 = vector.broadcast %341 : vector<1x128xf32> to vector<160x128xf32>
    %343 = arith.addf %340, %342 : vector<160x128xf32>
    %344 = arith.negf %343 : vector<160x128xf32>
    %345 = math.exp %344 : vector<160x128xf32>
    %cst_243 = arith.constant 1.000000e+00 : f32
    %346 = vector.broadcast %cst_243 : f32 to vector<160x128xf32>
    %347 = arith.addf %346, %345 : vector<160x128xf32>
    %348 = arith.divf %346, %347 : vector<160x128xf32>
    %349 = arith.mulf %343, %348 : vector<160x128xf32>
    %350 = vector.broadcast %0 : vector<160x1xf32> to vector<160x128xf32>
    %351 = arith.mulf %349, %350 : vector<160x128xf32>
    %cst_244 = arith.constant dense<0.000000e+00> : vector<128xf32>
    %352 = vector.multi_reduction <add>, %351, %cst_244 [0] : vector<160x128xf32> to vector<128xf32>
    %353 = vector.shape_cast %352 : vector<128xf32> to vector<1x128xf32>
    %cst_245 = arith.constant 1.562500e-02 : f32
    %354 = vector.broadcast %cst_245 : f32 to vector<1x128xf32>
    %355 = arith.mulf %353, %354 : vector<1x128xf32>
    %c0_246 = arith.constant 0 : index
    %c0_247 = arith.constant 0 : index
    %356 = vector.load %arg37[%c0_246, %c0_247] : memref<1x128xf32, #tpu.memory_space<vmem>>, vector<1x128xf32>
    %357 = arith.mulf %355, %356 : vector<1x128xf32>
    %cst_248 = arith.constant dense<0.000000e+00> : vector<1xf32>
    %358 = vector.multi_reduction <add>, %357, %cst_248 [1] : vector<1x128xf32> to vector<1xf32>
    %359 = vector.shape_cast %358 : vector<1xf32> to vector<1x1xf32>
    %c0_249 = arith.constant 0 : index
    %c0_250 = arith.constant 0 : index
    %360 = vector.load %arg38[%c0_249, %c0_250] : memref<1x1xf32, #tpu.memory_space<vmem>>, vector<1x1xf32>
    %361 = arith.addf %359, %360 : vector<1x1xf32>
    %362 = vector.shape_cast %361 : vector<1x1xf32> to vector<1x1xf32>
    %363 = vector.broadcast %362 : vector<1x1xf32> to vector<1x128xf32>
    %c0_251 = arith.constant 0 : index
    %c0_252 = arith.constant 0 : index
    %c0_253 = arith.constant 0 : index
    %364 = vector.load %arg39[%c0_251, %c0_252, %c0_253] : memref<1x1x128xf32, #tpu.memory_space<vmem>>, vector<1x1x128xf32>
    %365 = vector.shape_cast %364 : vector<1x1x128xf32> to vector<1x128xf32>
    %366 = vector.shape_cast %363 : vector<1x128xf32> to vector<1x1x128xf32>
    tpu.vector_store %arg39[%c0_251, %c0_252, %c0_253], %366 {strides = array<i32>} : memref<1x1x128xf32, #tpu.memory_space<vmem>>, vector<1x1x128xf32>,
    return
  }
  func.func @transform_0(%arg0: i32) -> (i32, i32, i32) {
    %c0_i32 = arith.constant 0 : i32
    %c0_i32_0 = arith.constant 0 : i32
    %c0_i32_1 = arith.constant 0 : i32
    return %arg0, %c0_i32, %c0_i32_0 : i32, i32, i32
  }
  func.func @transform_1(%arg0: i32) -> (i32, i32) {
    %c0_i32 = arith.constant 0 : i32
    %c0_i32_0 = arith.constant 0 : i32
    %c0_i32_1 = arith.constant 0 : i32
    return %c0_i32, %c0_i32_0 : i32, i32
  }
  func.func @transform_2(%arg0: i32) -> (i32, i32) {
    %c0_i32 = arith.constant 0 : i32
    %c0_i32_0 = arith.constant 0 : i32
    %c0_i32_1 = arith.constant 0 : i32
    return %c0_i32, %c0_i32_0 : i32, i32
  }
  func.func @transform_3(%arg0: i32) -> (i32, i32) {
    %c0_i32 = arith.constant 0 : i32
    %c0_i32_0 = arith.constant 0 : i32
    %c0_i32_1 = arith.constant 0 : i32
    return %c0_i32, %c0_i32_0 : i32, i32
  }
  func.func @transform_4(%arg0: i32) -> (i32, i32) {
    %c0_i32 = arith.constant 0 : i32
    %c0_i32_0 = arith.constant 0 : i32
    %c0_i32_1 = arith.constant 0 : i32
    return %c0_i32, %c0_i32_0 : i32, i32
  }
  func.func @transform_5(%arg0: i32) -> (i32, i32) {
    %c0_i32 = arith.constant 0 : i32
    %c0_i32_0 = arith.constant 0 : i32
    %c0_i32_1 = arith.constant 0 : i32
    return %c0_i32, %c0_i32_0 : i32, i32
  }
  func.func @transform_6(%arg0: i32) -> (i32, i32) {
    %c0_i32 = arith.constant 0 : i32
    %c0_i32_0 = arith.constant 0 : i32
    %c0_i32_1 = arith.constant 0 : i32
    return %c0_i32, %c0_i32_0 : i32, i32
  }
  func.func @transform_7(%arg0: i32) -> (i32, i32) {
    %c0_i32 = arith.constant 0 : i32
    %c0_i32_0 = arith.constant 0 : i32
    %c0_i32_1 = arith.constant 0 : i32
    return %c0_i32, %c0_i32_0 : i32, i32
  }
  func.func @transform_8(%arg0: i32) -> (i32, i32) {
    %c0_i32 = arith.constant 0 : i32
    %c0_i32_0 = arith.constant 0 : i32
    %c0_i32_1 = arith.constant 0 : i32
    return %c0_i32, %c0_i32_0 : i32, i32
  }
  func.func @transform_9(%arg0: i32) -> (i32, i32) {
    %c0_i32 = arith.constant 0 : i32
    %c0_i32_0 = arith.constant 0 : i32
    %c0_i32_1 = arith.constant 0 : i32
    return %c0_i32, %c0_i32_0 : i32, i32
  }
  func.func @transform_10(%arg0: i32) -> (i32, i32) {
    %c0_i32 = arith.constant 0 : i32
    %c0_i32_0 = arith.constant 0 : i32
    %c0_i32_1 = arith.constant 0 : i32
    return %c0_i32, %c0_i32_0 : i32, i32
  }
  func.func @transform_11(%arg0: i32) -> (i32, i32) {
    %c0_i32 = arith.constant 0 : i32
    %c0_i32_0 = arith.constant 0 : i32
    %c0_i32_1 = arith.constant 0 : i32
    return %c0_i32, %c0_i32_0 : i32, i32
  }
  func.func @transform_12(%arg0: i32) -> (i32, i32) {
    %c0_i32 = arith.constant 0 : i32
    %c0_i32_0 = arith.constant 0 : i32
    %c0_i32_1 = arith.constant 0 : i32
    return %c0_i32, %c0_i32_0 : i32, i32
  }
  func.func @transform_13(%arg0: i32) -> (i32, i32) {
    %c0_i32 = arith.constant 0 : i32
    %c0_i32_0 = arith.constant 0 : i32
    %c0_i32_1 = arith.constant 0 : i32
    return %c0_i32, %c0_i32_0 : i32, i32
  }
  func.func @transform_14(%arg0: i32) -> (i32, i32) {
    %c0_i32 = arith.constant 0 : i32
    %c0_i32_0 = arith.constant 0 : i32
    %c0_i32_1 = arith.constant 0 : i32
    return %c0_i32, %c0_i32_0 : i32, i32
  }
  func.func @transform_15(%arg0: i32) -> (i32, i32) {
    %c0_i32 = arith.constant 0 : i32
    %c0_i32_0 = arith.constant 0 : i32
    %c0_i32_1 = arith.constant 0 : i32
    return %c0_i32, %c0_i32_0 : i32, i32
  }
  func.func @transform_16(%arg0: i32) -> (i32, i32) {
    %c0_i32 = arith.constant 0 : i32
    %c0_i32_0 = arith.constant 0 : i32
    %c0_i32_1 = arith.constant 0 : i32
    return %c0_i32, %c0_i32_0 : i32, i32
  }
  func.func @transform_17(%arg0: i32) -> (i32, i32) {
    %c0_i32 = arith.constant 0 : i32
    %c0_i32_0 = arith.constant 0 : i32
    %c0_i32_1 = arith.constant 0 : i32
    return %c0_i32, %c0_i32_0 : i32, i32
  }
  func.func @transform_18(%arg0: i32) -> (i32, i32) {
    %c0_i32 = arith.constant 0 : i32
    %c0_i32_0 = arith.constant 0 : i32
    %c0_i32_1 = arith.constant 0 : i32
    return %c0_i32, %c0_i32_0 : i32, i32
  }
  func.func @transform_19(%arg0: i32) -> (i32, i32) {
    %c0_i32 = arith.constant 0 : i32
    %c0_i32_0 = arith.constant 0 : i32
    %c0_i32_1 = arith.constant 0 : i32
    return %c0_i32, %c0_i32_0 : i32, i32
  }
  func.func @transform_20(%arg0: i32) -> (i32, i32) {
    %c0_i32 = arith.constant 0 : i32
    %c0_i32_0 = arith.constant 0 : i32
    %c0_i32_1 = arith.constant 0 : i32
    return %c0_i32, %c0_i32_0 : i32, i32
  }
  func.func @transform_21(%arg0: i32) -> (i32, i32) {
    %c0_i32 = arith.constant 0 : i32
    %c0_i32_0 = arith.constant 0 : i32
    %c0_i32_1 = arith.constant 0 : i32
    return %c0_i32, %c0_i32_0 : i32, i32
  }
  func.func @transform_22(%arg0: i32) -> (i32, i32) {
    %c0_i32 = arith.constant 0 : i32
    %c0_i32_0 = arith.constant 0 : i32
    %c0_i32_1 = arith.constant 0 : i32
    return %c0_i32, %c0_i32_0 : i32, i32
  }
  func.func @transform_23(%arg0: i32) -> (i32, i32) {
    %c0_i32 = arith.constant 0 : i32
    %c0_i32_0 = arith.constant 0 : i32
    %c0_i32_1 = arith.constant 0 : i32
    return %c0_i32, %c0_i32_0 : i32, i32
  }
  func.func @transform_24(%arg0: i32) -> (i32, i32) {
    %c0_i32 = arith.constant 0 : i32
    %c0_i32_0 = arith.constant 0 : i32
    %c0_i32_1 = arith.constant 0 : i32
    return %c0_i32, %c0_i32_0 : i32, i32
  }
  func.func @transform_25(%arg0: i32) -> (i32, i32) {
    %c0_i32 = arith.constant 0 : i32
    %c0_i32_0 = arith.constant 0 : i32
    %c0_i32_1 = arith.constant 0 : i32
    return %c0_i32, %c0_i32_0 : i32, i32
  }
  func.func @transform_26(%arg0: i32) -> (i32, i32) {
    %c0_i32 = arith.constant 0 : i32
    %c0_i32_0 = arith.constant 0 : i32
    %c0_i32_1 = arith.constant 0 : i32
    return %c0_i32, %c0_i32_0 : i32, i32
  }
  func.func @transform_27(%arg0: i32) -> (i32, i32) {
    %c0_i32 = arith.constant 0 : i32
    %c0_i32_0 = arith.constant 0 : i32
    %c0_i32_1 = arith.constant 0 : i32
    return %c0_i32, %c0_i32_0 : i32, i32
  }
  func.func @transform_28(%arg0: i32) -> (i32, i32) {
    %c0_i32 = arith.constant 0 : i32
    %c0_i32_0 = arith.constant 0 : i32
    %c0_i32_1 = arith.constant 0 : i32
    return %c0_i32, %c0_i32_0 : i32, i32
  }
  func.func @transform_29(%arg0: i32) -> (i32, i32, i32) {
    %c0_i32 = arith.constant 0 : i32
    %c0_i32_0 = arith.constant 0 : i32
    %c0_i32_1 = arith.constant 0 : i32
    %c0_i32_2 = arith.constant 0 : i32
    return %c0_i32, %c0_i32_0, %c0_i32_1 : i32, i32, i32
  }
  func.func @transform_30(%arg0: i32) -> (i32, i32) {
    %c0_i32 = arith.constant 0 : i32
    %c0_i32_0 = arith.constant 0 : i32
    %c0_i32_1 = arith.constant 0 : i32
    return %c0_i32, %c0_i32_0 : i32, i32
  }
  func.func @transform_31(%arg0: i32) -> (i32, i32) {
    %c0_i32 = arith.constant 0 : i32
    %c0_i32_0 = arith.constant 0 : i32
    %c0_i32_1 = arith.constant 0 : i32
    return %c0_i32, %c0_i32_0 : i32, i32
  }
  func.func @transform_32(%arg0: i32) -> (i32, i32) {
    %c0_i32 = arith.constant 0 : i32
    %c0_i32_0 = arith.constant 0 : i32
    %c0_i32_1 = arith.constant 0 : i32
    return %c0_i32, %c0_i32_0 : i32, i32
  }
  func.func @transform_33(%arg0: i32) -> (i32, i32) {
    %c0_i32 = arith.constant 0 : i32
    %c0_i32_0 = arith.constant 0 : i32
    %c0_i32_1 = arith.constant 0 : i32
    return %c0_i32, %c0_i32_0 : i32, i32
  }
  func.func @transform_34(%arg0: i32) -> (i32, i32) {
    %c0_i32 = arith.constant 0 : i32
    %c0_i32_0 = arith.constant 0 : i32
    %c0_i32_1 = arith.constant 0 : i32
    return %c0_i32, %c0_i32_0 : i32, i32
  }
  func.func @transform_35(%arg0: i32) -> (i32, i32) {
    %c0_i32 = arith.constant 0 : i32
    %c0_i32_0 = arith.constant 0 : i32
    %c0_i32_1 = arith.constant 0 : i32
    return %c0_i32, %c0_i32_0 : i32, i32
  }
  func.func @transform_36(%arg0: i32) -> (i32, i32) {
    %c0_i32 = arith.constant 0 : i32
    %c0_i32_0 = arith.constant 0 : i32
    %c0_i32_1 = arith.constant 0 : i32
    return %c0_i32, %c0_i32_0 : i32, i32
  }
  func.func @transform_37(%arg0: i32) -> (i32, i32) {
    %c0_i32 = arith.constant 0 : i32
    %c0_i32_0 = arith.constant 0 : i32
    %c0_i32_1 = arith.constant 0 : i32
    return %c0_i32, %c0_i32_0 : i32, i32
  }
  func.func @transform_38(%arg0: i32) -> (i32, i32, i32) {
    %c0_i32 = arith.constant 0 : i32
    %c0_i32_0 = arith.constant 0 : i32
    %c0_i32_1 = arith.constant 0 : i32
    return %arg0, %c0_i32, %c0_i32_0 : i32, i32, i32
  }
}

</mosaic_0001>

<llo_original>
// kernel: forward.1
$region0: #{forward.1}
  #allocation0 [shape = 'u32[]', space=smem, size = 0x4, offset = 0x4, fixed_abs, tag = 'smem constant byte address 0x4 - core index']
  #allocation1 [shape = 'u32[144,128]{1,0:T(1,128)}', space=vmem, size = 0x12000, scoped, tag = 'internal scratch']
  #allocation2 [shape = 'f32[224,128]{1,0:T(8,128)}', space=vmem, size = 0x1c000, scoped, tag = 'scratch operand']
  #allocation3 [shape = 'bf16[224,128]{1,0:T(16,128)(2,1)}', space=vmem, size = 0xe000, scoped, tag = 'scratch operand']
  #allocation4 [shape = 'f32[1,1]{1,0:T(1,128)S(1)}', space=vmem, size = 0x200, scoped, tag = 'scoped memory for forward.1']
  #allocation5 [shape = 'f32[1,1]{1,0:T(1,128)S(1)}', space=vmem, size = 0x200, scoped, tag = 'scoped memory for forward.1']
  %s0 = inlined_call_operand.smem [shape: u32[39], index: -1, kind: input, shape index: {}]
  %s1 = sld [smem:[%s0]]
  %s2 = scalar_lea.smem %s0, 1
  %s3 = sld [smem:[%s2]]
  %s4 = scalar_lea.smem %s0, 2
  %s5 = sld [smem:[%s4]]
  %s6 = scalar_lea.smem %s0, 3
  %s7 = sld [smem:[%s6]]
  %s8 = scalar_lea.smem %s0, 4
  %s9 = sld [smem:[%s8]]
  %s10 = scalar_lea.smem %s0, 5
  %s11 = sld [smem:[%s10]]
  %s12 = scalar_lea.smem %s0, 6
  %s13 = sld [smem:[%s12]]
  %s14 = scalar_lea.smem %s0, 7
  %s15 = sld [smem:[%s14]]
  %s16 = scalar_lea.smem %s0, 8
  %s17 = sld [smem:[%s16]]
  %s18 = scalar_lea.smem %s0, 9
  %s19 = sld [smem:[%s18]]
  %s20 = scalar_lea.smem %s0, 10
  %s21 = sld [smem:[%s20]]
  %s22 = scalar_lea.smem %s0, 11
  %s23 = sld [smem:[%s22]]
  %s24 = scalar_lea.smem %s0, 12
  %s25 = sld [smem:[%s24]]
  %s26 = scalar_lea.smem %s0, 13
  %s27 = sld [smem:[%s26]]
  %s28 = scalar_lea.smem %s0, 14
  %s29 = sld [smem:[%s28]]
  %s30 = scalar_lea.smem %s0, 15
  %s31 = sld [smem:[%s30]]
  %s32 = scalar_lea.smem %s0, 16
  %s33 = sld [smem:[%s32]]
  %s34 = scalar_lea.smem %s0, 17
  %s35 = sld [smem:[%s34]]
  %s36 = scalar_lea.smem %s0, 18
  %s37 = sld [smem:[%s36]]
  %s38 = scalar_lea.smem %s0, 19
  %s39 = sld [smem:[%s38]]
  %s40 = scalar_lea.smem %s0, 20
  %s41 = sld [smem:[%s40]]
  %s42 = scalar_lea.smem %s0, 21
  %s43 = sld [smem:[%s42]]
  %s44 = scalar_lea.smem %s0, 22
  %s45 = sld [smem:[%s44]]
  %s46 = scalar_lea.smem %s0, 23
  %s47 = sld [smem:[%s46]]
  %s48 = scalar_lea.smem %s0, 24
  %s49 = sld [smem:[%s48]]
  %s50 = scalar_lea.smem %s0, 25
  %s51 = sld [smem:[%s50]]
  %s52 = scalar_lea.smem %s0, 26
  %s53 = sld [smem:[%s52]]
  %s54 = scalar_lea.smem %s0, 27
  %s55 = sld [smem:[%s54]]
  %s56 = scalar_lea.smem %s0, 28
  %s57 = sld [smem:[%s56]]
  %s58 = scalar_lea.smem %s0, 29
  %s59 = sld [smem:[%s58]]
  %s60 = scalar_lea.smem %s0, 30
  %s61 = sld [smem:[%s60]]
  %s62 = scalar_lea.smem %s0, 31
  %s63 = sld [smem:[%s62]]
  %s64 = scalar_lea.smem %s0, 32
  %s65 = sld [smem:[%s64]]
  %s66 = scalar_lea.smem %s0, 33
  %s67 = sld [smem:[%s66]]
  %s68 = scalar_lea.smem %s0, 34
  %s69 = sld [smem:[%s68]]
  %s70 = scalar_lea.smem %s0, 35
  %s71 = sld [smem:[%s70]]
  %s72 = scalar_lea.smem %s0, 36
  %s73 = sld [smem:[%s72]]
  %s74 = scalar_lea.smem %s0, 37
  %s75 = sld [smem:[%s74]]
  %s76 = scalar_lea.smem %s0, 38
  %s77 = sld [smem:[%s76]]
  %s78 = sld [smem:[#allocation0]]
  $region185: #{forward.1} parent=0
    _
  %s80 = ssub.s32 1, %s78
  %s81 = scalar_select 0, %s80, %s78
  %v82 = vstv %s65
  %83 = vst [vmem:[#allocation4] sm:$0x1] %v82
  %v84 = vstv %s75
  %85 = vst [vmem:[#allocation5] sm:$0x1] %v84
  loop: start=0, step=1, limit=4
  $region2: #{forward.1} parent=0 // loop_pre_header
    _
  $region3: #{forward.1} parent=0 // loop_header
    %s87 = sphi 0, %s91
    %p88 = scmp.ge.s32.totalorder %s87, 4
    %s97 = sphi 0, %s99
    %s100 = sphi 0, %s97
    %s101 = sphi 0, %s100
    %s117 = sphi 0, %s101
    %s121 = sphi 0, %s121
    %s123 = sphi 0, %s121
    %s124 = sphi 0, %s123
    %s138 = sphi 0, %s124
    %s142 = sphi 0, %s142
    %s144 = sphi 0, %s142
    %s145 = sphi 0, %s144
    %s159 = sphi 0, %s145
    %s163 = sphi 0, %s163
    %s165 = sphi 0, %s163
    %s166 = sphi 0, %s165
    %s180 = sphi 0, %s166
    %s184 = sphi 0, %s184
    %s186 = sphi 0, %s184
    %s187 = sphi 0, %s186
    %s201 = sphi 0, %s187
    %s205 = sphi 0, %s205
    %s207 = sphi 0, %s205
    %s208 = sphi 0, %s207
    %s222 = sphi 0, %s208
    %s226 = sphi 0, %s226
    %s228 = sphi 0, %s226
    %s229 = sphi 0, %s228
    %s243 = sphi 0, %s229
    %s247 = sphi 0, %s247
    %s249 = sphi 0, %s247
    %s250 = sphi 0, %s249
    %s264 = sphi 0, %s250
    %s268 = sphi 0, %s268
    %s270 = sphi 0, %s268
    %s271 = sphi 0, %s270
    %s285 = sphi 0, %s271
    %s289 = sphi 0, %s289
    %s291 = sphi 0, %s289
    %s292 = sphi 0, %s291
    %s306 = sphi 0, %s292
    %s310 = sphi 0, %s310
    %s312 = sphi 0, %s310
    %s313 = sphi 0, %s312
    %s327 = sphi 0, %s313
    %s331 = sphi 0, %s331
    %s333 = sphi 0, %s331
    %s334 = sphi 0, %s333
    %s348 = sphi 0, %s334
    %s352 = sphi 0, %s352
    %s354 = sphi 0, %s352
    %s355 = sphi 0, %s354
    %s369 = sphi 0, %s355
    %s373 = sphi 0, %s373
    %s375 = sphi 0, %s373
    %s376 = sphi 0, %s375
    %s390 = sphi 0, %s376
    %s394 = sphi 0, %s394
    %s396 = sphi 0, %s394
    %s397 = sphi 0, %s396
    %s411 = sphi 0, %s397
    %s415 = sphi 0, %s415
    %s417 = sphi 0, %s415
    %s418 = sphi 0, %s417
    %s432 = sphi 0, %s418
    %s436 = sphi 0, %s436
    %s438 = sphi 0, %s436
    %s439 = sphi 0, %s438
    %s453 = sphi 0, %s439
    %s457 = sphi 0, %s457
    %s459 = sphi 0, %s457
    %s460 = sphi 0, %s459
    %s474 = sphi 0, %s460
    %s478 = sphi 0, %s478
    %s480 = sphi 0, %s478
    %s481 = sphi 0, %s480
    %s495 = sphi 0, %s481
    %s499 = sphi 0, %s499
    %s501 = sphi 0, %s499
    %s502 = sphi 0, %s501
    %s516 = sphi 0, %s502
    %s520 = sphi 0, %s520
    %s522 = sphi 0, %s520
    %s523 = sphi 0, %s522
    %s537 = sphi 0, %s523
    %s541 = sphi 0, %s541
    %s543 = sphi 0, %s541
    %s544 = sphi 0, %s543
    %s558 = sphi 0, %s544
    %s562 = sphi 0, %s562
    %s564 = sphi 0, %s562
    %s565 = sphi 0, %s564
    %s579 = sphi 0, %s565
    %s583 = sphi 0, %s583
    %s585 = sphi 0, %s583
    %s586 = sphi 0, %s585
    %s600 = sphi 0, %s586
    %s604 = sphi 0, %s604
    %s606 = sphi 0, %s604
    %s607 = sphi 0, %s606
    %s621 = sphi 0, %s607
    %s625 = sphi 0, %s625
    %s627 = sphi 0, %s625
    %s628 = sphi 0, %s627
    %s642 = sphi 0, %s628
    %s646 = sphi 0, %s646
    %s648 = sphi 0, %s646
    %s649 = sphi 0, %s648
    %s663 = sphi 0, %s649
    %s667 = sphi 0, %s667
    %s669 = sphi 0, %s667
    %s670 = sphi 0, %s669
    %s684 = sphi 0, %s670
    %s688 = sphi 0, %s688
    %s690 = sphi 0, %s688
    %s691 = sphi 0, %s690
    %s705 = sphi 0, %s691
    %s709 = sphi 0, %s709
    %s711 = sphi 0, %s709
    %s712 = sphi 0, %s711
    %s726 = sphi 0, %s712
    %s730 = sphi 0, %s730
    %s732 = sphi 0, %s730
    %s733 = sphi 0, %s732
    %s747 = sphi 0, %s733
    %s751 = sphi 0, %s751
    %s753 = sphi 0, %s751
    %s754 = sphi 0, %s753
    %s768 = sphi 0, %s754
    %s772 = sphi 0, %s772
    %s774 = sphi 0, %s772
    %s775 = sphi 0, %s774
    %s789 = sphi 0, %s775
    %s793 = sphi 0, %s793
    %s795 = sphi 0, %s793
    %s796 = sphi 0, %s795
    %s810 = sphi 0, %s796
    %s814 = sphi 0, %s814
    %s816 = sphi 0, %s814
    %s817 = sphi 0, %s816
    %s831 = sphi 0, %s817
    %s835 = sphi 0, %s835
    %s837 = sphi 0, %s835
    %s838 = sphi 0, %s837
    %s852 = sphi 0, %s838
    %s856 = sphi 0, %s856
    %s858 = sphi 0, %s856
    %s859 = sphi 0, %s858
    %s873 = sphi 0, %s859
    %s877 = sphi 0, %s877
    %s879 = sphi 0, %s877
    %s880 = sphi 0, %s879
    %s894 = sphi 0, %s880
    %s900 = sphi 0, %s902
    %s903 = sphi 0, %s900
    %s904 = sphi 0, %s903
    %s920 = sphi 0, %s904
  $region4: #{forward.1} parent=0 // loop_header_branch
    %90 = sbr.rel (%p88) target = $region8
  $region5: #{forward.1} parent=0 // loop_body
    %s92 = ssub.s32 %s87, 1
    %s93 = ssub.s32 %s87, 2
    %s94 = sadd.s32 %s87, 1
    %s95 = ssub.s32 %s87, %s94
    %p96 = scmp.eq.s32.totalorder %s95, 0
    %s98 = sadd.s32 %s97, 1
    %s99 = scalar_select %p96, %s97, %s98
    %p102 = pneg %p96
    %p103 = scmp.eq.s32.totalorder %s87, 1
    %p104 = por %p102, %p103
    %p105 = scmp.ne.s32.totalorder %s97, %s100
    %p106 = scmp.eq.s32.totalorder %s87, 0
    %p107 = por %p105, %p106
    %p108 = scmp.ne.s32.totalorder %s97, %s100
    %p109 = scmp.eq.s32.totalorder %s92, 1
    %p110 = por %p108, %p109
    %p111 = scmp.ne.s32.totalorder %s100, %s101
    %p112 = scmp.eq.s32.totalorder %s92, 0
    %p113 = por %p111, %p112
    %p114 = scmp.ne.s32.totalorder %s100, %s101
    %p115 = scmp.eq.s32.totalorder %s93, 1
    %p116 = por %p114, %p115
    %p118 = scmp.ne.s32.totalorder %s101, %s117
    %p119 = scmp.eq.s32.totalorder %s93, 0
    %p120 = por %p118, %p119
    %s122 = sadd.s32 %s121, 1
    %p125 = scmp.eq.s32.totalorder %s87, 1
    %p126 = scmp.ne.s32.totalorder %s121, %s123
    %p127 = scmp.eq.s32.totalorder %s87, 0
    %p128 = por %p126, %p127
    %p129 = scmp.ne.s32.totalorder %s121, %s123
    %p130 = scmp.eq.s32.totalorder %s92, 1
    %p131 = por %p129, %p130
    %p132 = scmp.ne.s32.totalorder %s123, %s124
    %p133 = scmp.eq.s32.totalorder %s92, 0
    %p134 = por %p132, %p133
    %p135 = scmp.ne.s32.totalorder %s123, %s124
    %p136 = scmp.eq.s32.totalorder %s93, 1
    %p137 = por %p135, %p136
    %p139 = scmp.ne.s32.totalorder %s124, %s138
    %p140 = scmp.eq.s32.totalorder %s93, 0
    %p141 = por %p139, %p140
    %s143 = sadd.s32 %s142, 1
    %p146 = scmp.eq.s32.totalorder %s87, 1
    %p147 = scmp.ne.s32.totalorder %s142, %s144
    %p148 = scmp.eq.s32.totalorder %s87, 0
    %p149 = por %p147, %p148
    %p150 = scmp.ne.s32.totalorder %s142, %s144
    %p151 = scmp.eq.s32.totalorder %s92, 1
    %p152 = por %p150, %p151
    %p153 = scmp.ne.s32.totalorder %s144, %s145
    %p154 = scmp.eq.s32.totalorder %s92, 0
    %p155 = por %p153, %p154
    %p156 = scmp.ne.s32.totalorder %s144, %s145
    %p157 = scmp.eq.s32.totalorder %s93, 1
    %p158 = por %p156, %p157
    %p160 = scmp.ne.s32.totalorder %s145, %s159
    %p161 = scmp.eq.s32.totalorder %s93, 0
    %p162 = por %p160, %p161
    %s164 = sadd.s32 %s163, 1
    %p167 = scmp.eq.s32.totalorder %s87, 1
    %p168 = scmp.ne.s32.totalorder %s163, %s165
    %p169 = scmp.eq.s32.totalorder %s87, 0
    %p170 = por %p168, %p169
    %p171 = scmp.ne.s32.totalorder %s163, %s165
    %p172 = scmp.eq.s32.totalorder %s92, 1
    %p173 = por %p171, %p172
    %p174 = scmp.ne.s32.totalorder %s165, %s166
    %p175 = scmp.eq.s32.totalorder %s92, 0
    %p176 = por %p174, %p175
    %p177 = scmp.ne.s32.totalorder %s165, %s166
    %p178 = scmp.eq.s32.totalorder %s93, 1
    %p179 = por %p177, %p178
    %p181 = scmp.ne.s32.totalorder %s166, %s180
    %p182 = scmp.eq.s32.totalorder %s93, 0
    %p183 = por %p181, %p182
    %s185 = sadd.s32 %s184, 1
    %p188 = scmp.eq.s32.totalorder %s87, 1
    %p189 = scmp.ne.s32.totalorder %s184, %s186
    %p190 = scmp.eq.s32.totalorder %s87, 0
    %p191 = por %p189, %p190
    %p192 = scmp.ne.s32.totalorder %s184, %s186
    %p193 = scmp.eq.s32.totalorder %s92, 1
    %p194 = por %p192, %p193
    %p195 = scmp.ne.s32.totalorder %s186, %s187
    %p196 = scmp.eq.s32.totalorder %s92, 0
    %p197 = por %p195, %p196
    %p198 = scmp.ne.s32.totalorder %s186, %s187
    %p199 = scmp.eq.s32.totalorder %s93, 1
    %p200 = por %p198, %p199
    %p202 = scmp.ne.s32.totalorder %s187, %s201
    %p203 = scmp.eq.s32.totalorder %s93, 0
    %p204 = por %p202, %p203
    %s206 = sadd.s32 %s205, 1
    %p209 = scmp.eq.s32.totalorder %s87, 1
    %p210 = scmp.ne.s32.totalorder %s205, %s207
    %p211 = scmp.eq.s32.totalorder %s87, 0
    %p212 = por %p210, %p211
    %p213 = scmp.ne.s32.totalorder %s205, %s207
    %p214 = scmp.eq.s32.totalorder %s92, 1
    %p215 = por %p213, %p214
    %p216 = scmp.ne.s32.totalorder %s207, %s208
    %p217 = scmp.eq.s32.totalorder %s92, 0
    %p218 = por %p216, %p217
    %p219 = scmp.ne.s32.totalorder %s207, %s208
    %p220 = scmp.eq.s32.totalorder %s93, 1
    %p221 = por %p219, %p220
    %p223 = scmp.ne.s32.totalorder %s208, %s222
    %p224 = scmp.eq.s32.totalorder %s93, 0
    %p225 = por %p223, %p224
    %s227 = sadd.s32 %s226, 1
    %p230 = scmp.eq.s32.totalorder %s87, 1
    %p231 = scmp.ne.s32.totalorder %s226, %s228
    %p232 = scmp.eq.s32.totalorder %s87, 0
    %p233 = por %p231, %p232
    %p234 = scmp.ne.s32.totalorder %s226, %s228
    %p235 = scmp.eq.s32.totalorder %s92, 1
    %p236 = por %p234, %p235
    %p237 = scmp.ne.s32.totalorder %s228, %s229
    %p238 = scmp.eq.s32.totalorder %s92, 0
    %p239 = por %p237, %p238
    %p240 = scmp.ne.s32.totalorder %s228, %s229
    %p241 = scmp.eq.s32.totalorder %s93, 1
    %p242 = por %p240, %p241
    %p244 = scmp.ne.s32.totalorder %s229, %s243
    %p245 = scmp.eq.s32.totalorder %s93, 0
    %p246 = por %p244, %p245
    %s248 = sadd.s32 %s247, 1
    %p251 = scmp.eq.s32.totalorder %s87, 1
    %p252 = scmp.ne.s32.totalorder %s247, %s249
    %p253 = scmp.eq.s32.totalorder %s87, 0
    %p254 = por %p252, %p253
    %p255 = scmp.ne.s32.totalorder %s247, %s249
    %p256 = scmp.eq.s32.totalorder %s92, 1
    %p257 = por %p255, %p256
    %p258 = scmp.ne.s32.totalorder %s249, %s250
    %p259 = scmp.eq.s32.totalorder %s92, 0
    %p260 = por %p258, %p259
    %p261 = scmp.ne.s32.totalorder %s249, %s250
    %p262 = scmp.eq.s32.totalorder %s93, 1
    %p263 = por %p261, %p262
    %p265 = scmp.ne.s32.totalorder %s250, %s264
    %p266 = scmp.eq.s32.totalorder %s93, 0
    %p267 = por %p265, %p266
    %s269 = sadd.s32 %s268, 1
    %p272 = scmp.eq.s32.totalorder %s87, 1
    %p273 = scmp.ne.s32.totalorder %s268, %s270
    %p274 = scmp.eq.s32.totalorder %s87, 0
    %p275 = por %p273, %p274
    %p276 = scmp.ne.s32.totalorder %s268, %s270
    %p277 = scmp.eq.s32.totalorder %s92, 1
    %p278 = por %p276, %p277
    %p279 = scmp.ne.s32.totalorder %s270, %s271
    %p280 = scmp.eq.s32.totalorder %s92, 0
    %p281 = por %p279, %p280
    %p282 = scmp.ne.s32.totalorder %s270, %s271
    %p283 = scmp.eq.s32.totalorder %s93, 1
    %p284 = por %p282, %p283
    %p286 = scmp.ne.s32.totalorder %s271, %s285
    %p287 = scmp.eq.s32.totalorder %s93, 0
    %p288 = por %p286, %p287
    %s290 = sadd.s32 %s289, 1
    %p293 = scmp.eq.s32.totalorder %s87, 1
    %p294 = scmp.ne.s32.totalorder %s289, %s291
    %p295 = scmp.eq.s32.totalorder %s87, 0
    %p296 = por %p294, %p295
    %p297 = scmp.ne.s32.totalorder %s289, %s291
    %p298 = scmp.eq.s32.totalorder %s92, 1
    %p299 = por %p297, %p298
    %p300 = scmp.ne.s32.totalorder %s291, %s292
    %p301 = scmp.eq.s32.totalorder %s92, 0
    %p302 = por %p300, %p301
    %p303 = scmp.ne.s32.totalorder %s291, %s292
    %p304 = scmp.eq.s32.totalorder %s93, 1
    %p305 = por %p303, %p304
    %p307 = scmp.ne.s32.totalorder %s292, %s306
    %p308 = scmp.eq.s32.totalorder %s93, 0
    %p309 = por %p307, %p308
    %s311 = sadd.s32 %s310, 1
    %p314 = scmp.eq.s32.totalorder %s87, 1
    %p315 = scmp.ne.s32.totalorder %s310, %s312
    %p316 = scmp.eq.s32.totalorder %s87, 0
    %p317 = por %p315, %p316
    %p318 = scmp.ne.s32.totalorder %s310, %s312
    %p319 = scmp.eq.s32.totalorder %s92, 1
    %p320 = por %p318, %p319
    %p321 = scmp.ne.s32.totalorder %s312, %s313
    %p322 = scmp.eq.s32.totalorder %s92, 0
    %p323 = por %p321, %p322
    %p324 = scmp.ne.s32.totalorder %s312, %s313
    %p325 = scmp.eq.s32.totalorder %s93, 1
    %p326 = por %p324, %p325
    %p328 = scmp.ne.s32.totalorder %s313, %s327
    %p329 = scmp.eq.s32.totalorder %s93, 0
    %p330 = por %p328, %p329
    %s332 = sadd.s32 %s331, 1
    %p335 = scmp.eq.s32.totalorder %s87, 1
    %p336 = scmp.ne.s32.totalorder %s331, %s333
    %p337 = scmp.eq.s32.totalorder %s87, 0
    %p338 = por %p336, %p337
    %p339 = scmp.ne.s32.totalorder %s331, %s333
    %p340 = scmp.eq.s32.totalorder %s92, 1
    %p341 = por %p339, %p340
    %p342 = scmp.ne.s32.totalorder %s333, %s334
    %p343 = scmp.eq.s32.totalorder %s92, 0
    %p344 = por %p342, %p343
    %p345 = scmp.ne.s32.totalorder %s333, %s334
    %p346 = scmp.eq.s32.totalorder %s93, 1
    %p347 = por %p345, %p346
    %p349 = scmp.ne.s32.totalorder %s334, %s348
    %p350 = scmp.eq.s32.totalorder %s93, 0
    %p351 = por %p349, %p350
    %s353 = sadd.s32 %s352, 1
    %p356 = scmp.eq.s32.totalorder %s87, 1
    %p357 = scmp.ne.s32.totalorder %s352, %s354
    %p358 = scmp.eq.s32.totalorder %s87, 0
    %p359 = por %p357, %p358
    %p360 = scmp.ne.s32.totalorder %s352, %s354
    %p361 = scmp.eq.s32.totalorder %s92, 1
    %p362 = por %p360, %p361
    %p363 = scmp.ne.s32.totalorder %s354, %s355
    %p364 = scmp.eq.s32.totalorder %s92, 0
    %p365 = por %p363, %p364
    %p366 = scmp.ne.s32.totalorder %s354, %s355
    %p367 = scmp.eq.s32.totalorder %s93, 1
    %p368 = por %p366, %p367
    %p370 = scmp.ne.s32.totalorder %s355, %s369
    %p371 = scmp.eq.s32.totalorder %s93, 0
    %p372 = por %p370, %p371
    %s374 = sadd.s32 %s373, 1
    %p377 = scmp.eq.s32.totalorder %s87, 1
    %p378 = scmp.ne.s32.totalorder %s373, %s375
    %p379 = scmp.eq.s32.totalorder %s87, 0
    %p380 = por %p378, %p379
    %p381 = scmp.ne.s32.totalorder %s373, %s375
    %p382 = scmp.eq.s32.totalorder %s92, 1
    %p383 = por %p381, %p382
    %p384 = scmp.ne.s32.totalorder %s375, %s376
    %p385 = scmp.eq.s32.totalorder %s92, 0
    %p386 = por %p384, %p385
    %p387 = scmp.ne.s32.totalorder %s375, %s376
    %p388 = scmp.eq.s32.totalorder %s93, 1
    %p389 = por %p387, %p388
    %p391 = scmp.ne.s32.totalorder %s376, %s390
    %p392 = scmp.eq.s32.totalorder %s93, 0
    %p393 = por %p391, %p392
    %s395 = sadd.s32 %s394, 1
    %p398 = scmp.eq.s32.totalorder %s87, 1
    %p399 = scmp.ne.s32.totalorder %s394, %s396
    %p400 = scmp.eq.s32.totalorder %s87, 0
    %p401 = por %p399, %p400
    %p402 = scmp.ne.s32.totalorder %s394, %s396
    %p403 = scmp.eq.s32.totalorder %s92, 1
    %p404 = por %p402, %p403
    %p405 = scmp.ne.s32.totalorder %s396, %s397
    %p406 = scmp.eq.s32.totalorder %s92, 0
    %p407 = por %p405, %p406
    %p408 = scmp.ne.s32.totalorder %s396, %s397
    %p409 = scmp.eq.s32.totalorder %s93, 1
    %p410 = por %p408, %p409
    %p412 = scmp.ne.s32.totalorder %s397, %s411
    %p413 = scmp.eq.s32.totalorder %s93, 0
    %p414 = por %p412, %p413
    %s416 = sadd.s32 %s415, 1
    %p419 = scmp.eq.s32.totalorder %s87, 1
    %p420 = scmp.ne.s32.totalorder %s415, %s417
    %p421 = scmp.eq.s32.totalorder %s87, 0
    %p422 = por %p420, %p421
    %p423 = scmp.ne.s32.totalorder %s415, %s417
    %p424 = scmp.eq.s32.totalorder %s92, 1
    %p425 = por %p423, %p424
    %p426 = scmp.ne.s32.totalorder %s417, %s418
    %p427 = scmp.eq.s32.totalorder %s92, 0
    %p428 = por %p426, %p427
    %p429 = scmp.ne.s32.totalorder %s417, %s418
    %p430 = scmp.eq.s32.totalorder %s93, 1
    %p431 = por %p429, %p430
    %p433 = scmp.ne.s32.totalorder %s418, %s432
    %p434 = scmp.eq.s32.totalorder %s93, 0
    %p435 = por %p433, %p434
    %s437 = sadd.s32 %s436, 1
    %p440 = scmp.eq.s32.totalorder %s87, 1
    %p441 = scmp.ne.s32.totalorder %s436, %s438
    %p442 = scmp.eq.s32.totalorder %s87, 0
    %p443 = por %p441, %p442
    %p444 = scmp.ne.s32.totalorder %s436, %s438
    %p445 = scmp.eq.s32.totalorder %s92, 1
    %p446 = por %p444, %p445
    %p447 = scmp.ne.s32.totalorder %s438, %s439
    %p448 = scmp.eq.s32.totalorder %s92, 0
    %p449 = por %p447, %p448
    %p450 = scmp.ne.s32.totalorder %s438, %s439
    %p451 = scmp.eq.s32.totalorder %s93, 1
    %p452 = por %p450, %p451
    %p454 = scmp.ne.s32.totalorder %s439, %s453
    %p455 = scmp.eq.s32.totalorder %s93, 0
    %p456 = por %p454, %p455
    %s458 = sadd.s32 %s457, 1
    %p461 = scmp.eq.s32.totalorder %s87, 1
    %p462 = scmp.ne.s32.totalorder %s457, %s459
    %p463 = scmp.eq.s32.totalorder %s87, 0
    %p464 = por %p462, %p463
    %p465 = scmp.ne.s32.totalorder %s457, %s459
    %p466 = scmp.eq.s32.totalorder %s92, 1
    %p467 = por %p465, %p466
    %p468 = scmp.ne.s32.totalorder %s459, %s460
    %p469 = scmp.eq.s32.totalorder %s92, 0
    %p470 = por %p468, %p469
    %p471 = scmp.ne.s32.totalorder %s459, %s460
    %p472 = scmp.eq.s32.totalorder %s93, 1
    %p473 = por %p471, %p472
    %p475 = scmp.ne.s32.totalorder %s460, %s474
    %p476 = scmp.eq.s32.totalorder %s93, 0
    %p477 = por %p475, %p476
    %s479 = sadd.s32 %s478, 1
    %p482 = scmp.eq.s32.totalorder %s87, 1
    %p483 = scmp.ne.s32.totalorder %s478, %s480
    %p484 = scmp.eq.s32.totalorder %s87, 0
    %p485 = por %p483, %p484
    %p486 = scmp.ne.s32.totalorder %s478, %s480
    %p487 = scmp.eq.s32.totalorder %s92, 1
    %p488 = por %p486, %p487
    %p489 = scmp.ne.s32.totalorder %s480, %s481
    %p490 = scmp.eq.s32.totalorder %s92, 0
    %p491 = por %p489, %p490
    %p492 = scmp.ne.s32.totalorder %s480, %s481
    %p493 = scmp.eq.s32.totalorder %s93, 1
    %p494 = por %p492, %p493
    %p496 = scmp.ne.s32.totalorder %s481, %s495
    %p497 = scmp.eq.s32.totalorder %s93, 0
    %p498 = por %p496, %p497
    %s500 = sadd.s32 %s499, 1
    %p503 = scmp.eq.s32.totalorder %s87, 1
    %p504 = scmp.ne.s32.totalorder %s499, %s501
    %p505 = scmp.eq.s32.totalorder %s87, 0
    %p506 = por %p504, %p505
    %p507 = scmp.ne.s32.totalorder %s499, %s501
    %p508 = scmp.eq.s32.totalorder %s92, 1
    %p509 = por %p507, %p508
    %p510 = scmp.ne.s32.totalorder %s501, %s502
    %p511 = scmp.eq.s32.totalorder %s92, 0
    %p512 = por %p510, %p511
    %p513 = scmp.ne.s32.totalorder %s501, %s502
    %p514 = scmp.eq.s32.totalorder %s93, 1
    %p515 = por %p513, %p514
    %p517 = scmp.ne.s32.totalorder %s502, %s516
    %p518 = scmp.eq.s32.totalorder %s93, 0
    %p519 = por %p517, %p518
    %s521 = sadd.s32 %s520, 1
    %p524 = scmp.eq.s32.totalorder %s87, 1
    %p525 = scmp.ne.s32.totalorder %s520, %s522
    %p526 = scmp.eq.s32.totalorder %s87, 0
    %p527 = por %p525, %p526
    %p528 = scmp.ne.s32.totalorder %s520, %s522
    %p529 = scmp.eq.s32.totalorder %s92, 1
    %p530 = por %p528, %p529
    %p531 = scmp.ne.s32.totalorder %s522, %s523
    %p532 = scmp.eq.s32.totalorder %s92, 0
    %p533 = por %p531, %p532
    %p534 = scmp.ne.s32.totalorder %s522, %s523
    %p535 = scmp.eq.s32.totalorder %s93, 1
    %p536 = por %p534, %p535
    %p538 = scmp.ne.s32.totalorder %s523, %s537
    %p539 = scmp.eq.s32.totalorder %s93, 0
    %p540 = por %p538, %p539
    %s542 = sadd.s32 %s541, 1
    %p545 = scmp.eq.s32.totalorder %s87, 1
    %p546 = scmp.ne.s32.totalorder %s541, %s543
    %p547 = scmp.eq.s32.totalorder %s87, 0
    %p548 = por %p546, %p547
    %p549 = scmp.ne.s32.totalorder %s541, %s543
    %p550 = scmp.eq.s32.totalorder %s92, 1
    %p551 = por %p549, %p550
    %p552 = scmp.ne.s32.totalorder %s543, %s544
    %p553 = scmp.eq.s32.totalorder %s92, 0
    %p554 = por %p552, %p553
    %p555 = scmp.ne.s32.totalorder %s543, %s544
    %p556 = scmp.eq.s32.totalorder %s93, 1
    %p557 = por %p555, %p556
    %p559 = scmp.ne.s32.totalorder %s544, %s558
    %p560 = scmp.eq.s32.totalorder %s93, 0
    %p561 = por %p559, %p560
    %s563 = sadd.s32 %s562, 1
    %p566 = scmp.eq.s32.totalorder %s87, 1
    %p567 = scmp.ne.s32.totalorder %s562, %s564
    %p568 = scmp.eq.s32.totalorder %s87, 0
    %p569 = por %p567, %p568
    %p570 = scmp.ne.s32.totalorder %s562, %s564
    %p571 = scmp.eq.s32.totalorder %s92, 1
    %p572 = por %p570, %p571
    %p573 = scmp.ne.s32.totalorder %s564, %s565
    %p574 = scmp.eq.s32.totalorder %s92, 0
    %p575 = por %p573, %p574
    %p576 = scmp.ne.s32.totalorder %s564, %s565
    %p577 = scmp.eq.s32.totalorder %s93, 1
    %p578 = por %p576, %p577
    %p580 = scmp.ne.s32.totalorder %s565, %s579
    %p581 = scmp.eq.s32.totalorder %s93, 0
    %p582 = por %p580, %p581
    %s584 = sadd.s32 %s583, 1
    %p587 = scmp.eq.s32.totalorder %s87, 1
    %p588 = scmp.ne.s32.totalorder %s583, %s585
    %p589 = scmp.eq.s32.totalorder %s87, 0
    %p590 = por %p588, %p589
    %p591 = scmp.ne.s32.totalorder %s583, %s585
    %p592 = scmp.eq.s32.totalorder %s92, 1
    %p593 = por %p591, %p592
    %p594 = scmp.ne.s32.totalorder %s585, %s586
    %p595 = scmp.eq.s32.totalorder %s92, 0
    %p596 = por %p594, %p595
    %p597 = scmp.ne.s32.totalorder %s585, %s586
    %p598 = scmp.eq.s32.totalorder %s93, 1
    %p599 = por %p597, %p598
    %p601 = scmp.ne.s32.totalorder %s586, %s600
    %p602 = scmp.eq.s32.totalorder %s93, 0
    %p603 = por %p601, %p602
    %s605 = sadd.s32 %s604, 1
    %p608 = scmp.eq.s32.totalorder %s87, 1
    %p609 = scmp.ne.s32.totalorder %s604, %s606
    %p610 = scmp.eq.s32.totalorder %s87, 0
    %p611 = por %p609, %p610
    %p612 = scmp.ne.s32.totalorder %s604, %s606
    %p613 = scmp.eq.s32.totalorder %s92, 1
    %p614 = por %p612, %p613
    %p615 = scmp.ne.s32.totalorder %s606, %s607
    %p616 = scmp.eq.s32.totalorder %s92, 0
    %p617 = por %p615, %p616
    %p618 = scmp.ne.s32.totalorder %s606, %s607
    %p619 = scmp.eq.s32.totalorder %s93, 1
    %p620 = por %p618, %p619
    %p622 = scmp.ne.s32.totalorder %s607, %s621
    %p623 = scmp.eq.s32.totalorder %s93, 0
    %p624 = por %p622, %p623
    %s626 = sadd.s32 %s625, 1
    %p629 = scmp.eq.s32.totalorder %s87, 1
    %p630 = scmp.ne.s32.totalorder %s625, %s627
    %p631 = scmp.eq.s32.totalorder %s87, 0
    %p632 = por %p630, %p631
    %p633 = scmp.ne.s32.totalorder %s625, %s627
    %p634 = scmp.eq.s32.totalorder %s92, 1
    %p635 = por %p633, %p634
    %p636 = scmp.ne.s32.totalorder %s627, %s628
    %p637 = scmp.eq.s32.totalorder %s92, 0
    %p638 = por %p636, %p637
    %p639 = scmp.ne.s32.totalorder %s627, %s628
    %p640 = scmp.eq.s32.totalorder %s93, 1
    %p641 = por %p639, %p640
    %p643 = scmp.ne.s32.totalorder %s628, %s642
    %p644 = scmp.eq.s32.totalorder %s93, 0
    %p645 = por %p643, %p644
    %s647 = sadd.s32 %s646, 1
    %p650 = scmp.eq.s32.totalorder %s87, 1
    %p651 = scmp.ne.s32.totalorder %s646, %s648
    %p652 = scmp.eq.s32.totalorder %s87, 0
    %p653 = por %p651, %p652
    %p654 = scmp.ne.s32.totalorder %s646, %s648
    %p655 = scmp.eq.s32.totalorder %s92, 1
    %p656 = por %p654, %p655
    %p657 = scmp.ne.s32.totalorder %s648, %s649
    %p658 = scmp.eq.s32.totalorder %s92, 0
    %p659 = por %p657, %p658
    %p660 = scmp.ne.s32.totalorder %s648, %s649
    %p661 = scmp.eq.s32.totalorder %s93, 1
    %p662 = por %p660, %p661
    %p664 = scmp.ne.s32.totalorder %s649, %s663
    %p665 = scmp.eq.s32.totalorder %s93, 0
    %p666 = por %p664, %p665
    %s668 = sadd.s32 %s667, 1
    %p671 = scmp.eq.s32.totalorder %s87, 1
    %p672 = scmp.ne.s32.totalorder %s667, %s669
    %p673 = scmp.eq.s32.totalorder %s87, 0
    %p674 = por %p672, %p673
    %p675 = scmp.ne.s32.totalorder %s667, %s669
    %p676 = scmp.eq.s32.totalorder %s92, 1
    %p677 = por %p675, %p676
    %p678 = scmp.ne.s32.totalorder %s669, %s670
    %p679 = scmp.eq.s32.totalorder %s92, 0
    %p680 = por %p678, %p679
    %p681 = scmp.ne.s32.totalorder %s669, %s670
    %p682 = scmp.eq.s32.totalorder %s93, 1
    %p683 = por %p681, %p682
    %p685 = scmp.ne.s32.totalorder %s670, %s684
    %p686 = scmp.eq.s32.totalorder %s93, 0
    %p687 = por %p685, %p686
    %s689 = sadd.s32 %s688, 1
    %p692 = scmp.eq.s32.totalorder %s87, 1
    %p693 = scmp.ne.s32.totalorder %s688, %s690
    %p694 = scmp.eq.s32.totalorder %s87, 0
    %p695 = por %p693, %p694
    %p696 = scmp.ne.s32.totalorder %s688, %s690
    %p697 = scmp.eq.s32.totalorder %s92, 1
    %p698 = por %p696, %p697
    %p699 = scmp.ne.s32.totalorder %s690, %s691
    %p700 = scmp.eq.s32.totalorder %s92, 0
    %p701 = por %p699, %p700
    %p702 = scmp.ne.s32.totalorder %s690, %s691
    %p703 = scmp.eq.s32.totalorder %s93, 1
    %p704 = por %p702, %p703
    %p706 = scmp.ne.s32.totalorder %s691, %s705
    %p707 = scmp.eq.s32.totalorder %s93, 0
    %p708 = por %p706, %p707
    %s710 = sadd.s32 %s709, 1
    %p713 = scmp.eq.s32.totalorder %s87, 1
    %p714 = scmp.ne.s32.totalorder %s709, %s711
    %p715 = scmp.eq.s32.totalorder %s87, 0
    %p716 = por %p714, %p715
    %p717 = scmp.ne.s32.totalorder %s709, %s711
    %p718 = scmp.eq.s32.totalorder %s92, 1
    %p719 = por %p717, %p718
    %p720 = scmp.ne.s32.totalorder %s711, %s712
    %p721 = scmp.eq.s32.totalorder %s92, 0
    %p722 = por %p720, %p721
    %p723 = scmp.ne.s32.totalorder %s711, %s712
    %p724 = scmp.eq.s32.totalorder %s93, 1
    %p725 = por %p723, %p724
    %p727 = scmp.ne.s32.totalorder %s712, %s726
    %p728 = scmp.eq.s32.totalorder %s93, 0
    %p729 = por %p727, %p728
    %s731 = sadd.s32 %s730, 1
    %p734 = scmp.eq.s32.totalorder %s87, 1
    %p735 = scmp.ne.s32.totalorder %s730, %s732
    %p736 = scmp.eq.s32.totalorder %s87, 0
    %p737 = por %p735, %p736
    %p738 = scmp.ne.s32.totalorder %s730, %s732
    %p739 = scmp.eq.s32.totalorder %s92, 1
    %p740 = por %p738, %p739
    %p741 = scmp.ne.s32.totalorder %s732, %s733
    %p742 = scmp.eq.s32.totalorder %s92, 0
    %p743 = por %p741, %p742
    %p744 = scmp.ne.s32.totalorder %s732, %s733
    %p745 = scmp.eq.s32.totalorder %s93, 1
    %p746 = por %p744, %p745
    %p748 = scmp.ne.s32.totalorder %s733, %s747
    %p749 = scmp.eq.s32.totalorder %s93, 0
    %p750 = por %p748, %p749
    %s752 = sadd.s32 %s751, 1
    %p755 = scmp.eq.s32.totalorder %s87, 1
    %p756 = scmp.ne.s32.totalorder %s751, %s753
    %p757 = scmp.eq.s32.totalorder %s87, 0
    %p758 = por %p756, %p757
    %p759 = scmp.ne.s32.totalorder %s751, %s753
    %p760 = scmp.eq.s32.totalorder %s92, 1
    %p761 = por %p759, %p760
    %p762 = scmp.ne.s32.totalorder %s753, %s754
    %p763 = scmp.eq.s32.totalorder %s92, 0
    %p764 = por %p762, %p763
    %p765 = scmp.ne.s32.totalorder %s753, %s754
    %p766 = scmp.eq.s32.totalorder %s93, 1
    %p767 = por %p765, %p766
    %p769 = scmp.ne.s32.totalorder %s754, %s768
    %p770 = scmp.eq.s32.totalorder %s93, 0
    %p771 = por %p769, %p770
    %s773 = sadd.s32 %s772, 1
    %p776 = scmp.eq.s32.totalorder %s87, 1
    %p777 = scmp.ne.s32.totalorder %s772, %s774
    %p778 = scmp.eq.s32.totalorder %s87, 0
    %p779 = por %p777, %p778
    %p780 = scmp.ne.s32.totalorder %s772, %s774
    %p781 = scmp.eq.s32.totalorder %s92, 1
    %p782 = por %p780, %p781
    %p783 = scmp.ne.s32.totalorder %s774, %s775
    %p784 = scmp.eq.s32.totalorder %s92, 0
    %p785 = por %p783, %p784
    %p786 = scmp.ne.s32.totalorder %s774, %s775
    %p787 = scmp.eq.s32.totalorder %s93, 1
    %p788 = por %p786, %p787
    %p790 = scmp.ne.s32.totalorder %s775, %s789
    %p791 = scmp.eq.s32.totalorder %s93, 0
    %p792 = por %p790, %p791
    %s794 = sadd.s32 %s793, 1
    %p797 = scmp.eq.s32.totalorder %s87, 1
    %p798 = scmp.ne.s32.totalorder %s793, %s795
    %p799 = scmp.eq.s32.totalorder %s87, 0
    %p800 = por %p798, %p799
    %p801 = scmp.ne.s32.totalorder %s793, %s795
    %p802 = scmp.eq.s32.totalorder %s92, 1
    %p803 = por %p801, %p802
    %p804 = scmp.ne.s32.totalorder %s795, %s796
    %p805 = scmp.eq.s32.totalorder %s92, 0
    %p806 = por %p804, %p805
    %p807 = scmp.ne.s32.totalorder %s795, %s796
    %p808 = scmp.eq.s32.totalorder %s93, 1
    %p809 = por %p807, %p808
    %p811 = scmp.ne.s32.totalorder %s796, %s810
    %p812 = scmp.eq.s32.totalorder %s93, 0
    %p813 = por %p811, %p812
    %s815 = sadd.s32 %s814, 1
    %p818 = scmp.eq.s32.totalorder %s87, 1
    %p819 = scmp.ne.s32.totalorder %s814, %s816
    %p820 = scmp.eq.s32.totalorder %s87, 0
    %p821 = por %p819, %p820
    %p822 = scmp.ne.s32.totalorder %s814, %s816
    %p823 = scmp.eq.s32.totalorder %s92, 1
    %p824 = por %p822, %p823
    %p825 = scmp.ne.s32.totalorder %s816, %s817
    %p826 = scmp.eq.s32.totalorder %s92, 0
    %p827 = por %p825, %p826
    %p828 = scmp.ne.s32.totalorder %s816, %s817
    %p829 = scmp.eq.s32.totalorder %s93, 1
    %p830 = por %p828, %p829
    %p832 = scmp.ne.s32.totalorder %s817, %s831
    %p833 = scmp.eq.s32.totalorder %s93, 0
    %p834 = por %p832, %p833
    %s836 = sadd.s32 %s835, 1
    %p839 = scmp.eq.s32.totalorder %s87, 1
    %p840 = scmp.ne.s32.totalorder %s835, %s837
    %p841 = scmp.eq.s32.totalorder %s87, 0
    %p842 = por %p840, %p841
    %p843 = scmp.ne.s32.totalorder %s835, %s837
    %p844 = scmp.eq.s32.totalorder %s92, 1
    %p845 = por %p843, %p844
    %p846 = scmp.ne.s32.totalorder %s837, %s838
    %p847 = scmp.eq.s32.totalorder %s92, 0
    %p848 = por %p846, %p847
    %p849 = scmp.ne.s32.totalorder %s837, %s838
    %p850 = scmp.eq.s32.totalorder %s93, 1
    %p851 = por %p849, %p850
    %p853 = scmp.ne.s32.totalorder %s838, %s852
    %p854 = scmp.eq.s32.totalorder %s93, 0
    %p855 = por %p853, %p854
    %s857 = sadd.s32 %s856, 1
    %p860 = scmp.eq.s32.totalorder %s87, 1
    %p861 = scmp.ne.s32.totalorder %s856, %s858
    %p862 = scmp.eq.s32.totalorder %s87, 0
    %p863 = por %p861, %p862
    %p864 = scmp.ne.s32.totalorder %s856, %s858
    %p865 = scmp.eq.s32.totalorder %s92, 1
    %p866 = por %p864, %p865
    %p867 = scmp.ne.s32.totalorder %s858, %s859
    %p868 = scmp.eq.s32.totalorder %s92, 0
    %p869 = por %p867, %p868
    %p870 = scmp.ne.s32.totalorder %s858, %s859
    %p871 = scmp.eq.s32.totalorder %s93, 1
    %p872 = por %p870, %p871
    %p874 = scmp.ne.s32.totalorder %s859, %s873
    %p875 = scmp.eq.s32.totalorder %s93, 0
    %p876 = por %p874, %p875
    %s878 = sadd.s32 %s877, 1
    %p881 = scmp.eq.s32.totalorder %s87, 1
    %p882 = scmp.ne.s32.totalorder %s877, %s879
    %p883 = scmp.eq.s32.totalorder %s87, 0
    %p884 = por %p882, %p883
    %p885 = scmp.ne.s32.totalorder %s877, %s879
    %p886 = scmp.eq.s32.totalorder %s92, 1
    %p887 = por %p885, %p886
    %p888 = scmp.ne.s32.totalorder %s879, %s880
    %p889 = scmp.eq.s32.totalorder %s92, 0
    %p890 = por %p888, %p889
    %p891 = scmp.ne.s32.totalorder %s879, %s880
    %p892 = scmp.eq.s32.totalorder %s93, 1
    %p893 = por %p891, %p892
    %p895 = scmp.ne.s32.totalorder %s880, %s894
    %p896 = scmp.eq.s32.totalorder %s93, 0
    %p897 = por %p895, %p896
    %s898 = ssub.s32 %s87, %s94
    %p899 = scmp.eq.s32.totalorder %s898, 0
    %s901 = sadd.s32 %s900, 1
    %s902 = scalar_select %p899, %s900, %s901
    %p905 = pneg %p899
    %p906 = scmp.eq.s32.totalorder %s87, 1
    %p907 = por %p905, %p906
    %p908 = scmp.ne.s32.totalorder %s900, %s903
    %p909 = scmp.eq.s32.totalorder %s87, 0
    %p910 = por %p908, %p909
    %p911 = scmp.ne.s32.totalorder %s900, %s903
    %p912 = scmp.eq.s32.totalorder %s92, 1
    %p913 = por %p911, %p912
    %p914 = scmp.ne.s32.totalorder %s903, %s904
    %p915 = scmp.eq.s32.totalorder %s92, 0
    %p916 = por %p914, %p915
    %p917 = scmp.ne.s32.totalorder %s903, %s904
    %p918 = scmp.eq.s32.totalorder %s93, 1
    %p919 = por %p917, %p918
    %p921 = scmp.ne.s32.totalorder %s904, %s920
    %p922 = scmp.eq.s32.totalorder %s93, 0
    %p923 = por %p921, %p922
    %p924 = scmp.le.s32.totalorder 1, %s87
    %p925 = scmp.lt.s32.totalorder %s87, 3
    %p926 = pnand %p924, %p925
    %p927 = pneg %p926
    // Predicated region
    $region9: #{forward.1} parent=5 // pred_check
      _
    $region10: #{forward.1} parent=5 // pred_check_branch
      %929 = sbr.rel (%p926) target = $region12
    $region11: #{forward.1} parent=5 // pred_region
      %s930 = ssub.s32 %s87, 1
      // Predicated region
      $region13: #{forward.1} parent=11 // pred_check
        %p931 = pneg %p134
      $region14: #{forward.1} parent=11 // pred_check_branch
        %933 = sbr.rel (%p931) target = $region16
      $region15: #{forward.1} parent=11 // pred_region
        _
      $region16: #{forward.1} parent=11 // pred_fallthru
        _
      // Predicated region
      $region17: #{forward.1} parent=11 // pred_check
        %p934 = pneg %p155
      $region18: #{forward.1} parent=11 // pred_check_branch
        %936 = sbr.rel (%p934) target = $region20
      $region19: #{forward.1} parent=11 // pred_region
        _
      $region20: #{forward.1} parent=11 // pred_fallthru
        _
      // Predicated region
      $region21: #{forward.1} parent=11 // pred_check
        %p937 = pneg %p176
      $region22: #{forward.1} parent=11 // pred_check_branch
        %939 = sbr.rel (%p937) target = $region24
      $region23: #{forward.1} parent=11 // pred_region
        _
      $region24: #{forward.1} parent=11 // pred_fallthru
        _
      // Predicated region
      $region25: #{forward.1} parent=11 // pred_check
        %p940 = pneg %p197
      $region26: #{forward.1} parent=11 // pred_check_branch
        %942 = sbr.rel (%p940) target = $region28
      $region27: #{forward.1} parent=11 // pred_region
        _
      $region28: #{forward.1} parent=11 // pred_fallthru
        _
      // Predicated region
      $region29: #{forward.1} parent=11 // pred_check
        %p943 = pneg %p218
      $region30: #{forward.1} parent=11 // pred_check_branch
        %945 = sbr.rel (%p943) target = $region32
      $region31: #{forward.1} parent=11 // pred_region
        _
      $region32: #{forward.1} parent=11 // pred_fallthru
        _
      // Predicated region
      $region33: #{forward.1} parent=11 // pred_check
        %p946 = pneg %p239
      $region34: #{forward.1} parent=11 // pred_check_branch
        %948 = sbr.rel (%p946) target = $region36
      $region35: #{forward.1} parent=11 // pred_region
        _
      $region36: #{forward.1} parent=11 // pred_fallthru
        _
      // Predicated region
      $region37: #{forward.1} parent=11 // pred_check
        %p949 = pneg %p260
      $region38: #{forward.1} parent=11 // pred_check_branch
        %951 = sbr.rel (%p949) target = $region40
      $region39: #{forward.1} parent=11 // pred_region
        _
      $region40: #{forward.1} parent=11 // pred_fallthru
        _
      // Predicated region
      $region41: #{forward.1} parent=11 // pred_check
        %p952 = pneg %p281
      $region42: #{forward.1} parent=11 // pred_check_branch
        %954 = sbr.rel (%p952) target = $region44
      $region43: #{forward.1} parent=11 // pred_region
        _
      $region44: #{forward.1} parent=11 // pred_fallthru
        _
      // Predicated region
      $region45: #{forward.1} parent=11 // pred_check
        %p955 = pneg %p302
      $region46: #{forward.1} parent=11 // pred_check_branch
        %957 = sbr.rel (%p955) target = $region48
      $region47: #{forward.1} parent=11 // pred_region
        _
      $region48: #{forward.1} parent=11 // pred_fallthru
        _
      // Predicated region
      $region49: #{forward.1} parent=11 // pred_check
        %p958 = pneg %p323
      $region50: #{forward.1} parent=11 // pred_check_branch
        %960 = sbr.rel (%p958) target = $region52
      $region51: #{forward.1} parent=11 // pred_region
        _
      $region52: #{forward.1} parent=11 // pred_fallthru
        _
      // Predicated region
      $region53: #{forward.1} parent=11 // pred_check
        %p961 = pneg %p344
      $region54: #{forward.1} parent=11 // pred_check_branch
        %963 = sbr.rel (%p961) target = $region56
      $region55: #{forward.1} parent=11 // pred_region
        _
      $region56: #{forward.1} parent=11 // pred_fallthru
        _
      // Predicated region
      $region57: #{forward.1} parent=11 // pred_check
        %p964 = pneg %p365
      $region58: #{forward.1} parent=11 // pred_check_branch
        %966 = sbr.rel (%p964) target = $region60
      $region59: #{forward.1} parent=11 // pred_region
        _
      $region60: #{forward.1} parent=11 // pred_fallthru
        _
      // Predicated region
      $region61: #{forward.1} parent=11 // pred_check
        %p967 = pneg %p386
      $region62: #{forward.1} parent=11 // pred_check_branch
        %969 = sbr.rel (%p967) target = $region64
      $region63: #{forward.1} parent=11 // pred_region
        _
      $region64: #{forward.1} parent=11 // pred_fallthru
        _
      // Predicated region
      $region65: #{forward.1} parent=11 // pred_check
        %p970 = pneg %p407
      $region66: #{forward.1} parent=11 // pred_check_branch
        %972 = sbr.rel (%p970) target = $region68
      $region67: #{forward.1} parent=11 // pred_region
        _
      $region68: #{forward.1} parent=11 // pred_fallthru
        _
      // Predicated region
      $region69: #{forward.1} parent=11 // pred_check
        %p973 = pneg %p428
      $region70: #{forward.1} parent=11 // pred_check_branch
        %975 = sbr.rel (%p973) target = $region72
      $region71: #{forward.1} parent=11 // pred_region
        _
      $region72: #{forward.1} parent=11 // pred_fallthru
        _
      // Predicated region
      $region73: #{forward.1} parent=11 // pred_check
        %p976 = pneg %p449
      $region74: #{forward.1} parent=11 // pred_check_branch
        %978 = sbr.rel (%p976) target = $region76
      $region75: #{forward.1} parent=11 // pred_region
        _
      $region76: #{forward.1} parent=11 // pred_fallthru
        _
      // Predicated region
      $region77: #{forward.1} parent=11 // pred_check
        %p979 = pneg %p470
      $region78: #{forward.1} parent=11 // pred_check_branch
        %981 = sbr.rel (%p979) target = $region80
      $region79: #{forward.1} parent=11 // pred_region
        _
      $region80: #{forward.1} parent=11 // pred_fallthru
        _
      // Predicated region
      $region81: #{forward.1} parent=11 // pred_check
        %p982 = pneg %p491
      $region82: #{forward.1} parent=11 // pred_check_branch
        %984 = sbr.rel (%p982) target = $region84
      $region83: #{forward.1} parent=11 // pred_region
        _
      $region84: #{forward.1} parent=11 // pred_fallthru
        _
      // Predicated region
      $region85: #{forward.1} parent=11 // pred_check
        %p985 = pneg %p512
      $region86: #{forward.1} parent=11 // pred_check_branch
        %987 = sbr.rel (%p985) target = $region88
      $region87: #{forward.1} parent=11 // pred_region
        _
      $region88: #{forward.1} parent=11 // pred_fallthru
        _
      // Predicated region
      $region89: #{forward.1} parent=11 // pred_check
        %p988 = pneg %p533
      $region90: #{forward.1} parent=11 // pred_check_branch
        %990 = sbr.rel (%p988) target = $region92
      $region91: #{forward.1} parent=11 // pred_region
        _
      $region92: #{forward.1} parent=11 // pred_fallthru
        _
      // Predicated region
      $region93: #{forward.1} parent=11 // pred_check
        %p991 = pneg %p554
      $region94: #{forward.1} parent=11 // pred_check_branch
        %993 = sbr.rel (%p991) target = $region96
      $region95: #{forward.1} parent=11 // pred_region
        _
      $region96: #{forward.1} parent=11 // pred_fallthru
        _
      // Predicated region
      $region97: #{forward.1} parent=11 // pred_check
        %p994 = pneg %p575
      $region98: #{forward.1} parent=11 // pred_check_branch
        %996 = sbr.rel (%p994) target = $region100
      $region99: #{forward.1} parent=11 // pred_region
        _
      $region100: #{forward.1} parent=11 // pred_fallthru
        _
      // Predicated region
      $region101: #{forward.1} parent=11 // pred_check
        %p997 = pneg %p596
      $region102: #{forward.1} parent=11 // pred_check_branch
        %999 = sbr.rel (%p997) target = $region104
      $region103: #{forward.1} parent=11 // pred_region
        _
      $region104: #{forward.1} parent=11 // pred_fallthru
        _
      // Predicated region
      $region105: #{forward.1} parent=11 // pred_check
        %p1000 = pneg %p617
      $region106: #{forward.1} parent=11 // pred_check_branch
        %1002 = sbr.rel (%p1000) target = $region108
      $region107: #{forward.1} parent=11 // pred_region
        _
      $region108: #{forward.1} parent=11 // pred_fallthru
        _
      // Predicated region
      $region109: #{forward.1} parent=11 // pred_check
        %p1003 = pneg %p638
      $region110: #{forward.1} parent=11 // pred_check_branch
        %1005 = sbr.rel (%p1003) target = $region112
      $region111: #{forward.1} parent=11 // pred_region
        _
      $region112: #{forward.1} parent=11 // pred_fallthru
        _
      // Predicated region
      $region113: #{forward.1} parent=11 // pred_check
        %p1006 = pneg %p659
      $region114: #{forward.1} parent=11 // pred_check_branch
        %1008 = sbr.rel (%p1006) target = $region116
      $region115: #{forward.1} parent=11 // pred_region
        _
      $region116: #{forward.1} parent=11 // pred_fallthru
        _
      // Predicated region
      $region117: #{forward.1} parent=11 // pred_check
        %p1009 = pneg %p680
      $region118: #{forward.1} parent=11 // pred_check_branch
        %1011 = sbr.rel (%p1009) target = $region120
      $region119: #{forward.1} parent=11 // pred_region
        _
      $region120: #{forward.1} parent=11 // pred_fallthru
        _
      // Predicated region
      $region121: #{forward.1} parent=11 // pred_check
        %p1012 = pneg %p701
      $region122: #{forward.1} parent=11 // pred_check_branch
        %1014 = sbr.rel (%p1012) target = $region124
      $region123: #{forward.1} parent=11 // pred_region
        _
      $region124: #{forward.1} parent=11 // pred_fallthru
        _
      // Predicated region
      $region125: #{forward.1} parent=11 // pred_check
        %p1015 = pneg %p722
      $region126: #{forward.1} parent=11 // pred_check_branch
        %1017 = sbr.rel (%p1015) target = $region128
      $region127: #{forward.1} parent=11 // pred_region
        _
      $region128: #{forward.1} parent=11 // pred_fallthru
        _
      // Predicated region
      $region129: #{forward.1} parent=11 // pred_check
        %p1018 = pneg %p743
      $region130: #{forward.1} parent=11 // pred_check_branch
        %1020 = sbr.rel (%p1018) target = $region132
      $region131: #{forward.1} parent=11 // pred_region
        _
      $region132: #{forward.1} parent=11 // pred_fallthru
        _
      // Predicated region
      $region133: #{forward.1} parent=11 // pred_check
        %p1021 = pneg %p764
      $region134: #{forward.1} parent=11 // pred_check_branch
        %1023 = sbr.rel (%p1021) target = $region136
      $region135: #{forward.1} parent=11 // pred_region
        _
      $region136: #{forward.1} parent=11 // pred_fallthru
        _
      // Predicated region
      $region137: #{forward.1} parent=11 // pred_check
        %p1024 = pneg %p785
      $region138: #{forward.1} parent=11 // pred_check_branch
        %1026 = sbr.rel (%p1024) target = $region140
      $region139: #{forward.1} parent=11 // pred_region
        _
      $region140: #{forward.1} parent=11 // pred_fallthru
        _
      // Predicated region
      $region141: #{forward.1} parent=11 // pred_check
        %p1027 = pneg %p806
      $region142: #{forward.1} parent=11 // pred_check_branch
        %1029 = sbr.rel (%p1027) target = $region144
      $region143: #{forward.1} parent=11 // pred_region
        _
      $region144: #{forward.1} parent=11 // pred_fallthru
        _
      // Predicated region
      $region145: #{forward.1} parent=11 // pred_check
        %p1030 = pneg %p827
      $region146: #{forward.1} parent=11 // pred_check_branch
        %1032 = sbr.rel (%p1030) target = $region148
      $region147: #{forward.1} parent=11 // pred_region
        _
      $region148: #{forward.1} parent=11 // pred_fallthru
        _
      // Predicated region
      $region149: #{forward.1} parent=11 // pred_check
        %p1033 = pneg %p848
      $region150: #{forward.1} parent=11 // pred_check_branch
        %1035 = sbr.rel (%p1033) target = $region152
      $region151: #{forward.1} parent=11 // pred_region
        _
      $region152: #{forward.1} parent=11 // pred_fallthru
        _
      // Predicated region
      $region153: #{forward.1} parent=11 // pred_check
        %p1036 = pneg %p869
      $region154: #{forward.1} parent=11 // pred_check_branch
        %1038 = sbr.rel (%p1036) target = $region156
      $region155: #{forward.1} parent=11 // pred_region
        _
      $region156: #{forward.1} parent=11 // pred_fallthru
        _
      // Predicated region
      $region157: #{forward.1} parent=11 // pred_check
        %p1039 = pneg %p890
      $region158: #{forward.1} parent=11 // pred_check_branch
        %1041 = sbr.rel (%p1039) target = $region160
      $region159: #{forward.1} parent=11 // pred_region
        _
      $region160: #{forward.1} parent=11 // pred_fallthru
        _
    $region12: #{forward.1} parent=5 // pred_fallthru
      _
    %p1042 = scmp.lt.s32.totalorder %s87, 2
    // Predicated region
    $region161: #{forward.1} parent=5 // pred_check
      %p1043 = pneg %p1042
    $region162: #{forward.1} parent=5 // pred_check_branch
      %1045 = sbr.rel (%p1043) target = $region164
    $region163: #{forward.1} parent=5 // pred_region
      // Predicated region
      $region165: #{forward.1} parent=163 // pred_check
        %p1046 = pneg %p107
      $region166: #{forward.1} parent=163 // pred_check_branch
        %1048 = sbr.rel (%p1046) target = $region168
      $region167: #{forward.1} parent=163 // pred_region
        %p1049 = scmp.lt.s32.totalorder %s87, 1
        %s1050 = scalar_select %p1049, %s87, 1
        %s1051 = smul.addr %s1050, 20
        %s1052 = smul.addr %s1051, 4
        %s1053 = scalar_lea.vmem %s1, %s1052
      $region168: #{forward.1} parent=163 // pred_fallthru
        _
    $region164: #{forward.1} parent=5 // pred_fallthru
      _
    %p1054 = scmp.le.s32.totalorder 1, %s87
    %p1055 = scmp.lt.s32.totalorder %s87, 3
    %p1056 = pnand %p1054, %p1055
    %p1057 = pneg %p1056
    // Predicated region
    $region169: #{forward.1} parent=5 // pred_check
      _
    $region170: #{forward.1} parent=5 // pred_check_branch
      %1059 = sbr.rel (%p1056) target = $region172
    $region171: #{forward.1} parent=5 // pred_region
      %s1060 = ssub.s32 %s87, 1
      %p1061 = scmp.lt.s32.totalorder %s92, 1
      %s1062 = scalar_select %p1061, %s92, 1
      %s1063 = smul.addr %s1062, 20
      %s1064 = smul.addr %s1063, 4
      %s1065 = scalar_lea.vmem %s1, %s1064
      %p1066 = pneg %p113
      %p1067 = pneg %p110
      %p1068 = pneg %p134
      %p1069 = pneg %p131
      %p1070 = pneg %p155
      %p1071 = pneg %p152
      %p1072 = pneg %p176
      %p1073 = pneg %p173
      %p1074 = pneg %p197
      %p1075 = pneg %p194
      %p1076 = pneg %p218
      %p1077 = pneg %p215
      %p1078 = pneg %p239
      %p1079 = pneg %p236
      %p1080 = pneg %p260
      %p1081 = pneg %p257
      %p1082 = pneg %p281
      %p1083 = pneg %p278
      %p1084 = pneg %p302
      %p1085 = pneg %p299
      %p1086 = pneg %p323
      %p1087 = pneg %p320
      %p1088 = pneg %p344
      %p1089 = pneg %p341
      %p1090 = pneg %p365
      %p1091 = pneg %p362
      %p1092 = pneg %p386
      %p1093 = pneg %p383
      %p1094 = pneg %p407
      %p1095 = pneg %p404
      %p1096 = pneg %p428
      %p1097 = pneg %p425
      %p1098 = pneg %p449
      %p1099 = pneg %p446
      %p1100 = pneg %p470
      %p1101 = pneg %p467
      %p1102 = pneg %p491
      %p1103 = pneg %p488
      %p1104 = pneg %p512
      %p1105 = pneg %p509
      %p1106 = pneg %p533
      %p1107 = pneg %p530
      %p1108 = pneg %p554
      %p1109 = pneg %p551
      %p1110 = pneg %p575
      %p1111 = pneg %p572
      %p1112 = pneg %p596
      %p1113 = pneg %p593
      %p1114 = pneg %p617
      %p1115 = pneg %p614
      %p1116 = pneg %p638
      %p1117 = pneg %p635
      %p1118 = pneg %p659
      %p1119 = pneg %p656
      %p1120 = pneg %p680
      %p1121 = pneg %p677
      %p1122 = pneg %p701
      %p1123 = pneg %p698
      %p1124 = pneg %p722
      %p1125 = pneg %p719
      %p1126 = pneg %p743
      %p1127 = pneg %p740
      %p1128 = pneg %p764
      %p1129 = pneg %p761
      %p1130 = pneg %p785
      %p1131 = pneg %p782
      %p1132 = pneg %p806
      %p1133 = pneg %p803
      %p1134 = pneg %p827
      %p1135 = pneg %p824
      %p1136 = pneg %p848
      %p1137 = pneg %p845
      %p1138 = pneg %p869
      %p1139 = pneg %p866
      %p1140 = pneg %p890
      %p1141 = pneg %p887
      %p1142 = pneg %p916
      %p1143 = pneg %p913
      %p1144 = scmp.lt.s32.totalorder %s92, 1
      %s1145 = scalar_select %p1144, %s92, 1
      %s1146 = scalar_lea.vmem %s77, %s1145
      %p1147 = scmp.lt.s32.totalorder %s92, 1
      %s1148 = scalar_select %p1147, %s92, 1
      %s1149 = smul.addr %s1148, 20
      %s1150 = smul.addr %s1149, 4
      %s1151 = scalar_lea.vmem %s1, %s1150
      %p1152 = scmp.lt.s32.totalorder %s92, 1
      %s1153 = scalar_select %p1152, %s92, 1
      %s1154 = scalar_lea.vmem %s77, %s1153
      %v1156 = vld [vmem:[%s3] sm:$0xff]
      %v1157 = vld [vmem:[%s3 + $0x8] sm:$0xff]
      %v1158 = vld [vmem:[%s3 + $0x10] sm:$0xff]
      %v1159 = vld [vmem:[%s3 + $0x18] sm:$0xff]
      %v1160 = vld [vmem:[%s3 + $0x20] sm:$0xff]
      %v1161 = vld [vmem:[%s3 + $0x28] sm:$0xff]
      %v1162 = vld [vmem:[%s3 + $0x30] sm:$0xff]
      %v1163 = vld [vmem:[%s3 + $0x38] sm:$0xff]
      %v1164 = vld [vmem:[%s3 + $0x40] sm:$0xff]
      %v1165 = vld [vmem:[%s3 + $0x48] sm:$0xff]
      %v1166 = vld [vmem:[%s3 + $0x50] sm:$0xff]
      %v1167 = vld [vmem:[%s3 + $0x58] sm:$0xff]
      %v1168 = vld [vmem:[%s3 + $0x60] sm:$0xff]
      %v1169 = vld [vmem:[%s3 + $0x68] sm:$0xff]
      %v1170 = vld [vmem:[%s3 + $0x70] sm:$0xff]
      %v1171 = vld [vmem:[%s3 + $0x78] sm:$0xff]
      %v1172 = vld [vmem:[%s3 + $0x80] sm:$0xff]
      %v1173 = vld [vmem:[%s3 + $0x88] sm:$0xff]
      %v1174 = vld [vmem:[%s3 + $0x90] sm:$0xff]
      %v1175 = vld [vmem:[%s3 + $0x98] sm:$0xff]
      %1176 = vst [vmem:[#allocation2] sm:$0xff] 0.0
      %1177 = vst [vmem:[#allocation2 + $0x8] sm:$0xff] 0.0
      %1178 = vst [vmem:[#allocation2 + $0x10] sm:$0xff] 0.0
      %1179 = vst [vmem:[#allocation2 + $0x18] sm:$0xff] 0.0
      %1180 = vst [vmem:[#allocation2 + $0xc0] sm:$0xff] 0.0
      %1181 = vst [vmem:[#allocation2 + $0xc8] sm:$0xff] 0.0
      %1182 = vst [vmem:[#allocation2 + $0xd0] sm:$0xff] 0.0
      %1183 = vst [vmem:[#allocation2 + $0xd8] sm:$0xff] 0.0
      %1184 = vst [vmem:[#allocation3] sm:$0xff] 0
      %1185 = vst [vmem:[#allocation3 + $0x8] sm:$0xff] 0
      %1186 = vst [vmem:[#allocation3 + $0x60] sm:$0xff] 0
      %1187 = vst [vmem:[#allocation3 + $0x68] sm:$0xff] 0
      %v1188 = vld [vmem:[%s1151] sm:$0xf]
      %v1189 = vld [vmem:[%s1151 + $0x4] sm:$0xf]
      %v1190 = vld [vmem:[%s1151 + $0x8] sm:$0xf]
      %v1191 = vld [vmem:[%s1151 + $0xc] sm:$0xf]
      %v1192 = vld [vmem:[%s1151 + $0x10] sm:$0xf]
      %v1193 = vld [vmem:[%s1151 + $0x14] sm:$0xf]
      %v1194 = vld [vmem:[%s1151 + $0x18] sm:$0xf]
      %v1195 = vld [vmem:[%s1151 + $0x1c] sm:$0xf]
      %v1196 = vld [vmem:[%s1151 + $0x20] sm:$0xf]
      %v1197 = vld [vmem:[%s1151 + $0x24] sm:$0xf]
      %v1198 = vld [vmem:[%s1151 + $0x28] sm:$0xf]
      %v1199 = vld [vmem:[%s1151 + $0x2c] sm:$0xf]
      %v1200 = vld [vmem:[%s1151 + $0x30] sm:$0xf]
      %v1201 = vld [vmem:[%s1151 + $0x34] sm:$0xf]
      %v1202 = vld [vmem:[%s1151 + $0x38] sm:$0xf]
      %v1203 = vld [vmem:[%s1151 + $0x3c] sm:$0xf]
      %v1204 = vld [vmem:[%s1151 + $0x40] sm:$0xf]
      %v1205 = vld [vmem:[%s1151 + $0x44] sm:$0xf]
      %v1206 = vld [vmem:[%s1151 + $0x48] sm:$0xf]
      %v1207 = vld [vmem:[%s1151 + $0x4c] sm:$0xf]
      %v1208 = vld [vmem:[%s5] sm:$0xf]
      %v1209 = vld [vmem:[%s5 + $0x4] sm:$0xf]
      %v1210 = vld [vmem:[%s5 + $0x8] sm:$0xf]
      %v1211 = vld [vmem:[%s5 + $0xc] sm:$0xf]
      %v1212 = vld [vmem:[%s5 + $0x10] sm:$0xf]
      %v1213 = vld [vmem:[%s5 + $0x14] sm:$0xf]
      %v1214 = vld [vmem:[%s5 + $0x18] sm:$0xf]
      %v1215 = vld [vmem:[%s5 + $0x1c] sm:$0xf]
      %v1216 = vld [vmem:[%s5 + $0x20] sm:$0xf]
      %v1217 = vld [vmem:[%s5 + $0x24] sm:$0xf]
      %v1218 = vld [vmem:[%s5 + $0x28] sm:$0xf]
      %v1219 = vld [vmem:[%s5 + $0x2c] sm:$0xf]
      %v1220 = vld [vmem:[%s5 + $0x30] sm:$0xf]
      %v1221 = vld [vmem:[%s5 + $0x34] sm:$0xf]
      %v1222 = vld [vmem:[%s5 + $0x38] sm:$0xf]
      %v1223 = vld [vmem:[%s5 + $0x3c] sm:$0xf]
      %v1244 = vunpack.c.l.b16 %v1188
      %v1245 = vunpack.c.l.b16 %v1189
      %v1246 = vunpack.c.l.b16 %v1190
      %v1247 = vunpack.c.l.b16 %v1191
      %v1248 = vunpack.c.l.b16 %v1192
      %v1249 = vunpack.c.l.b16 %v1193
      %v1250 = vunpack.c.l.b16 %v1194
      %v1251 = vunpack.c.l.b16 %v1195
      %v1252 = vunpack.c.l.b16 %v1196
      %v1253 = vunpack.c.l.b16 %v1197
      %v1254 = vunpack.c.l.b16 %v1198
      %v1255 = vunpack.c.l.b16 %v1199
      %v1256 = vunpack.c.l.b16 %v1200
      %v1257 = vunpack.c.l.b16 %v1201
      %v1258 = vunpack.c.l.b16 %v1202
      %v1259 = vunpack.c.l.b16 %v1203
      %v1260 = vunpack.c.l.b16 %v1204
      %v1261 = vunpack.c.l.b16 %v1205
      %v1262 = vunpack.c.l.b16 %v1206
      %v1263 = vunpack.c.l.b16 %v1207
      %v1264 = vpack.c.b16 %v1245, %v1244
      %v1265 = vpack.c.b16 %v1247, %v1246
      %v1266 = vpack.c.b16 %v1249, %v1248
      %v1267 = vpack.c.b16 %v1251, %v1250
      %v1268 = vpack.c.b16 %v1253, %v1252
      %v1269 = vpack.c.b16 %v1255, %v1254
      %v1270 = vpack.c.b16 %v1257, %v1256
      %v1271 = vpack.c.b16 %v1259, %v1258
      %v1272 = vpack.c.b16 %v1261, %v1260
      %v1273 = vpack.c.b16 %v1263, %v1262
      %v1300 = vunpack.c.l.b16 %v1208
      %v1301 = vunpack.c.l.b16 %v1209
      %v1302 = vunpack.c.l.b16 %v1210
      %v1303 = vunpack.c.l.b16 %v1211
      %v1304 = vunpack.c.l.b16 %v1212
      %v1305 = vunpack.c.l.b16 %v1213
      %v1306 = vunpack.c.l.b16 %v1214
      %v1307 = vunpack.c.l.b16 %v1215
      %v1308 = vunpack.c.l.b16 %v1216
      %v1309 = vunpack.c.l.b16 %v1217
      %v1310 = vunpack.c.l.b16 %v1218
      %v1311 = vunpack.c.l.b16 %v1219
      %v1312 = vunpack.c.l.b16 %v1220
      %v1313 = vunpack.c.l.b16 %v1221
      %v1314 = vunpack.c.l.b16 %v1222
      %v1315 = vunpack.c.l.b16 %v1223
      %v1316 = vpack.c.b16 %v1301, %v1300
      %v1317 = vpack.c.b16 %v1303, %v1302
      %v1318 = vpack.c.b16 %v1305, %v1304
      %v1319 = vpack.c.b16 %v1307, %v1306
      %v1320 = vpack.c.b16 %v1309, %v1308
      %v1321 = vpack.c.b16 %v1311, %v1310
      %v1322 = vpack.c.b16 %v1313, %v1312
      %v1323 = vpack.c.b16 %v1315, %v1314
      %1332 = vmatprep.subr.bf16.mxu0 0
      %1333 = vmatpush1.bf16.msra.mxu0 %v1316
      %1334 = vmatprep.subr.bf16.mxu0 0
      %1335 = vmatpush1.bf16.msra.mxu0 %v1317
      %1336 = vmatprep.subr.bf16.mxu0 0
      %1337 = vmatpush1.bf16.msra.mxu0 %v1318
      %1338 = vmatprep.subr.bf16.mxu0 0
      %1339 = vmatpush1.bf16.msra.mxu0 %v1319
      %1340 = vmatprep.subr.bf16.mxu0 0
      %1341 = vmatpush1.bf16.msra.mxu0 %v1320
      %1342 = vmatprep.subr.bf16.mxu0 0
      %1343 = vmatpush1.bf16.msra.mxu0 %v1321
      %1344 = vmatprep.subr.bf16.mxu0 0
      %1345 = vmatpush1.bf16.msra.mxu0 %v1322
      %1346 = vmatprep.subr.bf16.mxu0 0
      %1347 = vmatpush1.bf16.msra.mxu0 %v1323
      %1348 = vmatprep.subr.bf16.mxu0 0
      %1349 = vmatpush1.bf16.msra.mxu0 0
      %1350 = vmatprep.subr.bf16.mxu0 0
      %1351 = vmatpush1.bf16.msra.mxu0 0
      %1352 = vmatprep.subr.bf16.mxu0 0
      %1353 = vmatpush1.bf16.msra.mxu0 0
      %1354 = vmatprep.subr.bf16.mxu0 0
      %1355 = vmatpush1.bf16.msra.mxu0 0
      %1356 = vmatprep.subr.bf16.mxu0 0
      %1357 = vmatpush1.bf16.msra.mxu0 0
      %1358 = vmatprep.subr.bf16.mxu0 0
      %1359 = vmatpush1.bf16.msra.mxu0 0
      %1360 = vmatprep.subr.bf16.mxu0 0
      %1361 = vmatpush1.bf16.msra.mxu0 0
      %1362 = vmatprep.subr.bf16.mxu0 0
      %1363 = vmatpush1.bf16.msra.mxu0 0
      %1364 = vmatprep.mubr.bf16.mxu0 0
      %1365 = vmatmul.mubr.bf16.gmra.mrb[0].mxu0 %v1264
      %v1366 = vpop.f32.mrb[0].mxu0
      %v1367 = vadd.f32 0.0, %v1366
      %v1368 = vpop.f32.mrb[0].mxu0
      %v1369 = vpop.f32.mrb[0].mxu0
      %v1370 = vadd.f32 0.0, %v1369
      %v1371 = vpop.f32.mrb[0].mxu0
      %1372 = vmatprep.mubr.bf16.mxu0 0
      %1373 = vmatmul.mubr.bf16.gmra.mrb[0].mxu0 %v1265
      %v1374 = vpop.f32.mrb[0].mxu0
      %v1375 = vadd.f32 0.0, %v1374
      %v1376 = vpop.f32.mrb[0].mxu0
      %v1377 = vpop.f32.mrb[0].mxu0
      %v1378 = vadd.f32 0.0, %v1377
      %v1379 = vpop.f32.mrb[0].mxu0
      %1380 = vmatprep.mubr.bf16.mxu0 0
      %1381 = vmatmul.mubr.bf16.gmra.mrb[0].mxu0 %v1266
      %v1382 = vpop.f32.mrb[0].mxu0
      %v1383 = vadd.f32 0.0, %v1382
      %v1384 = vpop.f32.mrb[0].mxu0
      %v1385 = vpop.f32.mrb[0].mxu0
      %v1386 = vadd.f32 0.0, %v1385
      %v1387 = vpop.f32.mrb[0].mxu0
      %1388 = vmatprep.mubr.bf16.mxu0 0
      %1389 = vmatmul.mubr.bf16.gmra.mrb[0].mxu0 %v1267
      %v1390 = vpop.f32.mrb[0].mxu0
      %v1391 = vadd.f32 0.0, %v1390
      %v1392 = vpop.f32.mrb[0].mxu0
      %v1393 = vpop.f32.mrb[0].mxu0
      %v1394 = vadd.f32 0.0, %v1393
      %v1395 = vpop.f32.mrb[0].mxu0
      %1396 = vmatprep.mubr.bf16.mxu0 0
      %1397 = vmatmul.mubr.bf16.gmra.mrb[0].mxu0 %v1268
      %v1398 = vpop.f32.mrb[0].mxu0
      %v1399 = vadd.f32 0.0, %v1398
      %v1400 = vpop.f32.mrb[0].mxu0
      %v1401 = vpop.f32.mrb[0].mxu0
      %v1402 = vadd.f32 0.0, %v1401
      %v1403 = vpop.f32.mrb[0].mxu0
      %1404 = vmatprep.mubr.bf16.mxu0 0
      %1405 = vmatmul.mubr.bf16.gmra.mrb[0].mxu0 %v1269
      %v1406 = vpop.f32.mrb[0].mxu0
      %v1407 = vadd.f32 0.0, %v1406
      %v1408 = vpop.f32.mrb[0].mxu0
      %v1409 = vpop.f32.mrb[0].mxu0
      %v1410 = vadd.f32 0.0, %v1409
      %v1411 = vpop.f32.mrb[0].mxu0
      %1412 = vmatprep.mubr.bf16.mxu0 0
      %1413 = vmatmul.mubr.bf16.gmra.mrb[0].mxu0 %v1270
      %v1414 = vpop.f32.mrb[0].mxu0
      %v1415 = vadd.f32 0.0, %v1414
      %v1416 = vpop.f32.mrb[0].mxu0
      %v1417 = vpop.f32.mrb[0].mxu0
      %v1418 = vadd.f32 0.0, %v1417
      %v1419 = vpop.f32.mrb[0].mxu0
      %1420 = vmatprep.mubr.bf16.mxu0 0
      %1421 = vmatmul.mubr.bf16.gmra.mrb[0].mxu0 %v1271
      %v1422 = vpop.f32.mrb[0].mxu0
      %v1423 = vadd.f32 0.0, %v1422
      %v1424 = vpop.f32.mrb[0].mxu0
      %v1425 = vpop.f32.mrb[0].mxu0
      %v1426 = vadd.f32 0.0, %v1425
      %v1427 = vpop.f32.mrb[0].mxu0
      %1428 = vmatprep.mubr.bf16.mxu0 0
      %1429 = vmatmul.mubr.bf16.gmra.mrb[0].mxu0 %v1272
      %v1430 = vpop.f32.mrb[0].mxu0
      %v1431 = vadd.f32 0.0, %v1430
      %v1432 = vpop.f32.mrb[0].mxu0
      %v1433 = vpop.f32.mrb[0].mxu0
      %v1434 = vadd.f32 0.0, %v1433
      %v1435 = vpop.f32.mrb[0].mxu0
      %1436 = vmatprep.mubr.bf16.mxu0 0
      %1437 = vmatmul.mubr.bf16.gmra.mrb[0].mxu0 %v1273
      %v1438 = vpop.f32.mrb[0].mxu0
      %v1439 = vadd.f32 0.0, %v1438
      %v1440 = vpop.f32.mrb[0].mxu0
      %v1441 = vpop.f32.mrb[0].mxu0
      %v1442 = vadd.f32 0.0, %v1441
      %v1443 = vpop.f32.mrb[0].mxu0
      %1444 = vdwg.mxu0
      %v1445 = vld [vmem:[%s7] sm:$0x1]
      %v1447 = vlaneseq
      %v1448 = vshrl.u32 %v1447, 7
      %v1449 = vsub.s32 0, %v1448
      %v1450 = vrot.slane %v1445, %v1449
      %v1452 = vmul.f32 %v1367, %v1450
      %v1453 = vmul.f32 %v1370, %v1450
      %v1454 = vmul.f32 %v1375, %v1450
      %v1455 = vmul.f32 %v1378, %v1450
      %v1456 = vmul.f32 %v1383, %v1450
      %v1457 = vmul.f32 %v1386, %v1450
      %v1458 = vmul.f32 %v1391, %v1450
      %v1459 = vmul.f32 %v1394, %v1450
      %v1460 = vmul.f32 %v1399, %v1450
      %v1461 = vmul.f32 %v1402, %v1450
      %v1462 = vmul.f32 %v1407, %v1450
      %v1463 = vmul.f32 %v1410, %v1450
      %v1464 = vmul.f32 %v1415, %v1450
      %v1465 = vmul.f32 %v1418, %v1450
      %v1466 = vmul.f32 %v1423, %v1450
      %v1467 = vmul.f32 %v1426, %v1450
      %v1468 = vmul.f32 %v1431, %v1450
      %v1469 = vmul.f32 %v1434, %v1450
      %v1470 = vmul.f32 %v1439, %v1450
      %v1471 = vmul.f32 %v1442, %v1450
      %v1472 = vld [vmem:[%s9] sm:$0x1]
      %v1474 = vlaneseq
      %v1475 = vshrl.u32 %v1474, 7
      %v1476 = vsub.s32 0, %v1475
      %v1477 = vrot.slane %v1472, %v1476
      %v1479 = vadd.f32 %v1452, %v1477
      %v1480 = vadd.f32 %v1453, %v1477
      %v1481 = vadd.f32 %v1454, %v1477
      %v1482 = vadd.f32 %v1455, %v1477
      %v1483 = vadd.f32 %v1456, %v1477
      %v1484 = vadd.f32 %v1457, %v1477
      %v1485 = vadd.f32 %v1458, %v1477
      %v1486 = vadd.f32 %v1459, %v1477
      %v1487 = vadd.f32 %v1460, %v1477
      %v1488 = vadd.f32 %v1461, %v1477
      %v1489 = vadd.f32 %v1462, %v1477
      %v1490 = vadd.f32 %v1463, %v1477
      %v1491 = vadd.f32 %v1464, %v1477
      %v1492 = vadd.f32 %v1465, %v1477
      %v1493 = vadd.f32 %v1466, %v1477
      %v1494 = vadd.f32 %v1467, %v1477
      %v1495 = vadd.f32 %v1468, %v1477
      %v1496 = vadd.f32 %v1469, %v1477
      %v1497 = vadd.f32 %v1470, %v1477
      %v1498 = vadd.f32 %v1471, %v1477
      %v1499 = vxor.u32 %v1479, 2147483648
      %v1500 = vxor.u32 %v1480, 2147483648
      %v1501 = vxor.u32 %v1481, 2147483648
      %v1502 = vxor.u32 %v1482, 2147483648
      %v1503 = vxor.u32 %v1483, 2147483648
      %v1504 = vxor.u32 %v1484, 2147483648
      %v1505 = vxor.u32 %v1485, 2147483648
      %v1506 = vxor.u32 %v1486, 2147483648
      %v1507 = vxor.u32 %v1487, 2147483648
      %v1508 = vxor.u32 %v1488, 2147483648
      %v1509 = vxor.u32 %v1489, 2147483648
      %v1510 = vxor.u32 %v1490, 2147483648
      %v1511 = vxor.u32 %v1491, 2147483648
      %v1512 = vxor.u32 %v1492, 2147483648
      %v1513 = vxor.u32 %v1493, 2147483648
      %v1514 = vxor.u32 %v1494, 2147483648
      %v1515 = vxor.u32 %v1495, 2147483648
      %v1516 = vxor.u32 %v1496, 2147483648
      %v1517 = vxor.u32 %v1497, 2147483648
      %v1518 = vxor.u32 %v1498, 2147483648
      %v1519 = vmul.f32 %v1499, 1.442695
      %v1520 = vpow.pop %v1519
      %v1521 = vmul.f32 %v1500, 1.442695
      %v1522 = vpow.pop %v1521
      %v1523 = vmul.f32 %v1501, 1.442695
      %v1524 = vpow.pop %v1523
      %v1525 = vmul.f32 %v1502, 1.442695
      %v1526 = vpow.pop %v1525
      %v1527 = vmul.f32 %v1503, 1.442695
      %v1528 = vpow.pop %v1527
      %v1529 = vmul.f32 %v1504, 1.442695
      %v1530 = vpow.pop %v1529
      %v1531 = vmul.f32 %v1505, 1.442695
      %v1532 = vpow.pop %v1531
      %v1533 = vmul.f32 %v1506, 1.442695
      %v1534 = vpow.pop %v1533
      %v1535 = vmul.f32 %v1507, 1.442695
      %v1536 = vpow.pop %v1535
      %v1537 = vmul.f32 %v1508, 1.442695
      %v1538 = vpow.pop %v1537
      %v1539 = vmul.f32 %v1509, 1.442695
      %v1540 = vpow.pop %v1539
      %v1541 = vmul.f32 %v1510, 1.442695
      %v1542 = vpow.pop %v1541
      %v1543 = vmul.f32 %v1511, 1.442695
      %v1544 = vpow.pop %v1543
      %v1545 = vmul.f32 %v1512, 1.442695
      %v1546 = vpow.pop %v1545
      %v1547 = vmul.f32 %v1513, 1.442695
      %v1548 = vpow.pop %v1547
      %v1549 = vmul.f32 %v1514, 1.442695
      %v1550 = vpow.pop %v1549
      %v1551 = vmul.f32 %v1515, 1.442695
      %v1552 = vpow.pop %v1551
      %v1553 = vmul.f32 %v1516, 1.442695
      %v1554 = vpow.pop %v1553
      %v1555 = vmul.f32 %v1517, 1.442695
      %v1556 = vpow.pop %v1555
      %v1557 = vmul.f32 %v1518, 1.442695
      %v1558 = vpow.pop %v1557
      %v1559 = vadd.f32 %v1520, 1.0
      %v1560 = vadd.f32 %v1522, 1.0
      %v1561 = vadd.f32 %v1524, 1.0
      %v1562 = vadd.f32 %v1526, 1.0
      %v1563 = vadd.f32 %v1528, 1.0
      %v1564 = vadd.f32 %v1530, 1.0
      %v1565 = vadd.f32 %v1532, 1.0
      %v1566 = vadd.f32 %v1534, 1.0
      %v1567 = vadd.f32 %v1536, 1.0
      %v1568 = vadd.f32 %v1538, 1.0
      %v1569 = vadd.f32 %v1540, 1.0
      %v1570 = vadd.f32 %v1542, 1.0
      %v1571 = vadd.f32 %v1544, 1.0
      %v1572 = vadd.f32 %v1546, 1.0
      %v1573 = vadd.f32 %v1548, 1.0
      %v1574 = vadd.f32 %v1550, 1.0
      %v1575 = vadd.f32 %v1552, 1.0
      %v1576 = vadd.f32 %v1554, 1.0
      %v1577 = vadd.f32 %v1556, 1.0
      %v1578 = vadd.f32 %v1558, 1.0
      %v1579 = vrcp.pop %v1559
      %v1580 = vmul.f32 1.0, %v1579
      %v1581 = vrcp.pop %v1560
      %v1582 = vmul.f32 1.0, %v1581
      %v1583 = vrcp.pop %v1561
      %v1584 = vmul.f32 1.0, %v1583
      %v1585 = vrcp.pop %v1562
      %v1586 = vmul.f32 1.0, %v1585
      %v1587 = vrcp.pop %v1563
      %v1588 = vmul.f32 1.0, %v1587
      %v1589 = vrcp.pop %v1564
      %v1590 = vmul.f32 1.0, %v1589
      %v1591 = vrcp.pop %v1565
      %v1592 = vmul.f32 1.0, %v1591
      %v1593 = vrcp.pop %v1566
      %v1594 = vmul.f32 1.0, %v1593
      %v1595 = vrcp.pop %v1567
      %v1596 = vmul.f32 1.0, %v1595
      %v1597 = vrcp.pop %v1568
      %v1598 = vmul.f32 1.0, %v1597
      %v1599 = vrcp.pop %v1569
      %v1600 = vmul.f32 1.0, %v1599
      %v1601 = vrcp.pop %v1570
      %v1602 = vmul.f32 1.0, %v1601
      %v1603 = vrcp.pop %v1571
      %v1604 = vmul.f32 1.0, %v1603
      %v1605 = vrcp.pop %v1572
      %v1606 = vmul.f32 1.0, %v1605
      %v1607 = vrcp.pop %v1573
      %v1608 = vmul.f32 1.0, %v1607
      %v1609 = vrcp.pop %v1574
      %v1610 = vmul.f32 1.0, %v1609
      %v1611 = vrcp.pop %v1575
      %v1612 = vmul.f32 1.0, %v1611
      %v1613 = vrcp.pop %v1576
      %v1614 = vmul.f32 1.0, %v1613
      %v1615 = vrcp.pop %v1577
      %v1616 = vmul.f32 1.0, %v1615
      %v1617 = vrcp.pop %v1578
      %v1618 = vmul.f32 1.0, %v1617
      %v1619 = vmul.f32 %v1479, %v1580
      %v1620 = vmul.f32 %v1480, %v1582
      %v1621 = vmul.f32 %v1481, %v1584
      %v1622 = vmul.f32 %v1482, %v1586
      %v1623 = vmul.f32 %v1483, %v1588
      %v1624 = vmul.f32 %v1484, %v1590
      %v1625 = vmul.f32 %v1485, %v1592
      %v1626 = vmul.f32 %v1486, %v1594
      %v1627 = vmul.f32 %v1487, %v1596
      %v1628 = vmul.f32 %v1488, %v1598
      %v1629 = vmul.f32 %v1489, %v1600
      %v1630 = vmul.f32 %v1490, %v1602
      %v1631 = vmul.f32 %v1491, %v1604
      %v1632 = vmul.f32 %v1492, %v1606
      %v1633 = vmul.f32 %v1493, %v1608
      %v1634 = vmul.f32 %v1494, %v1610
      %v1635 = vmul.f32 %v1495, %v1612
      %v1636 = vmul.f32 %v1496, %v1614
      %v1637 = vmul.f32 %v1497, %v1616
      %v1638 = vmul.f32 %v1498, %v1618
      %1640 = vset.pattern.permute.xlu0 0
      %1641 = vperm.xlu0 %1640, %v1156
      %v1642 = vpop.permute.xlu0 %1641
      %1645 = vset.pattern.permute.xlu0 0
      %1646 = vperm.xlu0 %1645, %v1157
      %v1647 = vpop.permute.xlu0 %1646
      %1650 = vset.pattern.permute.xlu0 0
      %1651 = vperm.xlu0 %1650, %v1158
      %v1652 = vpop.permute.xlu0 %1651
      %1655 = vset.pattern.permute.xlu0 0
      %1656 = vperm.xlu0 %1655, %v1159
      %v1657 = vpop.permute.xlu0 %1656
      %1660 = vset.pattern.permute.xlu0 0
      %1661 = vperm.xlu0 %1660, %v1160
      %v1662 = vpop.permute.xlu0 %1661
      %1665 = vset.pattern.permute.xlu0 0
      %1666 = vperm.xlu0 %1665, %v1161
      %v1667 = vpop.permute.xlu0 %1666
      %1670 = vset.pattern.permute.xlu0 0
      %1671 = vperm.xlu0 %1670, %v1162
      %v1672 = vpop.permute.xlu0 %1671
      %1675 = vset.pattern.permute.xlu0 0
      %1676 = vperm.xlu0 %1675, %v1163
      %v1677 = vpop.permute.xlu0 %1676
      %1680 = vset.pattern.permute.xlu0 0
      %1681 = vperm.xlu0 %1680, %v1164
      %v1682 = vpop.permute.xlu0 %1681
      %1685 = vset.pattern.permute.xlu0 0
      %1686 = vperm.xlu0 %1685, %v1165
      %v1687 = vpop.permute.xlu0 %1686
      %1690 = vset.pattern.permute.xlu0 0
      %1691 = vperm.xlu0 %1690, %v1166
      %v1692 = vpop.permute.xlu0 %1691
      %1695 = vset.pattern.permute.xlu0 0
      %1696 = vperm.xlu0 %1695, %v1167
      %v1697 = vpop.permute.xlu0 %1696
      %1700 = vset.pattern.permute.xlu0 0
      %1701 = vperm.xlu0 %1700, %v1168
      %v1702 = vpop.permute.xlu0 %1701
      %1705 = vset.pattern.permute.xlu0 0
      %1706 = vperm.xlu0 %1705, %v1169
      %v1707 = vpop.permute.xlu0 %1706
      %1710 = vset.pattern.permute.xlu0 0
      %1711 = vperm.xlu0 %1710, %v1170
      %v1712 = vpop.permute.xlu0 %1711
      %1715 = vset.pattern.permute.xlu0 0
      %1716 = vperm.xlu0 %1715, %v1171
      %v1717 = vpop.permute.xlu0 %1716
      %1720 = vset.pattern.permute.xlu0 0
      %1721 = vperm.xlu0 %1720, %v1172
      %v1722 = vpop.permute.xlu0 %1721
      %1725 = vset.pattern.permute.xlu0 0
      %1726 = vperm.xlu0 %1725, %v1173
      %v1727 = vpop.permute.xlu0 %1726
      %1730 = vset.pattern.permute.xlu0 0
      %1731 = vperm.xlu0 %1730, %v1174
      %v1732 = vpop.permute.xlu0 %1731
      %1735 = vset.pattern.permute.xlu0 0
      %1736 = vperm.xlu0 %1735, %v1175
      %v1737 = vpop.permute.xlu0 %1736
      %v1739 = vmul.f32 %v1619, %v1642
      %v1740 = vmul.f32 %v1620, %v1647
      %v1741 = vmul.f32 %v1621, %v1652
      %v1742 = vmul.f32 %v1622, %v1657
      %v1743 = vmul.f32 %v1623, %v1662
      %v1744 = vmul.f32 %v1624, %v1667
      %v1745 = vmul.f32 %v1625, %v1672
      %v1746 = vmul.f32 %v1626, %v1677
      %v1747 = vmul.f32 %v1627, %v1682
      %v1748 = vmul.f32 %v1628, %v1687
      %v1749 = vmul.f32 %v1629, %v1692
      %v1750 = vmul.f32 %v1630, %v1697
      %v1751 = vmul.f32 %v1631, %v1702
      %v1752 = vmul.f32 %v1632, %v1707
      %v1753 = vmul.f32 %v1633, %v1712
      %v1754 = vmul.f32 %v1634, %v1717
      %v1755 = vmul.f32 %v1635, %v1722
      %v1756 = vmul.f32 %v1636, %v1727
      %v1757 = vmul.f32 %v1637, %v1732
      %v1758 = vmul.f32 %v1638, %v1737
      %1759 = vst [vmem:[#allocation2 + $0x20] sm:$0xff] %v1739
      %1760 = vst [vmem:[#allocation2 + $0x28] sm:$0xff] %v1740
      %1761 = vst [vmem:[#allocation2 + $0x30] sm:$0xff] %v1741
      %1762 = vst [vmem:[#allocation2 + $0x38] sm:$0xff] %v1742
      %1763 = vst [vmem:[#allocation2 + $0x40] sm:$0xff] %v1743
      %1764 = vst [vmem:[#allocation2 + $0x48] sm:$0xff] %v1744
      %1765 = vst [vmem:[#allocation2 + $0x50] sm:$0xff] %v1745
      %1766 = vst [vmem:[#allocation2 + $0x58] sm:$0xff] %v1746
      %1767 = vst [vmem:[#allocation2 + $0x60] sm:$0xff] %v1747
      %1768 = vst [vmem:[#allocation2 + $0x68] sm:$0xff] %v1748
      %1769 = vst [vmem:[#allocation2 + $0x70] sm:$0xff] %v1749
      %1770 = vst [vmem:[#allocation2 + $0x78] sm:$0xff] %v1750
      %1771 = vst [vmem:[#allocation2 + $0x80] sm:$0xff] %v1751
      %1772 = vst [vmem:[#allocation2 + $0x88] sm:$0xff] %v1752
      %1773 = vst [vmem:[#allocation2 + $0x90] sm:$0xff] %v1753
      %1774 = vst [vmem:[#allocation2 + $0x98] sm:$0xff] %v1754
      %1775 = vst [vmem:[#allocation2 + $0xa0] sm:$0xff] %v1755
      %1776 = vst [vmem:[#allocation2 + $0xa8] sm:$0xff] %v1756
      %1777 = vst [vmem:[#allocation2 + $0xb0] sm:$0xff] %v1757
      %1778 = vst [vmem:[#allocation2 + $0xb8] sm:$0xff] %v1758
      %v1779 = vld [vmem:[#allocation2 + $0xf] sm:$0xff]
      %v1780 = vld [vmem:[#allocation2 + $0x17] sm:$0xff]
      %v1781 = vld [vmem:[#allocation2 + $0x1f] sm:$0xff]
      %v1782 = vld [vmem:[#allocation2 + $0x27] sm:$0xff]
      %v1783 = vld [vmem:[#allocation2 + $0x2f] sm:$0xff]
      %v1784 = vld [vmem:[#allocation2 + $0x37] sm:$0xff]
      %v1785 = vld [vmem:[#allocation2 + $0x3f] sm:$0xff]
      %v1786 = vld [vmem:[#allocation2 + $0x47] sm:$0xff]
      %v1787 = vld [vmem:[#allocation2 + $0x4f] sm:$0xff]
      %v1788 = vld [vmem:[#allocation2 + $0x57] sm:$0xff]
      %v1789 = vld [vmem:[#allocation2 + $0x5f] sm:$0xff]
      %v1790 = vld [vmem:[#allocation2 + $0x67] sm:$0xff]
      %v1791 = vld [vmem:[#allocation2 + $0x6f] sm:$0xff]
      %v1792 = vld [vmem:[#allocation2 + $0x77] sm:$0xff]
      %v1793 = vld [vmem:[#allocation2 + $0x7f] sm:$0xff]
      %v1794 = vld [vmem:[#allocation2 + $0x87] sm:$0xff]
      %v1795 = vld [vmem:[#allocation2 + $0x8f] sm:$0xff]
      %v1796 = vld [vmem:[#allocation2 + $0x97] sm:$0xff]
      %v1797 = vld [vmem:[#allocation2 + $0x9f] sm:$0xff]
      %v1798 = vld [vmem:[#allocation2 + $0xa7] sm:$0xff]
      %v1799 = vld [vmem:[%s11] sm:$0x1]
      %v1800 = vlaneseq
      %v1801 = vshrl.u32 %v1800, 7
      %v1802 = vsub.s32 0, %v1801
      %v1803 = vrot.slane %v1799, %v1802
      %v1804 = vmul.f32 %v1779, %v1803
      %v1805 = vmul.f32 %v1780, %v1803
      %v1806 = vmul.f32 %v1781, %v1803
      %v1807 = vmul.f32 %v1782, %v1803
      %v1808 = vmul.f32 %v1783, %v1803
      %v1809 = vmul.f32 %v1784, %v1803
      %v1810 = vmul.f32 %v1785, %v1803
      %v1811 = vmul.f32 %v1786, %v1803
      %v1812 = vmul.f32 %v1787, %v1803
      %v1813 = vmul.f32 %v1788, %v1803
      %v1814 = vmul.f32 %v1789, %v1803
      %v1815 = vmul.f32 %v1790, %v1803
      %v1816 = vmul.f32 %v1791, %v1803
      %v1817 = vmul.f32 %v1792, %v1803
      %v1818 = vmul.f32 %v1793, %v1803
      %v1819 = vmul.f32 %v1794, %v1803
      %v1820 = vmul.f32 %v1795, %v1803
      %v1821 = vmul.f32 %v1796, %v1803
      %v1822 = vmul.f32 %v1797, %v1803
      %v1823 = vmul.f32 %v1798, %v1803
      %v1824 = vld [vmem:[#allocation2 + $0x10] sm:$0xff]
      %v1825 = vld [vmem:[#allocation2 + $0x18] sm:$0xff]
      %v1826 = vld [vmem:[#allocation2 + $0x20] sm:$0xff]
      %v1827 = vld [vmem:[#allocation2 + $0x28] sm:$0xff]
      %v1828 = vld [vmem:[#allocation2 + $0x30] sm:$0xff]
      %v1829 = vld [vmem:[#allocation2 + $0x38] sm:$0xff]
      %v1830 = vld [vmem:[#allocation2 + $0x40] sm:$0xff]
      %v1831 = vld [vmem:[#allocation2 + $0x48] sm:$0xff]
      %v1832 = vld [vmem:[#allocation2 + $0x50] sm:$0xff]
      %v1833 = vld [vmem:[#allocation2 + $0x58] sm:$0xff]
      %v1834 = vld [vmem:[#allocation2 + $0x60] sm:$0xff]
      %v1835 = vld [vmem:[#allocation2 + $0x68] sm:$0xff]
      %v1836 = vld [vmem:[#allocation2 + $0x70] sm:$0xff]
      %v1837 = vld [vmem:[#allocation2 + $0x78] sm:$0xff]
      %v1838 = vld [vmem:[#allocation2 + $0x80] sm:$0xff]
      %v1839 = vld [vmem:[#allocation2 + $0x88] sm:$0xff]
      %v1840 = vld [vmem:[#allocation2 + $0x90] sm:$0xff]
      %v1841 = vld [vmem:[#allocation2 + $0x98] sm:$0xff]
      %v1842 = vld [vmem:[#allocation2 + $0xa0] sm:$0xff]
      %v1843 = vld [vmem:[#allocation2 + $0xa8] sm:$0xff]
      %v1844 = vld [vmem:[%s11 + $0x1] sm:$0x1]
      %v1845 = vlaneseq
      %v1846 = vshrl.u32 %v1845, 7
      %v1847 = vsub.s32 0, %v1846
      %v1848 = vrot.slane %v1844, %v1847
      %v1849 = vmul.f32 %v1824, %v1848
      %v1850 = vmul.f32 %v1825, %v1848
      %v1851 = vmul.f32 %v1826, %v1848
      %v1852 = vmul.f32 %v1827, %v1848
      %v1853 = vmul.f32 %v1828, %v1848
      %v1854 = vmul.f32 %v1829, %v1848
      %v1855 = vmul.f32 %v1830, %v1848
      %v1856 = vmul.f32 %v1831, %v1848
      %v1857 = vmul.f32 %v1832, %v1848
      %v1858 = vmul.f32 %v1833, %v1848
      %v1859 = vmul.f32 %v1834, %v1848
      %v1860 = vmul.f32 %v1835, %v1848
      %v1861 = vmul.f32 %v1836, %v1848
      %v1862 = vmul.f32 %v1837, %v1848
      %v1863 = vmul.f32 %v1838, %v1848
      %v1864 = vmul.f32 %v1839, %v1848
      %v1865 = vmul.f32 %v1840, %v1848
      %v1866 = vmul.f32 %v1841, %v1848
      %v1867 = vmul.f32 %v1842, %v1848
      %v1868 = vmul.f32 %v1843, %v1848
      %v1869 = vadd.f32 %v1804, %v1849
      %v1870 = vadd.f32 %v1805, %v1850
      %v1871 = vadd.f32 %v1806, %v1851
      %v1872 = vadd.f32 %v1807, %v1852
      %v1873 = vadd.f32 %v1808, %v1853
      %v1874 = vadd.f32 %v1809, %v1854
      %v1875 = vadd.f32 %v1810, %v1855
      %v1876 = vadd.f32 %v1811, %v1856
      %v1877 = vadd.f32 %v1812, %v1857
      %v1878 = vadd.f32 %v1813, %v1858
      %v1879 = vadd.f32 %v1814, %v1859
      %v1880 = vadd.f32 %v1815, %v1860
      %v1881 = vadd.f32 %v1816, %v1861
      %v1882 = vadd.f32 %v1817, %v1862
      %v1883 = vadd.f32 %v1818, %v1863
      %v1884 = vadd.f32 %v1819, %v1864
      %v1885 = vadd.f32 %v1820, %v1865
      %v1886 = vadd.f32 %v1821, %v1866
      %v1887 = vadd.f32 %v1822, %v1867
      %v1888 = vadd.f32 %v1823, %v1868
      %v1889 = vld [vmem:[#allocation2 + $0x11] sm:$0xff]
      %v1890 = vld [vmem:[#allocation2 + $0x19] sm:$0xff]
      %v1891 = vld [vmem:[#allocation2 + $0x21] sm:$0xff]
      %v1892 = vld [vmem:[#allocation2 + $0x29] sm:$0xff]
      %v1893 = vld [vmem:[#allocation2 + $0x31] sm:$0xff]
      %v1894 = vld [vmem:[#allocation2 + $0x39] sm:$0xff]
      %v1895 = vld [vmem:[#allocation2 + $0x41] sm:$0xff]
      %v1896 = vld [vmem:[#allocation2 + $0x49] sm:$0xff]
      %v1897 = vld [vmem:[#allocation2 + $0x51] sm:$0xff]
      %v1898 = vld [vmem:[#allocation2 + $0x59] sm:$0xff]
      %v1899 = vld [vmem:[#allocation2 + $0x61] sm:$0xff]
      %v1900 = vld [vmem:[#allocation2 + $0x69] sm:$0xff]
      %v1901 = vld [vmem:[#allocation2 + $0x71] sm:$0xff]
      %v1902 = vld [vmem:[#allocation2 + $0x79] sm:$0xff]
      %v1903 = vld [vmem:[#allocation2 + $0x81] sm:$0xff]
      %v1904 = vld [vmem:[#allocation2 + $0x89] sm:$0xff]
      %v1905 = vld [vmem:[#allocation2 + $0x91] sm:$0xff]
      %v1906 = vld [vmem:[#allocation2 + $0x99] sm:$0xff]
      %v1907 = vld [vmem:[#allocation2 + $0xa1] sm:$0xff]
      %v1908 = vld [vmem:[#allocation2 + $0xa9] sm:$0xff]
      %v1909 = vld [vmem:[%s11 + $0x2] sm:$0x1]
      %v1910 = vlaneseq
      %v1911 = vshrl.u32 %v1910, 7
      %v1912 = vsub.s32 0, %v1911
      %v1913 = vrot.slane %v1909, %v1912
      %v1914 = vmul.f32 %v1889, %v1913
      %v1915 = vmul.f32 %v1890, %v1913
      %v1916 = vmul.f32 %v1891, %v1913
      %v1917 = vmul.f32 %v1892, %v1913
      %v1918 = vmul.f32 %v1893, %v1913
      %v1919 = vmul.f32 %v1894, %v1913
      %v1920 = vmul.f32 %v1895, %v1913
      %v1921 = vmul.f32 %v1896, %v1913
      %v1922 = vmul.f32 %v1897, %v1913
      %v1923 = vmul.f32 %v1898, %v1913
      %v1924 = vmul.f32 %v1899, %v1913
      %v1925 = vmul.f32 %v1900, %v1913
      %v1926 = vmul.f32 %v1901, %v1913
      %v1927 = vmul.f32 %v1902, %v1913
      %v1928 = vmul.f32 %v1903, %v1913
      %v1929 = vmul.f32 %v1904, %v1913
      %v1930 = vmul.f32 %v1905, %v1913
      %v1931 = vmul.f32 %v1906, %v1913
      %v1932 = vmul.f32 %v1907, %v1913
      %v1933 = vmul.f32 %v1908, %v1913
      %v1934 = vadd.f32 %v1869, %v1914
      %v1935 = vadd.f32 %v1870, %v1915
      %v1936 = vadd.f32 %v1871, %v1916
      %v1937 = vadd.f32 %v1872, %v1917
      %v1938 = vadd.f32 %v1873, %v1918
      %v1939 = vadd.f32 %v1874, %v1919
      %v1940 = vadd.f32 %v1875, %v1920
      %v1941 = vadd.f32 %v1876, %v1921
      %v1942 = vadd.f32 %v1877, %v1922
      %v1943 = vadd.f32 %v1878, %v1923
      %v1944 = vadd.f32 %v1879, %v1924
      %v1945 = vadd.f32 %v1880, %v1925
      %v1946 = vadd.f32 %v1881, %v1926
      %v1947 = vadd.f32 %v1882, %v1927
      %v1948 = vadd.f32 %v1883, %v1928
      %v1949 = vadd.f32 %v1884, %v1929
      %v1950 = vadd.f32 %v1885, %v1930
      %v1951 = vadd.f32 %v1886, %v1931
      %v1952 = vadd.f32 %v1887, %v1932
      %v1953 = vadd.f32 %v1888, %v1933
      %v1954 = vld [vmem:[#allocation2 + $0xaf] sm:$0xff]
      %v1955 = vld [vmem:[#allocation2 + $0xb7] sm:$0xff]
      %v1956 = vld [vmem:[%s11 + $0x3] sm:$0x1]
      %v1957 = vlaneseq
      %v1958 = vshrl.u32 %v1957, 7
      %v1959 = vsub.s32 0, %v1958
      %v1960 = vrot.slane %v1956, %v1959
      %v1961 = vmul.f32 %v1781, %v1960
      %v1962 = vmul.f32 %v1782, %v1960
      %v1963 = vmul.f32 %v1783, %v1960
      %v1964 = vmul.f32 %v1784, %v1960
      %v1965 = vmul.f32 %v1785, %v1960
      %v1966 = vmul.f32 %v1786, %v1960
      %v1967 = vmul.f32 %v1787, %v1960
      %v1968 = vmul.f32 %v1788, %v1960
      %v1969 = vmul.f32 %v1789, %v1960
      %v1970 = vmul.f32 %v1790, %v1960
      %v1971 = vmul.f32 %v1791, %v1960
      %v1972 = vmul.f32 %v1792, %v1960
      %v1973 = vmul.f32 %v1793, %v1960
      %v1974 = vmul.f32 %v1794, %v1960
      %v1975 = vmul.f32 %v1795, %v1960
      %v1976 = vmul.f32 %v1796, %v1960
      %v1977 = vmul.f32 %v1797, %v1960
      %v1978 = vmul.f32 %v1798, %v1960
      %v1979 = vmul.f32 %v1954, %v1960
      %v1980 = vmul.f32 %v1955, %v1960
      %v1981 = vadd.f32 %v1934, %v1961
      %v1982 = vadd.f32 %v1935, %v1962
      %v1983 = vadd.f32 %v1936, %v1963
      %v1984 = vadd.f32 %v1937, %v1964
      %v1985 = vadd.f32 %v1938, %v1965
      %v1986 = vadd.f32 %v1939, %v1966
      %v1987 = vadd.f32 %v1940, %v1967
      %v1988 = vadd.f32 %v1941, %v1968
      %v1989 = vadd.f32 %v1942, %v1969
      %v1990 = vadd.f32 %v1943, %v1970
      %v1991 = vadd.f32 %v1944, %v1971
      %v1992 = vadd.f32 %v1945, %v1972
      %v1993 = vadd.f32 %v1946, %v1973
      %v1994 = vadd.f32 %v1947, %v1974
      %v1995 = vadd.f32 %v1948, %v1975
      %v1996 = vadd.f32 %v1949, %v1976
      %v1997 = vadd.f32 %v1950, %v1977
      %v1998 = vadd.f32 %v1951, %v1978
      %v1999 = vadd.f32 %v1952, %v1979
      %v2000 = vadd.f32 %v1953, %v1980
      %v2001 = vld [vmem:[#allocation2 + $0xb0] sm:$0xff]
      %v2002 = vld [vmem:[#allocation2 + $0xb8] sm:$0xff]
      %v2003 = vld [vmem:[%s11 + $0x4] sm:$0x1]
      %v2004 = vlaneseq
      %v2005 = vshrl.u32 %v2004, 7
      %v2006 = vsub.s32 0, %v2005
      %v2007 = vrot.slane %v2003, %v2006
      %v2008 = vmul.f32 %v1826, %v2007
      %v2009 = vmul.f32 %v1827, %v2007
      %v2010 = vmul.f32 %v1828, %v2007
      %v2011 = vmul.f32 %v1829, %v2007
      %v2012 = vmul.f32 %v1830, %v2007
      %v2013 = vmul.f32 %v1831, %v2007
      %v2014 = vmul.f32 %v1832, %v2007
      %v2015 = vmul.f32 %v1833, %v2007
      %v2016 = vmul.f32 %v1834, %v2007
      %v2017 = vmul.f32 %v1835, %v2007
      %v2018 = vmul.f32 %v1836, %v2007
      %v2019 = vmul.f32 %v1837, %v2007
      %v2020 = vmul.f32 %v1838, %v2007
      %v2021 = vmul.f32 %v1839, %v2007
      %v2022 = vmul.f32 %v1840, %v2007
      %v2023 = vmul.f32 %v1841, %v2007
      %v2024 = vmul.f32 %v1842, %v2007
      %v2025 = vmul.f32 %v1843, %v2007
      %v2026 = vmul.f32 %v2001, %v2007
      %v2027 = vmul.f32 %v2002, %v2007
      %v2028 = vadd.f32 %v1981, %v2008
      %v2029 = vadd.f32 %v1982, %v2009
      %v2030 = vadd.f32 %v1983, %v2010
      %v2031 = vadd.f32 %v1984, %v2011
      %v2032 = vadd.f32 %v1985, %v2012
      %v2033 = vadd.f32 %v1986, %v2013
      %v2034 = vadd.f32 %v1987, %v2014
      %v2035 = vadd.f32 %v1988, %v2015
      %v2036 = vadd.f32 %v1989, %v2016
      %v2037 = vadd.f32 %v1990, %v2017
      %v2038 = vadd.f32 %v1991, %v2018
      %v2039 = vadd.f32 %v1992, %v2019
      %v2040 = vadd.f32 %v1993, %v2020
      %v2041 = vadd.f32 %v1994, %v2021
      %v2042 = vadd.f32 %v1995, %v2022
      %v2043 = vadd.f32 %v1996, %v2023
      %v2044 = vadd.f32 %v1997, %v2024
      %v2045 = vadd.f32 %v1998, %v2025
      %v2046 = vadd.f32 %v1999, %v2026
      %v2047 = vadd.f32 %v2000, %v2027
      %v2048 = vld [vmem:[#allocation2 + $0xb1] sm:$0xff]
      %v2049 = vld [vmem:[#allocation2 + $0xb9] sm:$0xff]
      %v2050 = vld [vmem:[%s11 + $0x5] sm:$0x1]
      %v2051 = vlaneseq
      %v2052 = vshrl.u32 %v2051, 7
      %v2053 = vsub.s32 0, %v2052
      %v2054 = vrot.slane %v2050, %v2053
      %v2055 = vmul.f32 %v1891, %v2054
      %v2056 = vmul.f32 %v1892, %v2054
      %v2057 = vmul.f32 %v1893, %v2054
      %v2058 = vmul.f32 %v1894, %v2054
      %v2059 = vmul.f32 %v1895, %v2054
      %v2060 = vmul.f32 %v1896, %v2054
      %v2061 = vmul.f32 %v1897, %v2054
      %v2062 = vmul.f32 %v1898, %v2054
      %v2063 = vmul.f32 %v1899, %v2054
      %v2064 = vmul.f32 %v1900, %v2054
      %v2065 = vmul.f32 %v1901, %v2054
      %v2066 = vmul.f32 %v1902, %v2054
      %v2067 = vmul.f32 %v1903, %v2054
      %v2068 = vmul.f32 %v1904, %v2054
      %v2069 = vmul.f32 %v1905, %v2054
      %v2070 = vmul.f32 %v1906, %v2054
      %v2071 = vmul.f32 %v1907, %v2054
      %v2072 = vmul.f32 %v1908, %v2054
      %v2073 = vmul.f32 %v2048, %v2054
      %v2074 = vmul.f32 %v2049, %v2054
      %v2075 = vadd.f32 %v2028, %v2055
      %v2076 = vadd.f32 %v2029, %v2056
      %v2077 = vadd.f32 %v2030, %v2057
      %v2078 = vadd.f32 %v2031, %v2058
      %v2079 = vadd.f32 %v2032, %v2059
      %v2080 = vadd.f32 %v2033, %v2060
      %v2081 = vadd.f32 %v2034, %v2061
      %v2082 = vadd.f32 %v2035, %v2062
      %v2083 = vadd.f32 %v2036, %v2063
      %v2084 = vadd.f32 %v2037, %v2064
      %v2085 = vadd.f32 %v2038, %v2065
      %v2086 = vadd.f32 %v2039, %v2066
      %v2087 = vadd.f32 %v2040, %v2067
      %v2088 = vadd.f32 %v2041, %v2068
      %v2089 = vadd.f32 %v2042, %v2069
      %v2090 = vadd.f32 %v2043, %v2070
      %v2091 = vadd.f32 %v2044, %v2071
      %v2092 = vadd.f32 %v2045, %v2072
      %v2093 = vadd.f32 %v2046, %v2073
      %v2094 = vadd.f32 %v2047, %v2074
      %v2095 = vld [vmem:[#allocation2 + $0xbf] sm:$0xff]
      %v2096 = vld [vmem:[#allocation2 + $0xc7] sm:$0xff]
      %v2097 = vld [vmem:[%s11 + $0x6] sm:$0x1]
      %v2098 = vlaneseq
      %v2099 = vshrl.u32 %v2098, 7
      %v2100 = vsub.s32 0, %v2099
      %v2101 = vrot.slane %v2097, %v2100
      %v2102 = vmul.f32 %v1783, %v2101
      %v2103 = vmul.f32 %v1784, %v2101
      %v2104 = vmul.f32 %v1785, %v2101
      %v2105 = vmul.f32 %v1786, %v2101
      %v2106 = vmul.f32 %v1787, %v2101
      %v2107 = vmul.f32 %v1788, %v2101
      %v2108 = vmul.f32 %v1789, %v2101
      %v2109 = vmul.f32 %v1790, %v2101
      %v2110 = vmul.f32 %v1791, %v2101
      %v2111 = vmul.f32 %v1792, %v2101
      %v2112 = vmul.f32 %v1793, %v2101
      %v2113 = vmul.f32 %v1794, %v2101
      %v2114 = vmul.f32 %v1795, %v2101
      %v2115 = vmul.f32 %v1796, %v2101
      %v2116 = vmul.f32 %v1797, %v2101
      %v2117 = vmul.f32 %v1798, %v2101
      %v2118 = vmul.f32 %v1954, %v2101
      %v2119 = vmul.f32 %v1955, %v2101
      %v2120 = vmul.f32 %v2095, %v2101
      %v2121 = vmul.f32 %v2096, %v2101
      %v2122 = vadd.f32 %v2075, %v2102
      %v2123 = vadd.f32 %v2076, %v2103
      %v2124 = vadd.f32 %v2077, %v2104
      %v2125 = vadd.f32 %v2078, %v2105
      %v2126 = vadd.f32 %v2079, %v2106
      %v2127 = vadd.f32 %v2080, %v2107
      %v2128 = vadd.f32 %v2081, %v2108
      %v2129 = vadd.f32 %v2082, %v2109
      %v2130 = vadd.f32 %v2083, %v2110
      %v2131 = vadd.f32 %v2084, %v2111
      %v2132 = vadd.f32 %v2085, %v2112
      %v2133 = vadd.f32 %v2086, %v2113
      %v2134 = vadd.f32 %v2087, %v2114
      %v2135 = vadd.f32 %v2088, %v2115
      %v2136 = vadd.f32 %v2089, %v2116
      %v2137 = vadd.f32 %v2090, %v2117
      %v2138 = vadd.f32 %v2091, %v2118
      %v2139 = vadd.f32 %v2092, %v2119
      %v2140 = vadd.f32 %v2093, %v2120
      %v2141 = vadd.f32 %v2094, %v2121
      %v2142 = vld [vmem:[#allocation2 + $0xc0] sm:$0xff]
      %v2143 = vld [vmem:[#allocation2 + $0xc8] sm:$0xff]
      %v2144 = vld [vmem:[%s11 + $0x7] sm:$0x1]
      %v2145 = vlaneseq
      %v2146 = vshrl.u32 %v2145, 7
      %v2147 = vsub.s32 0, %v2146
      %v2148 = vrot.slane %v2144, %v2147
      %v2149 = vmul.f32 %v1828, %v2148
      %v2150 = vmul.f32 %v1829, %v2148
      %v2151 = vmul.f32 %v1830, %v2148
      %v2152 = vmul.f32 %v1831, %v2148
      %v2153 = vmul.f32 %v1832, %v2148
      %v2154 = vmul.f32 %v1833, %v2148
      %v2155 = vmul.f32 %v1834, %v2148
      %v2156 = vmul.f32 %v1835, %v2148
      %v2157 = vmul.f32 %v1836, %v2148
      %v2158 = vmul.f32 %v1837, %v2148
      %v2159 = vmul.f32 %v1838, %v2148
      %v2160 = vmul.f32 %v1839, %v2148
      %v2161 = vmul.f32 %v1840, %v2148
      %v2162 = vmul.f32 %v1841, %v2148
      %v2163 = vmul.f32 %v1842, %v2148
      %v2164 = vmul.f32 %v1843, %v2148
      %v2165 = vmul.f32 %v2001, %v2148
      %v2166 = vmul.f32 %v2002, %v2148
      %v2167 = vmul.f32 %v2142, %v2148
      %v2168 = vmul.f32 %v2143, %v2148
      %v2169 = vadd.f32 %v2122, %v2149
      %v2170 = vadd.f32 %v2123, %v2150
      %v2171 = vadd.f32 %v2124, %v2151
      %v2172 = vadd.f32 %v2125, %v2152
      %v2173 = vadd.f32 %v2126, %v2153
      %v2174 = vadd.f32 %v2127, %v2154
      %v2175 = vadd.f32 %v2128, %v2155
      %v2176 = vadd.f32 %v2129, %v2156
      %v2177 = vadd.f32 %v2130, %v2157
      %v2178 = vadd.f32 %v2131, %v2158
      %v2179 = vadd.f32 %v2132, %v2159
      %v2180 = vadd.f32 %v2133, %v2160
      %v2181 = vadd.f32 %v2134, %v2161
      %v2182 = vadd.f32 %v2135, %v2162
      %v2183 = vadd.f32 %v2136, %v2163
      %v2184 = vadd.f32 %v2137, %v2164
      %v2185 = vadd.f32 %v2138, %v2165
      %v2186 = vadd.f32 %v2139, %v2166
      %v2187 = vadd.f32 %v2140, %v2167
      %v2188 = vadd.f32 %v2141, %v2168
      %v2189 = vld [vmem:[#allocation2 + $0xc1] sm:$0xff]
      %v2190 = vld [vmem:[#allocation2 + $0xc9] sm:$0xff]
      %v2191 = vld [vmem:[%s11 + $0x8] sm:$0x1]
      %v2192 = vlaneseq
      %v2193 = vshrl.u32 %v2192, 7
      %v2194 = vsub.s32 0, %v2193
      %v2195 = vrot.slane %v2191, %v2194
      %v2196 = vmul.f32 %v1893, %v2195
      %v2197 = vmul.f32 %v1894, %v2195
      %v2198 = vmul.f32 %v1895, %v2195
      %v2199 = vmul.f32 %v1896, %v2195
      %v2200 = vmul.f32 %v1897, %v2195
      %v2201 = vmul.f32 %v1898, %v2195
      %v2202 = vmul.f32 %v1899, %v2195
      %v2203 = vmul.f32 %v1900, %v2195
      %v2204 = vmul.f32 %v1901, %v2195
      %v2205 = vmul.f32 %v1902, %v2195
      %v2206 = vmul.f32 %v1903, %v2195
      %v2207 = vmul.f32 %v1904, %v2195
      %v2208 = vmul.f32 %v1905, %v2195
      %v2209 = vmul.f32 %v1906, %v2195
      %v2210 = vmul.f32 %v1907, %v2195
      %v2211 = vmul.f32 %v1908, %v2195
      %v2212 = vmul.f32 %v2048, %v2195
      %v2213 = vmul.f32 %v2049, %v2195
      %v2214 = vmul.f32 %v2189, %v2195
      %v2215 = vmul.f32 %v2190, %v2195
      %v2216 = vadd.f32 %v2169, %v2196
      %v2217 = vadd.f32 %v2170, %v2197
      %v2218 = vadd.f32 %v2171, %v2198
      %v2219 = vadd.f32 %v2172, %v2199
      %v2220 = vadd.f32 %v2173, %v2200
      %v2221 = vadd.f32 %v2174, %v2201
      %v2222 = vadd.f32 %v2175, %v2202
      %v2223 = vadd.f32 %v2176, %v2203
      %v2224 = vadd.f32 %v2177, %v2204
      %v2225 = vadd.f32 %v2178, %v2205
      %v2226 = vadd.f32 %v2179, %v2206
      %v2227 = vadd.f32 %v2180, %v2207
      %v2228 = vadd.f32 %v2181, %v2208
      %v2229 = vadd.f32 %v2182, %v2209
      %v2230 = vadd.f32 %v2183, %v2210
      %v2231 = vadd.f32 %v2184, %v2211
      %v2232 = vadd.f32 %v2185, %v2212
      %v2233 = vadd.f32 %v2186, %v2213
      %v2234 = vadd.f32 %v2187, %v2214
      %v2235 = vadd.f32 %v2188, %v2215
      %v2236 = vld [vmem:[%s13] sm:$0x1]
      %v2238 = vlaneseq
      %v2239 = vshrl.u32 %v2238, 7
      %v2240 = vsub.s32 0, %v2239
      %v2241 = vrot.slane %v2236, %v2240
      %v2243 = vmul.f32 %v2216, %v2241
      %v2244 = vmul.f32 %v2217, %v2241
      %v2245 = vmul.f32 %v2218, %v2241
      %v2246 = vmul.f32 %v2219, %v2241
      %v2247 = vmul.f32 %v2220, %v2241
      %v2248 = vmul.f32 %v2221, %v2241
      %v2249 = vmul.f32 %v2222, %v2241
      %v2250 = vmul.f32 %v2223, %v2241
      %v2251 = vmul.f32 %v2224, %v2241
      %v2252 = vmul.f32 %v2225, %v2241
      %v2253 = vmul.f32 %v2226, %v2241
      %v2254 = vmul.f32 %v2227, %v2241
      %v2255 = vmul.f32 %v2228, %v2241
      %v2256 = vmul.f32 %v2229, %v2241
      %v2257 = vmul.f32 %v2230, %v2241
      %v2258 = vmul.f32 %v2231, %v2241
      %v2259 = vmul.f32 %v2232, %v2241
      %v2260 = vmul.f32 %v2233, %v2241
      %v2261 = vmul.f32 %v2234, %v2241
      %v2262 = vmul.f32 %v2235, %v2241
      %v2263 = vld [vmem:[%s15] sm:$0x1]
      %v2265 = vlaneseq
      %v2266 = vshrl.u32 %v2265, 7
      %v2267 = vsub.s32 0, %v2266
      %v2268 = vrot.slane %v2263, %v2267
      %v2270 = vadd.f32 %v2243, %v2268
      %v2271 = vadd.f32 %v2244, %v2268
      %v2272 = vadd.f32 %v2245, %v2268
      %v2273 = vadd.f32 %v2246, %v2268
      %v2274 = vadd.f32 %v2247, %v2268
      %v2275 = vadd.f32 %v2248, %v2268
      %v2276 = vadd.f32 %v2249, %v2268
      %v2277 = vadd.f32 %v2250, %v2268
      %v2278 = vadd.f32 %v2251, %v2268
      %v2279 = vadd.f32 %v2252, %v2268
      %v2280 = vadd.f32 %v2253, %v2268
      %v2281 = vadd.f32 %v2254, %v2268
      %v2282 = vadd.f32 %v2255, %v2268
      %v2283 = vadd.f32 %v2256, %v2268
      %v2284 = vadd.f32 %v2257, %v2268
      %v2285 = vadd.f32 %v2258, %v2268
      %v2286 = vadd.f32 %v2259, %v2268
      %v2287 = vadd.f32 %v2260, %v2268
      %v2288 = vadd.f32 %v2261, %v2268
      %v2289 = vadd.f32 %v2262, %v2268
      %v2290 = vxor.u32 %v2270, 2147483648
      %v2291 = vxor.u32 %v2271, 2147483648
      %v2292 = vxor.u32 %v2272, 2147483648
      %v2293 = vxor.u32 %v2273, 2147483648
      %v2294 = vxor.u32 %v2274, 2147483648
      %v2295 = vxor.u32 %v2275, 2147483648
      %v2296 = vxor.u32 %v2276, 2147483648
      %v2297 = vxor.u32 %v2277, 2147483648
      %v2298 = vxor.u32 %v2278, 2147483648
      %v2299 = vxor.u32 %v2279, 2147483648
      %v2300 = vxor.u32 %v2280, 2147483648
      %v2301 = vxor.u32 %v2281, 2147483648
      %v2302 = vxor.u32 %v2282, 2147483648
      %v2303 = vxor.u32 %v2283, 2147483648
      %v2304 = vxor.u32 %v2284, 2147483648
      %v2305 = vxor.u32 %v2285, 2147483648
      %v2306 = vxor.u32 %v2286, 2147483648
      %v2307 = vxor.u32 %v2287, 2147483648
      %v2308 = vxor.u32 %v2288, 2147483648
      %v2309 = vxor.u32 %v2289, 2147483648
      %v2310 = vmul.f32 %v2290, 1.442695
      %v2311 = vpow.pop %v2310
      %v2312 = vmul.f32 %v2291, 1.442695
      %v2313 = vpow.pop %v2312
      %v2314 = vmul.f32 %v2292, 1.442695
      %v2315 = vpow.pop %v2314
      %v2316 = vmul.f32 %v2293, 1.442695
      %v2317 = vpow.pop %v2316
      %v2318 = vmul.f32 %v2294, 1.442695
      %v2319 = vpow.pop %v2318
      %v2320 = vmul.f32 %v2295, 1.442695
      %v2321 = vpow.pop %v2320
      %v2322 = vmul.f32 %v2296, 1.442695
      %v2323 = vpow.pop %v2322
      %v2324 = vmul.f32 %v2297, 1.442695
      %v2325 = vpow.pop %v2324
      %v2326 = vmul.f32 %v2298, 1.442695
      %v2327 = vpow.pop %v2326
      %v2328 = vmul.f32 %v2299, 1.442695
      %v2329 = vpow.pop %v2328
      %v2330 = vmul.f32 %v2300, 1.442695
      %v2331 = vpow.pop %v2330
      %v2332 = vmul.f32 %v2301, 1.442695
      %v2333 = vpow.pop %v2332
      %v2334 = vmul.f32 %v2302, 1.442695
      %v2335 = vpow.pop %v2334
      %v2336 = vmul.f32 %v2303, 1.442695
      %v2337 = vpow.pop %v2336
      %v2338 = vmul.f32 %v2304, 1.442695
      %v2339 = vpow.pop %v2338
      %v2340 = vmul.f32 %v2305, 1.442695
      %v2341 = vpow.pop %v2340
      %v2342 = vmul.f32 %v2306, 1.442695
      %v2343 = vpow.pop %v2342
      %v2344 = vmul.f32 %v2307, 1.442695
      %v2345 = vpow.pop %v2344
      %v2346 = vmul.f32 %v2308, 1.442695
      %v2347 = vpow.pop %v2346
      %v2348 = vmul.f32 %v2309, 1.442695
      %v2349 = vpow.pop %v2348
      %v2350 = vadd.f32 %v2311, 1.0
      %v2351 = vadd.f32 %v2313, 1.0
      %v2352 = vadd.f32 %v2315, 1.0
      %v2353 = vadd.f32 %v2317, 1.0
      %v2354 = vadd.f32 %v2319, 1.0
      %v2355 = vadd.f32 %v2321, 1.0
      %v2356 = vadd.f32 %v2323, 1.0
      %v2357 = vadd.f32 %v2325, 1.0
      %v2358 = vadd.f32 %v2327, 1.0
      %v2359 = vadd.f32 %v2329, 1.0
      %v2360 = vadd.f32 %v2331, 1.0
      %v2361 = vadd.f32 %v2333, 1.0
      %v2362 = vadd.f32 %v2335, 1.0
      %v2363 = vadd.f32 %v2337, 1.0
      %v2364 = vadd.f32 %v2339, 1.0
      %v2365 = vadd.f32 %v2341, 1.0
      %v2366 = vadd.f32 %v2343, 1.0
      %v2367 = vadd.f32 %v2345, 1.0
      %v2368 = vadd.f32 %v2347, 1.0
      %v2369 = vadd.f32 %v2349, 1.0
      %v2370 = vrcp.pop %v2350
      %v2371 = vmul.f32 1.0, %v2370
      %v2372 = vrcp.pop %v2351
      %v2373 = vmul.f32 1.0, %v2372
      %v2374 = vrcp.pop %v2352
      %v2375 = vmul.f32 1.0, %v2374
      %v2376 = vrcp.pop %v2353
      %v2377 = vmul.f32 1.0, %v2376
      %v2378 = vrcp.pop %v2354
      %v2379 = vmul.f32 1.0, %v2378
      %v2380 = vrcp.pop %v2355
      %v2381 = vmul.f32 1.0, %v2380
      %v2382 = vrcp.pop %v2356
      %v2383 = vmul.f32 1.0, %v2382
      %v2384 = vrcp.pop %v2357
      %v2385 = vmul.f32 1.0, %v2384
      %v2386 = vrcp.pop %v2358
      %v2387 = vmul.f32 1.0, %v2386
      %v2388 = vrcp.pop %v2359
      %v2389 = vmul.f32 1.0, %v2388
      %v2390 = vrcp.pop %v2360
      %v2391 = vmul.f32 1.0, %v2390
      %v2392 = vrcp.pop %v2361
      %v2393 = vmul.f32 1.0, %v2392
      %v2394 = vrcp.pop %v2362
      %v2395 = vmul.f32 1.0, %v2394
      %v2396 = vrcp.pop %v2363
      %v2397 = vmul.f32 1.0, %v2396
      %v2398 = vrcp.pop %v2364
      %v2399 = vmul.f32 1.0, %v2398
      %v2400 = vrcp.pop %v2365
      %v2401 = vmul.f32 1.0, %v2400
      %v2402 = vrcp.pop %v2366
      %v2403 = vmul.f32 1.0, %v2402
      %v2404 = vrcp.pop %v2367
      %v2405 = vmul.f32 1.0, %v2404
      %v2406 = vrcp.pop %v2368
      %v2407 = vmul.f32 1.0, %v2406
      %v2408 = vrcp.pop %v2369
      %v2409 = vmul.f32 1.0, %v2408
      %v2410 = vmul.f32 %v2270, %v2371
      %v2411 = vmul.f32 %v2271, %v2373
      %v2412 = vmul.f32 %v2272, %v2375
      %v2413 = vmul.f32 %v2273, %v2377
      %v2414 = vmul.f32 %v2274, %v2379
      %v2415 = vmul.f32 %v2275, %v2381
      %v2416 = vmul.f32 %v2276, %v2383
      %v2417 = vmul.f32 %v2277, %v2385
      %v2418 = vmul.f32 %v2278, %v2387
      %v2419 = vmul.f32 %v2279, %v2389
      %v2420 = vmul.f32 %v2280, %v2391
      %v2421 = vmul.f32 %v2281, %v2393
      %v2422 = vmul.f32 %v2282, %v2395
      %v2423 = vmul.f32 %v2283, %v2397
      %v2424 = vmul.f32 %v2284, %v2399
      %v2425 = vmul.f32 %v2285, %v2401
      %v2426 = vmul.f32 %v2286, %v2403
      %v2427 = vmul.f32 %v2287, %v2405
      %v2428 = vmul.f32 %v2288, %v2407
      %v2429 = vmul.f32 %v2289, %v2409
      %v2430 = vpack.c.bf16 %v2411, %v2410
      %v2431 = vpack.c.bf16 %v2413, %v2412
      %v2432 = vpack.c.bf16 %v2415, %v2414
      %v2433 = vpack.c.bf16 %v2417, %v2416
      %v2434 = vpack.c.bf16 %v2419, %v2418
      %v2435 = vpack.c.bf16 %v2421, %v2420
      %v2436 = vpack.c.bf16 %v2423, %v2422
      %v2437 = vpack.c.bf16 %v2425, %v2424
      %v2438 = vpack.c.bf16 %v2427, %v2426
      %v2439 = vpack.c.bf16 %v2429, %v2428
      %v2440 = vld [vmem:[%s17] sm:$0xf]
      %v2441 = vld [vmem:[%s17 + $0x4] sm:$0xf]
      %v2442 = vld [vmem:[%s17 + $0x8] sm:$0xf]
      %v2443 = vld [vmem:[%s17 + $0xc] sm:$0xf]
      %v2444 = vld [vmem:[%s17 + $0x10] sm:$0xf]
      %v2445 = vld [vmem:[%s17 + $0x14] sm:$0xf]
      %v2446 = vld [vmem:[%s17 + $0x18] sm:$0xf]
      %v2447 = vld [vmem:[%s17 + $0x1c] sm:$0xf]
      %v2448 = vld [vmem:[%s17 + $0x20] sm:$0xf]
      %v2449 = vld [vmem:[%s17 + $0x24] sm:$0xf]
      %v2450 = vld [vmem:[%s17 + $0x28] sm:$0xf]
      %v2451 = vld [vmem:[%s17 + $0x2c] sm:$0xf]
      %v2452 = vld [vmem:[%s17 + $0x30] sm:$0xf]
      %v2453 = vld [vmem:[%s17 + $0x34] sm:$0xf]
      %v2454 = vld [vmem:[%s17 + $0x38] sm:$0xf]
      %v2455 = vld [vmem:[%s17 + $0x3c] sm:$0xf]
      %v2472 = vunpack.c.l.b16 %v2440
      %v2473 = vunpack.c.l.b16 %v2441
      %v2474 = vunpack.c.l.b16 %v2442
      %v2475 = vunpack.c.l.b16 %v2443
      %v2476 = vunpack.c.l.b16 %v2444
      %v2477 = vunpack.c.l.b16 %v2445
      %v2478 = vunpack.c.l.b16 %v2446
      %v2479 = vunpack.c.l.b16 %v2447
      %v2480 = vunpack.c.l.b16 %v2448
      %v2481 = vunpack.c.l.b16 %v2449
      %v2482 = vunpack.c.l.b16 %v2450
      %v2483 = vunpack.c.l.b16 %v2451
      %v2484 = vunpack.c.l.b16 %v2452
      %v2485 = vunpack.c.l.b16 %v2453
      %v2486 = vunpack.c.l.b16 %v2454
      %v2487 = vunpack.c.l.b16 %v2455
      %v2488 = vpack.c.b16 %v2473, %v2472
      %v2489 = vpack.c.b16 %v2475, %v2474
      %v2490 = vpack.c.b16 %v2477, %v2476
      %v2491 = vpack.c.b16 %v2479, %v2478
      %v2492 = vpack.c.b16 %v2481, %v2480
      %v2493 = vpack.c.b16 %v2483, %v2482
      %v2494 = vpack.c.b16 %v2485, %v2484
      %v2495 = vpack.c.b16 %v2487, %v2486
      %2504 = vmatprep.subr.bf16.mxu0 0
      %2505 = vmatpush1.bf16.msra.mxu0 %v2488
      %2506 = vmatprep.subr.bf16.mxu0 0
      %2507 = vmatpush1.bf16.msra.mxu0 %v2489
      %2508 = vmatprep.subr.bf16.mxu0 0
      %2509 = vmatpush1.bf16.msra.mxu0 %v2490
      %2510 = vmatprep.subr.bf16.mxu0 0
      %2511 = vmatpush1.bf16.msra.mxu0 %v2491
      %2512 = vmatprep.subr.bf16.mxu0 0
      %2513 = vmatpush1.bf16.msra.mxu0 %v2492
      %2514 = vmatprep.subr.bf16.mxu0 0
      %2515 = vmatpush1.bf16.msra.mxu0 %v2493
      %2516 = vmatprep.subr.bf16.mxu0 0
      %2517 = vmatpush1.bf16.msra.mxu0 %v2494
      %2518 = vmatprep.subr.bf16.mxu0 0
      %2519 = vmatpush1.bf16.msra.mxu0 %v2495
      %2520 = vmatprep.subr.bf16.mxu0 0
      %2521 = vmatpush1.bf16.msra.mxu0 0
      %2522 = vmatprep.subr.bf16.mxu0 0
      %2523 = vmatpush1.bf16.msra.mxu0 0
      %2524 = vmatprep.subr.bf16.mxu0 0
      %2525 = vmatpush1.bf16.msra.mxu0 0
      %2526 = vmatprep.subr.bf16.mxu0 0
      %2527 = vmatpush1.bf16.msra.mxu0 0
      %2528 = vmatprep.subr.bf16.mxu0 0
      %2529 = vmatpush1.bf16.msra.mxu0 0
      %2530 = vmatprep.subr.bf16.mxu0 0
      %2531 = vmatpush1.bf16.msra.mxu0 0
      %2532 = vmatprep.subr.bf16.mxu0 0
      %2533 = vmatpush1.bf16.msra.mxu0 0
      %2534 = vmatprep.subr.bf16.mxu0 0
      %2535 = vmatpush1.bf16.msra.mxu0 0
      %2536 = vmatprep.mubr.bf16.mxu0 0
      %2537 = vmatmul.mubr.bf16.gmra.mrb[0].mxu0 %v2430
      %v2538 = vpop.f32.mrb[0].mxu0
      %v2539 = vadd.f32 0.0, %v2538
      %v2540 = vpop.f32.mrb[0].mxu0
      %v2541 = vpop.f32.mrb[0].mxu0
      %v2542 = vadd.f32 0.0, %v2541
      %v2543 = vpop.f32.mrb[0].mxu0
      %2544 = vmatprep.mubr.bf16.mxu0 0
      %2545 = vmatmul.mubr.bf16.gmra.mrb[0].mxu0 %v2431
      %v2546 = vpop.f32.mrb[0].mxu0
      %v2547 = vadd.f32 0.0, %v2546
      %v2548 = vpop.f32.mrb[0].mxu0
      %v2549 = vpop.f32.mrb[0].mxu0
      %v2550 = vadd.f32 0.0, %v2549
      %v2551 = vpop.f32.mrb[0].mxu0
      %2552 = vmatprep.mubr.bf16.mxu0 0
      %2553 = vmatmul.mubr.bf16.gmra.mrb[0].mxu0 %v2432
      %v2554 = vpop.f32.mrb[0].mxu0
      %v2555 = vadd.f32 0.0, %v2554
      %v2556 = vpop.f32.mrb[0].mxu0
      %v2557 = vpop.f32.mrb[0].mxu0
      %v2558 = vadd.f32 0.0, %v2557
      %v2559 = vpop.f32.mrb[0].mxu0
      %2560 = vmatprep.mubr.bf16.mxu0 0
      %2561 = vmatmul.mubr.bf16.gmra.mrb[0].mxu0 %v2433
      %v2562 = vpop.f32.mrb[0].mxu0
      %v2563 = vadd.f32 0.0, %v2562
      %v2564 = vpop.f32.mrb[0].mxu0
      %v2565 = vpop.f32.mrb[0].mxu0
      %v2566 = vadd.f32 0.0, %v2565
      %v2567 = vpop.f32.mrb[0].mxu0
      %2568 = vmatprep.mubr.bf16.mxu0 0
      %2569 = vmatmul.mubr.bf16.gmra.mrb[0].mxu0 %v2434
      %v2570 = vpop.f32.mrb[0].mxu0
      %v2571 = vadd.f32 0.0, %v2570
      %v2572 = vpop.f32.mrb[0].mxu0
      %v2573 = vpop.f32.mrb[0].mxu0
      %v2574 = vadd.f32 0.0, %v2573
      %v2575 = vpop.f32.mrb[0].mxu0
      %2576 = vmatprep.mubr.bf16.mxu0 0
      %2577 = vmatmul.mubr.bf16.gmra.mrb[0].mxu0 %v2435
      %v2578 = vpop.f32.mrb[0].mxu0
      %v2579 = vadd.f32 0.0, %v2578
      %v2580 = vpop.f32.mrb[0].mxu0
      %v2581 = vpop.f32.mrb[0].mxu0
      %v2582 = vadd.f32 0.0, %v2581
      %v2583 = vpop.f32.mrb[0].mxu0
      %2584 = vmatprep.mubr.bf16.mxu0 0
      %2585 = vmatmul.mubr.bf16.gmra.mrb[0].mxu0 %v2436
      %v2586 = vpop.f32.mrb[0].mxu0
      %v2587 = vadd.f32 0.0, %v2586
      %v2588 = vpop.f32.mrb[0].mxu0
      %v2589 = vpop.f32.mrb[0].mxu0
      %v2590 = vadd.f32 0.0, %v2589
      %v2591 = vpop.f32.mrb[0].mxu0
      %2592 = vmatprep.mubr.bf16.mxu0 0
      %2593 = vmatmul.mubr.bf16.gmra.mrb[0].mxu0 %v2437
      %v2594 = vpop.f32.mrb[0].mxu0
      %v2595 = vadd.f32 0.0, %v2594
      %v2596 = vpop.f32.mrb[0].mxu0
      %v2597 = vpop.f32.mrb[0].mxu0
      %v2598 = vadd.f32 0.0, %v2597
      %v2599 = vpop.f32.mrb[0].mxu0
      %2600 = vmatprep.mubr.bf16.mxu0 0
      %2601 = vmatmul.mubr.bf16.gmra.mrb[0].mxu0 %v2438
      %v2602 = vpop.f32.mrb[0].mxu0
      %v2603 = vadd.f32 0.0, %v2602
      %v2604 = vpop.f32.mrb[0].mxu0
      %v2605 = vpop.f32.mrb[0].mxu0
      %v2606 = vadd.f32 0.0, %v2605
      %v2607 = vpop.f32.mrb[0].mxu0
      %2608 = vmatprep.mubr.bf16.mxu0 0
      %2609 = vmatmul.mubr.bf16.gmra.mrb[0].mxu0 %v2439
      %v2610 = vpop.f32.mrb[0].mxu0
      %v2611 = vadd.f32 0.0, %v2610
      %v2612 = vpop.f32.mrb[0].mxu0
      %v2613 = vpop.f32.mrb[0].mxu0
      %v2614 = vadd.f32 0.0, %v2613
      %v2615 = vpop.f32.mrb[0].mxu0
      %2616 = vdwg.mxu0
      %v2617 = vld [vmem:[%s19] sm:$0x1]
      %v2619 = vlaneseq
      %v2620 = vshrl.u32 %v2619, 7
      %v2621 = vsub.s32 0, %v2620
      %v2622 = vrot.slane %v2617, %v2621
      %v2624 = vmul.f32 %v2539, %v2622
      %v2625 = vmul.f32 %v2542, %v2622
      %v2626 = vmul.f32 %v2547, %v2622
      %v2627 = vmul.f32 %v2550, %v2622
      %v2628 = vmul.f32 %v2555, %v2622
      %v2629 = vmul.f32 %v2558, %v2622
      %v2630 = vmul.f32 %v2563, %v2622
      %v2631 = vmul.f32 %v2566, %v2622
      %v2632 = vmul.f32 %v2571, %v2622
      %v2633 = vmul.f32 %v2574, %v2622
      %v2634 = vmul.f32 %v2579, %v2622
      %v2635 = vmul.f32 %v2582, %v2622
      %v2636 = vmul.f32 %v2587, %v2622
      %v2637 = vmul.f32 %v2590, %v2622
      %v2638 = vmul.f32 %v2595, %v2622
      %v2639 = vmul.f32 %v2598, %v2622
      %v2640 = vmul.f32 %v2603, %v2622
      %v2641 = vmul.f32 %v2606, %v2622
      %v2642 = vmul.f32 %v2611, %v2622
      %v2643 = vmul.f32 %v2614, %v2622
      %v2644 = vld [vmem:[%s21] sm:$0x1]
      %v2646 = vlaneseq
      %v2647 = vshrl.u32 %v2646, 7
      %v2648 = vsub.s32 0, %v2647
      %v2649 = vrot.slane %v2644, %v2648
      %v2651 = vadd.f32 %v2624, %v2649
      %v2652 = vadd.f32 %v2625, %v2649
      %v2653 = vadd.f32 %v2626, %v2649
      %v2654 = vadd.f32 %v2627, %v2649
      %v2655 = vadd.f32 %v2628, %v2649
      %v2656 = vadd.f32 %v2629, %v2649
      %v2657 = vadd.f32 %v2630, %v2649
      %v2658 = vadd.f32 %v2631, %v2649
      %v2659 = vadd.f32 %v2632, %v2649
      %v2660 = vadd.f32 %v2633, %v2649
      %v2661 = vadd.f32 %v2634, %v2649
      %v2662 = vadd.f32 %v2635, %v2649
      %v2663 = vadd.f32 %v2636, %v2649
      %v2664 = vadd.f32 %v2637, %v2649
      %v2665 = vadd.f32 %v2638, %v2649
      %v2666 = vadd.f32 %v2639, %v2649
      %v2667 = vadd.f32 %v2640, %v2649
      %v2668 = vadd.f32 %v2641, %v2649
      %v2669 = vadd.f32 %v2642, %v2649
      %v2670 = vadd.f32 %v2643, %v2649
      %v2671 = vadd.f32 %v2651, %v1739
      %v2672 = vadd.f32 %v2652, %v1740
      %v2673 = vadd.f32 %v2653, %v1741
      %v2674 = vadd.f32 %v2654, %v1742
      %v2675 = vadd.f32 %v2655, %v1743
      %v2676 = vadd.f32 %v2656, %v1744
      %v2677 = vadd.f32 %v2657, %v1745
      %v2678 = vadd.f32 %v2658, %v1746
      %v2679 = vadd.f32 %v2659, %v1747
      %v2680 = vadd.f32 %v2660, %v1748
      %v2681 = vadd.f32 %v2661, %v1749
      %v2682 = vadd.f32 %v2662, %v1750
      %v2683 = vadd.f32 %v2663, %v1751
      %v2684 = vadd.f32 %v2664, %v1752
      %v2685 = vadd.f32 %v2665, %v1753
      %v2686 = vadd.f32 %v2666, %v1754
      %v2687 = vadd.f32 %v2667, %v1755
      %v2688 = vadd.f32 %v2668, %v1756
      %v2689 = vadd.f32 %v2669, %v1757
      %v2690 = vadd.f32 %v2670, %v1758
      %v2691 = vmul.f32 %v2671, %v1642
      %v2692 = vmul.f32 %v2672, %v1647
      %v2693 = vmul.f32 %v2673, %v1652
      %v2694 = vmul.f32 %v2674, %v1657
      %v2695 = vmul.f32 %v2675, %v1662
      %v2696 = vmul.f32 %v2676, %v1667
      %v2697 = vmul.f32 %v2677, %v1672
      %v2698 = vmul.f32 %v2678, %v1677
      %v2699 = vmul.f32 %v2679, %v1682
      %v2700 = vmul.f32 %v2680, %v1687
      %v2701 = vmul.f32 %v2681, %v1692
      %v2702 = vmul.f32 %v2682, %v1697
      %v2703 = vmul.f32 %v2683, %v1702
      %v2704 = vmul.f32 %v2684, %v1707
      %v2705 = vmul.f32 %v2685, %v1712
      %v2706 = vmul.f32 %v2686, %v1717
      %v2707 = vmul.f32 %v2687, %v1722
      %v2708 = vmul.f32 %v2688, %v1727
      %v2709 = vmul.f32 %v2689, %v1732
      %v2710 = vmul.f32 %v2690, %v1737
      %v2711 = vpack.c.bf16 %v2692, %v2691
      %v2712 = vpack.c.bf16 %v2694, %v2693
      %v2713 = vpack.c.bf16 %v2696, %v2695
      %v2714 = vpack.c.bf16 %v2698, %v2697
      %v2715 = vpack.c.bf16 %v2700, %v2699
      %v2716 = vpack.c.bf16 %v2702, %v2701
      %v2717 = vpack.c.bf16 %v2704, %v2703
      %v2718 = vpack.c.bf16 %v2706, %v2705
      %v2719 = vpack.c.bf16 %v2708, %v2707
      %v2720 = vpack.c.bf16 %v2710, %v2709
      %v2721 = vld [vmem:[%s23] sm:$0xf]
      %v2722 = vld [vmem:[%s23 + $0x4] sm:$0xf]
      %v2723 = vld [vmem:[%s23 + $0x8] sm:$0xf]
      %v2724 = vld [vmem:[%s23 + $0xc] sm:$0xf]
      %v2725 = vld [vmem:[%s23 + $0x10] sm:$0xf]
      %v2726 = vld [vmem:[%s23 + $0x14] sm:$0xf]
      %v2727 = vld [vmem:[%s23 + $0x18] sm:$0xf]
      %v2728 = vld [vmem:[%s23 + $0x1c] sm:$0xf]
      %v2729 = vld [vmem:[%s23 + $0x20] sm:$0xf]
      %v2730 = vld [vmem:[%s23 + $0x24] sm:$0xf]
      %v2731 = vld [vmem:[%s23 + $0x28] sm:$0xf]
      %v2732 = vld [vmem:[%s23 + $0x2c] sm:$0xf]
      %v2733 = vld [vmem:[%s23 + $0x30] sm:$0xf]
      %v2734 = vld [vmem:[%s23 + $0x34] sm:$0xf]
      %v2735 = vld [vmem:[%s23 + $0x38] sm:$0xf]
      %v2736 = vld [vmem:[%s23 + $0x3c] sm:$0xf]
      %v2753 = vunpack.c.l.b16 %v2721
      %v2754 = vunpack.c.l.b16 %v2722
      %v2755 = vunpack.c.l.b16 %v2723
      %v2756 = vunpack.c.l.b16 %v2724
      %v2757 = vunpack.c.l.b16 %v2725
      %v2758 = vunpack.c.l.b16 %v2726
      %v2759 = vunpack.c.l.b16 %v2727
      %v2760 = vunpack.c.l.b16 %v2728
      %v2761 = vunpack.c.l.b16 %v2729
      %v2762 = vunpack.c.l.b16 %v2730
      %v2763 = vunpack.c.l.b16 %v2731
      %v2764 = vunpack.c.l.b16 %v2732
      %v2765 = vunpack.c.l.b16 %v2733
      %v2766 = vunpack.c.l.b16 %v2734
      %v2767 = vunpack.c.l.b16 %v2735
      %v2768 = vunpack.c.l.b16 %v2736
      %v2769 = vpack.c.b16 %v2754, %v2753
      %v2770 = vpack.c.b16 %v2756, %v2755
      %v2771 = vpack.c.b16 %v2758, %v2757
      %v2772 = vpack.c.b16 %v2760, %v2759
      %v2773 = vpack.c.b16 %v2762, %v2761
      %v2774 = vpack.c.b16 %v2764, %v2763
      %v2775 = vpack.c.b16 %v2766, %v2765
      %v2776 = vpack.c.b16 %v2768, %v2767
      %2785 = vmatprep.subr.bf16.mxu0 0
      %2786 = vmatpush1.bf16.msra.mxu0 %v2769
      %2787 = vmatprep.subr.bf16.mxu0 0
      %2788 = vmatpush1.bf16.msra.mxu0 %v2770
      %2789 = vmatprep.subr.bf16.mxu0 0
      %2790 = vmatpush1.bf16.msra.mxu0 %v2771
      %2791 = vmatprep.subr.bf16.mxu0 0
      %2792 = vmatpush1.bf16.msra.mxu0 %v2772
      %2793 = vmatprep.subr.bf16.mxu0 0
      %2794 = vmatpush1.bf16.msra.mxu0 %v2773
      %2795 = vmatprep.subr.bf16.mxu0 0
      %2796 = vmatpush1.bf16.msra.mxu0 %v2774
      %2797 = vmatprep.subr.bf16.mxu0 0
      %2798 = vmatpush1.bf16.msra.mxu0 %v2775
      %2799 = vmatprep.subr.bf16.mxu0 0
      %2800 = vmatpush1.bf16.msra.mxu0 %v2776
      %2801 = vmatprep.subr.bf16.mxu0 0
      %2802 = vmatpush1.bf16.msra.mxu0 0
      %2803 = vmatprep.subr.bf16.mxu0 0
      %2804 = vmatpush1.bf16.msra.mxu0 0
      %2805 = vmatprep.subr.bf16.mxu0 0
      %2806 = vmatpush1.bf16.msra.mxu0 0
      %2807 = vmatprep.subr.bf16.mxu0 0
      %2808 = vmatpush1.bf16.msra.mxu0 0
      %2809 = vmatprep.subr.bf16.mxu0 0
      %2810 = vmatpush1.bf16.msra.mxu0 0
      %2811 = vmatprep.subr.bf16.mxu0 0
      %2812 = vmatpush1.bf16.msra.mxu0 0
      %2813 = vmatprep.subr.bf16.mxu0 0
      %2814 = vmatpush1.bf16.msra.mxu0 0
      %2815 = vmatprep.subr.bf16.mxu0 0
      %2816 = vmatpush1.bf16.msra.mxu0 0
      %2817 = vmatprep.mubr.bf16.mxu0 0
      %2818 = vmatmul.mubr.bf16.gmra.mrb[0].mxu0 %v2711
      %v2819 = vpop.f32.mrb[0].mxu0
      %v2820 = vadd.f32 0.0, %v2819
      %v2821 = vpop.f32.mrb[0].mxu0
      %v2822 = vpop.f32.mrb[0].mxu0
      %v2823 = vadd.f32 0.0, %v2822
      %v2824 = vpop.f32.mrb[0].mxu0
      %2825 = vmatprep.mubr.bf16.mxu0 0
      %2826 = vmatmul.mubr.bf16.gmra.mrb[0].mxu0 %v2712
      %v2827 = vpop.f32.mrb[0].mxu0
      %v2828 = vadd.f32 0.0, %v2827
      %v2829 = vpop.f32.mrb[0].mxu0
      %v2830 = vpop.f32.mrb[0].mxu0
      %v2831 = vadd.f32 0.0, %v2830
      %v2832 = vpop.f32.mrb[0].mxu0
      %2833 = vmatprep.mubr.bf16.mxu0 0
      %2834 = vmatmul.mubr.bf16.gmra.mrb[0].mxu0 %v2713
      %v2835 = vpop.f32.mrb[0].mxu0
      %v2836 = vadd.f32 0.0, %v2835
      %v2837 = vpop.f32.mrb[0].mxu0
      %v2838 = vpop.f32.mrb[0].mxu0
      %v2839 = vadd.f32 0.0, %v2838
      %v2840 = vpop.f32.mrb[0].mxu0
      %2841 = vmatprep.mubr.bf16.mxu0 0
      %2842 = vmatmul.mubr.bf16.gmra.mrb[0].mxu0 %v2714
      %v2843 = vpop.f32.mrb[0].mxu0
      %v2844 = vadd.f32 0.0, %v2843
      %v2845 = vpop.f32.mrb[0].mxu0
      %v2846 = vpop.f32.mrb[0].mxu0
      %v2847 = vadd.f32 0.0, %v2846
      %v2848 = vpop.f32.mrb[0].mxu0
      %2849 = vmatprep.mubr.bf16.mxu0 0
      %2850 = vmatmul.mubr.bf16.gmra.mrb[0].mxu0 %v2715
      %v2851 = vpop.f32.mrb[0].mxu0
      %v2852 = vadd.f32 0.0, %v2851
      %v2853 = vpop.f32.mrb[0].mxu0
      %v2854 = vpop.f32.mrb[0].mxu0
      %v2855 = vadd.f32 0.0, %v2854
      %v2856 = vpop.f32.mrb[0].mxu0
      %2857 = vmatprep.mubr.bf16.mxu0 0
      %2858 = vmatmul.mubr.bf16.gmra.mrb[0].mxu0 %v2716
      %v2859 = vpop.f32.mrb[0].mxu0
      %v2860 = vadd.f32 0.0, %v2859
      %v2861 = vpop.f32.mrb[0].mxu0
      %v2862 = vpop.f32.mrb[0].mxu0
      %v2863 = vadd.f32 0.0, %v2862
      %v2864 = vpop.f32.mrb[0].mxu0
      %2865 = vmatprep.mubr.bf16.mxu0 0
      %2866 = vmatmul.mubr.bf16.gmra.mrb[0].mxu0 %v2717
      %v2867 = vpop.f32.mrb[0].mxu0
      %v2868 = vadd.f32 0.0, %v2867
      %v2869 = vpop.f32.mrb[0].mxu0
      %v2870 = vpop.f32.mrb[0].mxu0
      %v2871 = vadd.f32 0.0, %v2870
      %v2872 = vpop.f32.mrb[0].mxu0
      %2873 = vmatprep.mubr.bf16.mxu0 0
      %2874 = vmatmul.mubr.bf16.gmra.mrb[0].mxu0 %v2718
      %v2875 = vpop.f32.mrb[0].mxu0
      %v2876 = vadd.f32 0.0, %v2875
      %v2877 = vpop.f32.mrb[0].mxu0
      %v2878 = vpop.f32.mrb[0].mxu0
      %v2879 = vadd.f32 0.0, %v2878
      %v2880 = vpop.f32.mrb[0].mxu0
      %2881 = vmatprep.mubr.bf16.mxu0 0
      %2882 = vmatmul.mubr.bf16.gmra.mrb[0].mxu0 %v2719
      %v2883 = vpop.f32.mrb[0].mxu0
      %v2884 = vadd.f32 0.0, %v2883
      %v2885 = vpop.f32.mrb[0].mxu0
      %v2886 = vpop.f32.mrb[0].mxu0
      %v2887 = vadd.f32 0.0, %v2886
      %v2888 = vpop.f32.mrb[0].mxu0
      %2889 = vmatprep.mubr.bf16.mxu0 0
      %2890 = vmatmul.mubr.bf16.gmra.mrb[0].mxu0 %v2720
      %v2891 = vpop.f32.mrb[0].mxu0
      %v2892 = vadd.f32 0.0, %v2891
      %v2893 = vpop.f32.mrb[0].mxu0
      %v2894 = vpop.f32.mrb[0].mxu0
      %v2895 = vadd.f32 0.0, %v2894
      %v2896 = vpop.f32.mrb[0].mxu0
      %2897 = vdwg.mxu0
      %v2898 = vld [vmem:[%s25] sm:$0x1]
      %v2900 = vlaneseq
      %v2901 = vshrl.u32 %v2900, 7
      %v2902 = vsub.s32 0, %v2901
      %v2903 = vrot.slane %v2898, %v2902
      %v2905 = vmul.f32 %v2820, %v2903
      %v2906 = vmul.f32 %v2823, %v2903
      %v2907 = vmul.f32 %v2828, %v2903
      %v2908 = vmul.f32 %v2831, %v2903
      %v2909 = vmul.f32 %v2836, %v2903
      %v2910 = vmul.f32 %v2839, %v2903
      %v2911 = vmul.f32 %v2844, %v2903
      %v2912 = vmul.f32 %v2847, %v2903
      %v2913 = vmul.f32 %v2852, %v2903
      %v2914 = vmul.f32 %v2855, %v2903
      %v2915 = vmul.f32 %v2860, %v2903
      %v2916 = vmul.f32 %v2863, %v2903
      %v2917 = vmul.f32 %v2868, %v2903
      %v2918 = vmul.f32 %v2871, %v2903
      %v2919 = vmul.f32 %v2876, %v2903
      %v2920 = vmul.f32 %v2879, %v2903
      %v2921 = vmul.f32 %v2884, %v2903
      %v2922 = vmul.f32 %v2887, %v2903
      %v2923 = vmul.f32 %v2892, %v2903
      %v2924 = vmul.f32 %v2895, %v2903
      %v2925 = vld [vmem:[%s27] sm:$0x1]
      %v2927 = vlaneseq
      %v2928 = vshrl.u32 %v2927, 7
      %v2929 = vsub.s32 0, %v2928
      %v2930 = vrot.slane %v2925, %v2929
      %v2932 = vadd.f32 %v2905, %v2930
      %v2933 = vadd.f32 %v2906, %v2930
      %v2934 = vadd.f32 %v2907, %v2930
      %v2935 = vadd.f32 %v2908, %v2930
      %v2936 = vadd.f32 %v2909, %v2930
      %v2937 = vadd.f32 %v2910, %v2930
      %v2938 = vadd.f32 %v2911, %v2930
      %v2939 = vadd.f32 %v2912, %v2930
      %v2940 = vadd.f32 %v2913, %v2930
      %v2941 = vadd.f32 %v2914, %v2930
      %v2942 = vadd.f32 %v2915, %v2930
      %v2943 = vadd.f32 %v2916, %v2930
      %v2944 = vadd.f32 %v2917, %v2930
      %v2945 = vadd.f32 %v2918, %v2930
      %v2946 = vadd.f32 %v2919, %v2930
      %v2947 = vadd.f32 %v2920, %v2930
      %v2948 = vadd.f32 %v2921, %v2930
      %v2949 = vadd.f32 %v2922, %v2930
      %v2950 = vadd.f32 %v2923, %v2930
      %v2951 = vadd.f32 %v2924, %v2930
      %v2952 = vxor.u32 %v2932, 2147483648
      %v2953 = vxor.u32 %v2933, 2147483648
      %v2954 = vxor.u32 %v2934, 2147483648
      %v2955 = vxor.u32 %v2935, 2147483648
      %v2956 = vxor.u32 %v2936, 2147483648
      %v2957 = vxor.u32 %v2937, 2147483648
      %v2958 = vxor.u32 %v2938, 2147483648
      %v2959 = vxor.u32 %v2939, 2147483648
      %v2960 = vxor.u32 %v2940, 2147483648
      %v2961 = vxor.u32 %v2941, 2147483648
      %v2962 = vxor.u32 %v2942, 2147483648
      %v2963 = vxor.u32 %v2943, 2147483648
      %v2964 = vxor.u32 %v2944, 2147483648
      %v2965 = vxor.u32 %v2945, 2147483648
      %v2966 = vxor.u32 %v2946, 2147483648
      %v2967 = vxor.u32 %v2947, 2147483648
      %v2968 = vxor.u32 %v2948, 2147483648
      %v2969 = vxor.u32 %v2949, 2147483648
      %v2970 = vxor.u32 %v2950, 2147483648
      %v2971 = vxor.u32 %v2951, 2147483648
      %v2972 = vmul.f32 %v2952, 1.442695
      %v2973 = vpow.pop %v2972
      %v2974 = vmul.f32 %v2953, 1.442695
      %v2975 = vpow.pop %v2974
      %v2976 = vmul.f32 %v2954, 1.442695
      %v2977 = vpow.pop %v2976
      %v2978 = vmul.f32 %v2955, 1.442695
      %v2979 = vpow.pop %v2978
      %v2980 = vmul.f32 %v2956, 1.442695
      %v2981 = vpow.pop %v2980
      %v2982 = vmul.f32 %v2957, 1.442695
      %v2983 = vpow.pop %v2982
      %v2984 = vmul.f32 %v2958, 1.442695
      %v2985 = vpow.pop %v2984
      %v2986 = vmul.f32 %v2959, 1.442695
      %v2987 = vpow.pop %v2986
      %v2988 = vmul.f32 %v2960, 1.442695
      %v2989 = vpow.pop %v2988
      %v2990 = vmul.f32 %v2961, 1.442695
      %v2991 = vpow.pop %v2990
      %v2992 = vmul.f32 %v2962, 1.442695
      %v2993 = vpow.pop %v2992
      %v2994 = vmul.f32 %v2963, 1.442695
      %v2995 = vpow.pop %v2994
      %v2996 = vmul.f32 %v2964, 1.442695
      %v2997 = vpow.pop %v2996
      %v2998 = vmul.f32 %v2965, 1.442695
      %v2999 = vpow.pop %v2998
      %v3000 = vmul.f32 %v2966, 1.442695
      %v3001 = vpow.pop %v3000
      %v3002 = vmul.f32 %v2967, 1.442695
      %v3003 = vpow.pop %v3002
      %v3004 = vmul.f32 %v2968, 1.442695
      %v3005 = vpow.pop %v3004
      %v3006 = vmul.f32 %v2969, 1.442695
      %v3007 = vpow.pop %v3006
      %v3008 = vmul.f32 %v2970, 1.442695
      %v3009 = vpow.pop %v3008
      %v3010 = vmul.f32 %v2971, 1.442695
      %v3011 = vpow.pop %v3010
      %v3012 = vadd.f32 %v2973, 1.0
      %v3013 = vadd.f32 %v2975, 1.0
      %v3014 = vadd.f32 %v2977, 1.0
      %v3015 = vadd.f32 %v2979, 1.0
      %v3016 = vadd.f32 %v2981, 1.0
      %v3017 = vadd.f32 %v2983, 1.0
      %v3018 = vadd.f32 %v2985, 1.0
      %v3019 = vadd.f32 %v2987, 1.0
      %v3020 = vadd.f32 %v2989, 1.0
      %v3021 = vadd.f32 %v2991, 1.0
      %v3022 = vadd.f32 %v2993, 1.0
      %v3023 = vadd.f32 %v2995, 1.0
      %v3024 = vadd.f32 %v2997, 1.0
      %v3025 = vadd.f32 %v2999, 1.0
      %v3026 = vadd.f32 %v3001, 1.0
      %v3027 = vadd.f32 %v3003, 1.0
      %v3028 = vadd.f32 %v3005, 1.0
      %v3029 = vadd.f32 %v3007, 1.0
      %v3030 = vadd.f32 %v3009, 1.0
      %v3031 = vadd.f32 %v3011, 1.0
      %v3032 = vrcp.pop %v3012
      %v3033 = vmul.f32 1.0, %v3032
      %v3034 = vrcp.pop %v3013
      %v3035 = vmul.f32 1.0, %v3034
      %v3036 = vrcp.pop %v3014
      %v3037 = vmul.f32 1.0, %v3036
      %v3038 = vrcp.pop %v3015
      %v3039 = vmul.f32 1.0, %v3038
      %v3040 = vrcp.pop %v3016
      %v3041 = vmul.f32 1.0, %v3040
      %v3042 = vrcp.pop %v3017
      %v3043 = vmul.f32 1.0, %v3042
      %v3044 = vrcp.pop %v3018
      %v3045 = vmul.f32 1.0, %v3044
      %v3046 = vrcp.pop %v3019
      %v3047 = vmul.f32 1.0, %v3046
      %v3048 = vrcp.pop %v3020
      %v3049 = vmul.f32 1.0, %v3048
      %v3050 = vrcp.pop %v3021
      %v3051 = vmul.f32 1.0, %v3050
      %v3052 = vrcp.pop %v3022
      %v3053 = vmul.f32 1.0, %v3052
      %v3054 = vrcp.pop %v3023
      %v3055 = vmul.f32 1.0, %v3054
      %v3056 = vrcp.pop %v3024
      %v3057 = vmul.f32 1.0, %v3056
      %v3058 = vrcp.pop %v3025
      %v3059 = vmul.f32 1.0, %v3058
      %v3060 = vrcp.pop %v3026
      %v3061 = vmul.f32 1.0, %v3060
      %v3062 = vrcp.pop %v3027
      %v3063 = vmul.f32 1.0, %v3062
      %v3064 = vrcp.pop %v3028
      %v3065 = vmul.f32 1.0, %v3064
      %v3066 = vrcp.pop %v3029
      %v3067 = vmul.f32 1.0, %v3066
      %v3068 = vrcp.pop %v3030
      %v3069 = vmul.f32 1.0, %v3068
      %v3070 = vrcp.pop %v3031
      %v3071 = vmul.f32 1.0, %v3070
      %v3072 = vmul.f32 %v2932, %v3033
      %v3073 = vmul.f32 %v2933, %v3035
      %v3074 = vmul.f32 %v2934, %v3037
      %v3075 = vmul.f32 %v2935, %v3039
      %v3076 = vmul.f32 %v2936, %v3041
      %v3077 = vmul.f32 %v2937, %v3043
      %v3078 = vmul.f32 %v2938, %v3045
      %v3079 = vmul.f32 %v2939, %v3047
      %v3080 = vmul.f32 %v2940, %v3049
      %v3081 = vmul.f32 %v2941, %v3051
      %v3082 = vmul.f32 %v2942, %v3053
      %v3083 = vmul.f32 %v2943, %v3055
      %v3084 = vmul.f32 %v2944, %v3057
      %v3085 = vmul.f32 %v2945, %v3059
      %v3086 = vmul.f32 %v2946, %v3061
      %v3087 = vmul.f32 %v2947, %v3063
      %v3088 = vmul.f32 %v2948, %v3065
      %v3089 = vmul.f32 %v2949, %v3067
      %v3090 = vmul.f32 %v2950, %v3069
      %v3091 = vmul.f32 %v2951, %v3071
      %v3092 = vmul.f32 %v3072, %v1642
      %v3093 = vmul.f32 %v3073, %v1647
      %v3094 = vmul.f32 %v3074, %v1652
      %v3095 = vmul.f32 %v3075, %v1657
      %v3096 = vmul.f32 %v3076, %v1662
      %v3097 = vmul.f32 %v3077, %v1667
      %v3098 = vmul.f32 %v3078, %v1672
      %v3099 = vmul.f32 %v3079, %v1677
      %v3100 = vmul.f32 %v3080, %v1682
      %v3101 = vmul.f32 %v3081, %v1687
      %v3102 = vmul.f32 %v3082, %v1692
      %v3103 = vmul.f32 %v3083, %v1697
      %v3104 = vmul.f32 %v3084, %v1702
      %v3105 = vmul.f32 %v3085, %v1707
      %v3106 = vmul.f32 %v3086, %v1712
      %v3107 = vmul.f32 %v3087, %v1717
      %v3108 = vmul.f32 %v3088, %v1722
      %v3109 = vmul.f32 %v3089, %v1727
      %v3110 = vmul.f32 %v3090, %v1732
      %v3111 = vmul.f32 %v3091, %v1737
      %3112 = vst [vmem:[#allocation2 + $0x20] sm:$0xff] %v3092
      %3113 = vst [vmem:[#allocation2 + $0x28] sm:$0xff] %v3093
      %3114 = vst [vmem:[#allocation2 + $0x30] sm:$0xff] %v3094
      %3115 = vst [vmem:[#allocation2 + $0x38] sm:$0xff] %v3095
      %3116 = vst [vmem:[#allocation2 + $0x40] sm:$0xff] %v3096
      %3117 = vst [vmem:[#allocation2 + $0x48] sm:$0xff] %v3097
      %3118 = vst [vmem:[#allocation2 + $0x50] sm:$0xff] %v3098
      %3119 = vst [vmem:[#allocation2 + $0x58] sm:$0xff] %v3099
      %3120 = vst [vmem:[#allocation2 + $0x60] sm:$0xff] %v3100
      %3121 = vst [vmem:[#allocation2 + $0x68] sm:$0xff] %v3101
      %3122 = vst [vmem:[#allocation2 + $0x70] sm:$0xff] %v3102
      %3123 = vst [vmem:[#allocation2 + $0x78] sm:$0xff] %v3103
      %3124 = vst [vmem:[#allocation2 + $0x80] sm:$0xff] %v3104
      %3125 = vst [vmem:[#allocation2 + $0x88] sm:$0xff] %v3105
      %3126 = vst [vmem:[#allocation2 + $0x90] sm:$0xff] %v3106
      %3127 = vst [vmem:[#allocation2 + $0x98] sm:$0xff] %v3107
      %3128 = vst [vmem:[#allocation2 + $0xa0] sm:$0xff] %v3108
      %3129 = vst [vmem:[#allocation2 + $0xa8] sm:$0xff] %v3109
      %3130 = vst [vmem:[#allocation2 + $0xb0] sm:$0xff] %v3110
      %3131 = vst [vmem:[#allocation2 + $0xb8] sm:$0xff] %v3111
      %v3132 = vld [vmem:[#allocation2 + $0xf] sm:$0xff]
      %v3133 = vld [vmem:[#allocation2 + $0x17] sm:$0xff]
      %v3134 = vld [vmem:[#allocation2 + $0x1f] sm:$0xff]
      %v3135 = vld [vmem:[#allocation2 + $0x27] sm:$0xff]
      %v3136 = vld [vmem:[#allocation2 + $0x2f] sm:$0xff]
      %v3137 = vld [vmem:[#allocation2 + $0x37] sm:$0xff]
      %v3138 = vld [vmem:[#allocation2 + $0x3f] sm:$0xff]
      %v3139 = vld [vmem:[#allocation2 + $0x47] sm:$0xff]
      %v3140 = vld [vmem:[#allocation2 + $0x4f] sm:$0xff]
      %v3141 = vld [vmem:[#allocation2 + $0x57] sm:$0xff]
      %v3142 = vld [vmem:[#allocation2 + $0x5f] sm:$0xff]
      %v3143 = vld [vmem:[#allocation2 + $0x67] sm:$0xff]
      %v3144 = vld [vmem:[#allocation2 + $0x6f] sm:$0xff]
      %v3145 = vld [vmem:[#allocation2 + $0x77] sm:$0xff]
      %v3146 = vld [vmem:[#allocation2 + $0x7f] sm:$0xff]
      %v3147 = vld [vmem:[#allocation2 + $0x87] sm:$0xff]
      %v3148 = vld [vmem:[#allocation2 + $0x8f] sm:$0xff]
      %v3149 = vld [vmem:[#allocation2 + $0x97] sm:$0xff]
      %v3150 = vld [vmem:[#allocation2 + $0x9f] sm:$0xff]
      %v3151 = vld [vmem:[#allocation2 + $0xa7] sm:$0xff]
      %v3152 = vld [vmem:[%s29] sm:$0x1]
      %v3153 = vlaneseq
      %v3154 = vshrl.u32 %v3153, 7
      %v3155 = vsub.s32 0, %v3154
      %v3156 = vrot.slane %v3152, %v3155
      %v3157 = vmul.f32 %v3132, %v3156
      %v3158 = vmul.f32 %v3133, %v3156
      %v3159 = vmul.f32 %v3134, %v3156
      %v3160 = vmul.f32 %v3135, %v3156
      %v3161 = vmul.f32 %v3136, %v3156
      %v3162 = vmul.f32 %v3137, %v3156
      %v3163 = vmul.f32 %v3138, %v3156
      %v3164 = vmul.f32 %v3139, %v3156
      %v3165 = vmul.f32 %v3140, %v3156
      %v3166 = vmul.f32 %v3141, %v3156
      %v3167 = vmul.f32 %v3142, %v3156
      %v3168 = vmul.f32 %v3143, %v3156
      %v3169 = vmul.f32 %v3144, %v3156
      %v3170 = vmul.f32 %v3145, %v3156
      %v3171 = vmul.f32 %v3146, %v3156
      %v3172 = vmul.f32 %v3147, %v3156
      %v3173 = vmul.f32 %v3148, %v3156
      %v3174 = vmul.f32 %v3149, %v3156
      %v3175 = vmul.f32 %v3150, %v3156
      %v3176 = vmul.f32 %v3151, %v3156
      %v3177 = vld [vmem:[#allocation2 + $0x10] sm:$0xff]
      %v3178 = vld [vmem:[#allocation2 + $0x18] sm:$0xff]
      %v3179 = vld [vmem:[#allocation2 + $0x20] sm:$0xff]
      %v3180 = vld [vmem:[#allocation2 + $0x28] sm:$0xff]
      %v3181 = vld [vmem:[#allocation2 + $0x30] sm:$0xff]
      %v3182 = vld [vmem:[#allocation2 + $0x38] sm:$0xff]
      %v3183 = vld [vmem:[#allocation2 + $0x40] sm:$0xff]
      %v3184 = vld [vmem:[#allocation2 + $0x48] sm:$0xff]
      %v3185 = vld [vmem:[#allocation2 + $0x50] sm:$0xff]
      %v3186 = vld [vmem:[#allocation2 + $0x58] sm:$0xff]
      %v3187 = vld [vmem:[#allocation2 + $0x60] sm:$0xff]
      %v3188 = vld [vmem:[#allocation2 + $0x68] sm:$0xff]
      %v3189 = vld [vmem:[#allocation2 + $0x70] sm:$0xff]
      %v3190 = vld [vmem:[#allocation2 + $0x78] sm:$0xff]
      %v3191 = vld [vmem:[#allocation2 + $0x80] sm:$0xff]
      %v3192 = vld [vmem:[#allocation2 + $0x88] sm:$0xff]
      %v3193 = vld [vmem:[#allocation2 + $0x90] sm:$0xff]
      %v3194 = vld [vmem:[#allocation2 + $0x98] sm:$0xff]
      %v3195 = vld [vmem:[#allocation2 + $0xa0] sm:$0xff]
      %v3196 = vld [vmem:[#allocation2 + $0xa8] sm:$0xff]
      %v3197 = vld [vmem:[%s29 + $0x1] sm:$0x1]
      %v3198 = vlaneseq
      %v3199 = vshrl.u32 %v3198, 7
      %v3200 = vsub.s32 0, %v3199
      %v3201 = vrot.slane %v3197, %v3200
      %v3202 = vmul.f32 %v3177, %v3201
      %v3203 = vmul.f32 %v3178, %v3201
      %v3204 = vmul.f32 %v3179, %v3201
      %v3205 = vmul.f32 %v3180, %v3201
      %v3206 = vmul.f32 %v3181, %v3201
      %v3207 = vmul.f32 %v3182, %v3201
      %v3208 = vmul.f32 %v3183, %v3201
      %v3209 = vmul.f32 %v3184, %v3201
      %v3210 = vmul.f32 %v3185, %v3201
      %v3211 = vmul.f32 %v3186, %v3201
      %v3212 = vmul.f32 %v3187, %v3201
      %v3213 = vmul.f32 %v3188, %v3201
      %v3214 = vmul.f32 %v3189, %v3201
      %v3215 = vmul.f32 %v3190, %v3201
      %v3216 = vmul.f32 %v3191, %v3201
      %v3217 = vmul.f32 %v3192, %v3201
      %v3218 = vmul.f32 %v3193, %v3201
      %v3219 = vmul.f32 %v3194, %v3201
      %v3220 = vmul.f32 %v3195, %v3201
      %v3221 = vmul.f32 %v3196, %v3201
      %v3222 = vadd.f32 %v3157, %v3202
      %v3223 = vadd.f32 %v3158, %v3203
      %v3224 = vadd.f32 %v3159, %v3204
      %v3225 = vadd.f32 %v3160, %v3205
      %v3226 = vadd.f32 %v3161, %v3206
      %v3227 = vadd.f32 %v3162, %v3207
      %v3228 = vadd.f32 %v3163, %v3208
      %v3229 = vadd.f32 %v3164, %v3209
      %v3230 = vadd.f32 %v3165, %v3210
      %v3231 = vadd.f32 %v3166, %v3211
      %v3232 = vadd.f32 %v3167, %v3212
      %v3233 = vadd.f32 %v3168, %v3213
      %v3234 = vadd.f32 %v3169, %v3214
      %v3235 = vadd.f32 %v3170, %v3215
      %v3236 = vadd.f32 %v3171, %v3216
      %v3237 = vadd.f32 %v3172, %v3217
      %v3238 = vadd.f32 %v3173, %v3218
      %v3239 = vadd.f32 %v3174, %v3219
      %v3240 = vadd.f32 %v3175, %v3220
      %v3241 = vadd.f32 %v3176, %v3221
      %v3242 = vld [vmem:[#allocation2 + $0x11] sm:$0xff]
      %v3243 = vld [vmem:[#allocation2 + $0x19] sm:$0xff]
      %v3244 = vld [vmem:[#allocation2 + $0x21] sm:$0xff]
      %v3245 = vld [vmem:[#allocation2 + $0x29] sm:$0xff]
      %v3246 = vld [vmem:[#allocation2 + $0x31] sm:$0xff]
      %v3247 = vld [vmem:[#allocation2 + $0x39] sm:$0xff]
      %v3248 = vld [vmem:[#allocation2 + $0x41] sm:$0xff]
      %v3249 = vld [vmem:[#allocation2 + $0x49] sm:$0xff]
      %v3250 = vld [vmem:[#allocation2 + $0x51] sm:$0xff]
      %v3251 = vld [vmem:[#allocation2 + $0x59] sm:$0xff]
      %v3252 = vld [vmem:[#allocation2 + $0x61] sm:$0xff]
      %v3253 = vld [vmem:[#allocation2 + $0x69] sm:$0xff]
      %v3254 = vld [vmem:[#allocation2 + $0x71] sm:$0xff]
      %v3255 = vld [vmem:[#allocation2 + $0x79] sm:$0xff]
      %v3256 = vld [vmem:[#allocation2 + $0x81] sm:$0xff]
      %v3257 = vld [vmem:[#allocation2 + $0x89] sm:$0xff]
      %v3258 = vld [vmem:[#allocation2 + $0x91] sm:$0xff]
      %v3259 = vld [vmem:[#allocation2 + $0x99] sm:$0xff]
      %v3260 = vld [vmem:[#allocation2 + $0xa1] sm:$0xff]
      %v3261 = vld [vmem:[#allocation2 + $0xa9] sm:$0xff]
      %v3262 = vld [vmem:[%s29 + $0x2] sm:$0x1]
      %v3263 = vlaneseq
      %v3264 = vshrl.u32 %v3263, 7
      %v3265 = vsub.s32 0, %v3264
      %v3266 = vrot.slane %v3262, %v3265
      %v3267 = vmul.f32 %v3242, %v3266
      %v3268 = vmul.f32 %v3243, %v3266
      %v3269 = vmul.f32 %v3244, %v3266
      %v3270 = vmul.f32 %v3245, %v3266
      %v3271 = vmul.f32 %v3246, %v3266
      %v3272 = vmul.f32 %v3247, %v3266
      %v3273 = vmul.f32 %v3248, %v3266
      %v3274 = vmul.f32 %v3249, %v3266
      %v3275 = vmul.f32 %v3250, %v3266
      %v3276 = vmul.f32 %v3251, %v3266
      %v3277 = vmul.f32 %v3252, %v3266
      %v3278 = vmul.f32 %v3253, %v3266
      %v3279 = vmul.f32 %v3254, %v3266
      %v3280 = vmul.f32 %v3255, %v3266
      %v3281 = vmul.f32 %v3256, %v3266
      %v3282 = vmul.f32 %v3257, %v3266
      %v3283 = vmul.f32 %v3258, %v3266
      %v3284 = vmul.f32 %v3259, %v3266
      %v3285 = vmul.f32 %v3260, %v3266
      %v3286 = vmul.f32 %v3261, %v3266
      %v3287 = vadd.f32 %v3222, %v3267
      %v3288 = vadd.f32 %v3223, %v3268
      %v3289 = vadd.f32 %v3224, %v3269
      %v3290 = vadd.f32 %v3225, %v3270
      %v3291 = vadd.f32 %v3226, %v3271
      %v3292 = vadd.f32 %v3227, %v3272
      %v3293 = vadd.f32 %v3228, %v3273
      %v3294 = vadd.f32 %v3229, %v3274
      %v3295 = vadd.f32 %v3230, %v3275
      %v3296 = vadd.f32 %v3231, %v3276
      %v3297 = vadd.f32 %v3232, %v3277
      %v3298 = vadd.f32 %v3233, %v3278
      %v3299 = vadd.f32 %v3234, %v3279
      %v3300 = vadd.f32 %v3235, %v3280
      %v3301 = vadd.f32 %v3236, %v3281
      %v3302 = vadd.f32 %v3237, %v3282
      %v3303 = vadd.f32 %v3238, %v3283
      %v3304 = vadd.f32 %v3239, %v3284
      %v3305 = vadd.f32 %v3240, %v3285
      %v3306 = vadd.f32 %v3241, %v3286
      %v3307 = vld [vmem:[#allocation2 + $0xaf] sm:$0xff]
      %v3308 = vld [vmem:[#allocation2 + $0xb7] sm:$0xff]
      %v3309 = vld [vmem:[%s29 + $0x3] sm:$0x1]
      %v3310 = vlaneseq
      %v3311 = vshrl.u32 %v3310, 7
      %v3312 = vsub.s32 0, %v3311
      %v3313 = vrot.slane %v3309, %v3312
      %v3314 = vmul.f32 %v3134, %v3313
      %v3315 = vmul.f32 %v3135, %v3313
      %v3316 = vmul.f32 %v3136, %v3313
      %v3317 = vmul.f32 %v3137, %v3313
      %v3318 = vmul.f32 %v3138, %v3313
      %v3319 = vmul.f32 %v3139, %v3313
      %v3320 = vmul.f32 %v3140, %v3313
      %v3321 = vmul.f32 %v3141, %v3313
      %v3322 = vmul.f32 %v3142, %v3313
      %v3323 = vmul.f32 %v3143, %v3313
      %v3324 = vmul.f32 %v3144, %v3313
      %v3325 = vmul.f32 %v3145, %v3313
      %v3326 = vmul.f32 %v3146, %v3313
      %v3327 = vmul.f32 %v3147, %v3313
      %v3328 = vmul.f32 %v3148, %v3313
      %v3329 = vmul.f32 %v3149, %v3313
      %v3330 = vmul.f32 %v3150, %v3313
      %v3331 = vmul.f32 %v3151, %v3313
      %v3332 = vmul.f32 %v3307, %v3313
      %v3333 = vmul.f32 %v3308, %v3313
      %v3334 = vadd.f32 %v3287, %v3314
      %v3335 = vadd.f32 %v3288, %v3315
      %v3336 = vadd.f32 %v3289, %v3316
      %v3337 = vadd.f32 %v3290, %v3317
      %v3338 = vadd.f32 %v3291, %v3318
      %v3339 = vadd.f32 %v3292, %v3319
      %v3340 = vadd.f32 %v3293, %v3320
      %v3341 = vadd.f32 %v3294, %v3321
      %v3342 = vadd.f32 %v3295, %v3322
      %v3343 = vadd.f32 %v3296, %v3323
      %v3344 = vadd.f32 %v3297, %v3324
      %v3345 = vadd.f32 %v3298, %v3325
      %v3346 = vadd.f32 %v3299, %v3326
      %v3347 = vadd.f32 %v3300, %v3327
      %v3348 = vadd.f32 %v3301, %v3328
      %v3349 = vadd.f32 %v3302, %v3329
      %v3350 = vadd.f32 %v3303, %v3330
      %v3351 = vadd.f32 %v3304, %v3331
      %v3352 = vadd.f32 %v3305, %v3332
      %v3353 = vadd.f32 %v3306, %v3333
      %v3354 = vld [vmem:[#allocation2 + $0xb0] sm:$0xff]
      %v3355 = vld [vmem:[#allocation2 + $0xb8] sm:$0xff]
      %v3356 = vld [vmem:[%s29 + $0x4] sm:$0x1]
      %v3357 = vlaneseq
      %v3358 = vshrl.u32 %v3357, 7
      %v3359 = vsub.s32 0, %v3358
      %v3360 = vrot.slane %v3356, %v3359
      %v3361 = vmul.f32 %v3179, %v3360
      %v3362 = vmul.f32 %v3180, %v3360
      %v3363 = vmul.f32 %v3181, %v3360
      %v3364 = vmul.f32 %v3182, %v3360
      %v3365 = vmul.f32 %v3183, %v3360
      %v3366 = vmul.f32 %v3184, %v3360
      %v3367 = vmul.f32 %v3185, %v3360
      %v3368 = vmul.f32 %v3186, %v3360
      %v3369 = vmul.f32 %v3187, %v3360
      %v3370 = vmul.f32 %v3188, %v3360
      %v3371 = vmul.f32 %v3189, %v3360
      %v3372 = vmul.f32 %v3190, %v3360
      %v3373 = vmul.f32 %v3191, %v3360
      %v3374 = vmul.f32 %v3192, %v3360
      %v3375 = vmul.f32 %v3193, %v3360
      %v3376 = vmul.f32 %v3194, %v3360
      %v3377 = vmul.f32 %v3195, %v3360
      %v3378 = vmul.f32 %v3196, %v3360
      %v3379 = vmul.f32 %v3354, %v3360
      %v3380 = vmul.f32 %v3355, %v3360
      %v3381 = vadd.f32 %v3334, %v3361
      %v3382 = vadd.f32 %v3335, %v3362
      %v3383 = vadd.f32 %v3336, %v3363
      %v3384 = vadd.f32 %v3337, %v3364
      %v3385 = vadd.f32 %v3338, %v3365
      %v3386 = vadd.f32 %v3339, %v3366
      %v3387 = vadd.f32 %v3340, %v3367
      %v3388 = vadd.f32 %v3341, %v3368
      %v3389 = vadd.f32 %v3342, %v3369
      %v3390 = vadd.f32 %v3343, %v3370
      %v3391 = vadd.f32 %v3344, %v3371
      %v3392 = vadd.f32 %v3345, %v3372
      %v3393 = vadd.f32 %v3346, %v3373
      %v3394 = vadd.f32 %v3347, %v3374
      %v3395 = vadd.f32 %v3348, %v3375
      %v3396 = vadd.f32 %v3349, %v3376
      %v3397 = vadd.f32 %v3350, %v3377
      %v3398 = vadd.f32 %v3351, %v3378
      %v3399 = vadd.f32 %v3352, %v3379
      %v3400 = vadd.f32 %v3353, %v3380
      %v3401 = vld [vmem:[#allocation2 + $0xb1] sm:$0xff]
      %v3402 = vld [vmem:[#allocation2 + $0xb9] sm:$0xff]
      %v3403 = vld [vmem:[%s29 + $0x5] sm:$0x1]
      %v3404 = vlaneseq
      %v3405 = vshrl.u32 %v3404, 7
      %v3406 = vsub.s32 0, %v3405
      %v3407 = vrot.slane %v3403, %v3406
      %v3408 = vmul.f32 %v3244, %v3407
      %v3409 = vmul.f32 %v3245, %v3407
      %v3410 = vmul.f32 %v3246, %v3407
      %v3411 = vmul.f32 %v3247, %v3407
      %v3412 = vmul.f32 %v3248, %v3407
      %v3413 = vmul.f32 %v3249, %v3407
      %v3414 = vmul.f32 %v3250, %v3407
      %v3415 = vmul.f32 %v3251, %v3407
      %v3416 = vmul.f32 %v3252, %v3407
      %v3417 = vmul.f32 %v3253, %v3407
      %v3418 = vmul.f32 %v3254, %v3407
      %v3419 = vmul.f32 %v3255, %v3407
      %v3420 = vmul.f32 %v3256, %v3407
      %v3421 = vmul.f32 %v3257, %v3407
      %v3422 = vmul.f32 %v3258, %v3407
      %v3423 = vmul.f32 %v3259, %v3407
      %v3424 = vmul.f32 %v3260, %v3407
      %v3425 = vmul.f32 %v3261, %v3407
      %v3426 = vmul.f32 %v3401, %v3407
      %v3427 = vmul.f32 %v3402, %v3407
      %v3428 = vadd.f32 %v3381, %v3408
      %v3429 = vadd.f32 %v3382, %v3409
      %v3430 = vadd.f32 %v3383, %v3410
      %v3431 = vadd.f32 %v3384, %v3411
      %v3432 = vadd.f32 %v3385, %v3412
      %v3433 = vadd.f32 %v3386, %v3413
      %v3434 = vadd.f32 %v3387, %v3414
      %v3435 = vadd.f32 %v3388, %v3415
      %v3436 = vadd.f32 %v3389, %v3416
      %v3437 = vadd.f32 %v3390, %v3417
      %v3438 = vadd.f32 %v3391, %v3418
      %v3439 = vadd.f32 %v3392, %v3419
      %v3440 = vadd.f32 %v3393, %v3420
      %v3441 = vadd.f32 %v3394, %v3421
      %v3442 = vadd.f32 %v3395, %v3422
      %v3443 = vadd.f32 %v3396, %v3423
      %v3444 = vadd.f32 %v3397, %v3424
      %v3445 = vadd.f32 %v3398, %v3425
      %v3446 = vadd.f32 %v3399, %v3426
      %v3447 = vadd.f32 %v3400, %v3427
      %v3448 = vld [vmem:[#allocation2 + $0xbf] sm:$0xff]
      %v3449 = vld [vmem:[#allocation2 + $0xc7] sm:$0xff]
      %v3450 = vld [vmem:[%s29 + $0x6] sm:$0x1]
      %v3451 = vlaneseq
      %v3452 = vshrl.u32 %v3451, 7
      %v3453 = vsub.s32 0, %v3452
      %v3454 = vrot.slane %v3450, %v3453
      %v3455 = vmul.f32 %v3136, %v3454
      %v3456 = vmul.f32 %v3137, %v3454
      %v3457 = vmul.f32 %v3138, %v3454
      %v3458 = vmul.f32 %v3139, %v3454
      %v3459 = vmul.f32 %v3140, %v3454
      %v3460 = vmul.f32 %v3141, %v3454
      %v3461 = vmul.f32 %v3142, %v3454
      %v3462 = vmul.f32 %v3143, %v3454
      %v3463 = vmul.f32 %v3144, %v3454
      %v3464 = vmul.f32 %v3145, %v3454
      %v3465 = vmul.f32 %v3146, %v3454
      %v3466 = vmul.f32 %v3147, %v3454
      %v3467 = vmul.f32 %v3148, %v3454
      %v3468 = vmul.f32 %v3149, %v3454
      %v3469 = vmul.f32 %v3150, %v3454
      %v3470 = vmul.f32 %v3151, %v3454
      %v3471 = vmul.f32 %v3307, %v3454
      %v3472 = vmul.f32 %v3308, %v3454
      %v3473 = vmul.f32 %v3448, %v3454
      %v3474 = vmul.f32 %v3449, %v3454
      %v3475 = vadd.f32 %v3428, %v3455
      %v3476 = vadd.f32 %v3429, %v3456
      %v3477 = vadd.f32 %v3430, %v3457
      %v3478 = vadd.f32 %v3431, %v3458
      %v3479 = vadd.f32 %v3432, %v3459
      %v3480 = vadd.f32 %v3433, %v3460
      %v3481 = vadd.f32 %v3434, %v3461
      %v3482 = vadd.f32 %v3435, %v3462
      %v3483 = vadd.f32 %v3436, %v3463
      %v3484 = vadd.f32 %v3437, %v3464
      %v3485 = vadd.f32 %v3438, %v3465
      %v3486 = vadd.f32 %v3439, %v3466
      %v3487 = vadd.f32 %v3440, %v3467
      %v3488 = vadd.f32 %v3441, %v3468
      %v3489 = vadd.f32 %v3442, %v3469
      %v3490 = vadd.f32 %v3443, %v3470
      %v3491 = vadd.f32 %v3444, %v3471
      %v3492 = vadd.f32 %v3445, %v3472
      %v3493 = vadd.f32 %v3446, %v3473
      %v3494 = vadd.f32 %v3447, %v3474
      %v3495 = vld [vmem:[#allocation2 + $0xc0] sm:$0xff]
      %v3496 = vld [vmem:[#allocation2 + $0xc8] sm:$0xff]
      %v3497 = vld [vmem:[%s29 + $0x7] sm:$0x1]
      %v3498 = vlaneseq
      %v3499 = vshrl.u32 %v3498, 7
      %v3500 = vsub.s32 0, %v3499
      %v3501 = vrot.slane %v3497, %v3500
      %v3502 = vmul.f32 %v3181, %v3501
      %v3503 = vmul.f32 %v3182, %v3501
      %v3504 = vmul.f32 %v3183, %v3501
      %v3505 = vmul.f32 %v3184, %v3501
      %v3506 = vmul.f32 %v3185, %v3501
      %v3507 = vmul.f32 %v3186, %v3501
      %v3508 = vmul.f32 %v3187, %v3501
      %v3509 = vmul.f32 %v3188, %v3501
      %v3510 = vmul.f32 %v3189, %v3501
      %v3511 = vmul.f32 %v3190, %v3501
      %v3512 = vmul.f32 %v3191, %v3501
      %v3513 = vmul.f32 %v3192, %v3501
      %v3514 = vmul.f32 %v3193, %v3501
      %v3515 = vmul.f32 %v3194, %v3501
      %v3516 = vmul.f32 %v3195, %v3501
      %v3517 = vmul.f32 %v3196, %v3501
      %v3518 = vmul.f32 %v3354, %v3501
      %v3519 = vmul.f32 %v3355, %v3501
      %v3520 = vmul.f32 %v3495, %v3501
      %v3521 = vmul.f32 %v3496, %v3501
      %v3522 = vadd.f32 %v3475, %v3502
      %v3523 = vadd.f32 %v3476, %v3503
      %v3524 = vadd.f32 %v3477, %v3504
      %v3525 = vadd.f32 %v3478, %v3505
      %v3526 = vadd.f32 %v3479, %v3506
      %v3527 = vadd.f32 %v3480, %v3507
      %v3528 = vadd.f32 %v3481, %v3508
      %v3529 = vadd.f32 %v3482, %v3509
      %v3530 = vadd.f32 %v3483, %v3510
      %v3531 = vadd.f32 %v3484, %v3511
      %v3532 = vadd.f32 %v3485, %v3512
      %v3533 = vadd.f32 %v3486, %v3513
      %v3534 = vadd.f32 %v3487, %v3514
      %v3535 = vadd.f32 %v3488, %v3515
      %v3536 = vadd.f32 %v3489, %v3516
      %v3537 = vadd.f32 %v3490, %v3517
      %v3538 = vadd.f32 %v3491, %v3518
      %v3539 = vadd.f32 %v3492, %v3519
      %v3540 = vadd.f32 %v3493, %v3520
      %v3541 = vadd.f32 %v3494, %v3521
      %v3542 = vld [vmem:[#allocation2 + $0xc1] sm:$0xff]
      %v3543 = vld [vmem:[#allocation2 + $0xc9] sm:$0xff]
      %v3544 = vld [vmem:[%s29 + $0x8] sm:$0x1]
      %v3545 = vlaneseq
      %v3546 = vshrl.u32 %v3545, 7
      %v3547 = vsub.s32 0, %v3546
      %v3548 = vrot.slane %v3544, %v3547
      %v3549 = vmul.f32 %v3246, %v3548
      %v3550 = vmul.f32 %v3247, %v3548
      %v3551 = vmul.f32 %v3248, %v3548
      %v3552 = vmul.f32 %v3249, %v3548
      %v3553 = vmul.f32 %v3250, %v3548
      %v3554 = vmul.f32 %v3251, %v3548
      %v3555 = vmul.f32 %v3252, %v3548
      %v3556 = vmul.f32 %v3253, %v3548
      %v3557 = vmul.f32 %v3254, %v3548
      %v3558 = vmul.f32 %v3255, %v3548
      %v3559 = vmul.f32 %v3256, %v3548
      %v3560 = vmul.f32 %v3257, %v3548
      %v3561 = vmul.f32 %v3258, %v3548
      %v3562 = vmul.f32 %v3259, %v3548
      %v3563 = vmul.f32 %v3260, %v3548
      %v3564 = vmul.f32 %v3261, %v3548
      %v3565 = vmul.f32 %v3401, %v3548
      %v3566 = vmul.f32 %v3402, %v3548
      %v3567 = vmul.f32 %v3542, %v3548
      %v3568 = vmul.f32 %v3543, %v3548
      %v3569 = vadd.f32 %v3522, %v3549
      %v3570 = vadd.f32 %v3523, %v3550
      %v3571 = vadd.f32 %v3524, %v3551
      %v3572 = vadd.f32 %v3525, %v3552
      %v3573 = vadd.f32 %v3526, %v3553
      %v3574 = vadd.f32 %v3527, %v3554
      %v3575 = vadd.f32 %v3528, %v3555
      %v3576 = vadd.f32 %v3529, %v3556
      %v3577 = vadd.f32 %v3530, %v3557
      %v3578 = vadd.f32 %v3531, %v3558
      %v3579 = vadd.f32 %v3532, %v3559
      %v3580 = vadd.f32 %v3533, %v3560
      %v3581 = vadd.f32 %v3534, %v3561
      %v3582 = vadd.f32 %v3535, %v3562
      %v3583 = vadd.f32 %v3536, %v3563
      %v3584 = vadd.f32 %v3537, %v3564
      %v3585 = vadd.f32 %v3538, %v3565
      %v3586 = vadd.f32 %v3539, %v3566
      %v3587 = vadd.f32 %v3540, %v3567
      %v3588 = vadd.f32 %v3541, %v3568
      %v3589 = vld [vmem:[%s31] sm:$0x1]
      %v3591 = vlaneseq
      %v3592 = vshrl.u32 %v3591, 7
      %v3593 = vsub.s32 0, %v3592
      %v3594 = vrot.slane %v3589, %v3593
      %v3596 = vmul.f32 %v3569, %v3594
      %v3597 = vmul.f32 %v3570, %v3594
      %v3598 = vmul.f32 %v3571, %v3594
      %v3599 = vmul.f32 %v3572, %v3594
      %v3600 = vmul.f32 %v3573, %v3594
      %v3601 = vmul.f32 %v3574, %v3594
      %v3602 = vmul.f32 %v3575, %v3594
      %v3603 = vmul.f32 %v3576, %v3594
      %v3604 = vmul.f32 %v3577, %v3594
      %v3605 = vmul.f32 %v3578, %v3594
      %v3606 = vmul.f32 %v3579, %v3594
      %v3607 = vmul.f32 %v3580, %v3594
      %v3608 = vmul.f32 %v3581, %v3594
      %v3609 = vmul.f32 %v3582, %v3594
      %v3610 = vmul.f32 %v3583, %v3594
      %v3611 = vmul.f32 %v3584, %v3594
      %v3612 = vmul.f32 %v3585, %v3594
      %v3613 = vmul.f32 %v3586, %v3594
      %v3614 = vmul.f32 %v3587, %v3594
      %v3615 = vmul.f32 %v3588, %v3594
      %v3616 = vld [vmem:[%s33] sm:$0x1]
      %v3618 = vlaneseq
      %v3619 = vshrl.u32 %v3618, 7
      %v3620 = vsub.s32 0, %v3619
      %v3621 = vrot.slane %v3616, %v3620
      %v3623 = vadd.f32 %v3596, %v3621
      %v3624 = vadd.f32 %v3597, %v3621
      %v3625 = vadd.f32 %v3598, %v3621
      %v3626 = vadd.f32 %v3599, %v3621
      %v3627 = vadd.f32 %v3600, %v3621
      %v3628 = vadd.f32 %v3601, %v3621
      %v3629 = vadd.f32 %v3602, %v3621
      %v3630 = vadd.f32 %v3603, %v3621
      %v3631 = vadd.f32 %v3604, %v3621
      %v3632 = vadd.f32 %v3605, %v3621
      %v3633 = vadd.f32 %v3606, %v3621
      %v3634 = vadd.f32 %v3607, %v3621
      %v3635 = vadd.f32 %v3608, %v3621
      %v3636 = vadd.f32 %v3609, %v3621
      %v3637 = vadd.f32 %v3610, %v3621
      %v3638 = vadd.f32 %v3611, %v3621
      %v3639 = vadd.f32 %v3612, %v3621
      %v3640 = vadd.f32 %v3613, %v3621
      %v3641 = vadd.f32 %v3614, %v3621
      %v3642 = vadd.f32 %v3615, %v3621
      %v3643 = vxor.u32 %v3623, 2147483648
      %v3644 = vxor.u32 %v3624, 2147483648
      %v3645 = vxor.u32 %v3625, 2147483648
      %v3646 = vxor.u32 %v3626, 2147483648
      %v3647 = vxor.u32 %v3627, 2147483648
      %v3648 = vxor.u32 %v3628, 2147483648
      %v3649 = vxor.u32 %v3629, 2147483648
      %v3650 = vxor.u32 %v3630, 2147483648
      %v3651 = vxor.u32 %v3631, 2147483648
      %v3652 = vxor.u32 %v3632, 2147483648
      %v3653 = vxor.u32 %v3633, 2147483648
      %v3654 = vxor.u32 %v3634, 2147483648
      %v3655 = vxor.u32 %v3635, 2147483648
      %v3656 = vxor.u32 %v3636, 2147483648
      %v3657 = vxor.u32 %v3637, 2147483648
      %v3658 = vxor.u32 %v3638, 2147483648
      %v3659 = vxor.u32 %v3639, 2147483648
      %v3660 = vxor.u32 %v3640, 2147483648
      %v3661 = vxor.u32 %v3641, 2147483648
      %v3662 = vxor.u32 %v3642, 2147483648
      %v3663 = vmul.f32 %v3643, 1.442695
      %v3664 = vpow.pop %v3663
      %v3665 = vmul.f32 %v3644, 1.442695
      %v3666 = vpow.pop %v3665
      %v3667 = vmul.f32 %v3645, 1.442695
      %v3668 = vpow.pop %v3667
      %v3669 = vmul.f32 %v3646, 1.442695
      %v3670 = vpow.pop %v3669
      %v3671 = vmul.f32 %v3647, 1.442695
      %v3672 = vpow.pop %v3671
      %v3673 = vmul.f32 %v3648, 1.442695
      %v3674 = vpow.pop %v3673
      %v3675 = vmul.f32 %v3649, 1.442695
      %v3676 = vpow.pop %v3675
      %v3677 = vmul.f32 %v3650, 1.442695
      %v3678 = vpow.pop %v3677
      %v3679 = vmul.f32 %v3651, 1.442695
      %v3680 = vpow.pop %v3679
      %v3681 = vmul.f32 %v3652, 1.442695
      %v3682 = vpow.pop %v3681
      %v3683 = vmul.f32 %v3653, 1.442695
      %v3684 = vpow.pop %v3683
      %v3685 = vmul.f32 %v3654, 1.442695
      %v3686 = vpow.pop %v3685
      %v3687 = vmul.f32 %v3655, 1.442695
      %v3688 = vpow.pop %v3687
      %v3689 = vmul.f32 %v3656, 1.442695
      %v3690 = vpow.pop %v3689
      %v3691 = vmul.f32 %v3657, 1.442695
      %v3692 = vpow.pop %v3691
      %v3693 = vmul.f32 %v3658, 1.442695
      %v3694 = vpow.pop %v3693
      %v3695 = vmul.f32 %v3659, 1.442695
      %v3696 = vpow.pop %v3695
      %v3697 = vmul.f32 %v3660, 1.442695
      %v3698 = vpow.pop %v3697
      %v3699 = vmul.f32 %v3661, 1.442695
      %v3700 = vpow.pop %v3699
      %v3701 = vmul.f32 %v3662, 1.442695
      %v3702 = vpow.pop %v3701
      %v3703 = vadd.f32 %v3664, 1.0
      %v3704 = vadd.f32 %v3666, 1.0
      %v3705 = vadd.f32 %v3668, 1.0
      %v3706 = vadd.f32 %v3670, 1.0
      %v3707 = vadd.f32 %v3672, 1.0
      %v3708 = vadd.f32 %v3674, 1.0
      %v3709 = vadd.f32 %v3676, 1.0
      %v3710 = vadd.f32 %v3678, 1.0
      %v3711 = vadd.f32 %v3680, 1.0
      %v3712 = vadd.f32 %v3682, 1.0
      %v3713 = vadd.f32 %v3684, 1.0
      %v3714 = vadd.f32 %v3686, 1.0
      %v3715 = vadd.f32 %v3688, 1.0
      %v3716 = vadd.f32 %v3690, 1.0
      %v3717 = vadd.f32 %v3692, 1.0
      %v3718 = vadd.f32 %v3694, 1.0
      %v3719 = vadd.f32 %v3696, 1.0
      %v3720 = vadd.f32 %v3698, 1.0
      %v3721 = vadd.f32 %v3700, 1.0
      %v3722 = vadd.f32 %v3702, 1.0
      %v3723 = vrcp.pop %v3703
      %v3724 = vmul.f32 1.0, %v3723
      %v3725 = vrcp.pop %v3704
      %v3726 = vmul.f32 1.0, %v3725
      %v3727 = vrcp.pop %v3705
      %v3728 = vmul.f32 1.0, %v3727
      %v3729 = vrcp.pop %v3706
      %v3730 = vmul.f32 1.0, %v3729
      %v3731 = vrcp.pop %v3707
      %v3732 = vmul.f32 1.0, %v3731
      %v3733 = vrcp.pop %v3708
      %v3734 = vmul.f32 1.0, %v3733
      %v3735 = vrcp.pop %v3709
      %v3736 = vmul.f32 1.0, %v3735
      %v3737 = vrcp.pop %v3710
      %v3738 = vmul.f32 1.0, %v3737
      %v3739 = vrcp.pop %v3711
      %v3740 = vmul.f32 1.0, %v3739
      %v3741 = vrcp.pop %v3712
      %v3742 = vmul.f32 1.0, %v3741
      %v3743 = vrcp.pop %v3713
      %v3744 = vmul.f32 1.0, %v3743
      %v3745 = vrcp.pop %v3714
      %v3746 = vmul.f32 1.0, %v3745
      %v3747 = vrcp.pop %v3715
      %v3748 = vmul.f32 1.0, %v3747
      %v3749 = vrcp.pop %v3716
      %v3750 = vmul.f32 1.0, %v3749
      %v3751 = vrcp.pop %v3717
      %v3752 = vmul.f32 1.0, %v3751
      %v3753 = vrcp.pop %v3718
      %v3754 = vmul.f32 1.0, %v3753
      %v3755 = vrcp.pop %v3719
      %v3756 = vmul.f32 1.0, %v3755
      %v3757 = vrcp.pop %v3720
      %v3758 = vmul.f32 1.0, %v3757
      %v3759 = vrcp.pop %v3721
      %v3760 = vmul.f32 1.0, %v3759
      %v3761 = vrcp.pop %v3722
      %v3762 = vmul.f32 1.0, %v3761
      %v3763 = vmul.f32 %v3623, %v3724
      %v3764 = vmul.f32 %v3624, %v3726
      %v3765 = vmul.f32 %v3625, %v3728
      %v3766 = vmul.f32 %v3626, %v3730
      %v3767 = vmul.f32 %v3627, %v3732
      %v3768 = vmul.f32 %v3628, %v3734
      %v3769 = vmul.f32 %v3629, %v3736
      %v3770 = vmul.f32 %v3630, %v3738
      %v3771 = vmul.f32 %v3631, %v3740
      %v3772 = vmul.f32 %v3632, %v3742
      %v3773 = vmul.f32 %v3633, %v3744
      %v3774 = vmul.f32 %v3634, %v3746
      %v3775 = vmul.f32 %v3635, %v3748
      %v3776 = vmul.f32 %v3636, %v3750
      %v3777 = vmul.f32 %v3637, %v3752
      %v3778 = vmul.f32 %v3638, %v3754
      %v3779 = vmul.f32 %v3639, %v3756
      %v3780 = vmul.f32 %v3640, %v3758
      %v3781 = vmul.f32 %v3641, %v3760
      %v3782 = vmul.f32 %v3642, %v3762
      %v3783 = vpack.c.bf16 %v3764, %v3763
      %v3784 = vpack.c.bf16 %v3766, %v3765
      %v3785 = vpack.c.bf16 %v3768, %v3767
      %v3786 = vpack.c.bf16 %v3770, %v3769
      %v3787 = vpack.c.bf16 %v3772, %v3771
      %v3788 = vpack.c.bf16 %v3774, %v3773
      %v3789 = vpack.c.bf16 %v3776, %v3775
      %v3790 = vpack.c.bf16 %v3778, %v3777
      %v3791 = vpack.c.bf16 %v3780, %v3779
      %v3792 = vpack.c.bf16 %v3782, %v3781
      %v3793 = vld [vmem:[%s35] sm:$0xf]
      %v3794 = vld [vmem:[%s35 + $0x4] sm:$0xf]
      %v3795 = vld [vmem:[%s35 + $0x8] sm:$0xf]
      %v3796 = vld [vmem:[%s35 + $0xc] sm:$0xf]
      %v3797 = vld [vmem:[%s35 + $0x10] sm:$0xf]
      %v3798 = vld [vmem:[%s35 + $0x14] sm:$0xf]
      %v3799 = vld [vmem:[%s35 + $0x18] sm:$0xf]
      %v3800 = vld [vmem:[%s35 + $0x1c] sm:$0xf]
      %v3801 = vld [vmem:[%s35 + $0x20] sm:$0xf]
      %v3802 = vld [vmem:[%s35 + $0x24] sm:$0xf]
      %v3803 = vld [vmem:[%s35 + $0x28] sm:$0xf]
      %v3804 = vld [vmem:[%s35 + $0x2c] sm:$0xf]
      %v3805 = vld [vmem:[%s35 + $0x30] sm:$0xf]
      %v3806 = vld [vmem:[%s35 + $0x34] sm:$0xf]
      %v3807 = vld [vmem:[%s35 + $0x38] sm:$0xf]
      %v3808 = vld [vmem:[%s35 + $0x3c] sm:$0xf]
      %v3825 = vunpack.c.l.b16 %v3793
      %v3826 = vunpack.c.l.b16 %v3794
      %v3827 = vunpack.c.l.b16 %v3795
      %v3828 = vunpack.c.l.b16 %v3796
      %v3829 = vunpack.c.l.b16 %v3797
      %v3830 = vunpack.c.l.b16 %v3798
      %v3831 = vunpack.c.l.b16 %v3799
      %v3832 = vunpack.c.l.b16 %v3800
      %v3833 = vunpack.c.l.b16 %v3801
      %v3834 = vunpack.c.l.b16 %v3802
      %v3835 = vunpack.c.l.b16 %v3803
      %v3836 = vunpack.c.l.b16 %v3804
      %v3837 = vunpack.c.l.b16 %v3805
      %v3838 = vunpack.c.l.b16 %v3806
      %v3839 = vunpack.c.l.b16 %v3807
      %v3840 = vunpack.c.l.b16 %v3808
      %v3841 = vpack.c.b16 %v3826, %v3825
      %v3842 = vpack.c.b16 %v3828, %v3827
      %v3843 = vpack.c.b16 %v3830, %v3829
      %v3844 = vpack.c.b16 %v3832, %v3831
      %v3845 = vpack.c.b16 %v3834, %v3833
      %v3846 = vpack.c.b16 %v3836, %v3835
      %v3847 = vpack.c.b16 %v3838, %v3837
      %v3848 = vpack.c.b16 %v3840, %v3839
      %3857 = vmatprep.subr.bf16.mxu0 0
      %3858 = vmatpush1.bf16.msra.mxu0 %v3841
      %3859 = vmatprep.subr.bf16.mxu0 0
      %3860 = vmatpush1.bf16.msra.mxu0 %v3842
      %3861 = vmatprep.subr.bf16.mxu0 0
      %3862 = vmatpush1.bf16.msra.mxu0 %v3843
      %3863 = vmatprep.subr.bf16.mxu0 0
      %3864 = vmatpush1.bf16.msra.mxu0 %v3844
      %3865 = vmatprep.subr.bf16.mxu0 0
      %3866 = vmatpush1.bf16.msra.mxu0 %v3845
      %3867 = vmatprep.subr.bf16.mxu0 0
      %3868 = vmatpush1.bf16.msra.mxu0 %v3846
      %3869 = vmatprep.subr.bf16.mxu0 0
      %3870 = vmatpush1.bf16.msra.mxu0 %v3847
      %3871 = vmatprep.subr.bf16.mxu0 0
      %3872 = vmatpush1.bf16.msra.mxu0 %v3848
      %3873 = vmatprep.subr.bf16.mxu0 0
      %3874 = vmatpush1.bf16.msra.mxu0 0
      %3875 = vmatprep.subr.bf16.mxu0 0
      %3876 = vmatpush1.bf16.msra.mxu0 0
      %3877 = vmatprep.subr.bf16.mxu0 0
      %3878 = vmatpush1.bf16.msra.mxu0 0
      %3879 = vmatprep.subr.bf16.mxu0 0
      %3880 = vmatpush1.bf16.msra.mxu0 0
      %3881 = vmatprep.subr.bf16.mxu0 0
      %3882 = vmatpush1.bf16.msra.mxu0 0
      %3883 = vmatprep.subr.bf16.mxu0 0
      %3884 = vmatpush1.bf16.msra.mxu0 0
      %3885 = vmatprep.subr.bf16.mxu0 0
      %3886 = vmatpush1.bf16.msra.mxu0 0
      %3887 = vmatprep.subr.bf16.mxu0 0
      %3888 = vmatpush1.bf16.msra.mxu0 0
      %3889 = vmatprep.mubr.bf16.mxu0 0
      %3890 = vmatmul.mubr.bf16.gmra.mrb[0].mxu0 %v3783
      %v3891 = vpop.f32.mrb[0].mxu0
      %v3892 = vadd.f32 0.0, %v3891
      %v3893 = vpop.f32.mrb[0].mxu0
      %v3894 = vpop.f32.mrb[0].mxu0
      %v3895 = vadd.f32 0.0, %v3894
      %v3896 = vpop.f32.mrb[0].mxu0
      %3897 = vmatprep.mubr.bf16.mxu0 0
      %3898 = vmatmul.mubr.bf16.gmra.mrb[0].mxu0 %v3784
      %v3899 = vpop.f32.mrb[0].mxu0
      %v3900 = vadd.f32 0.0, %v3899
      %v3901 = vpop.f32.mrb[0].mxu0
      %v3902 = vpop.f32.mrb[0].mxu0
      %v3903 = vadd.f32 0.0, %v3902
      %v3904 = vpop.f32.mrb[0].mxu0
      %3905 = vmatprep.mubr.bf16.mxu0 0
      %3906 = vmatmul.mubr.bf16.gmra.mrb[0].mxu0 %v3785
      %v3907 = vpop.f32.mrb[0].mxu0
      %v3908 = vadd.f32 0.0, %v3907
      %v3909 = vpop.f32.mrb[0].mxu0
      %v3910 = vpop.f32.mrb[0].mxu0
      %v3911 = vadd.f32 0.0, %v3910
      %v3912 = vpop.f32.mrb[0].mxu0
      %3913 = vmatprep.mubr.bf16.mxu0 0
      %3914 = vmatmul.mubr.bf16.gmra.mrb[0].mxu0 %v3786
      %v3915 = vpop.f32.mrb[0].mxu0
      %v3916 = vadd.f32 0.0, %v3915
      %v3917 = vpop.f32.mrb[0].mxu0
      %v3918 = vpop.f32.mrb[0].mxu0
      %v3919 = vadd.f32 0.0, %v3918
      %v3920 = vpop.f32.mrb[0].mxu0
      %3921 = vmatprep.mubr.bf16.mxu0 0
      %3922 = vmatmul.mubr.bf16.gmra.mrb[0].mxu0 %v3787
      %v3923 = vpop.f32.mrb[0].mxu0
      %v3924 = vadd.f32 0.0, %v3923
      %v3925 = vpop.f32.mrb[0].mxu0
      %v3926 = vpop.f32.mrb[0].mxu0
      %v3927 = vadd.f32 0.0, %v3926
      %v3928 = vpop.f32.mrb[0].mxu0
      %3929 = vmatprep.mubr.bf16.mxu0 0
      %3930 = vmatmul.mubr.bf16.gmra.mrb[0].mxu0 %v3788
      %v3931 = vpop.f32.mrb[0].mxu0
      %v3932 = vadd.f32 0.0, %v3931
      %v3933 = vpop.f32.mrb[0].mxu0
      %v3934 = vpop.f32.mrb[0].mxu0
      %v3935 = vadd.f32 0.0, %v3934
      %v3936 = vpop.f32.mrb[0].mxu0
      %3937 = vmatprep.mubr.bf16.mxu0 0
      %3938 = vmatmul.mubr.bf16.gmra.mrb[0].mxu0 %v3789
      %v3939 = vpop.f32.mrb[0].mxu0
      %v3940 = vadd.f32 0.0, %v3939
      %v3941 = vpop.f32.mrb[0].mxu0
      %v3942 = vpop.f32.mrb[0].mxu0
      %v3943 = vadd.f32 0.0, %v3942
      %v3944 = vpop.f32.mrb[0].mxu0
      %3945 = vmatprep.mubr.bf16.mxu0 0
      %3946 = vmatmul.mubr.bf16.gmra.mrb[0].mxu0 %v3790
      %v3947 = vpop.f32.mrb[0].mxu0
      %v3948 = vadd.f32 0.0, %v3947
      %v3949 = vpop.f32.mrb[0].mxu0
      %v3950 = vpop.f32.mrb[0].mxu0
      %v3951 = vadd.f32 0.0, %v3950
      %v3952 = vpop.f32.mrb[0].mxu0
      %3953 = vmatprep.mubr.bf16.mxu0 0
      %3954 = vmatmul.mubr.bf16.gmra.mrb[0].mxu0 %v3791
      %v3955 = vpop.f32.mrb[0].mxu0
      %v3956 = vadd.f32 0.0, %v3955
      %v3957 = vpop.f32.mrb[0].mxu0
      %v3958 = vpop.f32.mrb[0].mxu0
      %v3959 = vadd.f32 0.0, %v3958
      %v3960 = vpop.f32.mrb[0].mxu0
      %3961 = vmatprep.mubr.bf16.mxu0 0
      %3962 = vmatmul.mubr.bf16.gmra.mrb[0].mxu0 %v3792
      %v3963 = vpop.f32.mrb[0].mxu0
      %v3964 = vadd.f32 0.0, %v3963
      %v3965 = vpop.f32.mrb[0].mxu0
      %v3966 = vpop.f32.mrb[0].mxu0
      %v3967 = vadd.f32 0.0, %v3966
      %v3968 = vpop.f32.mrb[0].mxu0
      %3969 = vdwg.mxu0
      %v3970 = vld [vmem:[%s37] sm:$0x1]
      %v3972 = vlaneseq
      %v3973 = vshrl.u32 %v3972, 7
      %v3974 = vsub.s32 0, %v3973
      %v3975 = vrot.slane %v3970, %v3974
      %v3977 = vmul.f32 %v3892, %v3975
      %v3978 = vmul.f32 %v3895, %v3975
      %v3979 = vmul.f32 %v3900, %v3975
      %v3980 = vmul.f32 %v3903, %v3975
      %v3981 = vmul.f32 %v3908, %v3975
      %v3982 = vmul.f32 %v3911, %v3975
      %v3983 = vmul.f32 %v3916, %v3975
      %v3984 = vmul.f32 %v3919, %v3975
      %v3985 = vmul.f32 %v3924, %v3975
      %v3986 = vmul.f32 %v3927, %v3975
      %v3987 = vmul.f32 %v3932, %v3975
      %v3988 = vmul.f32 %v3935, %v3975
      %v3989 = vmul.f32 %v3940, %v3975
      %v3990 = vmul.f32 %v3943, %v3975
      %v3991 = vmul.f32 %v3948, %v3975
      %v3992 = vmul.f32 %v3951, %v3975
      %v3993 = vmul.f32 %v3956, %v3975
      %v3994 = vmul.f32 %v3959, %v3975
      %v3995 = vmul.f32 %v3964, %v3975
      %v3996 = vmul.f32 %v3967, %v3975
      %v3997 = vld [vmem:[%s39] sm:$0x1]
      %v3999 = vlaneseq
      %v4000 = vshrl.u32 %v3999, 7
      %v4001 = vsub.s32 0, %v4000
      %v4002 = vrot.slane %v3997, %v4001
      %v4004 = vadd.f32 %v3977, %v4002
      %v4005 = vadd.f32 %v3978, %v4002
      %v4006 = vadd.f32 %v3979, %v4002
      %v4007 = vadd.f32 %v3980, %v4002
      %v4008 = vadd.f32 %v3981, %v4002
      %v4009 = vadd.f32 %v3982, %v4002
      %v4010 = vadd.f32 %v3983, %v4002
      %v4011 = vadd.f32 %v3984, %v4002
      %v4012 = vadd.f32 %v3985, %v4002
      %v4013 = vadd.f32 %v3986, %v4002
      %v4014 = vadd.f32 %v3987, %v4002
      %v4015 = vadd.f32 %v3988, %v4002
      %v4016 = vadd.f32 %v3989, %v4002
      %v4017 = vadd.f32 %v3990, %v4002
      %v4018 = vadd.f32 %v3991, %v4002
      %v4019 = vadd.f32 %v3992, %v4002
      %v4020 = vadd.f32 %v3993, %v4002
      %v4021 = vadd.f32 %v3994, %v4002
      %v4022 = vadd.f32 %v3995, %v4002
      %v4023 = vadd.f32 %v3996, %v4002
      %v4024 = vmul.f32 %v4004, %v1642
      %v4025 = vmul.f32 %v4005, %v1647
      %v4026 = vmul.f32 %v4006, %v1652
      %v4027 = vmul.f32 %v4007, %v1657
      %v4028 = vmul.f32 %v4008, %v1662
      %v4029 = vmul.f32 %v4009, %v1667
      %v4030 = vmul.f32 %v4010, %v1672
      %v4031 = vmul.f32 %v4011, %v1677
      %v4032 = vmul.f32 %v4012, %v1682
      %v4033 = vmul.f32 %v4013, %v1687
      %v4034 = vmul.f32 %v4014, %v1692
      %v4035 = vmul.f32 %v4015, %v1697
      %v4036 = vmul.f32 %v4016, %v1702
      %v4037 = vmul.f32 %v4017, %v1707
      %v4038 = vmul.f32 %v4018, %v1712
      %v4039 = vmul.f32 %v4019, %v1717
      %v4040 = vmul.f32 %v4020, %v1722
      %v4041 = vmul.f32 %v4021, %v1727
      %v4042 = vmul.f32 %v4022, %v1732
      %v4043 = vmul.f32 %v4023, %v1737
      %v4044 = vpack.c.bf16 %v4025, %v4024
      %v4045 = vpack.c.bf16 %v4027, %v4026
      %v4046 = vpack.c.bf16 %v4029, %v4028
      %v4047 = vpack.c.bf16 %v4031, %v4030
      %v4048 = vpack.c.bf16 %v4033, %v4032
      %v4049 = vpack.c.bf16 %v4035, %v4034
      %v4050 = vpack.c.bf16 %v4037, %v4036
      %v4051 = vpack.c.bf16 %v4039, %v4038
      %v4052 = vpack.c.bf16 %v4041, %v4040
      %v4053 = vpack.c.bf16 %v4043, %v4042
      %4054 = vst [vmem:[#allocation3 + $0x10] sm:$0xff] %v4044
      %4055 = vst [vmem:[#allocation3 + $0x18] sm:$0xff] %v4045
      %4056 = vst [vmem:[#allocation3 + $0x20] sm:$0xff] %v4046
      %4057 = vst [vmem:[#allocation3 + $0x28] sm:$0xff] %v4047
      %4058 = vst [vmem:[#allocation3 + $0x30] sm:$0xff] %v4048
      %4059 = vst [vmem:[#allocation3 + $0x38] sm:$0xff] %v4049
      %4060 = vst [vmem:[#allocation3 + $0x40] sm:$0xff] %v4050
      %4061 = vst [vmem:[#allocation3 + $0x48] sm:$0xff] %v4051
      %4062 = vst [vmem:[#allocation3 + $0x50] sm:$0xff] %v4052
      %4063 = vst [vmem:[#allocation3 + $0x58] sm:$0xff] %v4053
      %v4064 = vld [vmem:[#allocation3] sm:$0x80]
      %v4065 = vld [vmem:[#allocation3 + $0x8] sm:$0xff]
      %v4066 = vld [vmem:[#allocation3 + $0x10] sm:$0xff]
      %v4067 = vld [vmem:[#allocation3 + $0x18] sm:$0xff]
      %v4068 = vld [vmem:[#allocation3 + $0x20] sm:$0xff]
      %v4069 = vld [vmem:[#allocation3 + $0x28] sm:$0xff]
      %v4070 = vld [vmem:[#allocation3 + $0x30] sm:$0xff]
      %v4071 = vld [vmem:[#allocation3 + $0x38] sm:$0xff]
      %v4072 = vld [vmem:[#allocation3 + $0x40] sm:$0xff]
      %v4073 = vld [vmem:[#allocation3 + $0x48] sm:$0xff]
      %v4074 = vld [vmem:[#allocation3 + $0x50] sm:$0xff]
      %v4075 = vld [vmem:[%s59] sm:$0xf]
      %v4076 = vld [vmem:[%s59 + $0x4] sm:$0xf]
      %v4077 = vld [vmem:[%s59 + $0x8] sm:$0xf]
      %v4078 = vld [vmem:[%s59 + $0xc] sm:$0xf]
      %v4079 = vld [vmem:[%s59 + $0x10] sm:$0xf]
      %v4080 = vld [vmem:[%s59 + $0x14] sm:$0xf]
      %v4081 = vld [vmem:[%s59 + $0x18] sm:$0xf]
      %v4082 = vld [vmem:[%s59 + $0x1c] sm:$0xf]
      %v4083 = vld [vmem:[%s59 + $0x20] sm:$0xf]
      %v4084 = vld [vmem:[%s59 + $0x24] sm:$0xf]
      %v4085 = vld [vmem:[%s59 + $0x28] sm:$0xf]
      %v4086 = vld [vmem:[%s59 + $0x2c] sm:$0xf]
      %v4087 = vld [vmem:[%s59 + $0x30] sm:$0xf]
      %v4088 = vld [vmem:[%s59 + $0x34] sm:$0xf]
      %v4089 = vld [vmem:[%s59 + $0x38] sm:$0xf]
      %v4090 = vld [vmem:[%s59 + $0x3c] sm:$0xf]
      %s4091 = scalar_lea.vmem %s59, 64
      %v4092 = vld [vmem:[%s4091] sm:$0xf]
      %v4093 = vld [vmem:[%s4091 + $0x4] sm:$0xf]
      %v4094 = vld [vmem:[%s4091 + $0x8] sm:$0xf]
      %v4095 = vld [vmem:[%s4091 + $0xc] sm:$0xf]
      %v4096 = vld [vmem:[%s4091 + $0x10] sm:$0xf]
      %v4097 = vld [vmem:[%s4091 + $0x14] sm:$0xf]
      %v4098 = vld [vmem:[%s4091 + $0x18] sm:$0xf]
      %v4099 = vld [vmem:[%s4091 + $0x1c] sm:$0xf]
      %v4100 = vld [vmem:[%s4091 + $0x20] sm:$0xf]
      %v4101 = vld [vmem:[%s4091 + $0x24] sm:$0xf]
      %v4102 = vld [vmem:[%s4091 + $0x28] sm:$0xf]
      %v4103 = vld [vmem:[%s4091 + $0x2c] sm:$0xf]
      %v4104 = vld [vmem:[%s4091 + $0x30] sm:$0xf]
      %v4105 = vld [vmem:[%s4091 + $0x34] sm:$0xf]
      %v4106 = vld [vmem:[%s4091 + $0x38] sm:$0xf]
      %v4107 = vld [vmem:[%s4091 + $0x3c] sm:$0xf]
      %v4124 = vunpack.c.l.b16 %v4092
      %v4125 = vunpack.c.l.b16 %v4093
      %v4126 = vunpack.c.l.b16 %v4094
      %v4127 = vunpack.c.l.b16 %v4095
      %v4128 = vunpack.c.l.b16 %v4096
      %v4129 = vunpack.c.l.b16 %v4097
      %v4130 = vunpack.c.l.b16 %v4098
      %v4131 = vunpack.c.l.b16 %v4099
      %v4132 = vunpack.c.l.b16 %v4100
      %v4133 = vunpack.c.l.b16 %v4101
      %v4134 = vunpack.c.l.b16 %v4102
      %v4135 = vunpack.c.l.b16 %v4103
      %v4136 = vunpack.c.l.b16 %v4104
      %v4137 = vunpack.c.l.b16 %v4105
      %v4138 = vunpack.c.l.b16 %v4106
      %v4139 = vunpack.c.l.b16 %v4107
      %v4140 = vpack.c.b16 %v4125, %v4124
      %v4141 = vpack.c.b16 %v4127, %v4126
      %v4142 = vpack.c.b16 %v4129, %v4128
      %v4143 = vpack.c.b16 %v4131, %v4130
      %v4144 = vpack.c.b16 %v4133, %v4132
      %v4145 = vpack.c.b16 %v4135, %v4134
      %v4146 = vpack.c.b16 %v4137, %v4136
      %v4147 = vpack.c.b16 %v4139, %v4138
      %4156 = vmatprep.subr.bf16.mxu0 0
      %4157 = vmatpush1.bf16.msra.mxu0 %v4140
      %4158 = vmatprep.subr.bf16.mxu0 0
      %4159 = vmatpush1.bf16.msra.mxu0 %v4141
      %4160 = vmatprep.subr.bf16.mxu0 0
      %4161 = vmatpush1.bf16.msra.mxu0 %v4142
      %4162 = vmatprep.subr.bf16.mxu0 0
      %4163 = vmatpush1.bf16.msra.mxu0 %v4143
      %4164 = vmatprep.subr.bf16.mxu0 0
      %4165 = vmatpush1.bf16.msra.mxu0 %v4144
      %4166 = vmatprep.subr.bf16.mxu0 0
      %4167 = vmatpush1.bf16.msra.mxu0 %v4145
      %4168 = vmatprep.subr.bf16.mxu0 0
      %4169 = vmatpush1.bf16.msra.mxu0 %v4146
      %4170 = vmatprep.subr.bf16.mxu0 0
      %4171 = vmatpush1.bf16.msra.mxu0 %v4147
      %4172 = vmatprep.subr.bf16.mxu0 0
      %4173 = vmatpush1.bf16.msra.mxu0 0
      %4174 = vmatprep.subr.bf16.mxu0 0
      %4175 = vmatpush1.bf16.msra.mxu0 0
      %4176 = vmatprep.subr.bf16.mxu0 0
      %4177 = vmatpush1.bf16.msra.mxu0 0
      %4178 = vmatprep.subr.bf16.mxu0 0
      %4179 = vmatpush1.bf16.msra.mxu0 0
      %4180 = vmatprep.subr.bf16.mxu0 0
      %4181 = vmatpush1.bf16.msra.mxu0 0
      %4182 = vmatprep.subr.bf16.mxu0 0
      %4183 = vmatpush1.bf16.msra.mxu0 0
      %4184 = vmatprep.subr.bf16.mxu0 0
      %4185 = vmatpush1.bf16.msra.mxu0 0
      %4186 = vmatprep.subr.bf16.mxu0 0
      %4187 = vmatpush1.bf16.msra.mxu0 0
      %4188 = vmatprep.mubr.bf16.mxu0 0
      %4189 = vmatmul.mubr.bf16.gmra.mrb[0].mxu0 %v4065
      %v4190 = vpop.f32.mrb[0].mxu0
      %v4191 = vadd.f32 0.0, %v4190
      %v4192 = vpop.f32.mrb[0].mxu0
      %v4193 = vpop.f32.mrb[0].mxu0
      %v4194 = vadd.f32 0.0, %v4193
      %v4195 = vpop.f32.mrb[0].mxu0
      %4196 = vmatprep.mubr.bf16.mxu0 0
      %4197 = vmatmul.mubr.bf16.gmra.mrb[0].mxu0 %v4066
      %v4198 = vpop.f32.mrb[0].mxu0
      %v4199 = vadd.f32 0.0, %v4198
      %v4200 = vpop.f32.mrb[0].mxu0
      %v4201 = vpop.f32.mrb[0].mxu0
      %v4202 = vadd.f32 0.0, %v4201
      %v4203 = vpop.f32.mrb[0].mxu0
      %4204 = vmatprep.mubr.bf16.mxu0 0
      %4205 = vmatmul.mubr.bf16.gmra.mrb[0].mxu0 %v4067
      %v4206 = vpop.f32.mrb[0].mxu0
      %v4207 = vadd.f32 0.0, %v4206
      %v4208 = vpop.f32.mrb[0].mxu0
      %v4209 = vpop.f32.mrb[0].mxu0
      %v4210 = vadd.f32 0.0, %v4209
      %v4211 = vpop.f32.mrb[0].mxu0
      %4212 = vmatprep.mubr.bf16.mxu0 0
      %4213 = vmatmul.mubr.bf16.gmra.mrb[0].mxu0 %v4068
      %v4214 = vpop.f32.mrb[0].mxu0
      %v4215 = vadd.f32 0.0, %v4214
      %v4216 = vpop.f32.mrb[0].mxu0
      %v4217 = vpop.f32.mrb[0].mxu0
      %v4218 = vadd.f32 0.0, %v4217
      %v4219 = vpop.f32.mrb[0].mxu0
      %4220 = vmatprep.mubr.bf16.mxu0 0
      %4221 = vmatmul.mubr.bf16.gmra.mrb[0].mxu0 %v4069
      %v4222 = vpop.f32.mrb[0].mxu0
      %v4223 = vadd.f32 0.0, %v4222
      %v4224 = vpop.f32.mrb[0].mxu0
      %v4225 = vpop.f32.mrb[0].mxu0
      %v4226 = vadd.f32 0.0, %v4225
      %v4227 = vpop.f32.mrb[0].mxu0
      %4228 = vmatprep.mubr.bf16.mxu0 0
      %4229 = vmatmul.mubr.bf16.gmra.mrb[0].mxu0 %v4070
      %v4230 = vpop.f32.mrb[0].mxu0
      %v4231 = vadd.f32 0.0, %v4230
      %v4232 = vpop.f32.mrb[0].mxu0
      %v4233 = vpop.f32.mrb[0].mxu0
      %v4234 = vadd.f32 0.0, %v4233
      %v4235 = vpop.f32.mrb[0].mxu0
      %4236 = vmatprep.mubr.bf16.mxu0 0
      %4237 = vmatmul.mubr.bf16.gmra.mrb[0].mxu0 %v4071
      %v4238 = vpop.f32.mrb[0].mxu0
      %v4239 = vadd.f32 0.0, %v4238
      %v4240 = vpop.f32.mrb[0].mxu0
      %v4241 = vpop.f32.mrb[0].mxu0
      %v4242 = vadd.f32 0.0, %v4241
      %v4243 = vpop.f32.mrb[0].mxu0
      %4244 = vmatprep.mubr.bf16.mxu0 0
      %4245 = vmatmul.mubr.bf16.gmra.mrb[0].mxu0 %v4072
      %v4246 = vpop.f32.mrb[0].mxu0
      %v4247 = vadd.f32 0.0, %v4246
      %v4248 = vpop.f32.mrb[0].mxu0
      %v4249 = vpop.f32.mrb[0].mxu0
      %v4250 = vadd.f32 0.0, %v4249
      %v4251 = vpop.f32.mrb[0].mxu0
      %4252 = vmatprep.mubr.bf16.mxu0 0
      %4253 = vmatmul.mubr.bf16.gmra.mrb[0].mxu0 %v4073
      %v4254 = vpop.f32.mrb[0].mxu0
      %v4255 = vadd.f32 0.0, %v4254
      %v4256 = vpop.f32.mrb[0].mxu0
      %v4257 = vpop.f32.mrb[0].mxu0
      %v4258 = vadd.f32 0.0, %v4257
      %v4259 = vpop.f32.mrb[0].mxu0
      %4260 = vmatprep.mubr.bf16.mxu0 0
      %4261 = vmatmul.mubr.bf16.gmra.mrb[0].mxu0 %v4074
      %v4262 = vpop.f32.mrb[0].mxu0
      %v4263 = vadd.f32 0.0, %v4262
      %v4264 = vpop.f32.mrb[0].mxu0
      %v4265 = vpop.f32.mrb[0].mxu0
      %v4266 = vadd.f32 0.0, %v4265
      %v4267 = vpop.f32.mrb[0].mxu0
      %4268 = vdwg.mxu0
      %vm4269 = vsmask.f32 256
      %v4271 = vshrl.u32 %v4064, 16
      %v4273 = vrot.slane %v4271, 7
      %v4275 = vshrl.u32 %v4065, 16
      %v4277 = vrot.slane %v4275, 7
      %v4278 = vshll.u32 %v4065, 16
      %v4280 = vor.u32 %v4277, %v4278
      %v4281 = vsel %vm4269, %v4273, %v4280
      %v4283 = vshrl.u32 %v4066, 16
      %v4285 = vrot.slane %v4283, 7
      %v4286 = vshll.u32 %v4066, 16
      %v4288 = vor.u32 %v4285, %v4286
      %v4289 = vsel %vm4269, %v4277, %v4288
      %v4291 = vshrl.u32 %v4067, 16
      %v4293 = vrot.slane %v4291, 7
      %v4294 = vshll.u32 %v4067, 16
      %v4296 = vor.u32 %v4293, %v4294
      %v4297 = vsel %vm4269, %v4285, %v4296
      %v4299 = vshrl.u32 %v4068, 16
      %v4301 = vrot.slane %v4299, 7
      %v4302 = vshll.u32 %v4068, 16
      %v4304 = vor.u32 %v4301, %v4302
      %v4305 = vsel %vm4269, %v4293, %v4304
      %v4307 = vshrl.u32 %v4069, 16
      %v4309 = vrot.slane %v4307, 7
      %v4310 = vshll.u32 %v4069, 16
      %v4312 = vor.u32 %v4309, %v4310
      %v4313 = vsel %vm4269, %v4301, %v4312
      %v4315 = vshrl.u32 %v4070, 16
      %v4317 = vrot.slane %v4315, 7
      %v4318 = vshll.u32 %v4070, 16
      %v4320 = vor.u32 %v4317, %v4318
      %v4321 = vsel %vm4269, %v4309, %v4320
      %v4323 = vshrl.u32 %v4071, 16
      %v4325 = vrot.slane %v4323, 7
      %v4326 = vshll.u32 %v4071, 16
      %v4328 = vor.u32 %v4325, %v4326
      %v4329 = vsel %vm4269, %v4317, %v4328
      %v4331 = vshrl.u32 %v4072, 16
      %v4333 = vrot.slane %v4331, 7
      %v4334 = vshll.u32 %v4072, 16
      %v4336 = vor.u32 %v4333, %v4334
      %v4337 = vsel %vm4269, %v4325, %v4336
      %v4339 = vshrl.u32 %v4073, 16
      %v4341 = vrot.slane %v4339, 7
      %v4342 = vshll.u32 %v4073, 16
      %v4344 = vor.u32 %v4341, %v4342
      %v4345 = vsel %vm4269, %v4333, %v4344
      %v4347 = vshrl.u32 %v4074, 16
      %v4349 = vrot.slane %v4347, 7
      %v4350 = vshll.u32 %v4074, 16
      %v4352 = vor.u32 %v4349, %v4350
      %v4353 = vsel %vm4269, %v4341, %v4352
      %v4380 = vunpack.c.l.b16 %v4075
      %v4381 = vunpack.c.l.b16 %v4076
      %v4382 = vunpack.c.l.b16 %v4077
      %v4383 = vunpack.c.l.b16 %v4078
      %v4384 = vunpack.c.l.b16 %v4079
      %v4385 = vunpack.c.l.b16 %v4080
      %v4386 = vunpack.c.l.b16 %v4081
      %v4387 = vunpack.c.l.b16 %v4082
      %v4388 = vunpack.c.l.b16 %v4083
      %v4389 = vunpack.c.l.b16 %v4084
      %v4390 = vunpack.c.l.b16 %v4085
      %v4391 = vunpack.c.l.b16 %v4086
      %v4392 = vunpack.c.l.b16 %v4087
      %v4393 = vunpack.c.l.b16 %v4088
      %v4394 = vunpack.c.l.b16 %v4089
      %v4395 = vunpack.c.l.b16 %v4090
      %v4396 = vpack.c.b16 %v4381, %v4380
      %v4397 = vpack.c.b16 %v4383, %v4382
      %v4398 = vpack.c.b16 %v4385, %v4384
      %v4399 = vpack.c.b16 %v4387, %v4386
      %v4400 = vpack.c.b16 %v4389, %v4388
      %v4401 = vpack.c.b16 %v4391, %v4390
      %v4402 = vpack.c.b16 %v4393, %v4392
      %v4403 = vpack.c.b16 %v4395, %v4394
      %4412 = vmatprep.subr.bf16.mxu0 0
      %4413 = vmatpush1.bf16.msra.mxu0 %v4396
      %4414 = vmatprep.subr.bf16.mxu0 0
      %4415 = vmatpush1.bf16.msra.mxu0 %v4397
      %4416 = vmatprep.subr.bf16.mxu0 0
      %4417 = vmatpush1.bf16.msra.mxu0 %v4398
      %4418 = vmatprep.subr.bf16.mxu0 0
      %4419 = vmatpush1.bf16.msra.mxu0 %v4399
      %4420 = vmatprep.subr.bf16.mxu0 0
      %4421 = vmatpush1.bf16.msra.mxu0 %v4400
      %4422 = vmatprep.subr.bf16.mxu0 0
      %4423 = vmatpush1.bf16.msra.mxu0 %v4401
      %4424 = vmatprep.subr.bf16.mxu0 0
      %4425 = vmatpush1.bf16.msra.mxu0 %v4402
      %4426 = vmatprep.subr.bf16.mxu0 0
      %4427 = vmatpush1.bf16.msra.mxu0 %v4403
      %4428 = vmatprep.subr.bf16.mxu0 0
      %4429 = vmatpush1.bf16.msra.mxu0 0
      %4430 = vmatprep.subr.bf16.mxu0 0
      %4431 = vmatpush1.bf16.msra.mxu0 0
      %4432 = vmatprep.subr.bf16.mxu0 0
      %4433 = vmatpush1.bf16.msra.mxu0 0
      %4434 = vmatprep.subr.bf16.mxu0 0
      %4435 = vmatpush1.bf16.msra.mxu0 0
      %4436 = vmatprep.subr.bf16.mxu0 0
      %4437 = vmatpush1.bf16.msra.mxu0 0
      %4438 = vmatprep.subr.bf16.mxu0 0
      %4439 = vmatpush1.bf16.msra.mxu0 0
      %4440 = vmatprep.subr.bf16.mxu0 0
      %4441 = vmatpush1.bf16.msra.mxu0 0
      %4442 = vmatprep.subr.bf16.mxu0 0
      %4443 = vmatpush1.bf16.msra.mxu0 0
      %4444 = vmatprep.mubr.bf16.mxu0 0
      %4445 = vmatmul.mubr.bf16.gmra.mrb[0].mxu0 %v4281
      %v4446 = vpop.f32.mrb[0].mxu0
      %v4447 = vadd.f32 %v4191, %v4446
      %v4448 = vpop.f32.mrb[0].mxu0
      %v4449 = vpop.f32.mrb[0].mxu0
      %v4450 = vadd.f32 %v4194, %v4449
      %v4451 = vpop.f32.mrb[0].mxu0
      %4452 = vmatprep.mubr.bf16.mxu0 0
      %4453 = vmatmul.mubr.bf16.gmra.mrb[0].mxu0 %v4289
      %v4454 = vpop.f32.mrb[0].mxu0
      %v4455 = vadd.f32 %v4199, %v4454
      %v4456 = vpop.f32.mrb[0].mxu0
      %v4457 = vpop.f32.mrb[0].mxu0
      %v4458 = vadd.f32 %v4202, %v4457
      %v4459 = vpop.f32.mrb[0].mxu0
      %4460 = vmatprep.mubr.bf16.mxu0 0
      %4461 = vmatmul.mubr.bf16.gmra.mrb[0].mxu0 %v4297
      %v4462 = vpop.f32.mrb[0].mxu0
      %v4463 = vadd.f32 %v4207, %v4462
      %v4464 = vpop.f32.mrb[0].mxu0
      %v4465 = vpop.f32.mrb[0].mxu0
      %v4466 = vadd.f32 %v4210, %v4465
      %v4467 = vpop.f32.mrb[0].mxu0
      %4468 = vmatprep.mubr.bf16.mxu0 0
      %4469 = vmatmul.mubr.bf16.gmra.mrb[0].mxu0 %v4305
      %v4470 = vpop.f32.mrb[0].mxu0
      %v4471 = vadd.f32 %v4215, %v4470
      %v4472 = vpop.f32.mrb[0].mxu0
      %v4473 = vpop.f32.mrb[0].mxu0
      %v4474 = vadd.f32 %v4218, %v4473
      %v4475 = vpop.f32.mrb[0].mxu0
      %4476 = vmatprep.mubr.bf16.mxu0 0
      %4477 = vmatmul.mubr.bf16.gmra.mrb[0].mxu0 %v4313
      %v4478 = vpop.f32.mrb[0].mxu0
      %v4479 = vadd.f32 %v4223, %v4478
      %v4480 = vpop.f32.mrb[0].mxu0
      %v4481 = vpop.f32.mrb[0].mxu0
      %v4482 = vadd.f32 %v4226, %v4481
      %v4483 = vpop.f32.mrb[0].mxu0
      %4484 = vmatprep.mubr.bf16.mxu0 0
      %4485 = vmatmul.mubr.bf16.gmra.mrb[0].mxu0 %v4321
      %v4486 = vpop.f32.mrb[0].mxu0
      %v4487 = vadd.f32 %v4231, %v4486
      %v4488 = vpop.f32.mrb[0].mxu0
      %v4489 = vpop.f32.mrb[0].mxu0
      %v4490 = vadd.f32 %v4234, %v4489
      %v4491 = vpop.f32.mrb[0].mxu0
      %4492 = vmatprep.mubr.bf16.mxu0 0
      %4493 = vmatmul.mubr.bf16.gmra.mrb[0].mxu0 %v4329
      %v4494 = vpop.f32.mrb[0].mxu0
      %v4495 = vadd.f32 %v4239, %v4494
      %v4496 = vpop.f32.mrb[0].mxu0
      %v4497 = vpop.f32.mrb[0].mxu0
      %v4498 = vadd.f32 %v4242, %v4497
      %v4499 = vpop.f32.mrb[0].mxu0
      %4500 = vmatprep.mubr.bf16.mxu0 0
      %4501 = vmatmul.mubr.bf16.gmra.mrb[0].mxu0 %v4337
      %v4502 = vpop.f32.mrb[0].mxu0
      %v4503 = vadd.f32 %v4247, %v4502
      %v4504 = vpop.f32.mrb[0].mxu0
      %v4505 = vpop.f32.mrb[0].mxu0
      %v4506 = vadd.f32 %v4250, %v4505
      %v4507 = vpop.f32.mrb[0].mxu0
      %4508 = vmatprep.mubr.bf16.mxu0 0
      %4509 = vmatmul.mubr.bf16.gmra.mrb[0].mxu0 %v4345
      %v4510 = vpop.f32.mrb[0].mxu0
      %v4511 = vadd.f32 %v4255, %v4510
      %v4512 = vpop.f32.mrb[0].mxu0
      %v4513 = vpop.f32.mrb[0].mxu0
      %v4514 = vadd.f32 %v4258, %v4513
      %v4515 = vpop.f32.mrb[0].mxu0
      %4516 = vmatprep.mubr.bf16.mxu0 0
      %4517 = vmatmul.mubr.bf16.gmra.mrb[0].mxu0 %v4353
      %v4518 = vpop.f32.mrb[0].mxu0
      %v4519 = vadd.f32 %v4263, %v4518
      %v4520 = vpop.f32.mrb[0].mxu0
      %v4521 = vpop.f32.mrb[0].mxu0
      %v4522 = vadd.f32 %v4266, %v4521
      %v4523 = vpop.f32.mrb[0].mxu0
      %4524 = vdwg.mxu0
      %v4525 = vld [vmem:[#allocation3 + $0x8] sm:$0xff]
      %v4526 = vld [vmem:[#allocation3 + $0x10] sm:$0xff]
      %v4527 = vld [vmem:[#allocation3 + $0x18] sm:$0xff]
      %v4528 = vld [vmem:[#allocation3 + $0x20] sm:$0xff]
      %v4529 = vld [vmem:[#allocation3 + $0x28] sm:$0xff]
      %v4530 = vld [vmem:[#allocation3 + $0x30] sm:$0xff]
      %v4531 = vld [vmem:[#allocation3 + $0x38] sm:$0xff]
      %v4532 = vld [vmem:[#allocation3 + $0x40] sm:$0xff]
      %v4533 = vld [vmem:[#allocation3 + $0x48] sm:$0xff]
      %v4534 = vld [vmem:[#allocation3 + $0x50] sm:$0xff]
      %v4535 = vld [vmem:[#allocation3 + $0x58] sm:$0x1]
      %s4536 = scalar_lea.vmem %s59, 128
      %v4537 = vld [vmem:[%s4536] sm:$0xf]
      %v4538 = vld [vmem:[%s4536 + $0x4] sm:$0xf]
      %v4539 = vld [vmem:[%s4536 + $0x8] sm:$0xf]
      %v4540 = vld [vmem:[%s4536 + $0xc] sm:$0xf]
      %v4541 = vld [vmem:[%s4536 + $0x10] sm:$0xf]
      %v4542 = vld [vmem:[%s4536 + $0x14] sm:$0xf]
      %v4543 = vld [vmem:[%s4536 + $0x18] sm:$0xf]
      %v4544 = vld [vmem:[%s4536 + $0x1c] sm:$0xf]
      %v4545 = vld [vmem:[%s4536 + $0x20] sm:$0xf]
      %v4546 = vld [vmem:[%s4536 + $0x24] sm:$0xf]
      %v4547 = vld [vmem:[%s4536 + $0x28] sm:$0xf]
      %v4548 = vld [vmem:[%s4536 + $0x2c] sm:$0xf]
      %v4549 = vld [vmem:[%s4536 + $0x30] sm:$0xf]
      %v4550 = vld [vmem:[%s4536 + $0x34] sm:$0xf]
      %v4551 = vld [vmem:[%s4536 + $0x38] sm:$0xf]
      %v4552 = vld [vmem:[%s4536 + $0x3c] sm:$0xf]
      %vm4553 = vsmask.f32 7424
      %v4555 = vshrl.u32 %v4525, 16
      %v4557 = vshll.u32 %v4525, 16
      %v4559 = vrot.slane %v4557, 1
      %v4560 = vor.u32 %v4555, %v4559
      %v4562 = vshll.u32 %v4526, 16
      %v4564 = vrot.slane %v4562, 1
      %v4565 = vsel %vm4553, %v4560, %v4564
      %v4566 = vshrl.u32 %v4526, 16
      %v4568 = vor.u32 %v4566, %v4564
      %v4570 = vshll.u32 %v4527, 16
      %v4572 = vrot.slane %v4570, 1
      %v4573 = vsel %vm4553, %v4568, %v4572
      %v4574 = vshrl.u32 %v4527, 16
      %v4576 = vor.u32 %v4574, %v4572
      %v4578 = vshll.u32 %v4528, 16
      %v4580 = vrot.slane %v4578, 1
      %v4581 = vsel %vm4553, %v4576, %v4580
      %v4582 = vshrl.u32 %v4528, 16
      %v4584 = vor.u32 %v4582, %v4580
      %v4586 = vshll.u32 %v4529, 16
      %v4588 = vrot.slane %v4586, 1
      %v4589 = vsel %vm4553, %v4584, %v4588
      %v4590 = vshrl.u32 %v4529, 16
      %v4592 = vor.u32 %v4590, %v4588
      %v4594 = vshll.u32 %v4530, 16
      %v4596 = vrot.slane %v4594, 1
      %v4597 = vsel %vm4553, %v4592, %v4596
      %v4598 = vshrl.u32 %v4530, 16
      %v4600 = vor.u32 %v4598, %v4596
      %v4602 = vshll.u32 %v4531, 16
      %v4604 = vrot.slane %v4602, 1
      %v4605 = vsel %vm4553, %v4600, %v4604
      %v4606 = vshrl.u32 %v4531, 16
      %v4608 = vor.u32 %v4606, %v4604
      %v4610 = vshll.u32 %v4532, 16
      %v4612 = vrot.slane %v4610, 1
      %v4613 = vsel %vm4553, %v4608, %v4612
      %v4614 = vshrl.u32 %v4532, 16
      %v4616 = vor.u32 %v4614, %v4612
      %v4618 = vshll.u32 %v4533, 16
      %v4620 = vrot.slane %v4618, 1
      %v4621 = vsel %vm4553, %v4616, %v4620
      %v4622 = vshrl.u32 %v4533, 16
      %v4624 = vor.u32 %v4622, %v4620
      %v4626 = vshll.u32 %v4534, 16
      %v4628 = vrot.slane %v4626, 1
      %v4629 = vsel %vm4553, %v4624, %v4628
      %v4630 = vshrl.u32 %v4534, 16
      %v4632 = vor.u32 %v4630, %v4628
      %v4634 = vshll.u32 %v4535, 16
      %v4636 = vrot.slane %v4634, 1
      %v4637 = vsel %vm4553, %v4632, %v4636
      %v4664 = vunpack.c.l.b16 %v4537
      %v4665 = vunpack.c.l.b16 %v4538
      %v4666 = vunpack.c.l.b16 %v4539
      %v4667 = vunpack.c.l.b16 %v4540
      %v4668 = vunpack.c.l.b16 %v4541
      %v4669 = vunpack.c.l.b16 %v4542
      %v4670 = vunpack.c.l.b16 %v4543
      %v4671 = vunpack.c.l.b16 %v4544
      %v4672 = vunpack.c.l.b16 %v4545
      %v4673 = vunpack.c.l.b16 %v4546
      %v4674 = vunpack.c.l.b16 %v4547
      %v4675 = vunpack.c.l.b16 %v4548
      %v4676 = vunpack.c.l.b16 %v4549
      %v4677 = vunpack.c.l.b16 %v4550
      %v4678 = vunpack.c.l.b16 %v4551
      %v4679 = vunpack.c.l.b16 %v4552
      %v4680 = vpack.c.b16 %v4665, %v4664
      %v4681 = vpack.c.b16 %v4667, %v4666
      %v4682 = vpack.c.b16 %v4669, %v4668
      %v4683 = vpack.c.b16 %v4671, %v4670
      %v4684 = vpack.c.b16 %v4673, %v4672
      %v4685 = vpack.c.b16 %v4675, %v4674
      %v4686 = vpack.c.b16 %v4677, %v4676
      %v4687 = vpack.c.b16 %v4679, %v4678
      %4696 = vmatprep.subr.bf16.mxu0 0
      %4697 = vmatpush1.bf16.msra.mxu0 %v4680
      %4698 = vmatprep.subr.bf16.mxu0 0
      %4699 = vmatpush1.bf16.msra.mxu0 %v4681
      %4700 = vmatprep.subr.bf16.mxu0 0
      %4701 = vmatpush1.bf16.msra.mxu0 %v4682
      %4702 = vmatprep.subr.bf16.mxu0 0
      %4703 = vmatpush1.bf16.msra.mxu0 %v4683
      %4704 = vmatprep.subr.bf16.mxu0 0
      %4705 = vmatpush1.bf16.msra.mxu0 %v4684
      %4706 = vmatprep.subr.bf16.mxu0 0
      %4707 = vmatpush1.bf16.msra.mxu0 %v4685
      %4708 = vmatprep.subr.bf16.mxu0 0
      %4709 = vmatpush1.bf16.msra.mxu0 %v4686
      %4710 = vmatprep.subr.bf16.mxu0 0
      %4711 = vmatpush1.bf16.msra.mxu0 %v4687
      %4712 = vmatprep.subr.bf16.mxu0 0
      %4713 = vmatpush1.bf16.msra.mxu0 0
      %4714 = vmatprep.subr.bf16.mxu0 0
      %4715 = vmatpush1.bf16.msra.mxu0 0
      %4716 = vmatprep.subr.bf16.mxu0 0
      %4717 = vmatpush1.bf16.msra.mxu0 0
      %4718 = vmatprep.subr.bf16.mxu0 0
      %4719 = vmatpush1.bf16.msra.mxu0 0
      %4720 = vmatprep.subr.bf16.mxu0 0
      %4721 = vmatpush1.bf16.msra.mxu0 0
      %4722 = vmatprep.subr.bf16.mxu0 0
      %4723 = vmatpush1.bf16.msra.mxu0 0
      %4724 = vmatprep.subr.bf16.mxu0 0
      %4725 = vmatpush1.bf16.msra.mxu0 0
      %4726 = vmatprep.subr.bf16.mxu0 0
      %4727 = vmatpush1.bf16.msra.mxu0 0
      %4728 = vmatprep.mubr.bf16.mxu0 0
      %4729 = vmatmul.mubr.bf16.gmra.mrb[0].mxu0 %v4565
      %v4730 = vpop.f32.mrb[0].mxu0
      %v4731 = vadd.f32 0.0, %v4730
      %v4732 = vpop.f32.mrb[0].mxu0
      %v4733 = vpop.f32.mrb[0].mxu0
      %v4734 = vadd.f32 0.0, %v4733
      %v4735 = vpop.f32.mrb[0].mxu0
      %4736 = vmatprep.mubr.bf16.mxu0 0
      %4737 = vmatmul.mubr.bf16.gmra.mrb[0].mxu0 %v4573
      %v4738 = vpop.f32.mrb[0].mxu0
      %v4739 = vadd.f32 0.0, %v4738
      %v4740 = vpop.f32.mrb[0].mxu0
      %v4741 = vpop.f32.mrb[0].mxu0
      %v4742 = vadd.f32 0.0, %v4741
      %v4743 = vpop.f32.mrb[0].mxu0
      %4744 = vmatprep.mubr.bf16.mxu0 0
      %4745 = vmatmul.mubr.bf16.gmra.mrb[0].mxu0 %v4581
      %v4746 = vpop.f32.mrb[0].mxu0
      %v4747 = vadd.f32 0.0, %v4746
      %v4748 = vpop.f32.mrb[0].mxu0
      %v4749 = vpop.f32.mrb[0].mxu0
      %v4750 = vadd.f32 0.0, %v4749
      %v4751 = vpop.f32.mrb[0].mxu0
      %4752 = vmatprep.mubr.bf16.mxu0 0
      %4753 = vmatmul.mubr.bf16.gmra.mrb[0].mxu0 %v4589
      %v4754 = vpop.f32.mrb[0].mxu0
      %v4755 = vadd.f32 0.0, %v4754
      %v4756 = vpop.f32.mrb[0].mxu0
      %v4757 = vpop.f32.mrb[0].mxu0
      %v4758 = vadd.f32 0.0, %v4757
      %v4759 = vpop.f32.mrb[0].mxu0
      %4760 = vmatprep.mubr.bf16.mxu0 0
      %4761 = vmatmul.mubr.bf16.gmra.mrb[0].mxu0 %v4597
      %v4762 = vpop.f32.mrb[0].mxu0
      %v4763 = vadd.f32 0.0, %v4762
      %v4764 = vpop.f32.mrb[0].mxu0
      %v4765 = vpop.f32.mrb[0].mxu0
      %v4766 = vadd.f32 0.0, %v4765
      %v4767 = vpop.f32.mrb[0].mxu0
      %4768 = vmatprep.mubr.bf16.mxu0 0
      %4769 = vmatmul.mubr.bf16.gmra.mrb[0].mxu0 %v4605
      %v4770 = vpop.f32.mrb[0].mxu0
      %v4771 = vadd.f32 0.0, %v4770
      %v4772 = vpop.f32.mrb[0].mxu0
      %v4773 = vpop.f32.mrb[0].mxu0
      %v4774 = vadd.f32 0.0, %v4773
      %v4775 = vpop.f32.mrb[0].mxu0
      %4776 = vmatprep.mubr.bf16.mxu0 0
      %4777 = vmatmul.mubr.bf16.gmra.mrb[0].mxu0 %v4613
      %v4778 = vpop.f32.mrb[0].mxu0
      %v4779 = vadd.f32 0.0, %v4778
      %v4780 = vpop.f32.mrb[0].mxu0
      %v4781 = vpop.f32.mrb[0].mxu0
      %v4782 = vadd.f32 0.0, %v4781
      %v4783 = vpop.f32.mrb[0].mxu0
      %4784 = vmatprep.mubr.bf16.mxu0 0
      %4785 = vmatmul.mubr.bf16.gmra.mrb[0].mxu0 %v4621
      %v4786 = vpop.f32.mrb[0].mxu0
      %v4787 = vadd.f32 0.0, %v4786
      %v4788 = vpop.f32.mrb[0].mxu0
      %v4789 = vpop.f32.mrb[0].mxu0
      %v4790 = vadd.f32 0.0, %v4789
      %v4791 = vpop.f32.mrb[0].mxu0
      %4792 = vmatprep.mubr.bf16.mxu0 0
      %4793 = vmatmul.mubr.bf16.gmra.mrb[0].mxu0 %v4629
      %v4794 = vpop.f32.mrb[0].mxu0
      %v4795 = vadd.f32 0.0, %v4794
      %v4796 = vpop.f32.mrb[0].mxu0
      %v4797 = vpop.f32.mrb[0].mxu0
      %v4798 = vadd.f32 0.0, %v4797
      %v4799 = vpop.f32.mrb[0].mxu0
      %4800 = vmatprep.mubr.bf16.mxu0 0
      %4801 = vmatmul.mubr.bf16.gmra.mrb[0].mxu0 %v4637
      %v4802 = vpop.f32.mrb[0].mxu0
      %v4803 = vadd.f32 0.0, %v4802
      %v4804 = vpop.f32.mrb[0].mxu0
      %v4805 = vpop.f32.mrb[0].mxu0
      %v4806 = vadd.f32 0.0, %v4805
      %v4807 = vpop.f32.mrb[0].mxu0
      %4808 = vdwg.mxu0
      %v4809 = vadd.f32 %v4447, %v4731
      %v4810 = vadd.f32 %v4450, %v4734
      %v4811 = vadd.f32 %v4455, %v4739
      %v4812 = vadd.f32 %v4458, %v4742
      %v4813 = vadd.f32 %v4463, %v4747
      %v4814 = vadd.f32 %v4466, %v4750
      %v4815 = vadd.f32 %v4471, %v4755
      %v4816 = vadd.f32 %v4474, %v4758
      %v4817 = vadd.f32 %v4479, %v4763
      %v4818 = vadd.f32 %v4482, %v4766
      %v4819 = vadd.f32 %v4487, %v4771
      %v4820 = vadd.f32 %v4490, %v4774
      %v4821 = vadd.f32 %v4495, %v4779
      %v4822 = vadd.f32 %v4498, %v4782
      %v4823 = vadd.f32 %v4503, %v4787
      %v4824 = vadd.f32 %v4506, %v4790
      %v4825 = vadd.f32 %v4511, %v4795
      %v4826 = vadd.f32 %v4514, %v4798
      %v4827 = vadd.f32 %v4519, %v4803
      %v4828 = vadd.f32 %v4522, %v4806
      %v4829 = vld [vmem:[#allocation3 + $0x8] sm:$0x80]
      %v4830 = vld [vmem:[#allocation3 + $0x58] sm:$0xff]
      %s4831 = scalar_lea.vmem %s59, 192
      %v4832 = vld [vmem:[%s4831] sm:$0xf]
      %v4833 = vld [vmem:[%s4831 + $0x4] sm:$0xf]
      %v4834 = vld [vmem:[%s4831 + $0x8] sm:$0xf]
      %v4835 = vld [vmem:[%s4831 + $0xc] sm:$0xf]
      %v4836 = vld [vmem:[%s4831 + $0x10] sm:$0xf]
      %v4837 = vld [vmem:[%s4831 + $0x14] sm:$0xf]
      %v4838 = vld [vmem:[%s4831 + $0x18] sm:$0xf]
      %v4839 = vld [vmem:[%s4831 + $0x1c] sm:$0xf]
      %v4840 = vld [vmem:[%s4831 + $0x20] sm:$0xf]
      %v4841 = vld [vmem:[%s4831 + $0x24] sm:$0xf]
      %v4842 = vld [vmem:[%s4831 + $0x28] sm:$0xf]
      %v4843 = vld [vmem:[%s4831 + $0x2c] sm:$0xf]
      %v4844 = vld [vmem:[%s4831 + $0x30] sm:$0xf]
      %v4845 = vld [vmem:[%s4831 + $0x34] sm:$0xf]
      %v4846 = vld [vmem:[%s4831 + $0x38] sm:$0xf]
      %v4847 = vld [vmem:[%s4831 + $0x3c] sm:$0xf]
      %v4849 = vshrl.u32 %v4829, 16
      %v4851 = vrot.slane %v4849, 7
      %v4852 = vrot.slane %v4566, 7
      %v4853 = vor.u32 %v4852, %v4562
      %v4854 = vsel %vm4269, %v4851, %v4853
      %v4855 = vrot.slane %v4574, 7
      %v4856 = vor.u32 %v4855, %v4570
      %v4857 = vsel %vm4269, %v4852, %v4856
      %v4858 = vrot.slane %v4582, 7
      %v4859 = vor.u32 %v4858, %v4578
      %v4860 = vsel %vm4269, %v4855, %v4859
      %v4861 = vrot.slane %v4590, 7
      %v4862 = vor.u32 %v4861, %v4586
      %v4863 = vsel %vm4269, %v4858, %v4862
      %v4864 = vrot.slane %v4598, 7
      %v4865 = vor.u32 %v4864, %v4594
      %v4866 = vsel %vm4269, %v4861, %v4865
      %v4867 = vrot.slane %v4606, 7
      %v4868 = vor.u32 %v4867, %v4602
      %v4869 = vsel %vm4269, %v4864, %v4868
      %v4870 = vrot.slane %v4614, 7
      %v4871 = vor.u32 %v4870, %v4610
      %v4872 = vsel %vm4269, %v4867, %v4871
      %v4873 = vrot.slane %v4622, 7
      %v4874 = vor.u32 %v4873, %v4618
      %v4875 = vsel %vm4269, %v4870, %v4874
      %v4876 = vrot.slane %v4630, 7
      %v4877 = vor.u32 %v4876, %v4626
      %v4878 = vsel %vm4269, %v4873, %v4877
      %v4880 = vshrl.u32 %v4830, 16
      %v4882 = vrot.slane %v4880, 7
      %v4883 = vshll.u32 %v4830, 16
      %v4885 = vor.u32 %v4882, %v4883
      %v4886 = vsel %vm4269, %v4876, %v4885
      %v4913 = vunpack.c.l.b16 %v4832
      %v4914 = vunpack.c.l.b16 %v4833
      %v4915 = vunpack.c.l.b16 %v4834
      %v4916 = vunpack.c.l.b16 %v4835
      %v4917 = vunpack.c.l.b16 %v4836
      %v4918 = vunpack.c.l.b16 %v4837
      %v4919 = vunpack.c.l.b16 %v4838
      %v4920 = vunpack.c.l.b16 %v4839
      %v4921 = vunpack.c.l.b16 %v4840
      %v4922 = vunpack.c.l.b16 %v4841
      %v4923 = vunpack.c.l.b16 %v4842
      %v4924 = vunpack.c.l.b16 %v4843
      %v4925 = vunpack.c.l.b16 %v4844
      %v4926 = vunpack.c.l.b16 %v4845
      %v4927 = vunpack.c.l.b16 %v4846
      %v4928 = vunpack.c.l.b16 %v4847
      %v4929 = vpack.c.b16 %v4914, %v4913
      %v4930 = vpack.c.b16 %v4916, %v4915
      %v4931 = vpack.c.b16 %v4918, %v4917
      %v4932 = vpack.c.b16 %v4920, %v4919
      %v4933 = vpack.c.b16 %v4922, %v4921
      %v4934 = vpack.c.b16 %v4924, %v4923
      %v4935 = vpack.c.b16 %v4926, %v4925
      %v4936 = vpack.c.b16 %v4928, %v4927
      %4945 = vmatprep.subr.bf16.mxu0 0
      %4946 = vmatpush1.bf16.msra.mxu0 %v4929
      %4947 = vmatprep.subr.bf16.mxu0 0
      %4948 = vmatpush1.bf16.msra.mxu0 %v4930
      %4949 = vmatprep.subr.bf16.mxu0 0
      %4950 = vmatpush1.bf16.msra.mxu0 %v4931
      %4951 = vmatprep.subr.bf16.mxu0 0
      %4952 = vmatpush1.bf16.msra.mxu0 %v4932
      %4953 = vmatprep.subr.bf16.mxu0 0
      %4954 = vmatpush1.bf16.msra.mxu0 %v4933
      %4955 = vmatprep.subr.bf16.mxu0 0
      %4956 = vmatpush1.bf16.msra.mxu0 %v4934
      %4957 = vmatprep.subr.bf16.mxu0 0
      %4958 = vmatpush1.bf16.msra.mxu0 %v4935
      %4959 = vmatprep.subr.bf16.mxu0 0
      %4960 = vmatpush1.bf16.msra.mxu0 %v4936
      %4961 = vmatprep.subr.bf16.mxu0 0
      %4962 = vmatpush1.bf16.msra.mxu0 0
      %4963 = vmatprep.subr.bf16.mxu0 0
      %4964 = vmatpush1.bf16.msra.mxu0 0
      %4965 = vmatprep.subr.bf16.mxu0 0
      %4966 = vmatpush1.bf16.msra.mxu0 0
      %4967 = vmatprep.subr.bf16.mxu0 0
      %4968 = vmatpush1.bf16.msra.mxu0 0
      %4969 = vmatprep.subr.bf16.mxu0 0
      %4970 = vmatpush1.bf16.msra.mxu0 0
      %4971 = vmatprep.subr.bf16.mxu0 0
      %4972 = vmatpush1.bf16.msra.mxu0 0
      %4973 = vmatprep.subr.bf16.mxu0 0
      %4974 = vmatpush1.bf16.msra.mxu0 0
      %4975 = vmatprep.subr.bf16.mxu0 0
      %4976 = vmatpush1.bf16.msra.mxu0 0
      %4977 = vmatprep.mubr.bf16.mxu0 0
      %4978 = vmatmul.mubr.bf16.gmra.mrb[0].mxu0 %v4854
      %v4979 = vpop.f32.mrb[0].mxu0
      %v4980 = vadd.f32 0.0, %v4979
      %v4981 = vpop.f32.mrb[0].mxu0
      %v4982 = vpop.f32.mrb[0].mxu0
      %v4983 = vadd.f32 0.0, %v4982
      %v4984 = vpop.f32.mrb[0].mxu0
      %4985 = vmatprep.mubr.bf16.mxu0 0
      %4986 = vmatmul.mubr.bf16.gmra.mrb[0].mxu0 %v4857
      %v4987 = vpop.f32.mrb[0].mxu0
      %v4988 = vadd.f32 0.0, %v4987
      %v4989 = vpop.f32.mrb[0].mxu0
      %v4990 = vpop.f32.mrb[0].mxu0
      %v4991 = vadd.f32 0.0, %v4990
      %v4992 = vpop.f32.mrb[0].mxu0
      %4993 = vmatprep.mubr.bf16.mxu0 0
      %4994 = vmatmul.mubr.bf16.gmra.mrb[0].mxu0 %v4860
      %v4995 = vpop.f32.mrb[0].mxu0
      %v4996 = vadd.f32 0.0, %v4995
      %v4997 = vpop.f32.mrb[0].mxu0
      %v4998 = vpop.f32.mrb[0].mxu0
      %v4999 = vadd.f32 0.0, %v4998
      %v5000 = vpop.f32.mrb[0].mxu0
      %5001 = vmatprep.mubr.bf16.mxu0 0
      %5002 = vmatmul.mubr.bf16.gmra.mrb[0].mxu0 %v4863
      %v5003 = vpop.f32.mrb[0].mxu0
      %v5004 = vadd.f32 0.0, %v5003
      %v5005 = vpop.f32.mrb[0].mxu0
      %v5006 = vpop.f32.mrb[0].mxu0
      %v5007 = vadd.f32 0.0, %v5006
      %v5008 = vpop.f32.mrb[0].mxu0
      %5009 = vmatprep.mubr.bf16.mxu0 0
      %5010 = vmatmul.mubr.bf16.gmra.mrb[0].mxu0 %v4866
      %v5011 = vpop.f32.mrb[0].mxu0
      %v5012 = vadd.f32 0.0, %v5011
      %v5013 = vpop.f32.mrb[0].mxu0
      %v5014 = vpop.f32.mrb[0].mxu0
      %v5015 = vadd.f32 0.0, %v5014
      %v5016 = vpop.f32.mrb[0].mxu0
      %5017 = vmatprep.mubr.bf16.mxu0 0
      %5018 = vmatmul.mubr.bf16.gmra.mrb[0].mxu0 %v4869
      %v5019 = vpop.f32.mrb[0].mxu0
      %v5020 = vadd.f32 0.0, %v5019
      %v5021 = vpop.f32.mrb[0].mxu0
      %v5022 = vpop.f32.mrb[0].mxu0
      %v5023 = vadd.f32 0.0, %v5022
      %v5024 = vpop.f32.mrb[0].mxu0
      %5025 = vmatprep.mubr.bf16.mxu0 0
      %5026 = vmatmul.mubr.bf16.gmra.mrb[0].mxu0 %v4872
      %v5027 = vpop.f32.mrb[0].mxu0
      %v5028 = vadd.f32 0.0, %v5027
      %v5029 = vpop.f32.mrb[0].mxu0
      %v5030 = vpop.f32.mrb[0].mxu0
      %v5031 = vadd.f32 0.0, %v5030
      %v5032 = vpop.f32.mrb[0].mxu0
      %5033 = vmatprep.mubr.bf16.mxu0 0
      %5034 = vmatmul.mubr.bf16.gmra.mrb[0].mxu0 %v4875
      %v5035 = vpop.f32.mrb[0].mxu0
      %v5036 = vadd.f32 0.0, %v5035
      %v5037 = vpop.f32.mrb[0].mxu0
      %v5038 = vpop.f32.mrb[0].mxu0
      %v5039 = vadd.f32 0.0, %v5038
      %v5040 = vpop.f32.mrb[0].mxu0
      %5041 = vmatprep.mubr.bf16.mxu0 0
      %5042 = vmatmul.mubr.bf16.gmra.mrb[0].mxu0 %v4878
      %v5043 = vpop.f32.mrb[0].mxu0
      %v5044 = vadd.f32 0.0, %v5043
      %v5045 = vpop.f32.mrb[0].mxu0
      %v5046 = vpop.f32.mrb[0].mxu0
      %v5047 = vadd.f32 0.0, %v5046
      %v5048 = vpop.f32.mrb[0].mxu0
      %5049 = vmatprep.mubr.bf16.mxu0 0
      %5050 = vmatmul.mubr.bf16.gmra.mrb[0].mxu0 %v4886
      %v5051 = vpop.f32.mrb[0].mxu0
      %v5052 = vadd.f32 0.0, %v5051
      %v5053 = vpop.f32.mrb[0].mxu0
      %v5054 = vpop.f32.mrb[0].mxu0
      %v5055 = vadd.f32 0.0, %v5054
      %v5056 = vpop.f32.mrb[0].mxu0
      %5057 = vdwg.mxu0
      %v5058 = vadd.f32 %v4809, %v4980
      %v5059 = vadd.f32 %v4810, %v4983
      %v5060 = vadd.f32 %v4811, %v4988
      %v5061 = vadd.f32 %v4812, %v4991
      %v5062 = vadd.f32 %v4813, %v4996
      %v5063 = vadd.f32 %v4814, %v4999
      %v5064 = vadd.f32 %v4815, %v5004
      %v5065 = vadd.f32 %v4816, %v5007
      %v5066 = vadd.f32 %v4817, %v5012
      %v5067 = vadd.f32 %v4818, %v5015
      %v5068 = vadd.f32 %v4819, %v5020
      %v5069 = vadd.f32 %v4820, %v5023
      %v5070 = vadd.f32 %v4821, %v5028
      %v5071 = vadd.f32 %v4822, %v5031
      %v5072 = vadd.f32 %v4823, %v5036
      %v5073 = vadd.f32 %v4824, %v5039
      %v5074 = vadd.f32 %v4825, %v5044
      %v5075 = vadd.f32 %v4826, %v5047
      %v5076 = vadd.f32 %v4827, %v5052
      %v5077 = vadd.f32 %v4828, %v5055
      %s5078 = scalar_lea.vmem %s59, 256
      %v5079 = vld [vmem:[%s5078] sm:$0xf]
      %v5080 = vld [vmem:[%s5078 + $0x4] sm:$0xf]
      %v5081 = vld [vmem:[%s5078 + $0x8] sm:$0xf]
      %v5082 = vld [vmem:[%s5078 + $0xc] sm:$0xf]
      %v5083 = vld [vmem:[%s5078 + $0x10] sm:$0xf]
      %v5084 = vld [vmem:[%s5078 + $0x14] sm:$0xf]
      %v5085 = vld [vmem:[%s5078 + $0x18] sm:$0xf]
      %v5086 = vld [vmem:[%s5078 + $0x1c] sm:$0xf]
      %v5087 = vld [vmem:[%s5078 + $0x20] sm:$0xf]
      %v5088 = vld [vmem:[%s5078 + $0x24] sm:$0xf]
      %v5089 = vld [vmem:[%s5078 + $0x28] sm:$0xf]
      %v5090 = vld [vmem:[%s5078 + $0x2c] sm:$0xf]
      %v5091 = vld [vmem:[%s5078 + $0x30] sm:$0xf]
      %v5092 = vld [vmem:[%s5078 + $0x34] sm:$0xf]
      %v5093 = vld [vmem:[%s5078 + $0x38] sm:$0xf]
      %v5094 = vld [vmem:[%s5078 + $0x3c] sm:$0xf]
      %v5111 = vunpack.c.l.b16 %v5079
      %v5112 = vunpack.c.l.b16 %v5080
      %v5113 = vunpack.c.l.b16 %v5081
      %v5114 = vunpack.c.l.b16 %v5082
      %v5115 = vunpack.c.l.b16 %v5083
      %v5116 = vunpack.c.l.b16 %v5084
      %v5117 = vunpack.c.l.b16 %v5085
      %v5118 = vunpack.c.l.b16 %v5086
      %v5119 = vunpack.c.l.b16 %v5087
      %v5120 = vunpack.c.l.b16 %v5088
      %v5121 = vunpack.c.l.b16 %v5089
      %v5122 = vunpack.c.l.b16 %v5090
      %v5123 = vunpack.c.l.b16 %v5091
      %v5124 = vunpack.c.l.b16 %v5092
      %v5125 = vunpack.c.l.b16 %v5093
      %v5126 = vunpack.c.l.b16 %v5094
      %v5127 = vpack.c.b16 %v5112, %v5111
      %v5128 = vpack.c.b16 %v5114, %v5113
      %v5129 = vpack.c.b16 %v5116, %v5115
      %v5130 = vpack.c.b16 %v5118, %v5117
      %v5131 = vpack.c.b16 %v5120, %v5119
      %v5132 = vpack.c.b16 %v5122, %v5121
      %v5133 = vpack.c.b16 %v5124, %v5123
      %v5134 = vpack.c.b16 %v5126, %v5125
      %5143 = vmatprep.subr.bf16.mxu0 0
      %5144 = vmatpush1.bf16.msra.mxu0 %v5127
      %5145 = vmatprep.subr.bf16.mxu0 0
      %5146 = vmatpush1.bf16.msra.mxu0 %v5128
      %5147 = vmatprep.subr.bf16.mxu0 0
      %5148 = vmatpush1.bf16.msra.mxu0 %v5129
      %5149 = vmatprep.subr.bf16.mxu0 0
      %5150 = vmatpush1.bf16.msra.mxu0 %v5130
      %5151 = vmatprep.subr.bf16.mxu0 0
      %5152 = vmatpush1.bf16.msra.mxu0 %v5131
      %5153 = vmatprep.subr.bf16.mxu0 0
      %5154 = vmatpush1.bf16.msra.mxu0 %v5132
      %5155 = vmatprep.subr.bf16.mxu0 0
      %5156 = vmatpush1.bf16.msra.mxu0 %v5133
      %5157 = vmatprep.subr.bf16.mxu0 0
      %5158 = vmatpush1.bf16.msra.mxu0 %v5134
      %5159 = vmatprep.subr.bf16.mxu0 0
      %5160 = vmatpush1.bf16.msra.mxu0 0
      %5161 = vmatprep.subr.bf16.mxu0 0
      %5162 = vmatpush1.bf16.msra.mxu0 0
      %5163 = vmatprep.subr.bf16.mxu0 0
      %5164 = vmatpush1.bf16.msra.mxu0 0
      %5165 = vmatprep.subr.bf16.mxu0 0
      %5166 = vmatpush1.bf16.msra.mxu0 0
      %5167 = vmatprep.subr.bf16.mxu0 0
      %5168 = vmatpush1.bf16.msra.mxu0 0
      %5169 = vmatprep.subr.bf16.mxu0 0
      %5170 = vmatpush1.bf16.msra.mxu0 0
      %5171 = vmatprep.subr.bf16.mxu0 0
      %5172 = vmatpush1.bf16.msra.mxu0 0
      %5173 = vmatprep.subr.bf16.mxu0 0
      %5174 = vmatpush1.bf16.msra.mxu0 0
      %5175 = vmatprep.mubr.bf16.mxu0 0
      %5176 = vmatmul.mubr.bf16.gmra.mrb[0].mxu0 %v4526
      %v5177 = vpop.f32.mrb[0].mxu0
      %v5178 = vadd.f32 0.0, %v5177
      %v5179 = vpop.f32.mrb[0].mxu0
      %v5180 = vpop.f32.mrb[0].mxu0
      %v5181 = vadd.f32 0.0, %v5180
      %v5182 = vpop.f32.mrb[0].mxu0
      %5183 = vmatprep.mubr.bf16.mxu0 0
      %5184 = vmatmul.mubr.bf16.gmra.mrb[0].mxu0 %v4527
      %v5185 = vpop.f32.mrb[0].mxu0
      %v5186 = vadd.f32 0.0, %v5185
      %v5187 = vpop.f32.mrb[0].mxu0
      %v5188 = vpop.f32.mrb[0].mxu0
      %v5189 = vadd.f32 0.0, %v5188
      %v5190 = vpop.f32.mrb[0].mxu0
      %5191 = vmatprep.mubr.bf16.mxu0 0
      %5192 = vmatmul.mubr.bf16.gmra.mrb[0].mxu0 %v4528
      %v5193 = vpop.f32.mrb[0].mxu0
      %v5194 = vadd.f32 0.0, %v5193
      %v5195 = vpop.f32.mrb[0].mxu0
      %v5196 = vpop.f32.mrb[0].mxu0
      %v5197 = vadd.f32 0.0, %v5196
      %v5198 = vpop.f32.mrb[0].mxu0
      %5199 = vmatprep.mubr.bf16.mxu0 0
      %5200 = vmatmul.mubr.bf16.gmra.mrb[0].mxu0 %v4529
      %v5201 = vpop.f32.mrb[0].mxu0
      %v5202 = vadd.f32 0.0, %v5201
      %v5203 = vpop.f32.mrb[0].mxu0
      %v5204 = vpop.f32.mrb[0].mxu0
      %v5205 = vadd.f32 0.0, %v5204
      %v5206 = vpop.f32.mrb[0].mxu0
      %5207 = vmatprep.mubr.bf16.mxu0 0
      %5208 = vmatmul.mubr.bf16.gmra.mrb[0].mxu0 %v4530
      %v5209 = vpop.f32.mrb[0].mxu0
      %v5210 = vadd.f32 0.0, %v5209
      %v5211 = vpop.f32.mrb[0].mxu0
      %v5212 = vpop.f32.mrb[0].mxu0
      %v5213 = vadd.f32 0.0, %v5212
      %v5214 = vpop.f32.mrb[0].mxu0
      %5215 = vmatprep.mubr.bf16.mxu0 0
      %5216 = vmatmul.mubr.bf16.gmra.mrb[0].mxu0 %v4531
      %v5217 = vpop.f32.mrb[0].mxu0
      %v5218 = vadd.f32 0.0, %v5217
      %v5219 = vpop.f32.mrb[0].mxu0
      %v5220 = vpop.f32.mrb[0].mxu0
      %v5221 = vadd.f32 0.0, %v5220
      %v5222 = vpop.f32.mrb[0].mxu0
      %5223 = vmatprep.mubr.bf16.mxu0 0
      %5224 = vmatmul.mubr.bf16.gmra.mrb[0].mxu0 %v4532
      %v5225 = vpop.f32.mrb[0].mxu0
      %v5226 = vadd.f32 0.0, %v5225
      %v5227 = vpop.f32.mrb[0].mxu0
      %v5228 = vpop.f32.mrb[0].mxu0
      %v5229 = vadd.f32 0.0, %v5228
      %v5230 = vpop.f32.mrb[0].mxu0
      %5231 = vmatprep.mubr.bf16.mxu0 0
      %5232 = vmatmul.mubr.bf16.gmra.mrb[0].mxu0 %v4533
      %v5233 = vpop.f32.mrb[0].mxu0
      %v5234 = vadd.f32 0.0, %v5233
      %v5235 = vpop.f32.mrb[0].mxu0
      %v5236 = vpop.f32.mrb[0].mxu0
      %v5237 = vadd.f32 0.0, %v5236
      %v5238 = vpop.f32.mrb[0].mxu0
      %5239 = vmatprep.mubr.bf16.mxu0 0
      %5240 = vmatmul.mubr.bf16.gmra.mrb[0].mxu0 %v4534
      %v5241 = vpop.f32.mrb[0].mxu0
      %v5242 = vadd.f32 0.0, %v5241
      %v5243 = vpop.f32.mrb[0].mxu0
      %v5244 = vpop.f32.mrb[0].mxu0
      %v5245 = vadd.f32 0.0, %v5244
      %v5246 = vpop.f32.mrb[0].mxu0
      %5247 = vmatprep.mubr.bf16.mxu0 0
      %5248 = vmatmul.mubr.bf16.gmra.mrb[0].mxu0 %v4830
      %v5249 = vpop.f32.mrb[0].mxu0
      %v5250 = vadd.f32 0.0, %v5249
      %v5251 = vpop.f32.mrb[0].mxu0
      %v5252 = vpop.f32.mrb[0].mxu0
      %v5253 = vadd.f32 0.0, %v5252
      %v5254 = vpop.f32.mrb[0].mxu0
      %5255 = vdwg.mxu0
      %v5256 = vadd.f32 %v5058, %v5178
      %v5257 = vadd.f32 %v5059, %v5181
      %v5258 = vadd.f32 %v5060, %v5186
      %v5259 = vadd.f32 %v5061, %v5189
      %v5260 = vadd.f32 %v5062, %v5194
      %v5261 = vadd.f32 %v5063, %v5197
      %v5262 = vadd.f32 %v5064, %v5202
      %v5263 = vadd.f32 %v5065, %v5205
      %v5264 = vadd.f32 %v5066, %v5210
      %v5265 = vadd.f32 %v5067, %v5213
      %v5266 = vadd.f32 %v5068, %v5218
      %v5267 = vadd.f32 %v5069, %v5221
      %v5268 = vadd.f32 %v5070, %v5226
      %v5269 = vadd.f32 %v5071, %v5229
      %v5270 = vadd.f32 %v5072, %v5234
      %v5271 = vadd.f32 %v5073, %v5237
      %v5272 = vadd.f32 %v5074, %v5242
      %v5273 = vadd.f32 %v5075, %v5245
      %v5274 = vadd.f32 %v5076, %v5250
      %v5275 = vadd.f32 %v5077, %v5253
      %v5276 = vld [vmem:[#allocation3 + $0x10] sm:$0xff]
      %v5277 = vld [vmem:[#allocation3 + $0x18] sm:$0xff]
      %v5278 = vld [vmem:[#allocation3 + $0x20] sm:$0xff]
      %v5279 = vld [vmem:[#allocation3 + $0x28] sm:$0xff]
      %v5280 = vld [vmem:[#allocation3 + $0x30] sm:$0xff]
      %v5281 = vld [vmem:[#allocation3 + $0x38] sm:$0xff]
      %v5282 = vld [vmem:[#allocation3 + $0x40] sm:$0xff]
      %v5283 = vld [vmem:[#allocation3 + $0x48] sm:$0xff]
      %v5284 = vld [vmem:[#allocation3 + $0x50] sm:$0xff]
      %v5285 = vld [vmem:[#allocation3 + $0x58] sm:$0xff]
      %v5286 = vld [vmem:[#allocation3 + $0x60] sm:$0x1]
      %s5287 = scalar_lea.vmem %s59, 320
      %v5288 = vld [vmem:[%s5287] sm:$0xf]
      %v5289 = vld [vmem:[%s5287 + $0x4] sm:$0xf]
      %v5290 = vld [vmem:[%s5287 + $0x8] sm:$0xf]
      %v5291 = vld [vmem:[%s5287 + $0xc] sm:$0xf]
      %v5292 = vld [vmem:[%s5287 + $0x10] sm:$0xf]
      %v5293 = vld [vmem:[%s5287 + $0x14] sm:$0xf]
      %v5294 = vld [vmem:[%s5287 + $0x18] sm:$0xf]
      %v5295 = vld [vmem:[%s5287 + $0x1c] sm:$0xf]
      %v5296 = vld [vmem:[%s5287 + $0x20] sm:$0xf]
      %v5297 = vld [vmem:[%s5287 + $0x24] sm:$0xf]
      %v5298 = vld [vmem:[%s5287 + $0x28] sm:$0xf]
      %v5299 = vld [vmem:[%s5287 + $0x2c] sm:$0xf]
      %v5300 = vld [vmem:[%s5287 + $0x30] sm:$0xf]
      %v5301 = vld [vmem:[%s5287 + $0x34] sm:$0xf]
      %v5302 = vld [vmem:[%s5287 + $0x38] sm:$0xf]
      %v5303 = vld [vmem:[%s5287 + $0x3c] sm:$0xf]
      %v5305 = vshrl.u32 %v5276, 16
      %v5307 = vshll.u32 %v5276, 16
      %v5309 = vrot.slane %v5307, 1
      %v5310 = vor.u32 %v5305, %v5309
      %v5312 = vshll.u32 %v5277, 16
      %v5314 = vrot.slane %v5312, 1
      %v5315 = vsel %vm4553, %v5310, %v5314
      %v5316 = vshrl.u32 %v5277, 16
      %v5318 = vor.u32 %v5316, %v5314
      %v5320 = vshll.u32 %v5278, 16
      %v5322 = vrot.slane %v5320, 1
      %v5323 = vsel %vm4553, %v5318, %v5322
      %v5324 = vshrl.u32 %v5278, 16
      %v5326 = vor.u32 %v5324, %v5322
      %v5328 = vshll.u32 %v5279, 16
      %v5330 = vrot.slane %v5328, 1
      %v5331 = vsel %vm4553, %v5326, %v5330
      %v5332 = vshrl.u32 %v5279, 16
      %v5334 = vor.u32 %v5332, %v5330
      %v5336 = vshll.u32 %v5280, 16
      %v5338 = vrot.slane %v5336, 1
      %v5339 = vsel %vm4553, %v5334, %v5338
      %v5340 = vshrl.u32 %v5280, 16
      %v5342 = vor.u32 %v5340, %v5338
      %v5344 = vshll.u32 %v5281, 16
      %v5346 = vrot.slane %v5344, 1
      %v5347 = vsel %vm4553, %v5342, %v5346
      %v5348 = vshrl.u32 %v5281, 16
      %v5350 = vor.u32 %v5348, %v5346
      %v5352 = vshll.u32 %v5282, 16
      %v5354 = vrot.slane %v5352, 1
      %v5355 = vsel %vm4553, %v5350, %v5354
      %v5356 = vshrl.u32 %v5282, 16
      %v5358 = vor.u32 %v5356, %v5354
      %v5360 = vshll.u32 %v5283, 16
      %v5362 = vrot.slane %v5360, 1
      %v5363 = vsel %vm4553, %v5358, %v5362
      %v5364 = vshrl.u32 %v5283, 16
      %v5366 = vor.u32 %v5364, %v5362
      %v5368 = vshll.u32 %v5284, 16
      %v5370 = vrot.slane %v5368, 1
      %v5371 = vsel %vm4553, %v5366, %v5370
      %v5372 = vshrl.u32 %v5284, 16
      %v5374 = vor.u32 %v5372, %v5370
      %v5376 = vshll.u32 %v5285, 16
      %v5378 = vrot.slane %v5376, 1
      %v5379 = vsel %vm4553, %v5374, %v5378
      %v5380 = vshrl.u32 %v5285, 16
      %v5382 = vor.u32 %v5380, %v5378
      %v5384 = vshll.u32 %v5286, 16
      %v5386 = vrot.slane %v5384, 1
      %v5387 = vsel %vm4553, %v5382, %v5386
      %v5414 = vunpack.c.l.b16 %v5288
      %v5415 = vunpack.c.l.b16 %v5289
      %v5416 = vunpack.c.l.b16 %v5290
      %v5417 = vunpack.c.l.b16 %v5291
      %v5418 = vunpack.c.l.b16 %v5292
      %v5419 = vunpack.c.l.b16 %v5293
      %v5420 = vunpack.c.l.b16 %v5294
      %v5421 = vunpack.c.l.b16 %v5295
      %v5422 = vunpack.c.l.b16 %v5296
      %v5423 = vunpack.c.l.b16 %v5297
      %v5424 = vunpack.c.l.b16 %v5298
      %v5425 = vunpack.c.l.b16 %v5299
      %v5426 = vunpack.c.l.b16 %v5300
      %v5427 = vunpack.c.l.b16 %v5301
      %v5428 = vunpack.c.l.b16 %v5302
      %v5429 = vunpack.c.l.b16 %v5303
      %v5430 = vpack.c.b16 %v5415, %v5414
      %v5431 = vpack.c.b16 %v5417, %v5416
      %v5432 = vpack.c.b16 %v5419, %v5418
      %v5433 = vpack.c.b16 %v5421, %v5420
      %v5434 = vpack.c.b16 %v5423, %v5422
      %v5435 = vpack.c.b16 %v5425, %v5424
      %v5436 = vpack.c.b16 %v5427, %v5426
      %v5437 = vpack.c.b16 %v5429, %v5428
      %5446 = vmatprep.subr.bf16.mxu0 0
      %5447 = vmatpush1.bf16.msra.mxu0 %v5430
      %5448 = vmatprep.subr.bf16.mxu0 0
      %5449 = vmatpush1.bf16.msra.mxu0 %v5431
      %5450 = vmatprep.subr.bf16.mxu0 0
      %5451 = vmatpush1.bf16.msra.mxu0 %v5432
      %5452 = vmatprep.subr.bf16.mxu0 0
      %5453 = vmatpush1.bf16.msra.mxu0 %v5433
      %5454 = vmatprep.subr.bf16.mxu0 0
      %5455 = vmatpush1.bf16.msra.mxu0 %v5434
      %5456 = vmatprep.subr.bf16.mxu0 0
      %5457 = vmatpush1.bf16.msra.mxu0 %v5435
      %5458 = vmatprep.subr.bf16.mxu0 0
      %5459 = vmatpush1.bf16.msra.mxu0 %v5436
      %5460 = vmatprep.subr.bf16.mxu0 0
      %5461 = vmatpush1.bf16.msra.mxu0 %v5437
      %5462 = vmatprep.subr.bf16.mxu0 0
      %5463 = vmatpush1.bf16.msra.mxu0 0
      %5464 = vmatprep.subr.bf16.mxu0 0
      %5465 = vmatpush1.bf16.msra.mxu0 0
      %5466 = vmatprep.subr.bf16.mxu0 0
      %5467 = vmatpush1.bf16.msra.mxu0 0
      %5468 = vmatprep.subr.bf16.mxu0 0
      %5469 = vmatpush1.bf16.msra.mxu0 0
      %5470 = vmatprep.subr.bf16.mxu0 0
      %5471 = vmatpush1.bf16.msra.mxu0 0
      %5472 = vmatprep.subr.bf16.mxu0 0
      %5473 = vmatpush1.bf16.msra.mxu0 0
      %5474 = vmatprep.subr.bf16.mxu0 0
      %5475 = vmatpush1.bf16.msra.mxu0 0
      %5476 = vmatprep.subr.bf16.mxu0 0
      %5477 = vmatpush1.bf16.msra.mxu0 0
      %5478 = vmatprep.mubr.bf16.mxu0 0
      %5479 = vmatmul.mubr.bf16.gmra.mrb[0].mxu0 %v5315
      %v5480 = vpop.f32.mrb[0].mxu0
      %v5481 = vadd.f32 0.0, %v5480
      %v5482 = vpop.f32.mrb[0].mxu0
      %v5483 = vpop.f32.mrb[0].mxu0
      %v5484 = vadd.f32 0.0, %v5483
      %v5485 = vpop.f32.mrb[0].mxu0
      %5486 = vmatprep.mubr.bf16.mxu0 0
      %5487 = vmatmul.mubr.bf16.gmra.mrb[0].mxu0 %v5323
      %v5488 = vpop.f32.mrb[0].mxu0
      %v5489 = vadd.f32 0.0, %v5488
      %v5490 = vpop.f32.mrb[0].mxu0
      %v5491 = vpop.f32.mrb[0].mxu0
      %v5492 = vadd.f32 0.0, %v5491
      %v5493 = vpop.f32.mrb[0].mxu0
      %5494 = vmatprep.mubr.bf16.mxu0 0
      %5495 = vmatmul.mubr.bf16.gmra.mrb[0].mxu0 %v5331
      %v5496 = vpop.f32.mrb[0].mxu0
      %v5497 = vadd.f32 0.0, %v5496
      %v5498 = vpop.f32.mrb[0].mxu0
      %v5499 = vpop.f32.mrb[0].mxu0
      %v5500 = vadd.f32 0.0, %v5499
      %v5501 = vpop.f32.mrb[0].mxu0
      %5502 = vmatprep.mubr.bf16.mxu0 0
      %5503 = vmatmul.mubr.bf16.gmra.mrb[0].mxu0 %v5339
      %v5504 = vpop.f32.mrb[0].mxu0
      %v5505 = vadd.f32 0.0, %v5504
      %v5506 = vpop.f32.mrb[0].mxu0
      %v5507 = vpop.f32.mrb[0].mxu0
      %v5508 = vadd.f32 0.0, %v5507
      %v5509 = vpop.f32.mrb[0].mxu0
      %5510 = vmatprep.mubr.bf16.mxu0 0
      %5511 = vmatmul.mubr.bf16.gmra.mrb[0].mxu0 %v5347
      %v5512 = vpop.f32.mrb[0].mxu0
      %v5513 = vadd.f32 0.0, %v5512
      %v5514 = vpop.f32.mrb[0].mxu0
      %v5515 = vpop.f32.mrb[0].mxu0
      %v5516 = vadd.f32 0.0, %v5515
      %v5517 = vpop.f32.mrb[0].mxu0
      %5518 = vmatprep.mubr.bf16.mxu0 0
      %5519 = vmatmul.mubr.bf16.gmra.mrb[0].mxu0 %v5355
      %v5520 = vpop.f32.mrb[0].mxu0
      %v5521 = vadd.f32 0.0, %v5520
      %v5522 = vpop.f32.mrb[0].mxu0
      %v5523 = vpop.f32.mrb[0].mxu0
      %v5524 = vadd.f32 0.0, %v5523
      %v5525 = vpop.f32.mrb[0].mxu0
      %5526 = vmatprep.mubr.bf16.mxu0 0
      %5527 = vmatmul.mubr.bf16.gmra.mrb[0].mxu0 %v5363
      %v5528 = vpop.f32.mrb[0].mxu0
      %v5529 = vadd.f32 0.0, %v5528
      %v5530 = vpop.f32.mrb[0].mxu0
      %v5531 = vpop.f32.mrb[0].mxu0
      %v5532 = vadd.f32 0.0, %v5531
      %v5533 = vpop.f32.mrb[0].mxu0
      %5534 = vmatprep.mubr.bf16.mxu0 0
      %5535 = vmatmul.mubr.bf16.gmra.mrb[0].mxu0 %v5371
      %v5536 = vpop.f32.mrb[0].mxu0
      %v5537 = vadd.f32 0.0, %v5536
      %v5538 = vpop.f32.mrb[0].mxu0
      %v5539 = vpop.f32.mrb[0].mxu0
      %v5540 = vadd.f32 0.0, %v5539
      %v5541 = vpop.f32.mrb[0].mxu0
      %5542 = vmatprep.mubr.bf16.mxu0 0
      %5543 = vmatmul.mubr.bf16.gmra.mrb[0].mxu0 %v5379
      %v5544 = vpop.f32.mrb[0].mxu0
      %v5545 = vadd.f32 0.0, %v5544
      %v5546 = vpop.f32.mrb[0].mxu0
      %v5547 = vpop.f32.mrb[0].mxu0
      %v5548 = vadd.f32 0.0, %v5547
      %v5549 = vpop.f32.mrb[0].mxu0
      %5550 = vmatprep.mubr.bf16.mxu0 0
      %5551 = vmatmul.mubr.bf16.gmra.mrb[0].mxu0 %v5387
      %v5552 = vpop.f32.mrb[0].mxu0
      %v5553 = vadd.f32 0.0, %v5552
      %v5554 = vpop.f32.mrb[0].mxu0
      %v5555 = vpop.f32.mrb[0].mxu0
      %v5556 = vadd.f32 0.0, %v5555
      %v5557 = vpop.f32.mrb[0].mxu0
      %5558 = vdwg.mxu0
      %v5559 = vadd.f32 %v5256, %v5481
      %v5560 = vadd.f32 %v5257, %v5484
      %v5561 = vadd.f32 %v5258, %v5489
      %v5562 = vadd.f32 %v5259, %v5492
      %v5563 = vadd.f32 %v5260, %v5497
      %v5564 = vadd.f32 %v5261, %v5500
      %v5565 = vadd.f32 %v5262, %v5505
      %v5566 = vadd.f32 %v5263, %v5508
      %v5567 = vadd.f32 %v5264, %v5513
      %v5568 = vadd.f32 %v5265, %v5516
      %v5569 = vadd.f32 %v5266, %v5521
      %v5570 = vadd.f32 %v5267, %v5524
      %v5571 = vadd.f32 %v5268, %v5529
      %v5572 = vadd.f32 %v5269, %v5532
      %v5573 = vadd.f32 %v5270, %v5537
      %v5574 = vadd.f32 %v5271, %v5540
      %v5575 = vadd.f32 %v5272, %v5545
      %v5576 = vadd.f32 %v5273, %v5548
      %v5577 = vadd.f32 %v5274, %v5553
      %v5578 = vadd.f32 %v5275, %v5556
      %v5579 = vld [vmem:[#allocation3 + $0x10] sm:$0x80]
      %v5580 = vld [vmem:[#allocation3 + $0x60] sm:$0xff]
      %s5581 = scalar_lea.vmem %s59, 384
      %v5582 = vld [vmem:[%s5581] sm:$0xf]
      %v5583 = vld [vmem:[%s5581 + $0x4] sm:$0xf]
      %v5584 = vld [vmem:[%s5581 + $0x8] sm:$0xf]
      %v5585 = vld [vmem:[%s5581 + $0xc] sm:$0xf]
      %v5586 = vld [vmem:[%s5581 + $0x10] sm:$0xf]
      %v5587 = vld [vmem:[%s5581 + $0x14] sm:$0xf]
      %v5588 = vld [vmem:[%s5581 + $0x18] sm:$0xf]
      %v5589 = vld [vmem:[%s5581 + $0x1c] sm:$0xf]
      %v5590 = vld [vmem:[%s5581 + $0x20] sm:$0xf]
      %v5591 = vld [vmem:[%s5581 + $0x24] sm:$0xf]
      %v5592 = vld [vmem:[%s5581 + $0x28] sm:$0xf]
      %v5593 = vld [vmem:[%s5581 + $0x2c] sm:$0xf]
      %v5594 = vld [vmem:[%s5581 + $0x30] sm:$0xf]
      %v5595 = vld [vmem:[%s5581 + $0x34] sm:$0xf]
      %v5596 = vld [vmem:[%s5581 + $0x38] sm:$0xf]
      %v5597 = vld [vmem:[%s5581 + $0x3c] sm:$0xf]
      %v5599 = vshrl.u32 %v5579, 16
      %v5601 = vrot.slane %v5599, 7
      %v5602 = vrot.slane %v5316, 7
      %v5603 = vor.u32 %v5602, %v5312
      %v5604 = vsel %vm4269, %v5601, %v5603
      %v5605 = vrot.slane %v5324, 7
      %v5606 = vor.u32 %v5605, %v5320
      %v5607 = vsel %vm4269, %v5602, %v5606
      %v5608 = vrot.slane %v5332, 7
      %v5609 = vor.u32 %v5608, %v5328
      %v5610 = vsel %vm4269, %v5605, %v5609
      %v5611 = vrot.slane %v5340, 7
      %v5612 = vor.u32 %v5611, %v5336
      %v5613 = vsel %vm4269, %v5608, %v5612
      %v5614 = vrot.slane %v5348, 7
      %v5615 = vor.u32 %v5614, %v5344
      %v5616 = vsel %vm4269, %v5611, %v5615
      %v5617 = vrot.slane %v5356, 7
      %v5618 = vor.u32 %v5617, %v5352
      %v5619 = vsel %vm4269, %v5614, %v5618
      %v5620 = vrot.slane %v5364, 7
      %v5621 = vor.u32 %v5620, %v5360
      %v5622 = vsel %vm4269, %v5617, %v5621
      %v5623 = vrot.slane %v5372, 7
      %v5624 = vor.u32 %v5623, %v5368
      %v5625 = vsel %vm4269, %v5620, %v5624
      %v5626 = vrot.slane %v5380, 7
      %v5627 = vor.u32 %v5626, %v5376
      %v5628 = vsel %vm4269, %v5623, %v5627
      %v5630 = vshrl.u32 %v5580, 16
      %v5632 = vrot.slane %v5630, 7
      %v5633 = vshll.u32 %v5580, 16
      %v5635 = vor.u32 %v5632, %v5633
      %v5636 = vsel %vm4269, %v5626, %v5635
      %v5663 = vunpack.c.l.b16 %v5582
      %v5664 = vunpack.c.l.b16 %v5583
      %v5665 = vunpack.c.l.b16 %v5584
      %v5666 = vunpack.c.l.b16 %v5585
      %v5667 = vunpack.c.l.b16 %v5586
      %v5668 = vunpack.c.l.b16 %v5587
      %v5669 = vunpack.c.l.b16 %v5588
      %v5670 = vunpack.c.l.b16 %v5589
      %v5671 = vunpack.c.l.b16 %v5590
      %v5672 = vunpack.c.l.b16 %v5591
      %v5673 = vunpack.c.l.b16 %v5592
      %v5674 = vunpack.c.l.b16 %v5593
      %v5675 = vunpack.c.l.b16 %v5594
      %v5676 = vunpack.c.l.b16 %v5595
      %v5677 = vunpack.c.l.b16 %v5596
      %v5678 = vunpack.c.l.b16 %v5597
      %v5679 = vpack.c.b16 %v5664, %v5663
      %v5680 = vpack.c.b16 %v5666, %v5665
      %v5681 = vpack.c.b16 %v5668, %v5667
      %v5682 = vpack.c.b16 %v5670, %v5669
      %v5683 = vpack.c.b16 %v5672, %v5671
      %v5684 = vpack.c.b16 %v5674, %v5673
      %v5685 = vpack.c.b16 %v5676, %v5675
      %v5686 = vpack.c.b16 %v5678, %v5677
      %5695 = vmatprep.subr.bf16.mxu0 0
      %5696 = vmatpush1.bf16.msra.mxu0 %v5679
      %5697 = vmatprep.subr.bf16.mxu0 0
      %5698 = vmatpush1.bf16.msra.mxu0 %v5680
      %5699 = vmatprep.subr.bf16.mxu0 0
      %5700 = vmatpush1.bf16.msra.mxu0 %v5681
      %5701 = vmatprep.subr.bf16.mxu0 0
      %5702 = vmatpush1.bf16.msra.mxu0 %v5682
      %5703 = vmatprep.subr.bf16.mxu0 0
      %5704 = vmatpush1.bf16.msra.mxu0 %v5683
      %5705 = vmatprep.subr.bf16.mxu0 0
      %5706 = vmatpush1.bf16.msra.mxu0 %v5684
      %5707 = vmatprep.subr.bf16.mxu0 0
      %5708 = vmatpush1.bf16.msra.mxu0 %v5685
      %5709 = vmatprep.subr.bf16.mxu0 0
      %5710 = vmatpush1.bf16.msra.mxu0 %v5686
      %5711 = vmatprep.subr.bf16.mxu0 0
      %5712 = vmatpush1.bf16.msra.mxu0 0
      %5713 = vmatprep.subr.bf16.mxu0 0
      %5714 = vmatpush1.bf16.msra.mxu0 0
      %5715 = vmatprep.subr.bf16.mxu0 0
      %5716 = vmatpush1.bf16.msra.mxu0 0
      %5717 = vmatprep.subr.bf16.mxu0 0
      %5718 = vmatpush1.bf16.msra.mxu0 0
      %5719 = vmatprep.subr.bf16.mxu0 0
      %5720 = vmatpush1.bf16.msra.mxu0 0
      %5721 = vmatprep.subr.bf16.mxu0 0
      %5722 = vmatpush1.bf16.msra.mxu0 0
      %5723 = vmatprep.subr.bf16.mxu0 0
      %5724 = vmatpush1.bf16.msra.mxu0 0
      %5725 = vmatprep.subr.bf16.mxu0 0
      %5726 = vmatpush1.bf16.msra.mxu0 0
      %5727 = vmatprep.mubr.bf16.mxu0 0
      %5728 = vmatmul.mubr.bf16.gmra.mrb[0].mxu0 %v5604
      %v5729 = vpop.f32.mrb[0].mxu0
      %v5730 = vadd.f32 0.0, %v5729
      %v5731 = vpop.f32.mrb[0].mxu0
      %v5732 = vpop.f32.mrb[0].mxu0
      %v5733 = vadd.f32 0.0, %v5732
      %v5734 = vpop.f32.mrb[0].mxu0
      %5735 = vmatprep.mubr.bf16.mxu0 0
      %5736 = vmatmul.mubr.bf16.gmra.mrb[0].mxu0 %v5607
      %v5737 = vpop.f32.mrb[0].mxu0
      %v5738 = vadd.f32 0.0, %v5737
      %v5739 = vpop.f32.mrb[0].mxu0
      %v5740 = vpop.f32.mrb[0].mxu0
      %v5741 = vadd.f32 0.0, %v5740
      %v5742 = vpop.f32.mrb[0].mxu0
      %5743 = vmatprep.mubr.bf16.mxu0 0
      %5744 = vmatmul.mubr.bf16.gmra.mrb[0].mxu0 %v5610
      %v5745 = vpop.f32.mrb[0].mxu0
      %v5746 = vadd.f32 0.0, %v5745
      %v5747 = vpop.f32.mrb[0].mxu0
      %v5748 = vpop.f32.mrb[0].mxu0
      %v5749 = vadd.f32 0.0, %v5748
      %v5750 = vpop.f32.mrb[0].mxu0
      %5751 = vmatprep.mubr.bf16.mxu0 0
      %5752 = vmatmul.mubr.bf16.gmra.mrb[0].mxu0 %v5613
      %v5753 = vpop.f32.mrb[0].mxu0
      %v5754 = vadd.f32 0.0, %v5753
      %v5755 = vpop.f32.mrb[0].mxu0
      %v5756 = vpop.f32.mrb[0].mxu0
      %v5757 = vadd.f32 0.0, %v5756
      %v5758 = vpop.f32.mrb[0].mxu0
      %5759 = vmatprep.mubr.bf16.mxu0 0
      %5760 = vmatmul.mubr.bf16.gmra.mrb[0].mxu0 %v5616
      %v5761 = vpop.f32.mrb[0].mxu0
      %v5762 = vadd.f32 0.0, %v5761
      %v5763 = vpop.f32.mrb[0].mxu0
      %v5764 = vpop.f32.mrb[0].mxu0
      %v5765 = vadd.f32 0.0, %v5764
      %v5766 = vpop.f32.mrb[0].mxu0
      %5767 = vmatprep.mubr.bf16.mxu0 0
      %5768 = vmatmul.mubr.bf16.gmra.mrb[0].mxu0 %v5619
      %v5769 = vpop.f32.mrb[0].mxu0
      %v5770 = vadd.f32 0.0, %v5769
      %v5771 = vpop.f32.mrb[0].mxu0
      %v5772 = vpop.f32.mrb[0].mxu0
      %v5773 = vadd.f32 0.0, %v5772
      %v5774 = vpop.f32.mrb[0].mxu0
      %5775 = vmatprep.mubr.bf16.mxu0 0
      %5776 = vmatmul.mubr.bf16.gmra.mrb[0].mxu0 %v5622
      %v5777 = vpop.f32.mrb[0].mxu0
      %v5778 = vadd.f32 0.0, %v5777
      %v5779 = vpop.f32.mrb[0].mxu0
      %v5780 = vpop.f32.mrb[0].mxu0
      %v5781 = vadd.f32 0.0, %v5780
      %v5782 = vpop.f32.mrb[0].mxu0
      %5783 = vmatprep.mubr.bf16.mxu0 0
      %5784 = vmatmul.mubr.bf16.gmra.mrb[0].mxu0 %v5625
      %v5785 = vpop.f32.mrb[0].mxu0
      %v5786 = vadd.f32 0.0, %v5785
      %v5787 = vpop.f32.mrb[0].mxu0
      %v5788 = vpop.f32.mrb[0].mxu0
      %v5789 = vadd.f32 0.0, %v5788
      %v5790 = vpop.f32.mrb[0].mxu0
      %5791 = vmatprep.mubr.bf16.mxu0 0
      %5792 = vmatmul.mubr.bf16.gmra.mrb[0].mxu0 %v5628
      %v5793 = vpop.f32.mrb[0].mxu0
      %v5794 = vadd.f32 0.0, %v5793
      %v5795 = vpop.f32.mrb[0].mxu0
      %v5796 = vpop.f32.mrb[0].mxu0
      %v5797 = vadd.f32 0.0, %v5796
      %v5798 = vpop.f32.mrb[0].mxu0
      %5799 = vmatprep.mubr.bf16.mxu0 0
      %5800 = vmatmul.mubr.bf16.gmra.mrb[0].mxu0 %v5636
      %v5801 = vpop.f32.mrb[0].mxu0
      %v5802 = vadd.f32 0.0, %v5801
      %v5803 = vpop.f32.mrb[0].mxu0
      %v5804 = vpop.f32.mrb[0].mxu0
      %v5805 = vadd.f32 0.0, %v5804
      %v5806 = vpop.f32.mrb[0].mxu0
      %5807 = vdwg.mxu0
      %v5808 = vadd.f32 %v5559, %v5730
      %v5809 = vadd.f32 %v5560, %v5733
      %v5810 = vadd.f32 %v5561, %v5738
      %v5811 = vadd.f32 %v5562, %v5741
      %v5812 = vadd.f32 %v5563, %v5746
      %v5813 = vadd.f32 %v5564, %v5749
      %v5814 = vadd.f32 %v5565, %v5754
      %v5815 = vadd.f32 %v5566, %v5757
      %v5816 = vadd.f32 %v5567, %v5762
      %v5817 = vadd.f32 %v5568, %v5765
      %v5818 = vadd.f32 %v5569, %v5770
      %v5819 = vadd.f32 %v5570, %v5773
      %v5820 = vadd.f32 %v5571, %v5778
      %v5821 = vadd.f32 %v5572, %v5781
      %v5822 = vadd.f32 %v5573, %v5786
      %v5823 = vadd.f32 %v5574, %v5789
      %v5824 = vadd.f32 %v5575, %v5794
      %v5825 = vadd.f32 %v5576, %v5797
      %v5826 = vadd.f32 %v5577, %v5802
      %v5827 = vadd.f32 %v5578, %v5805
      %s5828 = scalar_lea.vmem %s59, 448
      %v5829 = vld [vmem:[%s5828] sm:$0xf]
      %v5830 = vld [vmem:[%s5828 + $0x4] sm:$0xf]
      %v5831 = vld [vmem:[%s5828 + $0x8] sm:$0xf]
      %v5832 = vld [vmem:[%s5828 + $0xc] sm:$0xf]
      %v5833 = vld [vmem:[%s5828 + $0x10] sm:$0xf]
      %v5834 = vld [vmem:[%s5828 + $0x14] sm:$0xf]
      %v5835 = vld [vmem:[%s5828 + $0x18] sm:$0xf]
      %v5836 = vld [vmem:[%s5828 + $0x1c] sm:$0xf]
      %v5837 = vld [vmem:[%s5828 + $0x20] sm:$0xf]
      %v5838 = vld [vmem:[%s5828 + $0x24] sm:$0xf]
      %v5839 = vld [vmem:[%s5828 + $0x28] sm:$0xf]
      %v5840 = vld [vmem:[%s5828 + $0x2c] sm:$0xf]
      %v5841 = vld [vmem:[%s5828 + $0x30] sm:$0xf]
      %v5842 = vld [vmem:[%s5828 + $0x34] sm:$0xf]
      %v5843 = vld [vmem:[%s5828 + $0x38] sm:$0xf]
      %v5844 = vld [vmem:[%s5828 + $0x3c] sm:$0xf]
      %v5861 = vunpack.c.l.b16 %v5829
      %v5862 = vunpack.c.l.b16 %v5830
      %v5863 = vunpack.c.l.b16 %v5831
      %v5864 = vunpack.c.l.b16 %v5832
      %v5865 = vunpack.c.l.b16 %v5833
      %v5866 = vunpack.c.l.b16 %v5834
      %v5867 = vunpack.c.l.b16 %v5835
      %v5868 = vunpack.c.l.b16 %v5836
      %v5869 = vunpack.c.l.b16 %v5837
      %v5870 = vunpack.c.l.b16 %v5838
      %v5871 = vunpack.c.l.b16 %v5839
      %v5872 = vunpack.c.l.b16 %v5840
      %v5873 = vunpack.c.l.b16 %v5841
      %v5874 = vunpack.c.l.b16 %v5842
      %v5875 = vunpack.c.l.b16 %v5843
      %v5876 = vunpack.c.l.b16 %v5844
      %v5877 = vpack.c.b16 %v5862, %v5861
      %v5878 = vpack.c.b16 %v5864, %v5863
      %v5879 = vpack.c.b16 %v5866, %v5865
      %v5880 = vpack.c.b16 %v5868, %v5867
      %v5881 = vpack.c.b16 %v5870, %v5869
      %v5882 = vpack.c.b16 %v5872, %v5871
      %v5883 = vpack.c.b16 %v5874, %v5873
      %v5884 = vpack.c.b16 %v5876, %v5875
      %5893 = vmatprep.subr.bf16.mxu0 0
      %5894 = vmatpush1.bf16.msra.mxu0 %v5877
      %5895 = vmatprep.subr.bf16.mxu0 0
      %5896 = vmatpush1.bf16.msra.mxu0 %v5878
      %5897 = vmatprep.subr.bf16.mxu0 0
      %5898 = vmatpush1.bf16.msra.mxu0 %v5879
      %5899 = vmatprep.subr.bf16.mxu0 0
      %5900 = vmatpush1.bf16.msra.mxu0 %v5880
      %5901 = vmatprep.subr.bf16.mxu0 0
      %5902 = vmatpush1.bf16.msra.mxu0 %v5881
      %5903 = vmatprep.subr.bf16.mxu0 0
      %5904 = vmatpush1.bf16.msra.mxu0 %v5882
      %5905 = vmatprep.subr.bf16.mxu0 0
      %5906 = vmatpush1.bf16.msra.mxu0 %v5883
      %5907 = vmatprep.subr.bf16.mxu0 0
      %5908 = vmatpush1.bf16.msra.mxu0 %v5884
      %5909 = vmatprep.subr.bf16.mxu0 0
      %5910 = vmatpush1.bf16.msra.mxu0 0
      %5911 = vmatprep.subr.bf16.mxu0 0
      %5912 = vmatpush1.bf16.msra.mxu0 0
      %5913 = vmatprep.subr.bf16.mxu0 0
      %5914 = vmatpush1.bf16.msra.mxu0 0
      %5915 = vmatprep.subr.bf16.mxu0 0
      %5916 = vmatpush1.bf16.msra.mxu0 0
      %5917 = vmatprep.subr.bf16.mxu0 0
      %5918 = vmatpush1.bf16.msra.mxu0 0
      %5919 = vmatprep.subr.bf16.mxu0 0
      %5920 = vmatpush1.bf16.msra.mxu0 0
      %5921 = vmatprep.subr.bf16.mxu0 0
      %5922 = vmatpush1.bf16.msra.mxu0 0
      %5923 = vmatprep.subr.bf16.mxu0 0
      %5924 = vmatpush1.bf16.msra.mxu0 0
      %5925 = vmatprep.mubr.bf16.mxu0 0
      %5926 = vmatmul.mubr.bf16.gmra.mrb[0].mxu0 %v5277
      %v5927 = vpop.f32.mrb[0].mxu0
      %v5928 = vadd.f32 0.0, %v5927
      %v5929 = vpop.f32.mrb[0].mxu0
      %v5930 = vpop.f32.mrb[0].mxu0
      %v5931 = vadd.f32 0.0, %v5930
      %v5932 = vpop.f32.mrb[0].mxu0
      %5933 = vmatprep.mubr.bf16.mxu0 0
      %5934 = vmatmul.mubr.bf16.gmra.mrb[0].mxu0 %v5278
      %v5935 = vpop.f32.mrb[0].mxu0
      %v5936 = vadd.f32 0.0, %v5935
      %v5937 = vpop.f32.mrb[0].mxu0
      %v5938 = vpop.f32.mrb[0].mxu0
      %v5939 = vadd.f32 0.0, %v5938
      %v5940 = vpop.f32.mrb[0].mxu0
      %5941 = vmatprep.mubr.bf16.mxu0 0
      %5942 = vmatmul.mubr.bf16.gmra.mrb[0].mxu0 %v5279
      %v5943 = vpop.f32.mrb[0].mxu0
      %v5944 = vadd.f32 0.0, %v5943
      %v5945 = vpop.f32.mrb[0].mxu0
      %v5946 = vpop.f32.mrb[0].mxu0
      %v5947 = vadd.f32 0.0, %v5946
      %v5948 = vpop.f32.mrb[0].mxu0
      %5949 = vmatprep.mubr.bf16.mxu0 0
      %5950 = vmatmul.mubr.bf16.gmra.mrb[0].mxu0 %v5280
      %v5951 = vpop.f32.mrb[0].mxu0
      %v5952 = vadd.f32 0.0, %v5951
      %v5953 = vpop.f32.mrb[0].mxu0
      %v5954 = vpop.f32.mrb[0].mxu0
      %v5955 = vadd.f32 0.0, %v5954
      %v5956 = vpop.f32.mrb[0].mxu0
      %5957 = vmatprep.mubr.bf16.mxu0 0
      %5958 = vmatmul.mubr.bf16.gmra.mrb[0].mxu0 %v5281
      %v5959 = vpop.f32.mrb[0].mxu0
      %v5960 = vadd.f32 0.0, %v5959
      %v5961 = vpop.f32.mrb[0].mxu0
      %v5962 = vpop.f32.mrb[0].mxu0
      %v5963 = vadd.f32 0.0, %v5962
      %v5964 = vpop.f32.mrb[0].mxu0
      %5965 = vmatprep.mubr.bf16.mxu0 0
      %5966 = vmatmul.mubr.bf16.gmra.mrb[0].mxu0 %v5282
      %v5967 = vpop.f32.mrb[0].mxu0
      %v5968 = vadd.f32 0.0, %v5967
      %v5969 = vpop.f32.mrb[0].mxu0
      %v5970 = vpop.f32.mrb[0].mxu0
      %v5971 = vadd.f32 0.0, %v5970
      %v5972 = vpop.f32.mrb[0].mxu0
      %5973 = vmatprep.mubr.bf16.mxu0 0
      %5974 = vmatmul.mubr.bf16.gmra.mrb[0].mxu0 %v5283
      %v5975 = vpop.f32.mrb[0].mxu0
      %v5976 = vadd.f32 0.0, %v5975
      %v5977 = vpop.f32.mrb[0].mxu0
      %v5978 = vpop.f32.mrb[0].mxu0
      %v5979 = vadd.f32 0.0, %v5978
      %v5980 = vpop.f32.mrb[0].mxu0
      %5981 = vmatprep.mubr.bf16.mxu0 0
      %5982 = vmatmul.mubr.bf16.gmra.mrb[0].mxu0 %v5284
      %v5983 = vpop.f32.mrb[0].mxu0
      %v5984 = vadd.f32 0.0, %v5983
      %v5985 = vpop.f32.mrb[0].mxu0
      %v5986 = vpop.f32.mrb[0].mxu0
      %v5987 = vadd.f32 0.0, %v5986
      %v5988 = vpop.f32.mrb[0].mxu0
      %5989 = vmatprep.mubr.bf16.mxu0 0
      %5990 = vmatmul.mubr.bf16.gmra.mrb[0].mxu0 %v5285
      %v5991 = vpop.f32.mrb[0].mxu0
      %v5992 = vadd.f32 0.0, %v5991
      %v5993 = vpop.f32.mrb[0].mxu0
      %v5994 = vpop.f32.mrb[0].mxu0
      %v5995 = vadd.f32 0.0, %v5994
      %v5996 = vpop.f32.mrb[0].mxu0
      %5997 = vmatprep.mubr.bf16.mxu0 0
      %5998 = vmatmul.mubr.bf16.gmra.mrb[0].mxu0 %v5580
      %v5999 = vpop.f32.mrb[0].mxu0
      %v6000 = vadd.f32 0.0, %v5999
      %v6001 = vpop.f32.mrb[0].mxu0
      %v6002 = vpop.f32.mrb[0].mxu0
      %v6003 = vadd.f32 0.0, %v6002
      %v6004 = vpop.f32.mrb[0].mxu0
      %6005 = vdwg.mxu0
      %v6006 = vadd.f32 %v5808, %v5928
      %v6007 = vadd.f32 %v5809, %v5931
      %v6008 = vadd.f32 %v5810, %v5936
      %v6009 = vadd.f32 %v5811, %v5939
      %v6010 = vadd.f32 %v5812, %v5944
      %v6011 = vadd.f32 %v5813, %v5947
      %v6012 = vadd.f32 %v5814, %v5952
      %v6013 = vadd.f32 %v5815, %v5955
      %v6014 = vadd.f32 %v5816, %v5960
      %v6015 = vadd.f32 %v5817, %v5963
      %v6016 = vadd.f32 %v5818, %v5968
      %v6017 = vadd.f32 %v5819, %v5971
      %v6018 = vadd.f32 %v5820, %v5976
      %v6019 = vadd.f32 %v5821, %v5979
      %v6020 = vadd.f32 %v5822, %v5984
      %v6021 = vadd.f32 %v5823, %v5987
      %v6022 = vadd.f32 %v5824, %v5992
      %v6023 = vadd.f32 %v5825, %v5995
      %v6024 = vadd.f32 %v5826, %v6000
      %v6025 = vadd.f32 %v5827, %v6003
      %v6026 = vld [vmem:[#allocation3 + $0x18] sm:$0xff]
      %v6027 = vld [vmem:[#allocation3 + $0x20] sm:$0xff]
      %v6028 = vld [vmem:[#allocation3 + $0x28] sm:$0xff]
      %v6029 = vld [vmem:[#allocation3 + $0x30] sm:$0xff]
      %v6030 = vld [vmem:[#allocation3 + $0x38] sm:$0xff]
      %v6031 = vld [vmem:[#allocation3 + $0x40] sm:$0xff]
      %v6032 = vld [vmem:[#allocation3 + $0x48] sm:$0xff]
      %v6033 = vld [vmem:[#allocation3 + $0x50] sm:$0xff]
      %v6034 = vld [vmem:[#allocation3 + $0x58] sm:$0xff]
      %v6035 = vld [vmem:[#allocation3 + $0x60] sm:$0xff]
      %v6036 = vld [vmem:[#allocation3 + $0x68] sm:$0x1]
      %s6037 = scalar_lea.vmem %s59, 512
      %v6038 = vld [vmem:[%s6037] sm:$0xf]
      %v6039 = vld [vmem:[%s6037 + $0x4] sm:$0xf]
      %v6040 = vld [vmem:[%s6037 + $0x8] sm:$0xf]
      %v6041 = vld [vmem:[%s6037 + $0xc] sm:$0xf]
      %v6042 = vld [vmem:[%s6037 + $0x10] sm:$0xf]
      %v6043 = vld [vmem:[%s6037 + $0x14] sm:$0xf]
      %v6044 = vld [vmem:[%s6037 + $0x18] sm:$0xf]
      %v6045 = vld [vmem:[%s6037 + $0x1c] sm:$0xf]
      %v6046 = vld [vmem:[%s6037 + $0x20] sm:$0xf]
      %v6047 = vld [vmem:[%s6037 + $0x24] sm:$0xf]
      %v6048 = vld [vmem:[%s6037 + $0x28] sm:$0xf]
      %v6049 = vld [vmem:[%s6037 + $0x2c] sm:$0xf]
      %v6050 = vld [vmem:[%s6037 + $0x30] sm:$0xf]
      %v6051 = vld [vmem:[%s6037 + $0x34] sm:$0xf]
      %v6052 = vld [vmem:[%s6037 + $0x38] sm:$0xf]
      %v6053 = vld [vmem:[%s6037 + $0x3c] sm:$0xf]
      %v6055 = vshrl.u32 %v6026, 16
      %v6057 = vshll.u32 %v6026, 16
      %v6059 = vrot.slane %v6057, 1
      %v6060 = vor.u32 %v6055, %v6059
      %v6062 = vshll.u32 %v6027, 16
      %v6064 = vrot.slane %v6062, 1
      %v6065 = vsel %vm4553, %v6060, %v6064
      %v6066 = vshrl.u32 %v6027, 16
      %v6068 = vor.u32 %v6066, %v6064
      %v6070 = vshll.u32 %v6028, 16
      %v6072 = vrot.slane %v6070, 1
      %v6073 = vsel %vm4553, %v6068, %v6072
      %v6074 = vshrl.u32 %v6028, 16
      %v6076 = vor.u32 %v6074, %v6072
      %v6078 = vshll.u32 %v6029, 16
      %v6080 = vrot.slane %v6078, 1
      %v6081 = vsel %vm4553, %v6076, %v6080
      %v6082 = vshrl.u32 %v6029, 16
      %v6084 = vor.u32 %v6082, %v6080
      %v6086 = vshll.u32 %v6030, 16
      %v6088 = vrot.slane %v6086, 1
      %v6089 = vsel %vm4553, %v6084, %v6088
      %v6090 = vshrl.u32 %v6030, 16
      %v6092 = vor.u32 %v6090, %v6088
      %v6094 = vshll.u32 %v6031, 16
      %v6096 = vrot.slane %v6094, 1
      %v6097 = vsel %vm4553, %v6092, %v6096
      %v6098 = vshrl.u32 %v6031, 16
      %v6100 = vor.u32 %v6098, %v6096
      %v6102 = vshll.u32 %v6032, 16
      %v6104 = vrot.slane %v6102, 1
      %v6105 = vsel %vm4553, %v6100, %v6104
      %v6106 = vshrl.u32 %v6032, 16
      %v6108 = vor.u32 %v6106, %v6104
      %v6110 = vshll.u32 %v6033, 16
      %v6112 = vrot.slane %v6110, 1
      %v6113 = vsel %vm4553, %v6108, %v6112
      %v6114 = vshrl.u32 %v6033, 16
      %v6116 = vor.u32 %v6114, %v6112
      %v6118 = vshll.u32 %v6034, 16
      %v6120 = vrot.slane %v6118, 1
      %v6121 = vsel %vm4553, %v6116, %v6120
      %v6122 = vshrl.u32 %v6034, 16
      %v6124 = vor.u32 %v6122, %v6120
      %v6126 = vshll.u32 %v6035, 16
      %v6128 = vrot.slane %v6126, 1
      %v6129 = vsel %vm4553, %v6124, %v6128
      %v6130 = vshrl.u32 %v6035, 16
      %v6132 = vor.u32 %v6130, %v6128
      %v6134 = vshll.u32 %v6036, 16
      %v6136 = vrot.slane %v6134, 1
      %v6137 = vsel %vm4553, %v6132, %v6136
      %v6164 = vunpack.c.l.b16 %v6038
      %v6165 = vunpack.c.l.b16 %v6039
      %v6166 = vunpack.c.l.b16 %v6040
      %v6167 = vunpack.c.l.b16 %v6041
      %v6168 = vunpack.c.l.b16 %v6042
      %v6169 = vunpack.c.l.b16 %v6043
      %v6170 = vunpack.c.l.b16 %v6044
      %v6171 = vunpack.c.l.b16 %v6045
      %v6172 = vunpack.c.l.b16 %v6046
      %v6173 = vunpack.c.l.b16 %v6047
      %v6174 = vunpack.c.l.b16 %v6048
      %v6175 = vunpack.c.l.b16 %v6049
      %v6176 = vunpack.c.l.b16 %v6050
      %v6177 = vunpack.c.l.b16 %v6051
      %v6178 = vunpack.c.l.b16 %v6052
      %v6179 = vunpack.c.l.b16 %v6053
      %v6180 = vpack.c.b16 %v6165, %v6164
      %v6181 = vpack.c.b16 %v6167, %v6166
      %v6182 = vpack.c.b16 %v6169, %v6168
      %v6183 = vpack.c.b16 %v6171, %v6170
      %v6184 = vpack.c.b16 %v6173, %v6172
      %v6185 = vpack.c.b16 %v6175, %v6174
      %v6186 = vpack.c.b16 %v6177, %v6176
      %v6187 = vpack.c.b16 %v6179, %v6178
      %6196 = vmatprep.subr.bf16.mxu0 0
      %6197 = vmatpush1.bf16.msra.mxu0 %v6180
      %6198 = vmatprep.subr.bf16.mxu0 0
      %6199 = vmatpush1.bf16.msra.mxu0 %v6181
      %6200 = vmatprep.subr.bf16.mxu0 0
      %6201 = vmatpush1.bf16.msra.mxu0 %v6182
      %6202 = vmatprep.subr.bf16.mxu0 0
      %6203 = vmatpush1.bf16.msra.mxu0 %v6183
      %6204 = vmatprep.subr.bf16.mxu0 0
      %6205 = vmatpush1.bf16.msra.mxu0 %v6184
      %6206 = vmatprep.subr.bf16.mxu0 0
      %6207 = vmatpush1.bf16.msra.mxu0 %v6185
      %6208 = vmatprep.subr.bf16.mxu0 0
      %6209 = vmatpush1.bf16.msra.mxu0 %v6186
      %6210 = vmatprep.subr.bf16.mxu0 0
      %6211 = vmatpush1.bf16.msra.mxu0 %v6187
      %6212 = vmatprep.subr.bf16.mxu0 0
      %6213 = vmatpush1.bf16.msra.mxu0 0
      %6214 = vmatprep.subr.bf16.mxu0 0
      %6215 = vmatpush1.bf16.msra.mxu0 0
      %6216 = vmatprep.subr.bf16.mxu0 0
      %6217 = vmatpush1.bf16.msra.mxu0 0
      %6218 = vmatprep.subr.bf16.mxu0 0
      %6219 = vmatpush1.bf16.msra.mxu0 0
      %6220 = vmatprep.subr.bf16.mxu0 0
      %6221 = vmatpush1.bf16.msra.mxu0 0
      %6222 = vmatprep.subr.bf16.mxu0 0
      %6223 = vmatpush1.bf16.msra.mxu0 0
      %6224 = vmatprep.subr.bf16.mxu0 0
      %6225 = vmatpush1.bf16.msra.mxu0 0
      %6226 = vmatprep.subr.bf16.mxu0 0
      %6227 = vmatpush1.bf16.msra.mxu0 0
      %6228 = vmatprep.mubr.bf16.mxu0 0
      %6229 = vmatmul.mubr.bf16.gmra.mrb[0].mxu0 %v6065
      %v6230 = vpop.f32.mrb[0].mxu0
      %v6231 = vadd.f32 0.0, %v6230
      %v6232 = vpop.f32.mrb[0].mxu0
      %v6233 = vpop.f32.mrb[0].mxu0
      %v6234 = vadd.f32 0.0, %v6233
      %v6235 = vpop.f32.mrb[0].mxu0
      %6236 = vmatprep.mubr.bf16.mxu0 0
      %6237 = vmatmul.mubr.bf16.gmra.mrb[0].mxu0 %v6073
      %v6238 = vpop.f32.mrb[0].mxu0
      %v6239 = vadd.f32 0.0, %v6238
      %v6240 = vpop.f32.mrb[0].mxu0
      %v6241 = vpop.f32.mrb[0].mxu0
      %v6242 = vadd.f32 0.0, %v6241
      %v6243 = vpop.f32.mrb[0].mxu0
      %6244 = vmatprep.mubr.bf16.mxu0 0
      %6245 = vmatmul.mubr.bf16.gmra.mrb[0].mxu0 %v6081
      %v6246 = vpop.f32.mrb[0].mxu0
      %v6247 = vadd.f32 0.0, %v6246
      %v6248 = vpop.f32.mrb[0].mxu0
      %v6249 = vpop.f32.mrb[0].mxu0
      %v6250 = vadd.f32 0.0, %v6249
      %v6251 = vpop.f32.mrb[0].mxu0
      %6252 = vmatprep.mubr.bf16.mxu0 0
      %6253 = vmatmul.mubr.bf16.gmra.mrb[0].mxu0 %v6089
      %v6254 = vpop.f32.mrb[0].mxu0
      %v6255 = vadd.f32 0.0, %v6254
      %v6256 = vpop.f32.mrb[0].mxu0
      %v6257 = vpop.f32.mrb[0].mxu0
      %v6258 = vadd.f32 0.0, %v6257
      %v6259 = vpop.f32.mrb[0].mxu0
      %6260 = vmatprep.mubr.bf16.mxu0 0
      %6261 = vmatmul.mubr.bf16.gmra.mrb[0].mxu0 %v6097
      %v6262 = vpop.f32.mrb[0].mxu0
      %v6263 = vadd.f32 0.0, %v6262
      %v6264 = vpop.f32.mrb[0].mxu0
      %v6265 = vpop.f32.mrb[0].mxu0
      %v6266 = vadd.f32 0.0, %v6265
      %v6267 = vpop.f32.mrb[0].mxu0
      %6268 = vmatprep.mubr.bf16.mxu0 0
      %6269 = vmatmul.mubr.bf16.gmra.mrb[0].mxu0 %v6105
      %v6270 = vpop.f32.mrb[0].mxu0
      %v6271 = vadd.f32 0.0, %v6270
      %v6272 = vpop.f32.mrb[0].mxu0
      %v6273 = vpop.f32.mrb[0].mxu0
      %v6274 = vadd.f32 0.0, %v6273
      %v6275 = vpop.f32.mrb[0].mxu0
      %6276 = vmatprep.mubr.bf16.mxu0 0
      %6277 = vmatmul.mubr.bf16.gmra.mrb[0].mxu0 %v6113
      %v6278 = vpop.f32.mrb[0].mxu0
      %v6279 = vadd.f32 0.0, %v6278
      %v6280 = vpop.f32.mrb[0].mxu0
      %v6281 = vpop.f32.mrb[0].mxu0
      %v6282 = vadd.f32 0.0, %v6281
      %v6283 = vpop.f32.mrb[0].mxu0
      %6284 = vmatprep.mubr.bf16.mxu0 0
      %6285 = vmatmul.mubr.bf16.gmra.mrb[0].mxu0 %v6121
      %v6286 = vpop.f32.mrb[0].mxu0
      %v6287 = vadd.f32 0.0, %v6286
      %v6288 = vpop.f32.mrb[0].mxu0
      %v6289 = vpop.f32.mrb[0].mxu0
      %v6290 = vadd.f32 0.0, %v6289
      %v6291 = vpop.f32.mrb[0].mxu0
      %6292 = vmatprep.mubr.bf16.mxu0 0
      %6293 = vmatmul.mubr.bf16.gmra.mrb[0].mxu0 %v6129
      %v6294 = vpop.f32.mrb[0].mxu0
      %v6295 = vadd.f32 0.0, %v6294
      %v6296 = vpop.f32.mrb[0].mxu0
      %v6297 = vpop.f32.mrb[0].mxu0
      %v6298 = vadd.f32 0.0, %v6297
      %v6299 = vpop.f32.mrb[0].mxu0
      %6300 = vmatprep.mubr.bf16.mxu0 0
      %6301 = vmatmul.mubr.bf16.gmra.mrb[0].mxu0 %v6137
      %v6302 = vpop.f32.mrb[0].mxu0
      %v6303 = vadd.f32 0.0, %v6302
      %v6304 = vpop.f32.mrb[0].mxu0
      %v6305 = vpop.f32.mrb[0].mxu0
      %v6306 = vadd.f32 0.0, %v6305
      %v6307 = vpop.f32.mrb[0].mxu0
      %6308 = vdwg.mxu0
      %v6309 = vadd.f32 %v6006, %v6231
      %v6310 = vadd.f32 %v6007, %v6234
      %v6311 = vadd.f32 %v6008, %v6239
      %v6312 = vadd.f32 %v6009, %v6242
      %v6313 = vadd.f32 %v6010, %v6247
      %v6314 = vadd.f32 %v6011, %v6250
      %v6315 = vadd.f32 %v6012, %v6255
      %v6316 = vadd.f32 %v6013, %v6258
      %v6317 = vadd.f32 %v6014, %v6263
      %v6318 = vadd.f32 %v6015, %v6266
      %v6319 = vadd.f32 %v6016, %v6271
      %v6320 = vadd.f32 %v6017, %v6274
      %v6321 = vadd.f32 %v6018, %v6279
      %v6322 = vadd.f32 %v6019, %v6282
      %v6323 = vadd.f32 %v6020, %v6287
      %v6324 = vadd.f32 %v6021, %v6290
      %v6325 = vadd.f32 %v6022, %v6295
      %v6326 = vadd.f32 %v6023, %v6298
      %v6327 = vadd.f32 %v6024, %v6303
      %v6328 = vadd.f32 %v6025, %v6306
      %v6329 = vld [vmem:[%s61] sm:$0x1]
      %v6331 = vlaneseq
      %v6332 = vshrl.u32 %v6331, 7
      %v6333 = vsub.s32 0, %v6332
      %v6334 = vrot.slane %v6329, %v6333
      %v6336 = vadd.f32 %v6309, %v6334
      %v6337 = vadd.f32 %v6310, %v6334
      %v6338 = vadd.f32 %v6311, %v6334
      %v6339 = vadd.f32 %v6312, %v6334
      %v6340 = vadd.f32 %v6313, %v6334
      %v6341 = vadd.f32 %v6314, %v6334
      %v6342 = vadd.f32 %v6315, %v6334
      %v6343 = vadd.f32 %v6316, %v6334
      %v6344 = vadd.f32 %v6317, %v6334
      %v6345 = vadd.f32 %v6318, %v6334
      %v6346 = vadd.f32 %v6319, %v6334
      %v6347 = vadd.f32 %v6320, %v6334
      %v6348 = vadd.f32 %v6321, %v6334
      %v6349 = vadd.f32 %v6322, %v6334
      %v6350 = vadd.f32 %v6323, %v6334
      %v6351 = vadd.f32 %v6324, %v6334
      %v6352 = vadd.f32 %v6325, %v6334
      %v6353 = vadd.f32 %v6326, %v6334
      %v6354 = vadd.f32 %v6327, %v6334
      %v6355 = vadd.f32 %v6328, %v6334
      %v6356 = vmax.f32 %v6336, 0.0
      %v6357 = vmax.f32 %v6337, 0.0
      %v6358 = vmax.f32 %v6338, 0.0
      %v6359 = vmax.f32 %v6339, 0.0
      %v6360 = vmax.f32 %v6340, 0.0
      %v6361 = vmax.f32 %v6341, 0.0
      %v6362 = vmax.f32 %v6342, 0.0
      %v6363 = vmax.f32 %v6343, 0.0
      %v6364 = vmax.f32 %v6344, 0.0
      %v6365 = vmax.f32 %v6345, 0.0
      %v6366 = vmax.f32 %v6346, 0.0
      %v6367 = vmax.f32 %v6347, 0.0
      %v6368 = vmax.f32 %v6348, 0.0
      %v6369 = vmax.f32 %v6349, 0.0
      %v6370 = vmax.f32 %v6350, 0.0
      %v6371 = vmax.f32 %v6351, 0.0
      %v6372 = vmax.f32 %v6352, 0.0
      %v6373 = vmax.f32 %v6353, 0.0
      %v6374 = vmax.f32 %v6354, 0.0
      %v6375 = vmax.f32 %v6355, 0.0
      %v6376 = vmul.f32 %v6356, %v1642
      %v6377 = vmul.f32 %v6357, %v1647
      %v6378 = vmul.f32 %v6358, %v1652
      %v6379 = vmul.f32 %v6359, %v1657
      %v6380 = vmul.f32 %v6360, %v1662
      %v6381 = vmul.f32 %v6361, %v1667
      %v6382 = vmul.f32 %v6362, %v1672
      %v6383 = vmul.f32 %v6363, %v1677
      %v6384 = vmul.f32 %v6364, %v1682
      %v6385 = vmul.f32 %v6365, %v1687
      %v6386 = vmul.f32 %v6366, %v1692
      %v6387 = vmul.f32 %v6367, %v1697
      %v6388 = vmul.f32 %v6368, %v1702
      %v6389 = vmul.f32 %v6369, %v1707
      %v6390 = vmul.f32 %v6370, %v1712
      %v6391 = vmul.f32 %v6371, %v1717
      %v6392 = vmul.f32 %v6372, %v1722
      %v6393 = vmul.f32 %v6373, %v1727
      %v6394 = vmul.f32 %v6374, %v1732
      %v6395 = vmul.f32 %v6375, %v1737
      %v6396 = vld [vmem:[%s63] sm:$0x1]
      %v6398 = vlaneseq
      %v6399 = vshrl.u32 %v6398, 7
      %v6400 = vsub.s32 0, %v6399
      %v6401 = vrot.slane %v6396, %v6400
      %v6403 = vmul.f32 %v6376, %v6401
      %v6404 = vmul.f32 %v6377, %v6401
      %v6405 = vmul.f32 %v6378, %v6401
      %v6406 = vmul.f32 %v6379, %v6401
      %v6407 = vmul.f32 %v6380, %v6401
      %v6408 = vmul.f32 %v6381, %v6401
      %v6409 = vmul.f32 %v6382, %v6401
      %v6410 = vmul.f32 %v6383, %v6401
      %v6411 = vmul.f32 %v6384, %v6401
      %v6412 = vmul.f32 %v6385, %v6401
      %v6413 = vmul.f32 %v6386, %v6401
      %v6414 = vmul.f32 %v6387, %v6401
      %v6415 = vmul.f32 %v6388, %v6401
      %v6416 = vmul.f32 %v6389, %v6401
      %v6417 = vmul.f32 %v6390, %v6401
      %v6418 = vmul.f32 %v6391, %v6401
      %v6419 = vmul.f32 %v6392, %v6401
      %v6420 = vmul.f32 %v6393, %v6401
      %v6421 = vmul.f32 %v6394, %v6401
      %v6422 = vmul.f32 %v6395, %v6401
      %6423 = vadd.xlane.f32.xlu0 %v6403
      %v6424 = vpop.xlane.xlu0 %6423
      %6425 = vadd.xlane.f32.xlu0 %v6404
      %v6426 = vpop.xlane.xlu0 %6425
      %6427 = vadd.xlane.f32.xlu0 %v6405
      %v6428 = vpop.xlane.xlu0 %6427
      %6429 = vadd.xlane.f32.xlu0 %v6406
      %v6430 = vpop.xlane.xlu0 %6429
      %6431 = vadd.xlane.f32.xlu0 %v6407
      %v6432 = vpop.xlane.xlu0 %6431
      %6433 = vadd.xlane.f32.xlu0 %v6408
      %v6434 = vpop.xlane.xlu0 %6433
      %6435 = vadd.xlane.f32.xlu0 %v6409
      %v6436 = vpop.xlane.xlu0 %6435
      %6437 = vadd.xlane.f32.xlu0 %v6410
      %v6438 = vpop.xlane.xlu0 %6437
      %6439 = vadd.xlane.f32.xlu0 %v6411
      %v6440 = vpop.xlane.xlu0 %6439
      %6441 = vadd.xlane.f32.xlu0 %v6412
      %v6442 = vpop.xlane.xlu0 %6441
      %6443 = vadd.xlane.f32.xlu0 %v6413
      %v6444 = vpop.xlane.xlu0 %6443
      %6445 = vadd.xlane.f32.xlu0 %v6414
      %v6446 = vpop.xlane.xlu0 %6445
      %6447 = vadd.xlane.f32.xlu0 %v6415
      %v6448 = vpop.xlane.xlu0 %6447
      %6449 = vadd.xlane.f32.xlu0 %v6416
      %v6450 = vpop.xlane.xlu0 %6449
      %6451 = vadd.xlane.f32.xlu0 %v6417
      %v6452 = vpop.xlane.xlu0 %6451
      %6453 = vadd.xlane.f32.xlu0 %v6418
      %v6454 = vpop.xlane.xlu0 %6453
      %6455 = vadd.xlane.f32.xlu0 %v6419
      %v6456 = vpop.xlane.xlu0 %6455
      %6457 = vadd.xlane.f32.xlu0 %v6420
      %v6458 = vpop.xlane.xlu0 %6457
      %6459 = vadd.xlane.f32.xlu0 %v6421
      %v6460 = vpop.xlane.xlu0 %6459
      %6461 = vadd.xlane.f32.xlu0 %v6422
      %v6462 = vpop.xlane.xlu0 %6461
      %v6463 = vld [vmem:[#allocation4] sm:$0x1]
      %v6465 = vlaneseq
      %v6466 = vshrl.u32 %v6465, 7
      %v6467 = vsub.s32 0, %v6466
      %v6468 = vrot.slane %v6463, %v6467
      %v6470 = vadd.f32 %v6424, %v6468
      %v6471 = vadd.f32 %v6426, %v6468
      %v6472 = vadd.f32 %v6428, %v6468
      %v6473 = vadd.f32 %v6430, %v6468
      %v6474 = vadd.f32 %v6432, %v6468
      %v6475 = vadd.f32 %v6434, %v6468
      %v6476 = vadd.f32 %v6436, %v6468
      %v6477 = vadd.f32 %v6438, %v6468
      %v6478 = vadd.f32 %v6440, %v6468
      %v6479 = vadd.f32 %v6442, %v6468
      %v6480 = vadd.f32 %v6444, %v6468
      %v6481 = vadd.f32 %v6446, %v6468
      %v6482 = vadd.f32 %v6448, %v6468
      %v6483 = vadd.f32 %v6450, %v6468
      %v6484 = vadd.f32 %v6452, %v6468
      %v6485 = vadd.f32 %v6454, %v6468
      %v6486 = vadd.f32 %v6456, %v6468
      %v6487 = vadd.f32 %v6458, %v6468
      %v6488 = vadd.f32 %v6460, %v6468
      %v6489 = vadd.f32 %v6462, %v6468
      %v6490 = vxor.u32 %v6470, 2147483648
      %v6491 = vxor.u32 %v6471, 2147483648
      %v6492 = vxor.u32 %v6472, 2147483648
      %v6493 = vxor.u32 %v6473, 2147483648
      %v6494 = vxor.u32 %v6474, 2147483648
      %v6495 = vxor.u32 %v6475, 2147483648
      %v6496 = vxor.u32 %v6476, 2147483648
      %v6497 = vxor.u32 %v6477, 2147483648
      %v6498 = vxor.u32 %v6478, 2147483648
      %v6499 = vxor.u32 %v6479, 2147483648
      %v6500 = vxor.u32 %v6480, 2147483648
      %v6501 = vxor.u32 %v6481, 2147483648
      %v6502 = vxor.u32 %v6482, 2147483648
      %v6503 = vxor.u32 %v6483, 2147483648
      %v6504 = vxor.u32 %v6484, 2147483648
      %v6505 = vxor.u32 %v6485, 2147483648
      %v6506 = vxor.u32 %v6486, 2147483648
      %v6507 = vxor.u32 %v6487, 2147483648
      %v6508 = vxor.u32 %v6488, 2147483648
      %v6509 = vxor.u32 %v6489, 2147483648
      %v6510 = vmul.f32 %v6490, 1.442695
      %v6511 = vpow.pop %v6510
      %v6512 = vmul.f32 %v6491, 1.442695
      %v6513 = vpow.pop %v6512
      %v6514 = vmul.f32 %v6492, 1.442695
      %v6515 = vpow.pop %v6514
      %v6516 = vmul.f32 %v6493, 1.442695
      %v6517 = vpow.pop %v6516
      %v6518 = vmul.f32 %v6494, 1.442695
      %v6519 = vpow.pop %v6518
      %v6520 = vmul.f32 %v6495, 1.442695
      %v6521 = vpow.pop %v6520
      %v6522 = vmul.f32 %v6496, 1.442695
      %v6523 = vpow.pop %v6522
      %v6524 = vmul.f32 %v6497, 1.442695
      %v6525 = vpow.pop %v6524
      %v6526 = vmul.f32 %v6498, 1.442695
      %v6527 = vpow.pop %v6526
      %v6528 = vmul.f32 %v6499, 1.442695
      %v6529 = vpow.pop %v6528
      %v6530 = vmul.f32 %v6500, 1.442695
      %v6531 = vpow.pop %v6530
      %v6532 = vmul.f32 %v6501, 1.442695
      %v6533 = vpow.pop %v6532
      %v6534 = vmul.f32 %v6502, 1.442695
      %v6535 = vpow.pop %v6534
      %v6536 = vmul.f32 %v6503, 1.442695
      %v6537 = vpow.pop %v6536
      %v6538 = vmul.f32 %v6504, 1.442695
      %v6539 = vpow.pop %v6538
      %v6540 = vmul.f32 %v6505, 1.442695
      %v6541 = vpow.pop %v6540
      %v6542 = vmul.f32 %v6506, 1.442695
      %v6543 = vpow.pop %v6542
      %v6544 = vmul.f32 %v6507, 1.442695
      %v6545 = vpow.pop %v6544
      %v6546 = vmul.f32 %v6508, 1.442695
      %v6547 = vpow.pop %v6546
      %v6548 = vmul.f32 %v6509, 1.442695
      %v6549 = vpow.pop %v6548
      %v6550 = vadd.f32 %v6511, 1.0
      %v6551 = vadd.f32 %v6513, 1.0
      %v6552 = vadd.f32 %v6515, 1.0
      %v6553 = vadd.f32 %v6517, 1.0
      %v6554 = vadd.f32 %v6519, 1.0
      %v6555 = vadd.f32 %v6521, 1.0
      %v6556 = vadd.f32 %v6523, 1.0
      %v6557 = vadd.f32 %v6525, 1.0
      %v6558 = vadd.f32 %v6527, 1.0
      %v6559 = vadd.f32 %v6529, 1.0
      %v6560 = vadd.f32 %v6531, 1.0
      %v6561 = vadd.f32 %v6533, 1.0
      %v6562 = vadd.f32 %v6535, 1.0
      %v6563 = vadd.f32 %v6537, 1.0
      %v6564 = vadd.f32 %v6539, 1.0
      %v6565 = vadd.f32 %v6541, 1.0
      %v6566 = vadd.f32 %v6543, 1.0
      %v6567 = vadd.f32 %v6545, 1.0
      %v6568 = vadd.f32 %v6547, 1.0
      %v6569 = vadd.f32 %v6549, 1.0
      %v6570 = vrcp.pop %v6550
      %v6571 = vmul.f32 1.0, %v6570
      %v6572 = vrcp.pop %v6551
      %v6573 = vmul.f32 1.0, %v6572
      %v6574 = vrcp.pop %v6552
      %v6575 = vmul.f32 1.0, %v6574
      %v6576 = vrcp.pop %v6553
      %v6577 = vmul.f32 1.0, %v6576
      %v6578 = vrcp.pop %v6554
      %v6579 = vmul.f32 1.0, %v6578
      %v6580 = vrcp.pop %v6555
      %v6581 = vmul.f32 1.0, %v6580
      %v6582 = vrcp.pop %v6556
      %v6583 = vmul.f32 1.0, %v6582
      %v6584 = vrcp.pop %v6557
      %v6585 = vmul.f32 1.0, %v6584
      %v6586 = vrcp.pop %v6558
      %v6587 = vmul.f32 1.0, %v6586
      %v6588 = vrcp.pop %v6559
      %v6589 = vmul.f32 1.0, %v6588
      %v6590 = vrcp.pop %v6560
      %v6591 = vmul.f32 1.0, %v6590
      %v6592 = vrcp.pop %v6561
      %v6593 = vmul.f32 1.0, %v6592
      %v6594 = vrcp.pop %v6562
      %v6595 = vmul.f32 1.0, %v6594
      %v6596 = vrcp.pop %v6563
      %v6597 = vmul.f32 1.0, %v6596
      %v6598 = vrcp.pop %v6564
      %v6599 = vmul.f32 1.0, %v6598
      %v6600 = vrcp.pop %v6565
      %v6601 = vmul.f32 1.0, %v6600
      %v6602 = vrcp.pop %v6566
      %v6603 = vmul.f32 1.0, %v6602
      %v6604 = vrcp.pop %v6567
      %v6605 = vmul.f32 1.0, %v6604
      %v6606 = vrcp.pop %v6568
      %v6607 = vmul.f32 1.0, %v6606
      %v6608 = vrcp.pop %v6569
      %v6609 = vmul.f32 1.0, %v6608
      %6611 = vset.pattern.permute.xlu0 0
      %6612 = vperm.xlu0 %6611, %v6571
      %v6613 = vpop.permute.xlu0 %6612
      %6616 = vset.pattern.permute.xlu0 0
      %6617 = vperm.xlu0 %6616, %v6573
      %v6618 = vpop.permute.xlu0 %6617
      %6621 = vset.pattern.permute.xlu0 0
      %6622 = vperm.xlu0 %6621, %v6575
      %v6623 = vpop.permute.xlu0 %6622
      %6626 = vset.pattern.permute.xlu0 0
      %6627 = vperm.xlu0 %6626, %v6577
      %v6628 = vpop.permute.xlu0 %6627
      %6631 = vset.pattern.permute.xlu0 0
      %6632 = vperm.xlu0 %6631, %v6579
      %v6633 = vpop.permute.xlu0 %6632
      %6636 = vset.pattern.permute.xlu0 0
      %6637 = vperm.xlu0 %6636, %v6581
      %v6638 = vpop.permute.xlu0 %6637
      %6641 = vset.pattern.permute.xlu0 0
      %6642 = vperm.xlu0 %6641, %v6583
      %v6643 = vpop.permute.xlu0 %6642
      %6646 = vset.pattern.permute.xlu0 0
      %6647 = vperm.xlu0 %6646, %v6585
      %v6648 = vpop.permute.xlu0 %6647
      %6651 = vset.pattern.permute.xlu0 0
      %6652 = vperm.xlu0 %6651, %v6587
      %v6653 = vpop.permute.xlu0 %6652
      %6656 = vset.pattern.permute.xlu0 0
      %6657 = vperm.xlu0 %6656, %v6589
      %v6658 = vpop.permute.xlu0 %6657
      %6661 = vset.pattern.permute.xlu0 0
      %6662 = vperm.xlu0 %6661, %v6591
      %v6663 = vpop.permute.xlu0 %6662
      %6666 = vset.pattern.permute.xlu0 0
      %6667 = vperm.xlu0 %6666, %v6593
      %v6668 = vpop.permute.xlu0 %6667
      %6671 = vset.pattern.permute.xlu0 0
      %6672 = vperm.xlu0 %6671, %v6595
      %v6673 = vpop.permute.xlu0 %6672
      %6676 = vset.pattern.permute.xlu0 0
      %6677 = vperm.xlu0 %6676, %v6597
      %v6678 = vpop.permute.xlu0 %6677
      %6681 = vset.pattern.permute.xlu0 0
      %6682 = vperm.xlu0 %6681, %v6599
      %v6683 = vpop.permute.xlu0 %6682
      %6686 = vset.pattern.permute.xlu0 0
      %6687 = vperm.xlu0 %6686, %v6601
      %v6688 = vpop.permute.xlu0 %6687
      %6691 = vset.pattern.permute.xlu0 0
      %6692 = vperm.xlu0 %6691, %v6603
      %v6693 = vpop.permute.xlu0 %6692
      %6696 = vset.pattern.permute.xlu0 0
      %6697 = vperm.xlu0 %6696, %v6605
      %v6698 = vpop.permute.xlu0 %6697
      %6701 = vset.pattern.permute.xlu0 0
      %6702 = vperm.xlu0 %6701, %v6607
      %v6703 = vpop.permute.xlu0 %6702
      %6706 = vset.pattern.permute.xlu0 0
      %6707 = vperm.xlu0 %6706, %v6609
      %v6708 = vpop.permute.xlu0 %6707
      %v6710 = vmul.f32 %v4024, %v6613
      %v6711 = vmul.f32 %v4025, %v6618
      %v6712 = vmul.f32 %v4026, %v6623
      %v6713 = vmul.f32 %v4027, %v6628
      %v6714 = vmul.f32 %v4028, %v6633
      %v6715 = vmul.f32 %v4029, %v6638
      %v6716 = vmul.f32 %v4030, %v6643
      %v6717 = vmul.f32 %v4031, %v6648
      %v6718 = vmul.f32 %v4032, %v6653
      %v6719 = vmul.f32 %v4033, %v6658
      %v6720 = vmul.f32 %v4034, %v6663
      %v6721 = vmul.f32 %v4035, %v6668
      %v6722 = vmul.f32 %v4036, %v6673
      %v6723 = vmul.f32 %v4037, %v6678
      %v6724 = vmul.f32 %v4038, %v6683
      %v6725 = vmul.f32 %v4039, %v6688
      %v6726 = vmul.f32 %v4040, %v6693
      %v6727 = vmul.f32 %v4041, %v6698
      %v6728 = vmul.f32 %v4042, %v6703
      %v6729 = vmul.f32 %v4043, %v6708
      %v6730 = vpack.c.bf16 %v6711, %v6710
      %v6731 = vpack.c.bf16 %v6713, %v6712
      %v6732 = vpack.c.bf16 %v6715, %v6714
      %v6733 = vpack.c.bf16 %v6717, %v6716
      %v6734 = vpack.c.bf16 %v6719, %v6718
      %v6735 = vpack.c.bf16 %v6721, %v6720
      %v6736 = vpack.c.bf16 %v6723, %v6722
      %v6737 = vpack.c.bf16 %v6725, %v6724
      %v6738 = vpack.c.bf16 %v6727, %v6726
      %v6739 = vpack.c.bf16 %v6729, %v6728
      %v6740 = vld [vmem:[%s41] sm:$0xf]
      %v6741 = vld [vmem:[%s41 + $0x4] sm:$0xf]
      %v6742 = vld [vmem:[%s41 + $0x8] sm:$0xf]
      %v6743 = vld [vmem:[%s41 + $0xc] sm:$0xf]
      %v6744 = vld [vmem:[%s41 + $0x10] sm:$0xf]
      %v6745 = vld [vmem:[%s41 + $0x14] sm:$0xf]
      %v6746 = vld [vmem:[%s41 + $0x18] sm:$0xf]
      %v6747 = vld [vmem:[%s41 + $0x1c] sm:$0xf]
      %v6748 = vld [vmem:[%s41 + $0x20] sm:$0xf]
      %v6749 = vld [vmem:[%s41 + $0x24] sm:$0xf]
      %v6750 = vld [vmem:[%s41 + $0x28] sm:$0xf]
      %v6751 = vld [vmem:[%s41 + $0x2c] sm:$0xf]
      %v6752 = vld [vmem:[%s41 + $0x30] sm:$0xf]
      %v6753 = vld [vmem:[%s41 + $0x34] sm:$0xf]
      %v6754 = vld [vmem:[%s41 + $0x38] sm:$0xf]
      %v6755 = vld [vmem:[%s41 + $0x3c] sm:$0xf]
      %v6772 = vunpack.c.l.b16 %v6740
      %v6773 = vunpack.c.l.b16 %v6741
      %v6774 = vunpack.c.l.b16 %v6742
      %v6775 = vunpack.c.l.b16 %v6743
      %v6776 = vunpack.c.l.b16 %v6744
      %v6777 = vunpack.c.l.b16 %v6745
      %v6778 = vunpack.c.l.b16 %v6746
      %v6779 = vunpack.c.l.b16 %v6747
      %v6780 = vunpack.c.l.b16 %v6748
      %v6781 = vunpack.c.l.b16 %v6749
      %v6782 = vunpack.c.l.b16 %v6750
      %v6783 = vunpack.c.l.b16 %v6751
      %v6784 = vunpack.c.l.b16 %v6752
      %v6785 = vunpack.c.l.b16 %v6753
      %v6786 = vunpack.c.l.b16 %v6754
      %v6787 = vunpack.c.l.b16 %v6755
      %v6788 = vpack.c.b16 %v6773, %v6772
      %v6789 = vpack.c.b16 %v6775, %v6774
      %v6790 = vpack.c.b16 %v6777, %v6776
      %v6791 = vpack.c.b16 %v6779, %v6778
      %v6792 = vpack.c.b16 %v6781, %v6780
      %v6793 = vpack.c.b16 %v6783, %v6782
      %v6794 = vpack.c.b16 %v6785, %v6784
      %v6795 = vpack.c.b16 %v6787, %v6786
      %6804 = vmatprep.subr.bf16.mxu0 0
      %6805 = vmatpush1.bf16.msra.mxu0 %v6788
      %6806 = vmatprep.subr.bf16.mxu0 0
      %6807 = vmatpush1.bf16.msra.mxu0 %v6789
      %6808 = vmatprep.subr.bf16.mxu0 0
      %6809 = vmatpush1.bf16.msra.mxu0 %v6790
      %6810 = vmatprep.subr.bf16.mxu0 0
      %6811 = vmatpush1.bf16.msra.mxu0 %v6791
      %6812 = vmatprep.subr.bf16.mxu0 0
      %6813 = vmatpush1.bf16.msra.mxu0 %v6792
      %6814 = vmatprep.subr.bf16.mxu0 0
      %6815 = vmatpush1.bf16.msra.mxu0 %v6793
      %6816 = vmatprep.subr.bf16.mxu0 0
      %6817 = vmatpush1.bf16.msra.mxu0 %v6794
      %6818 = vmatprep.subr.bf16.mxu0 0
      %6819 = vmatpush1.bf16.msra.mxu0 %v6795
      %6820 = vmatprep.subr.bf16.mxu0 0
      %6821 = vmatpush1.bf16.msra.mxu0 0
      %6822 = vmatprep.subr.bf16.mxu0 0
      %6823 = vmatpush1.bf16.msra.mxu0 0
      %6824 = vmatprep.subr.bf16.mxu0 0
      %6825 = vmatpush1.bf16.msra.mxu0 0
      %6826 = vmatprep.subr.bf16.mxu0 0
      %6827 = vmatpush1.bf16.msra.mxu0 0
      %6828 = vmatprep.subr.bf16.mxu0 0
      %6829 = vmatpush1.bf16.msra.mxu0 0
      %6830 = vmatprep.subr.bf16.mxu0 0
      %6831 = vmatpush1.bf16.msra.mxu0 0
      %6832 = vmatprep.subr.bf16.mxu0 0
      %6833 = vmatpush1.bf16.msra.mxu0 0
      %6834 = vmatprep.subr.bf16.mxu0 0
      %6835 = vmatpush1.bf16.msra.mxu0 0
      %6836 = vmatprep.mubr.bf16.mxu0 0
      %6837 = vmatmul.mubr.bf16.gmra.mrb[0].mxu0 %v6730
      %v6838 = vpop.f32.mrb[0].mxu0
      %v6839 = vadd.f32 0.0, %v6838
      %v6840 = vpop.f32.mrb[0].mxu0
      %v6841 = vpop.f32.mrb[0].mxu0
      %v6842 = vadd.f32 0.0, %v6841
      %v6843 = vpop.f32.mrb[0].mxu0
      %6844 = vmatprep.mubr.bf16.mxu0 0
      %6845 = vmatmul.mubr.bf16.gmra.mrb[0].mxu0 %v6731
      %v6846 = vpop.f32.mrb[0].mxu0
      %v6847 = vadd.f32 0.0, %v6846
      %v6848 = vpop.f32.mrb[0].mxu0
      %v6849 = vpop.f32.mrb[0].mxu0
      %v6850 = vadd.f32 0.0, %v6849
      %v6851 = vpop.f32.mrb[0].mxu0
      %6852 = vmatprep.mubr.bf16.mxu0 0
      %6853 = vmatmul.mubr.bf16.gmra.mrb[0].mxu0 %v6732
      %v6854 = vpop.f32.mrb[0].mxu0
      %v6855 = vadd.f32 0.0, %v6854
      %v6856 = vpop.f32.mrb[0].mxu0
      %v6857 = vpop.f32.mrb[0].mxu0
      %v6858 = vadd.f32 0.0, %v6857
      %v6859 = vpop.f32.mrb[0].mxu0
      %6860 = vmatprep.mubr.bf16.mxu0 0
      %6861 = vmatmul.mubr.bf16.gmra.mrb[0].mxu0 %v6733
      %v6862 = vpop.f32.mrb[0].mxu0
      %v6863 = vadd.f32 0.0, %v6862
      %v6864 = vpop.f32.mrb[0].mxu0
      %v6865 = vpop.f32.mrb[0].mxu0
      %v6866 = vadd.f32 0.0, %v6865
      %v6867 = vpop.f32.mrb[0].mxu0
      %6868 = vmatprep.mubr.bf16.mxu0 0
      %6869 = vmatmul.mubr.bf16.gmra.mrb[0].mxu0 %v6734
      %v6870 = vpop.f32.mrb[0].mxu0
      %v6871 = vadd.f32 0.0, %v6870
      %v6872 = vpop.f32.mrb[0].mxu0
      %v6873 = vpop.f32.mrb[0].mxu0
      %v6874 = vadd.f32 0.0, %v6873
      %v6875 = vpop.f32.mrb[0].mxu0
      %6876 = vmatprep.mubr.bf16.mxu0 0
      %6877 = vmatmul.mubr.bf16.gmra.mrb[0].mxu0 %v6735
      %v6878 = vpop.f32.mrb[0].mxu0
      %v6879 = vadd.f32 0.0, %v6878
      %v6880 = vpop.f32.mrb[0].mxu0
      %v6881 = vpop.f32.mrb[0].mxu0
      %v6882 = vadd.f32 0.0, %v6881
      %v6883 = vpop.f32.mrb[0].mxu0
      %6884 = vmatprep.mubr.bf16.mxu0 0
      %6885 = vmatmul.mubr.bf16.gmra.mrb[0].mxu0 %v6736
      %v6886 = vpop.f32.mrb[0].mxu0
      %v6887 = vadd.f32 0.0, %v6886
      %v6888 = vpop.f32.mrb[0].mxu0
      %v6889 = vpop.f32.mrb[0].mxu0
      %v6890 = vadd.f32 0.0, %v6889
      %v6891 = vpop.f32.mrb[0].mxu0
      %6892 = vmatprep.mubr.bf16.mxu0 0
      %6893 = vmatmul.mubr.bf16.gmra.mrb[0].mxu0 %v6737
      %v6894 = vpop.f32.mrb[0].mxu0
      %v6895 = vadd.f32 0.0, %v6894
      %v6896 = vpop.f32.mrb[0].mxu0
      %v6897 = vpop.f32.mrb[0].mxu0
      %v6898 = vadd.f32 0.0, %v6897
      %v6899 = vpop.f32.mrb[0].mxu0
      %6900 = vmatprep.mubr.bf16.mxu0 0
      %6901 = vmatmul.mubr.bf16.gmra.mrb[0].mxu0 %v6738
      %v6902 = vpop.f32.mrb[0].mxu0
      %v6903 = vadd.f32 0.0, %v6902
      %v6904 = vpop.f32.mrb[0].mxu0
      %v6905 = vpop.f32.mrb[0].mxu0
      %v6906 = vadd.f32 0.0, %v6905
      %v6907 = vpop.f32.mrb[0].mxu0
      %6908 = vmatprep.mubr.bf16.mxu0 0
      %6909 = vmatmul.mubr.bf16.gmra.mrb[0].mxu0 %v6739
      %v6910 = vpop.f32.mrb[0].mxu0
      %v6911 = vadd.f32 0.0, %v6910
      %v6912 = vpop.f32.mrb[0].mxu0
      %v6913 = vpop.f32.mrb[0].mxu0
      %v6914 = vadd.f32 0.0, %v6913
      %v6915 = vpop.f32.mrb[0].mxu0
      %6916 = vdwg.mxu0
      %v6917 = vld [vmem:[%s43] sm:$0x1]
      %v6919 = vlaneseq
      %v6920 = vshrl.u32 %v6919, 7
      %v6921 = vsub.s32 0, %v6920
      %v6922 = vrot.slane %v6917, %v6921
      %v6924 = vmul.f32 %v6839, %v6922
      %v6925 = vmul.f32 %v6842, %v6922
      %v6926 = vmul.f32 %v6847, %v6922
      %v6927 = vmul.f32 %v6850, %v6922
      %v6928 = vmul.f32 %v6855, %v6922
      %v6929 = vmul.f32 %v6858, %v6922
      %v6930 = vmul.f32 %v6863, %v6922
      %v6931 = vmul.f32 %v6866, %v6922
      %v6932 = vmul.f32 %v6871, %v6922
      %v6933 = vmul.f32 %v6874, %v6922
      %v6934 = vmul.f32 %v6879, %v6922
      %v6935 = vmul.f32 %v6882, %v6922
      %v6936 = vmul.f32 %v6887, %v6922
      %v6937 = vmul.f32 %v6890, %v6922
      %v6938 = vmul.f32 %v6895, %v6922
      %v6939 = vmul.f32 %v6898, %v6922
      %v6940 = vmul.f32 %v6903, %v6922
      %v6941 = vmul.f32 %v6906, %v6922
      %v6942 = vmul.f32 %v6911, %v6922
      %v6943 = vmul.f32 %v6914, %v6922
      %v6944 = vld [vmem:[%s45] sm:$0x1]
      %v6946 = vlaneseq
      %v6947 = vshrl.u32 %v6946, 7
      %v6948 = vsub.s32 0, %v6947
      %v6949 = vrot.slane %v6944, %v6948
      %v6951 = vadd.f32 %v6924, %v6949
      %v6952 = vadd.f32 %v6925, %v6949
      %v6953 = vadd.f32 %v6926, %v6949
      %v6954 = vadd.f32 %v6927, %v6949
      %v6955 = vadd.f32 %v6928, %v6949
      %v6956 = vadd.f32 %v6929, %v6949
      %v6957 = vadd.f32 %v6930, %v6949
      %v6958 = vadd.f32 %v6931, %v6949
      %v6959 = vadd.f32 %v6932, %v6949
      %v6960 = vadd.f32 %v6933, %v6949
      %v6961 = vadd.f32 %v6934, %v6949
      %v6962 = vadd.f32 %v6935, %v6949
      %v6963 = vadd.f32 %v6936, %v6949
      %v6964 = vadd.f32 %v6937, %v6949
      %v6965 = vadd.f32 %v6938, %v6949
      %v6966 = vadd.f32 %v6939, %v6949
      %v6967 = vadd.f32 %v6940, %v6949
      %v6968 = vadd.f32 %v6941, %v6949
      %v6969 = vadd.f32 %v6942, %v6949
      %v6970 = vadd.f32 %v6943, %v6949
      %v6971 = vxor.u32 %v6951, 2147483648
      %v6972 = vxor.u32 %v6952, 2147483648
      %v6973 = vxor.u32 %v6953, 2147483648
      %v6974 = vxor.u32 %v6954, 2147483648
      %v6975 = vxor.u32 %v6955, 2147483648
      %v6976 = vxor.u32 %v6956, 2147483648
      %v6977 = vxor.u32 %v6957, 2147483648
      %v6978 = vxor.u32 %v6958, 2147483648
      %v6979 = vxor.u32 %v6959, 2147483648
      %v6980 = vxor.u32 %v6960, 2147483648
      %v6981 = vxor.u32 %v6961, 2147483648
      %v6982 = vxor.u32 %v6962, 2147483648
      %v6983 = vxor.u32 %v6963, 2147483648
      %v6984 = vxor.u32 %v6964, 2147483648
      %v6985 = vxor.u32 %v6965, 2147483648
      %v6986 = vxor.u32 %v6966, 2147483648
      %v6987 = vxor.u32 %v6967, 2147483648
      %v6988 = vxor.u32 %v6968, 2147483648
      %v6989 = vxor.u32 %v6969, 2147483648
      %v6990 = vxor.u32 %v6970, 2147483648
      %v6991 = vmul.f32 %v6971, 1.442695
      %v6992 = vpow.pop %v6991
      %v6993 = vmul.f32 %v6972, 1.442695
      %v6994 = vpow.pop %v6993
      %v6995 = vmul.f32 %v6973, 1.442695
      %v6996 = vpow.pop %v6995
      %v6997 = vmul.f32 %v6974, 1.442695
      %v6998 = vpow.pop %v6997
      %v6999 = vmul.f32 %v6975, 1.442695
      %v7000 = vpow.pop %v6999
      %v7001 = vmul.f32 %v6976, 1.442695
      %v7002 = vpow.pop %v7001
      %v7003 = vmul.f32 %v6977, 1.442695
      %v7004 = vpow.pop %v7003
      %v7005 = vmul.f32 %v6978, 1.442695
      %v7006 = vpow.pop %v7005
      %v7007 = vmul.f32 %v6979, 1.442695
      %v7008 = vpow.pop %v7007
      %v7009 = vmul.f32 %v6980, 1.442695
      %v7010 = vpow.pop %v7009
      %v7011 = vmul.f32 %v6981, 1.442695
      %v7012 = vpow.pop %v7011
      %v7013 = vmul.f32 %v6982, 1.442695
      %v7014 = vpow.pop %v7013
      %v7015 = vmul.f32 %v6983, 1.442695
      %v7016 = vpow.pop %v7015
      %v7017 = vmul.f32 %v6984, 1.442695
      %v7018 = vpow.pop %v7017
      %v7019 = vmul.f32 %v6985, 1.442695
      %v7020 = vpow.pop %v7019
      %v7021 = vmul.f32 %v6986, 1.442695
      %v7022 = vpow.pop %v7021
      %v7023 = vmul.f32 %v6987, 1.442695
      %v7024 = vpow.pop %v7023
      %v7025 = vmul.f32 %v6988, 1.442695
      %v7026 = vpow.pop %v7025
      %v7027 = vmul.f32 %v6989, 1.442695
      %v7028 = vpow.pop %v7027
      %v7029 = vmul.f32 %v6990, 1.442695
      %v7030 = vpow.pop %v7029
      %v7031 = vadd.f32 %v6992, 1.0
      %v7032 = vadd.f32 %v6994, 1.0
      %v7033 = vadd.f32 %v6996, 1.0
      %v7034 = vadd.f32 %v6998, 1.0
      %v7035 = vadd.f32 %v7000, 1.0
      %v7036 = vadd.f32 %v7002, 1.0
      %v7037 = vadd.f32 %v7004, 1.0
      %v7038 = vadd.f32 %v7006, 1.0
      %v7039 = vadd.f32 %v7008, 1.0
      %v7040 = vadd.f32 %v7010, 1.0
      %v7041 = vadd.f32 %v7012, 1.0
      %v7042 = vadd.f32 %v7014, 1.0
      %v7043 = vadd.f32 %v7016, 1.0
      %v7044 = vadd.f32 %v7018, 1.0
      %v7045 = vadd.f32 %v7020, 1.0
      %v7046 = vadd.f32 %v7022, 1.0
      %v7047 = vadd.f32 %v7024, 1.0
      %v7048 = vadd.f32 %v7026, 1.0
      %v7049 = vadd.f32 %v7028, 1.0
      %v7050 = vadd.f32 %v7030, 1.0
      %v7051 = vrcp.pop %v7031
      %v7052 = vmul.f32 1.0, %v7051
      %v7053 = vrcp.pop %v7032
      %v7054 = vmul.f32 1.0, %v7053
      %v7055 = vrcp.pop %v7033
      %v7056 = vmul.f32 1.0, %v7055
      %v7057 = vrcp.pop %v7034
      %v7058 = vmul.f32 1.0, %v7057
      %v7059 = vrcp.pop %v7035
      %v7060 = vmul.f32 1.0, %v7059
      %v7061 = vrcp.pop %v7036
      %v7062 = vmul.f32 1.0, %v7061
      %v7063 = vrcp.pop %v7037
      %v7064 = vmul.f32 1.0, %v7063
      %v7065 = vrcp.pop %v7038
      %v7066 = vmul.f32 1.0, %v7065
      %v7067 = vrcp.pop %v7039
      %v7068 = vmul.f32 1.0, %v7067
      %v7069 = vrcp.pop %v7040
      %v7070 = vmul.f32 1.0, %v7069
      %v7071 = vrcp.pop %v7041
      %v7072 = vmul.f32 1.0, %v7071
      %v7073 = vrcp.pop %v7042
      %v7074 = vmul.f32 1.0, %v7073
      %v7075 = vrcp.pop %v7043
      %v7076 = vmul.f32 1.0, %v7075
      %v7077 = vrcp.pop %v7044
      %v7078 = vmul.f32 1.0, %v7077
      %v7079 = vrcp.pop %v7045
      %v7080 = vmul.f32 1.0, %v7079
      %v7081 = vrcp.pop %v7046
      %v7082 = vmul.f32 1.0, %v7081
      %v7083 = vrcp.pop %v7047
      %v7084 = vmul.f32 1.0, %v7083
      %v7085 = vrcp.pop %v7048
      %v7086 = vmul.f32 1.0, %v7085
      %v7087 = vrcp.pop %v7049
      %v7088 = vmul.f32 1.0, %v7087
      %v7089 = vrcp.pop %v7050
      %v7090 = vmul.f32 1.0, %v7089
      %v7091 = vmul.f32 %v6951, %v7052
      %v7092 = vmul.f32 %v6952, %v7054
      %v7093 = vmul.f32 %v6953, %v7056
      %v7094 = vmul.f32 %v6954, %v7058
      %v7095 = vmul.f32 %v6955, %v7060
      %v7096 = vmul.f32 %v6956, %v7062
      %v7097 = vmul.f32 %v6957, %v7064
      %v7098 = vmul.f32 %v6958, %v7066
      %v7099 = vmul.f32 %v6959, %v7068
      %v7100 = vmul.f32 %v6960, %v7070
      %v7101 = vmul.f32 %v6961, %v7072
      %v7102 = vmul.f32 %v6962, %v7074
      %v7103 = vmul.f32 %v6963, %v7076
      %v7104 = vmul.f32 %v6964, %v7078
      %v7105 = vmul.f32 %v6965, %v7080
      %v7106 = vmul.f32 %v6966, %v7082
      %v7107 = vmul.f32 %v6967, %v7084
      %v7108 = vmul.f32 %v6968, %v7086
      %v7109 = vmul.f32 %v6969, %v7088
      %v7110 = vmul.f32 %v6970, %v7090
      %v7111 = vmul.f32 %v7091, %v1642
      %v7112 = vmul.f32 %v7092, %v1647
      %v7113 = vmul.f32 %v7093, %v1652
      %v7114 = vmul.f32 %v7094, %v1657
      %v7115 = vmul.f32 %v7095, %v1662
      %v7116 = vmul.f32 %v7096, %v1667
      %v7117 = vmul.f32 %v7097, %v1672
      %v7118 = vmul.f32 %v7098, %v1677
      %v7119 = vmul.f32 %v7099, %v1682
      %v7120 = vmul.f32 %v7100, %v1687
      %v7121 = vmul.f32 %v7101, %v1692
      %v7122 = vmul.f32 %v7102, %v1697
      %v7123 = vmul.f32 %v7103, %v1702
      %v7124 = vmul.f32 %v7104, %v1707
      %v7125 = vmul.f32 %v7105, %v1712
      %v7126 = vmul.f32 %v7106, %v1717
      %v7127 = vmul.f32 %v7107, %v1722
      %v7128 = vmul.f32 %v7108, %v1727
      %v7129 = vmul.f32 %v7109, %v1732
      %v7130 = vmul.f32 %v7110, %v1737
      %7131 = vst [vmem:[#allocation2 + $0x20] sm:$0xff] %v7111
      %7132 = vst [vmem:[#allocation2 + $0x28] sm:$0xff] %v7112
      %7133 = vst [vmem:[#allocation2 + $0x30] sm:$0xff] %v7113
      %7134 = vst [vmem:[#allocation2 + $0x38] sm:$0xff] %v7114
      %7135 = vst [vmem:[#allocation2 + $0x40] sm:$0xff] %v7115
      %7136 = vst [vmem:[#allocation2 + $0x48] sm:$0xff] %v7116
      %7137 = vst [vmem:[#allocation2 + $0x50] sm:$0xff] %v7117
      %7138 = vst [vmem:[#allocation2 + $0x58] sm:$0xff] %v7118
      %7139 = vst [vmem:[#allocation2 + $0x60] sm:$0xff] %v7119
      %7140 = vst [vmem:[#allocation2 + $0x68] sm:$0xff] %v7120
      %7141 = vst [vmem:[#allocation2 + $0x70] sm:$0xff] %v7121
      %7142 = vst [vmem:[#allocation2 + $0x78] sm:$0xff] %v7122
      %7143 = vst [vmem:[#allocation2 + $0x80] sm:$0xff] %v7123
      %7144 = vst [vmem:[#allocation2 + $0x88] sm:$0xff] %v7124
      %7145 = vst [vmem:[#allocation2 + $0x90] sm:$0xff] %v7125
      %7146 = vst [vmem:[#allocation2 + $0x98] sm:$0xff] %v7126
      %7147 = vst [vmem:[#allocation2 + $0xa0] sm:$0xff] %v7127
      %7148 = vst [vmem:[#allocation2 + $0xa8] sm:$0xff] %v7128
      %7149 = vst [vmem:[#allocation2 + $0xb0] sm:$0xff] %v7129
      %7150 = vst [vmem:[#allocation2 + $0xb8] sm:$0xff] %v7130
      %v7151 = vld [vmem:[#allocation2 + $0xf] sm:$0xff]
      %v7152 = vld [vmem:[#allocation2 + $0x17] sm:$0xff]
      %v7153 = vld [vmem:[#allocation2 + $0x1f] sm:$0xff]
      %v7154 = vld [vmem:[#allocation2 + $0x27] sm:$0xff]
      %v7155 = vld [vmem:[#allocation2 + $0x2f] sm:$0xff]
      %v7156 = vld [vmem:[#allocation2 + $0x37] sm:$0xff]
      %v7157 = vld [vmem:[#allocation2 + $0x3f] sm:$0xff]
      %v7158 = vld [vmem:[#allocation2 + $0x47] sm:$0xff]
      %v7159 = vld [vmem:[#allocation2 + $0x4f] sm:$0xff]
      %v7160 = vld [vmem:[#allocation2 + $0x57] sm:$0xff]
      %v7161 = vld [vmem:[#allocation2 + $0x5f] sm:$0xff]
      %v7162 = vld [vmem:[#allocation2 + $0x67] sm:$0xff]
      %v7163 = vld [vmem:[#allocation2 + $0x6f] sm:$0xff]
      %v7164 = vld [vmem:[#allocation2 + $0x77] sm:$0xff]
      %v7165 = vld [vmem:[#allocation2 + $0x7f] sm:$0xff]
      %v7166 = vld [vmem:[#allocation2 + $0x87] sm:$0xff]
      %v7167 = vld [vmem:[#allocation2 + $0x8f] sm:$0xff]
      %v7168 = vld [vmem:[#allocation2 + $0x97] sm:$0xff]
      %v7169 = vld [vmem:[#allocation2 + $0x9f] sm:$0xff]
      %v7170 = vld [vmem:[#allocation2 + $0xa7] sm:$0xff]
      %v7171 = vld [vmem:[%s47] sm:$0x1]
      %v7172 = vlaneseq
      %v7173 = vshrl.u32 %v7172, 7
      %v7174 = vsub.s32 0, %v7173
      %v7175 = vrot.slane %v7171, %v7174
      %v7176 = vmul.f32 %v7151, %v7175
      %v7177 = vmul.f32 %v7152, %v7175
      %v7178 = vmul.f32 %v7153, %v7175
      %v7179 = vmul.f32 %v7154, %v7175
      %v7180 = vmul.f32 %v7155, %v7175
      %v7181 = vmul.f32 %v7156, %v7175
      %v7182 = vmul.f32 %v7157, %v7175
      %v7183 = vmul.f32 %v7158, %v7175
      %v7184 = vmul.f32 %v7159, %v7175
      %v7185 = vmul.f32 %v7160, %v7175
      %v7186 = vmul.f32 %v7161, %v7175
      %v7187 = vmul.f32 %v7162, %v7175
      %v7188 = vmul.f32 %v7163, %v7175
      %v7189 = vmul.f32 %v7164, %v7175
      %v7190 = vmul.f32 %v7165, %v7175
      %v7191 = vmul.f32 %v7166, %v7175
      %v7192 = vmul.f32 %v7167, %v7175
      %v7193 = vmul.f32 %v7168, %v7175
      %v7194 = vmul.f32 %v7169, %v7175
      %v7195 = vmul.f32 %v7170, %v7175
      %v7196 = vld [vmem:[#allocation2 + $0x10] sm:$0xff]
      %v7197 = vld [vmem:[#allocation2 + $0x18] sm:$0xff]
      %v7198 = vld [vmem:[#allocation2 + $0x20] sm:$0xff]
      %v7199 = vld [vmem:[#allocation2 + $0x28] sm:$0xff]
      %v7200 = vld [vmem:[#allocation2 + $0x30] sm:$0xff]
      %v7201 = vld [vmem:[#allocation2 + $0x38] sm:$0xff]
      %v7202 = vld [vmem:[#allocation2 + $0x40] sm:$0xff]
      %v7203 = vld [vmem:[#allocation2 + $0x48] sm:$0xff]
      %v7204 = vld [vmem:[#allocation2 + $0x50] sm:$0xff]
      %v7205 = vld [vmem:[#allocation2 + $0x58] sm:$0xff]
      %v7206 = vld [vmem:[#allocation2 + $0x60] sm:$0xff]
      %v7207 = vld [vmem:[#allocation2 + $0x68] sm:$0xff]
      %v7208 = vld [vmem:[#allocation2 + $0x70] sm:$0xff]
      %v7209 = vld [vmem:[#allocation2 + $0x78] sm:$0xff]
      %v7210 = vld [vmem:[#allocation2 + $0x80] sm:$0xff]
      %v7211 = vld [vmem:[#allocation2 + $0x88] sm:$0xff]
      %v7212 = vld [vmem:[#allocation2 + $0x90] sm:$0xff]
      %v7213 = vld [vmem:[#allocation2 + $0x98] sm:$0xff]
      %v7214 = vld [vmem:[#allocation2 + $0xa0] sm:$0xff]
      %v7215 = vld [vmem:[#allocation2 + $0xa8] sm:$0xff]
      %v7216 = vld [vmem:[%s47 + $0x1] sm:$0x1]
      %v7217 = vlaneseq
      %v7218 = vshrl.u32 %v7217, 7
      %v7219 = vsub.s32 0, %v7218
      %v7220 = vrot.slane %v7216, %v7219
      %v7221 = vmul.f32 %v7196, %v7220
      %v7222 = vmul.f32 %v7197, %v7220
      %v7223 = vmul.f32 %v7198, %v7220
      %v7224 = vmul.f32 %v7199, %v7220
      %v7225 = vmul.f32 %v7200, %v7220
      %v7226 = vmul.f32 %v7201, %v7220
      %v7227 = vmul.f32 %v7202, %v7220
      %v7228 = vmul.f32 %v7203, %v7220
      %v7229 = vmul.f32 %v7204, %v7220
      %v7230 = vmul.f32 %v7205, %v7220
      %v7231 = vmul.f32 %v7206, %v7220
      %v7232 = vmul.f32 %v7207, %v7220
      %v7233 = vmul.f32 %v7208, %v7220
      %v7234 = vmul.f32 %v7209, %v7220
      %v7235 = vmul.f32 %v7210, %v7220
      %v7236 = vmul.f32 %v7211, %v7220
      %v7237 = vmul.f32 %v7212, %v7220
      %v7238 = vmul.f32 %v7213, %v7220
      %v7239 = vmul.f32 %v7214, %v7220
      %v7240 = vmul.f32 %v7215, %v7220
      %v7241 = vadd.f32 %v7176, %v7221
      %v7242 = vadd.f32 %v7177, %v7222
      %v7243 = vadd.f32 %v7178, %v7223
      %v7244 = vadd.f32 %v7179, %v7224
      %v7245 = vadd.f32 %v7180, %v7225
      %v7246 = vadd.f32 %v7181, %v7226
      %v7247 = vadd.f32 %v7182, %v7227
      %v7248 = vadd.f32 %v7183, %v7228
      %v7249 = vadd.f32 %v7184, %v7229
      %v7250 = vadd.f32 %v7185, %v7230
      %v7251 = vadd.f32 %v7186, %v7231
      %v7252 = vadd.f32 %v7187, %v7232
      %v7253 = vadd.f32 %v7188, %v7233
      %v7254 = vadd.f32 %v7189, %v7234
      %v7255 = vadd.f32 %v7190, %v7235
      %v7256 = vadd.f32 %v7191, %v7236
      %v7257 = vadd.f32 %v7192, %v7237
      %v7258 = vadd.f32 %v7193, %v7238
      %v7259 = vadd.f32 %v7194, %v7239
      %v7260 = vadd.f32 %v7195, %v7240
      %v7261 = vld [vmem:[#allocation2 + $0x11] sm:$0xff]
      %v7262 = vld [vmem:[#allocation2 + $0x19] sm:$0xff]
      %v7263 = vld [vmem:[#allocation2 + $0x21] sm:$0xff]
      %v7264 = vld [vmem:[#allocation2 + $0x29] sm:$0xff]
      %v7265 = vld [vmem:[#allocation2 + $0x31] sm:$0xff]
      %v7266 = vld [vmem:[#allocation2 + $0x39] sm:$0xff]
      %v7267 = vld [vmem:[#allocation2 + $0x41] sm:$0xff]
      %v7268 = vld [vmem:[#allocation2 + $0x49] sm:$0xff]
      %v7269 = vld [vmem:[#allocation2 + $0x51] sm:$0xff]
      %v7270 = vld [vmem:[#allocation2 + $0x59] sm:$0xff]
      %v7271 = vld [vmem:[#allocation2 + $0x61] sm:$0xff]
      %v7272 = vld [vmem:[#allocation2 + $0x69] sm:$0xff]
      %v7273 = vld [vmem:[#allocation2 + $0x71] sm:$0xff]
      %v7274 = vld [vmem:[#allocation2 + $0x79] sm:$0xff]
      %v7275 = vld [vmem:[#allocation2 + $0x81] sm:$0xff]
      %v7276 = vld [vmem:[#allocation2 + $0x89] sm:$0xff]
      %v7277 = vld [vmem:[#allocation2 + $0x91] sm:$0xff]
      %v7278 = vld [vmem:[#allocation2 + $0x99] sm:$0xff]
      %v7279 = vld [vmem:[#allocation2 + $0xa1] sm:$0xff]
      %v7280 = vld [vmem:[#allocation2 + $0xa9] sm:$0xff]
      %v7281 = vld [vmem:[%s47 + $0x2] sm:$0x1]
      %v7282 = vlaneseq
      %v7283 = vshrl.u32 %v7282, 7
      %v7284 = vsub.s32 0, %v7283
      %v7285 = vrot.slane %v7281, %v7284
      %v7286 = vmul.f32 %v7261, %v7285
      %v7287 = vmul.f32 %v7262, %v7285
      %v7288 = vmul.f32 %v7263, %v7285
      %v7289 = vmul.f32 %v7264, %v7285
      %v7290 = vmul.f32 %v7265, %v7285
      %v7291 = vmul.f32 %v7266, %v7285
      %v7292 = vmul.f32 %v7267, %v7285
      %v7293 = vmul.f32 %v7268, %v7285
      %v7294 = vmul.f32 %v7269, %v7285
      %v7295 = vmul.f32 %v7270, %v7285
      %v7296 = vmul.f32 %v7271, %v7285
      %v7297 = vmul.f32 %v7272, %v7285
      %v7298 = vmul.f32 %v7273, %v7285
      %v7299 = vmul.f32 %v7274, %v7285
      %v7300 = vmul.f32 %v7275, %v7285
      %v7301 = vmul.f32 %v7276, %v7285
      %v7302 = vmul.f32 %v7277, %v7285
      %v7303 = vmul.f32 %v7278, %v7285
      %v7304 = vmul.f32 %v7279, %v7285
      %v7305 = vmul.f32 %v7280, %v7285
      %v7306 = vadd.f32 %v7241, %v7286
      %v7307 = vadd.f32 %v7242, %v7287
      %v7308 = vadd.f32 %v7243, %v7288
      %v7309 = vadd.f32 %v7244, %v7289
      %v7310 = vadd.f32 %v7245, %v7290
      %v7311 = vadd.f32 %v7246, %v7291
      %v7312 = vadd.f32 %v7247, %v7292
      %v7313 = vadd.f32 %v7248, %v7293
      %v7314 = vadd.f32 %v7249, %v7294
      %v7315 = vadd.f32 %v7250, %v7295
      %v7316 = vadd.f32 %v7251, %v7296
      %v7317 = vadd.f32 %v7252, %v7297
      %v7318 = vadd.f32 %v7253, %v7298
      %v7319 = vadd.f32 %v7254, %v7299
      %v7320 = vadd.f32 %v7255, %v7300
      %v7321 = vadd.f32 %v7256, %v7301
      %v7322 = vadd.f32 %v7257, %v7302
      %v7323 = vadd.f32 %v7258, %v7303
      %v7324 = vadd.f32 %v7259, %v7304
      %v7325 = vadd.f32 %v7260, %v7305
      %v7326 = vld [vmem:[#allocation2 + $0xaf] sm:$0xff]
      %v7327 = vld [vmem:[#allocation2 + $0xb7] sm:$0xff]
      %v7328 = vld [vmem:[%s47 + $0x3] sm:$0x1]
      %v7329 = vlaneseq
      %v7330 = vshrl.u32 %v7329, 7
      %v7331 = vsub.s32 0, %v7330
      %v7332 = vrot.slane %v7328, %v7331
      %v7333 = vmul.f32 %v7153, %v7332
      %v7334 = vmul.f32 %v7154, %v7332
      %v7335 = vmul.f32 %v7155, %v7332
      %v7336 = vmul.f32 %v7156, %v7332
      %v7337 = vmul.f32 %v7157, %v7332
      %v7338 = vmul.f32 %v7158, %v7332
      %v7339 = vmul.f32 %v7159, %v7332
      %v7340 = vmul.f32 %v7160, %v7332
      %v7341 = vmul.f32 %v7161, %v7332
      %v7342 = vmul.f32 %v7162, %v7332
      %v7343 = vmul.f32 %v7163, %v7332
      %v7344 = vmul.f32 %v7164, %v7332
      %v7345 = vmul.f32 %v7165, %v7332
      %v7346 = vmul.f32 %v7166, %v7332
      %v7347 = vmul.f32 %v7167, %v7332
      %v7348 = vmul.f32 %v7168, %v7332
      %v7349 = vmul.f32 %v7169, %v7332
      %v7350 = vmul.f32 %v7170, %v7332
      %v7351 = vmul.f32 %v7326, %v7332
      %v7352 = vmul.f32 %v7327, %v7332
      %v7353 = vadd.f32 %v7306, %v7333
      %v7354 = vadd.f32 %v7307, %v7334
      %v7355 = vadd.f32 %v7308, %v7335
      %v7356 = vadd.f32 %v7309, %v7336
      %v7357 = vadd.f32 %v7310, %v7337
      %v7358 = vadd.f32 %v7311, %v7338
      %v7359 = vadd.f32 %v7312, %v7339
      %v7360 = vadd.f32 %v7313, %v7340
      %v7361 = vadd.f32 %v7314, %v7341
      %v7362 = vadd.f32 %v7315, %v7342
      %v7363 = vadd.f32 %v7316, %v7343
      %v7364 = vadd.f32 %v7317, %v7344
      %v7365 = vadd.f32 %v7318, %v7345
      %v7366 = vadd.f32 %v7319, %v7346
      %v7367 = vadd.f32 %v7320, %v7347
      %v7368 = vadd.f32 %v7321, %v7348
      %v7369 = vadd.f32 %v7322, %v7349
      %v7370 = vadd.f32 %v7323, %v7350
      %v7371 = vadd.f32 %v7324, %v7351
      %v7372 = vadd.f32 %v7325, %v7352
      %v7373 = vld [vmem:[#allocation2 + $0xb0] sm:$0xff]
      %v7374 = vld [vmem:[#allocation2 + $0xb8] sm:$0xff]
      %v7375 = vld [vmem:[%s47 + $0x4] sm:$0x1]
      %v7376 = vlaneseq
      %v7377 = vshrl.u32 %v7376, 7
      %v7378 = vsub.s32 0, %v7377
      %v7379 = vrot.slane %v7375, %v7378
      %v7380 = vmul.f32 %v7198, %v7379
      %v7381 = vmul.f32 %v7199, %v7379
      %v7382 = vmul.f32 %v7200, %v7379
      %v7383 = vmul.f32 %v7201, %v7379
      %v7384 = vmul.f32 %v7202, %v7379
      %v7385 = vmul.f32 %v7203, %v7379
      %v7386 = vmul.f32 %v7204, %v7379
      %v7387 = vmul.f32 %v7205, %v7379
      %v7388 = vmul.f32 %v7206, %v7379
      %v7389 = vmul.f32 %v7207, %v7379
      %v7390 = vmul.f32 %v7208, %v7379
      %v7391 = vmul.f32 %v7209, %v7379
      %v7392 = vmul.f32 %v7210, %v7379
      %v7393 = vmul.f32 %v7211, %v7379
      %v7394 = vmul.f32 %v7212, %v7379
      %v7395 = vmul.f32 %v7213, %v7379
      %v7396 = vmul.f32 %v7214, %v7379
      %v7397 = vmul.f32 %v7215, %v7379
      %v7398 = vmul.f32 %v7373, %v7379
      %v7399 = vmul.f32 %v7374, %v7379
      %v7400 = vadd.f32 %v7353, %v7380
      %v7401 = vadd.f32 %v7354, %v7381
      %v7402 = vadd.f32 %v7355, %v7382
      %v7403 = vadd.f32 %v7356, %v7383
      %v7404 = vadd.f32 %v7357, %v7384
      %v7405 = vadd.f32 %v7358, %v7385
      %v7406 = vadd.f32 %v7359, %v7386
      %v7407 = vadd.f32 %v7360, %v7387
      %v7408 = vadd.f32 %v7361, %v7388
      %v7409 = vadd.f32 %v7362, %v7389
      %v7410 = vadd.f32 %v7363, %v7390
      %v7411 = vadd.f32 %v7364, %v7391
      %v7412 = vadd.f32 %v7365, %v7392
      %v7413 = vadd.f32 %v7366, %v7393
      %v7414 = vadd.f32 %v7367, %v7394
      %v7415 = vadd.f32 %v7368, %v7395
      %v7416 = vadd.f32 %v7369, %v7396
      %v7417 = vadd.f32 %v7370, %v7397
      %v7418 = vadd.f32 %v7371, %v7398
      %v7419 = vadd.f32 %v7372, %v7399
      %v7420 = vld [vmem:[#allocation2 + $0xb1] sm:$0xff]
      %v7421 = vld [vmem:[#allocation2 + $0xb9] sm:$0xff]
      %v7422 = vld [vmem:[%s47 + $0x5] sm:$0x1]
      %v7423 = vlaneseq
      %v7424 = vshrl.u32 %v7423, 7
      %v7425 = vsub.s32 0, %v7424
      %v7426 = vrot.slane %v7422, %v7425
      %v7427 = vmul.f32 %v7263, %v7426
      %v7428 = vmul.f32 %v7264, %v7426
      %v7429 = vmul.f32 %v7265, %v7426
      %v7430 = vmul.f32 %v7266, %v7426
      %v7431 = vmul.f32 %v7267, %v7426
      %v7432 = vmul.f32 %v7268, %v7426
      %v7433 = vmul.f32 %v7269, %v7426
      %v7434 = vmul.f32 %v7270, %v7426
      %v7435 = vmul.f32 %v7271, %v7426
      %v7436 = vmul.f32 %v7272, %v7426
      %v7437 = vmul.f32 %v7273, %v7426
      %v7438 = vmul.f32 %v7274, %v7426
      %v7439 = vmul.f32 %v7275, %v7426
      %v7440 = vmul.f32 %v7276, %v7426
      %v7441 = vmul.f32 %v7277, %v7426
      %v7442 = vmul.f32 %v7278, %v7426
      %v7443 = vmul.f32 %v7279, %v7426
      %v7444 = vmul.f32 %v7280, %v7426
      %v7445 = vmul.f32 %v7420, %v7426
      %v7446 = vmul.f32 %v7421, %v7426
      %v7447 = vadd.f32 %v7400, %v7427
      %v7448 = vadd.f32 %v7401, %v7428
      %v7449 = vadd.f32 %v7402, %v7429
      %v7450 = vadd.f32 %v7403, %v7430
      %v7451 = vadd.f32 %v7404, %v7431
      %v7452 = vadd.f32 %v7405, %v7432
      %v7453 = vadd.f32 %v7406, %v7433
      %v7454 = vadd.f32 %v7407, %v7434
      %v7455 = vadd.f32 %v7408, %v7435
      %v7456 = vadd.f32 %v7409, %v7436
      %v7457 = vadd.f32 %v7410, %v7437
      %v7458 = vadd.f32 %v7411, %v7438
      %v7459 = vadd.f32 %v7412, %v7439
      %v7460 = vadd.f32 %v7413, %v7440
      %v7461 = vadd.f32 %v7414, %v7441
      %v7462 = vadd.f32 %v7415, %v7442
      %v7463 = vadd.f32 %v7416, %v7443
      %v7464 = vadd.f32 %v7417, %v7444
      %v7465 = vadd.f32 %v7418, %v7445
      %v7466 = vadd.f32 %v7419, %v7446
      %v7467 = vld [vmem:[#allocation2 + $0xbf] sm:$0xff]
      %v7468 = vld [vmem:[#allocation2 + $0xc7] sm:$0xff]
      %v7469 = vld [vmem:[%s47 + $0x6] sm:$0x1]
      %v7470 = vlaneseq
      %v7471 = vshrl.u32 %v7470, 7
      %v7472 = vsub.s32 0, %v7471
      %v7473 = vrot.slane %v7469, %v7472
      %v7474 = vmul.f32 %v7155, %v7473
      %v7475 = vmul.f32 %v7156, %v7473
      %v7476 = vmul.f32 %v7157, %v7473
      %v7477 = vmul.f32 %v7158, %v7473
      %v7478 = vmul.f32 %v7159, %v7473
      %v7479 = vmul.f32 %v7160, %v7473
      %v7480 = vmul.f32 %v7161, %v7473
      %v7481 = vmul.f32 %v7162, %v7473
      %v7482 = vmul.f32 %v7163, %v7473
      %v7483 = vmul.f32 %v7164, %v7473
      %v7484 = vmul.f32 %v7165, %v7473
      %v7485 = vmul.f32 %v7166, %v7473
      %v7486 = vmul.f32 %v7167, %v7473
      %v7487 = vmul.f32 %v7168, %v7473
      %v7488 = vmul.f32 %v7169, %v7473
      %v7489 = vmul.f32 %v7170, %v7473
      %v7490 = vmul.f32 %v7326, %v7473
      %v7491 = vmul.f32 %v7327, %v7473
      %v7492 = vmul.f32 %v7467, %v7473
      %v7493 = vmul.f32 %v7468, %v7473
      %v7494 = vadd.f32 %v7447, %v7474
      %v7495 = vadd.f32 %v7448, %v7475
      %v7496 = vadd.f32 %v7449, %v7476
      %v7497 = vadd.f32 %v7450, %v7477
      %v7498 = vadd.f32 %v7451, %v7478
      %v7499 = vadd.f32 %v7452, %v7479
      %v7500 = vadd.f32 %v7453, %v7480
      %v7501 = vadd.f32 %v7454, %v7481
      %v7502 = vadd.f32 %v7455, %v7482
      %v7503 = vadd.f32 %v7456, %v7483
      %v7504 = vadd.f32 %v7457, %v7484
      %v7505 = vadd.f32 %v7458, %v7485
      %v7506 = vadd.f32 %v7459, %v7486
      %v7507 = vadd.f32 %v7460, %v7487
      %v7508 = vadd.f32 %v7461, %v7488
      %v7509 = vadd.f32 %v7462, %v7489
      %v7510 = vadd.f32 %v7463, %v7490
      %v7511 = vadd.f32 %v7464, %v7491
      %v7512 = vadd.f32 %v7465, %v7492
      %v7513 = vadd.f32 %v7466, %v7493
      %v7514 = vld [vmem:[#allocation2 + $0xc0] sm:$0xff]
      %v7515 = vld [vmem:[#allocation2 + $0xc8] sm:$0xff]
      %v7516 = vld [vmem:[%s47 + $0x7] sm:$0x1]
      %v7517 = vlaneseq
      %v7518 = vshrl.u32 %v7517, 7
      %v7519 = vsub.s32 0, %v7518
      %v7520 = vrot.slane %v7516, %v7519
      %v7521 = vmul.f32 %v7200, %v7520
      %v7522 = vmul.f32 %v7201, %v7520
      %v7523 = vmul.f32 %v7202, %v7520
      %v7524 = vmul.f32 %v7203, %v7520
      %v7525 = vmul.f32 %v7204, %v7520
      %v7526 = vmul.f32 %v7205, %v7520
      %v7527 = vmul.f32 %v7206, %v7520
      %v7528 = vmul.f32 %v7207, %v7520
      %v7529 = vmul.f32 %v7208, %v7520
      %v7530 = vmul.f32 %v7209, %v7520
      %v7531 = vmul.f32 %v7210, %v7520
      %v7532 = vmul.f32 %v7211, %v7520
      %v7533 = vmul.f32 %v7212, %v7520
      %v7534 = vmul.f32 %v7213, %v7520
      %v7535 = vmul.f32 %v7214, %v7520
      %v7536 = vmul.f32 %v7215, %v7520
      %v7537 = vmul.f32 %v7373, %v7520
      %v7538 = vmul.f32 %v7374, %v7520
      %v7539 = vmul.f32 %v7514, %v7520
      %v7540 = vmul.f32 %v7515, %v7520
      %v7541 = vadd.f32 %v7494, %v7521
      %v7542 = vadd.f32 %v7495, %v7522
      %v7543 = vadd.f32 %v7496, %v7523
      %v7544 = vadd.f32 %v7497, %v7524
      %v7545 = vadd.f32 %v7498, %v7525
      %v7546 = vadd.f32 %v7499, %v7526
      %v7547 = vadd.f32 %v7500, %v7527
      %v7548 = vadd.f32 %v7501, %v7528
      %v7549 = vadd.f32 %v7502, %v7529
      %v7550 = vadd.f32 %v7503, %v7530
      %v7551 = vadd.f32 %v7504, %v7531
      %v7552 = vadd.f32 %v7505, %v7532
      %v7553 = vadd.f32 %v7506, %v7533
      %v7554 = vadd.f32 %v7507, %v7534
      %v7555 = vadd.f32 %v7508, %v7535
      %v7556 = vadd.f32 %v7509, %v7536
      %v7557 = vadd.f32 %v7510, %v7537
      %v7558 = vadd.f32 %v7511, %v7538
      %v7559 = vadd.f32 %v7512, %v7539
      %v7560 = vadd.f32 %v7513, %v7540
      %v7561 = vld [vmem:[#allocation2 + $0xc1] sm:$0xff]
      %v7562 = vld [vmem:[#allocation2 + $0xc9] sm:$0xff]
      %v7563 = vld [vmem:[%s47 + $0x8] sm:$0x1]
      %v7564 = vlaneseq
      %v7565 = vshrl.u32 %v7564, 7
      %v7566 = vsub.s32 0, %v7565
      %v7567 = vrot.slane %v7563, %v7566
      %v7568 = vmul.f32 %v7265, %v7567
      %v7569 = vmul.f32 %v7266, %v7567
      %v7570 = vmul.f32 %v7267, %v7567
      %v7571 = vmul.f32 %v7268, %v7567
      %v7572 = vmul.f32 %v7269, %v7567
      %v7573 = vmul.f32 %v7270, %v7567
      %v7574 = vmul.f32 %v7271, %v7567
      %v7575 = vmul.f32 %v7272, %v7567
      %v7576 = vmul.f32 %v7273, %v7567
      %v7577 = vmul.f32 %v7274, %v7567
      %v7578 = vmul.f32 %v7275, %v7567
      %v7579 = vmul.f32 %v7276, %v7567
      %v7580 = vmul.f32 %v7277, %v7567
      %v7581 = vmul.f32 %v7278, %v7567
      %v7582 = vmul.f32 %v7279, %v7567
      %v7583 = vmul.f32 %v7280, %v7567
      %v7584 = vmul.f32 %v7420, %v7567
      %v7585 = vmul.f32 %v7421, %v7567
      %v7586 = vmul.f32 %v7561, %v7567
      %v7587 = vmul.f32 %v7562, %v7567
      %v7588 = vadd.f32 %v7541, %v7568
      %v7589 = vadd.f32 %v7542, %v7569
      %v7590 = vadd.f32 %v7543, %v7570
      %v7591 = vadd.f32 %v7544, %v7571
      %v7592 = vadd.f32 %v7545, %v7572
      %v7593 = vadd.f32 %v7546, %v7573
      %v7594 = vadd.f32 %v7547, %v7574
      %v7595 = vadd.f32 %v7548, %v7575
      %v7596 = vadd.f32 %v7549, %v7576
      %v7597 = vadd.f32 %v7550, %v7577
      %v7598 = vadd.f32 %v7551, %v7578
      %v7599 = vadd.f32 %v7552, %v7579
      %v7600 = vadd.f32 %v7553, %v7580
      %v7601 = vadd.f32 %v7554, %v7581
      %v7602 = vadd.f32 %v7555, %v7582
      %v7603 = vadd.f32 %v7556, %v7583
      %v7604 = vadd.f32 %v7557, %v7584
      %v7605 = vadd.f32 %v7558, %v7585
      %v7606 = vadd.f32 %v7559, %v7586
      %v7607 = vadd.f32 %v7560, %v7587
      %v7608 = vld [vmem:[%s49] sm:$0x1]
      %v7610 = vlaneseq
      %v7611 = vshrl.u32 %v7610, 7
      %v7612 = vsub.s32 0, %v7611
      %v7613 = vrot.slane %v7608, %v7612
      %v7615 = vmul.f32 %v7588, %v7613
      %v7616 = vmul.f32 %v7589, %v7613
      %v7617 = vmul.f32 %v7590, %v7613
      %v7618 = vmul.f32 %v7591, %v7613
      %v7619 = vmul.f32 %v7592, %v7613
      %v7620 = vmul.f32 %v7593, %v7613
      %v7621 = vmul.f32 %v7594, %v7613
      %v7622 = vmul.f32 %v7595, %v7613
      %v7623 = vmul.f32 %v7596, %v7613
      %v7624 = vmul.f32 %v7597, %v7613
      %v7625 = vmul.f32 %v7598, %v7613
      %v7626 = vmul.f32 %v7599, %v7613
      %v7627 = vmul.f32 %v7600, %v7613
      %v7628 = vmul.f32 %v7601, %v7613
      %v7629 = vmul.f32 %v7602, %v7613
      %v7630 = vmul.f32 %v7603, %v7613
      %v7631 = vmul.f32 %v7604, %v7613
      %v7632 = vmul.f32 %v7605, %v7613
      %v7633 = vmul.f32 %v7606, %v7613
      %v7634 = vmul.f32 %v7607, %v7613
      %v7635 = vld [vmem:[%s51] sm:$0x1]
      %v7637 = vlaneseq
      %v7638 = vshrl.u32 %v7637, 7
      %v7639 = vsub.s32 0, %v7638
      %v7640 = vrot.slane %v7635, %v7639
      %v7642 = vadd.f32 %v7615, %v7640
      %v7643 = vadd.f32 %v7616, %v7640
      %v7644 = vadd.f32 %v7617, %v7640
      %v7645 = vadd.f32 %v7618, %v7640
      %v7646 = vadd.f32 %v7619, %v7640
      %v7647 = vadd.f32 %v7620, %v7640
      %v7648 = vadd.f32 %v7621, %v7640
      %v7649 = vadd.f32 %v7622, %v7640
      %v7650 = vadd.f32 %v7623, %v7640
      %v7651 = vadd.f32 %v7624, %v7640
      %v7652 = vadd.f32 %v7625, %v7640
      %v7653 = vadd.f32 %v7626, %v7640
      %v7654 = vadd.f32 %v7627, %v7640
      %v7655 = vadd.f32 %v7628, %v7640
      %v7656 = vadd.f32 %v7629, %v7640
      %v7657 = vadd.f32 %v7630, %v7640
      %v7658 = vadd.f32 %v7631, %v7640
      %v7659 = vadd.f32 %v7632, %v7640
      %v7660 = vadd.f32 %v7633, %v7640
      %v7661 = vadd.f32 %v7634, %v7640
      %v7662 = vxor.u32 %v7642, 2147483648
      %v7663 = vxor.u32 %v7643, 2147483648
      %v7664 = vxor.u32 %v7644, 2147483648
      %v7665 = vxor.u32 %v7645, 2147483648
      %v7666 = vxor.u32 %v7646, 2147483648
      %v7667 = vxor.u32 %v7647, 2147483648
      %v7668 = vxor.u32 %v7648, 2147483648
      %v7669 = vxor.u32 %v7649, 2147483648
      %v7670 = vxor.u32 %v7650, 2147483648
      %v7671 = vxor.u32 %v7651, 2147483648
      %v7672 = vxor.u32 %v7652, 2147483648
      %v7673 = vxor.u32 %v7653, 2147483648
      %v7674 = vxor.u32 %v7654, 2147483648
      %v7675 = vxor.u32 %v7655, 2147483648
      %v7676 = vxor.u32 %v7656, 2147483648
      %v7677 = vxor.u32 %v7657, 2147483648
      %v7678 = vxor.u32 %v7658, 2147483648
      %v7679 = vxor.u32 %v7659, 2147483648
      %v7680 = vxor.u32 %v7660, 2147483648
      %v7681 = vxor.u32 %v7661, 2147483648
      %v7682 = vmul.f32 %v7662, 1.442695
      %v7683 = vpow.pop %v7682
      %v7684 = vmul.f32 %v7663, 1.442695
      %v7685 = vpow.pop %v7684
      %v7686 = vmul.f32 %v7664, 1.442695
      %v7687 = vpow.pop %v7686
      %v7688 = vmul.f32 %v7665, 1.442695
      %v7689 = vpow.pop %v7688
      %v7690 = vmul.f32 %v7666, 1.442695
      %v7691 = vpow.pop %v7690
      %v7692 = vmul.f32 %v7667, 1.442695
      %v7693 = vpow.pop %v7692
      %v7694 = vmul.f32 %v7668, 1.442695
      %v7695 = vpow.pop %v7694
      %v7696 = vmul.f32 %v7669, 1.442695
      %v7697 = vpow.pop %v7696
      %v7698 = vmul.f32 %v7670, 1.442695
      %v7699 = vpow.pop %v7698
      %v7700 = vmul.f32 %v7671, 1.442695
      %v7701 = vpow.pop %v7700
      %v7702 = vmul.f32 %v7672, 1.442695
      %v7703 = vpow.pop %v7702
      %v7704 = vmul.f32 %v7673, 1.442695
      %v7705 = vpow.pop %v7704
      %v7706 = vmul.f32 %v7674, 1.442695
      %v7707 = vpow.pop %v7706
      %v7708 = vmul.f32 %v7675, 1.442695
      %v7709 = vpow.pop %v7708
      %v7710 = vmul.f32 %v7676, 1.442695
      %v7711 = vpow.pop %v7710
      %v7712 = vmul.f32 %v7677, 1.442695
      %v7713 = vpow.pop %v7712
      %v7714 = vmul.f32 %v7678, 1.442695
      %v7715 = vpow.pop %v7714
      %v7716 = vmul.f32 %v7679, 1.442695
      %v7717 = vpow.pop %v7716
      %v7718 = vmul.f32 %v7680, 1.442695
      %v7719 = vpow.pop %v7718
      %v7720 = vmul.f32 %v7681, 1.442695
      %v7721 = vpow.pop %v7720
      %v7722 = vadd.f32 %v7683, 1.0
      %v7723 = vadd.f32 %v7685, 1.0
      %v7724 = vadd.f32 %v7687, 1.0
      %v7725 = vadd.f32 %v7689, 1.0
      %v7726 = vadd.f32 %v7691, 1.0
      %v7727 = vadd.f32 %v7693, 1.0
      %v7728 = vadd.f32 %v7695, 1.0
      %v7729 = vadd.f32 %v7697, 1.0
      %v7730 = vadd.f32 %v7699, 1.0
      %v7731 = vadd.f32 %v7701, 1.0
      %v7732 = vadd.f32 %v7703, 1.0
      %v7733 = vadd.f32 %v7705, 1.0
      %v7734 = vadd.f32 %v7707, 1.0
      %v7735 = vadd.f32 %v7709, 1.0
      %v7736 = vadd.f32 %v7711, 1.0
      %v7737 = vadd.f32 %v7713, 1.0
      %v7738 = vadd.f32 %v7715, 1.0
      %v7739 = vadd.f32 %v7717, 1.0
      %v7740 = vadd.f32 %v7719, 1.0
      %v7741 = vadd.f32 %v7721, 1.0
      %v7742 = vrcp.pop %v7722
      %v7743 = vmul.f32 1.0, %v7742
      %v7744 = vrcp.pop %v7723
      %v7745 = vmul.f32 1.0, %v7744
      %v7746 = vrcp.pop %v7724
      %v7747 = vmul.f32 1.0, %v7746
      %v7748 = vrcp.pop %v7725
      %v7749 = vmul.f32 1.0, %v7748
      %v7750 = vrcp.pop %v7726
      %v7751 = vmul.f32 1.0, %v7750
      %v7752 = vrcp.pop %v7727
      %v7753 = vmul.f32 1.0, %v7752
      %v7754 = vrcp.pop %v7728
      %v7755 = vmul.f32 1.0, %v7754
      %v7756 = vrcp.pop %v7729
      %v7757 = vmul.f32 1.0, %v7756
      %v7758 = vrcp.pop %v7730
      %v7759 = vmul.f32 1.0, %v7758
      %v7760 = vrcp.pop %v7731
      %v7761 = vmul.f32 1.0, %v7760
      %v7762 = vrcp.pop %v7732
      %v7763 = vmul.f32 1.0, %v7762
      %v7764 = vrcp.pop %v7733
      %v7765 = vmul.f32 1.0, %v7764
      %v7766 = vrcp.pop %v7734
      %v7767 = vmul.f32 1.0, %v7766
      %v7768 = vrcp.pop %v7735
      %v7769 = vmul.f32 1.0, %v7768
      %v7770 = vrcp.pop %v7736
      %v7771 = vmul.f32 1.0, %v7770
      %v7772 = vrcp.pop %v7737
      %v7773 = vmul.f32 1.0, %v7772
      %v7774 = vrcp.pop %v7738
      %v7775 = vmul.f32 1.0, %v7774
      %v7776 = vrcp.pop %v7739
      %v7777 = vmul.f32 1.0, %v7776
      %v7778 = vrcp.pop %v7740
      %v7779 = vmul.f32 1.0, %v7778
      %v7780 = vrcp.pop %v7741
      %v7781 = vmul.f32 1.0, %v7780
      %v7782 = vmul.f32 %v7642, %v7743
      %v7783 = vmul.f32 %v7643, %v7745
      %v7784 = vmul.f32 %v7644, %v7747
      %v7785 = vmul.f32 %v7645, %v7749
      %v7786 = vmul.f32 %v7646, %v7751
      %v7787 = vmul.f32 %v7647, %v7753
      %v7788 = vmul.f32 %v7648, %v7755
      %v7789 = vmul.f32 %v7649, %v7757
      %v7790 = vmul.f32 %v7650, %v7759
      %v7791 = vmul.f32 %v7651, %v7761
      %v7792 = vmul.f32 %v7652, %v7763
      %v7793 = vmul.f32 %v7653, %v7765
      %v7794 = vmul.f32 %v7654, %v7767
      %v7795 = vmul.f32 %v7655, %v7769
      %v7796 = vmul.f32 %v7656, %v7771
      %v7797 = vmul.f32 %v7657, %v7773
      %v7798 = vmul.f32 %v7658, %v7775
      %v7799 = vmul.f32 %v7659, %v7777
      %v7800 = vmul.f32 %v7660, %v7779
      %v7801 = vmul.f32 %v7661, %v7781
      %v7802 = vpack.c.bf16 %v7783, %v7782
      %v7803 = vpack.c.bf16 %v7785, %v7784
      %v7804 = vpack.c.bf16 %v7787, %v7786
      %v7805 = vpack.c.bf16 %v7789, %v7788
      %v7806 = vpack.c.bf16 %v7791, %v7790
      %v7807 = vpack.c.bf16 %v7793, %v7792
      %v7808 = vpack.c.bf16 %v7795, %v7794
      %v7809 = vpack.c.bf16 %v7797, %v7796
      %v7810 = vpack.c.bf16 %v7799, %v7798
      %v7811 = vpack.c.bf16 %v7801, %v7800
      %v7812 = vld [vmem:[%s53] sm:$0xf]
      %v7813 = vld [vmem:[%s53 + $0x4] sm:$0xf]
      %v7814 = vld [vmem:[%s53 + $0x8] sm:$0xf]
      %v7815 = vld [vmem:[%s53 + $0xc] sm:$0xf]
      %v7816 = vld [vmem:[%s53 + $0x10] sm:$0xf]
      %v7817 = vld [vmem:[%s53 + $0x14] sm:$0xf]
      %v7818 = vld [vmem:[%s53 + $0x18] sm:$0xf]
      %v7819 = vld [vmem:[%s53 + $0x1c] sm:$0xf]
      %v7820 = vld [vmem:[%s53 + $0x20] sm:$0xf]
      %v7821 = vld [vmem:[%s53 + $0x24] sm:$0xf]
      %v7822 = vld [vmem:[%s53 + $0x28] sm:$0xf]
      %v7823 = vld [vmem:[%s53 + $0x2c] sm:$0xf]
      %v7824 = vld [vmem:[%s53 + $0x30] sm:$0xf]
      %v7825 = vld [vmem:[%s53 + $0x34] sm:$0xf]
      %v7826 = vld [vmem:[%s53 + $0x38] sm:$0xf]
      %v7827 = vld [vmem:[%s53 + $0x3c] sm:$0xf]
      %v7844 = vunpack.c.l.b16 %v7812
      %v7845 = vunpack.c.l.b16 %v7813
      %v7846 = vunpack.c.l.b16 %v7814
      %v7847 = vunpack.c.l.b16 %v7815
      %v7848 = vunpack.c.l.b16 %v7816
      %v7849 = vunpack.c.l.b16 %v7817
      %v7850 = vunpack.c.l.b16 %v7818
      %v7851 = vunpack.c.l.b16 %v7819
      %v7852 = vunpack.c.l.b16 %v7820
      %v7853 = vunpack.c.l.b16 %v7821
      %v7854 = vunpack.c.l.b16 %v7822
      %v7855 = vunpack.c.l.b16 %v7823
      %v7856 = vunpack.c.l.b16 %v7824
      %v7857 = vunpack.c.l.b16 %v7825
      %v7858 = vunpack.c.l.b16 %v7826
      %v7859 = vunpack.c.l.b16 %v7827
      %v7860 = vpack.c.b16 %v7845, %v7844
      %v7861 = vpack.c.b16 %v7847, %v7846
      %v7862 = vpack.c.b16 %v7849, %v7848
      %v7863 = vpack.c.b16 %v7851, %v7850
      %v7864 = vpack.c.b16 %v7853, %v7852
      %v7865 = vpack.c.b16 %v7855, %v7854
      %v7866 = vpack.c.b16 %v7857, %v7856
      %v7867 = vpack.c.b16 %v7859, %v7858
      %7876 = vmatprep.subr.bf16.mxu0 0
      %7877 = vmatpush1.bf16.msra.mxu0 %v7860
      %7878 = vmatprep.subr.bf16.mxu0 0
      %7879 = vmatpush1.bf16.msra.mxu0 %v7861
      %7880 = vmatprep.subr.bf16.mxu0 0
      %7881 = vmatpush1.bf16.msra.mxu0 %v7862
      %7882 = vmatprep.subr.bf16.mxu0 0
      %7883 = vmatpush1.bf16.msra.mxu0 %v7863
      %7884 = vmatprep.subr.bf16.mxu0 0
      %7885 = vmatpush1.bf16.msra.mxu0 %v7864
      %7886 = vmatprep.subr.bf16.mxu0 0
      %7887 = vmatpush1.bf16.msra.mxu0 %v7865
      %7888 = vmatprep.subr.bf16.mxu0 0
      %7889 = vmatpush1.bf16.msra.mxu0 %v7866
      %7890 = vmatprep.subr.bf16.mxu0 0
      %7891 = vmatpush1.bf16.msra.mxu0 %v7867
      %7892 = vmatprep.subr.bf16.mxu0 0
      %7893 = vmatpush1.bf16.msra.mxu0 0
      %7894 = vmatprep.subr.bf16.mxu0 0
      %7895 = vmatpush1.bf16.msra.mxu0 0
      %7896 = vmatprep.subr.bf16.mxu0 0
      %7897 = vmatpush1.bf16.msra.mxu0 0
      %7898 = vmatprep.subr.bf16.mxu0 0
      %7899 = vmatpush1.bf16.msra.mxu0 0
      %7900 = vmatprep.subr.bf16.mxu0 0
      %7901 = vmatpush1.bf16.msra.mxu0 0
      %7902 = vmatprep.subr.bf16.mxu0 0
      %7903 = vmatpush1.bf16.msra.mxu0 0
      %7904 = vmatprep.subr.bf16.mxu0 0
      %7905 = vmatpush1.bf16.msra.mxu0 0
      %7906 = vmatprep.subr.bf16.mxu0 0
      %7907 = vmatpush1.bf16.msra.mxu0 0
      %7908 = vmatprep.mubr.bf16.mxu0 0
      %7909 = vmatmul.mubr.bf16.gmra.mrb[0].mxu0 %v7802
      %v7910 = vpop.f32.mrb[0].mxu0
      %v7911 = vadd.f32 0.0, %v7910
      %v7912 = vpop.f32.mrb[0].mxu0
      %v7913 = vpop.f32.mrb[0].mxu0
      %v7914 = vadd.f32 0.0, %v7913
      %v7915 = vpop.f32.mrb[0].mxu0
      %7916 = vmatprep.mubr.bf16.mxu0 0
      %7917 = vmatmul.mubr.bf16.gmra.mrb[0].mxu0 %v7803
      %v7918 = vpop.f32.mrb[0].mxu0
      %v7919 = vadd.f32 0.0, %v7918
      %v7920 = vpop.f32.mrb[0].mxu0
      %v7921 = vpop.f32.mrb[0].mxu0
      %v7922 = vadd.f32 0.0, %v7921
      %v7923 = vpop.f32.mrb[0].mxu0
      %7924 = vmatprep.mubr.bf16.mxu0 0
      %7925 = vmatmul.mubr.bf16.gmra.mrb[0].mxu0 %v7804
      %v7926 = vpop.f32.mrb[0].mxu0
      %v7927 = vadd.f32 0.0, %v7926
      %v7928 = vpop.f32.mrb[0].mxu0
      %v7929 = vpop.f32.mrb[0].mxu0
      %v7930 = vadd.f32 0.0, %v7929
      %v7931 = vpop.f32.mrb[0].mxu0
      %7932 = vmatprep.mubr.bf16.mxu0 0
      %7933 = vmatmul.mubr.bf16.gmra.mrb[0].mxu0 %v7805
      %v7934 = vpop.f32.mrb[0].mxu0
      %v7935 = vadd.f32 0.0, %v7934
      %v7936 = vpop.f32.mrb[0].mxu0
      %v7937 = vpop.f32.mrb[0].mxu0
      %v7938 = vadd.f32 0.0, %v7937
      %v7939 = vpop.f32.mrb[0].mxu0
      %7940 = vmatprep.mubr.bf16.mxu0 0
      %7941 = vmatmul.mubr.bf16.gmra.mrb[0].mxu0 %v7806
      %v7942 = vpop.f32.mrb[0].mxu0
      %v7943 = vadd.f32 0.0, %v7942
      %v7944 = vpop.f32.mrb[0].mxu0
      %v7945 = vpop.f32.mrb[0].mxu0
      %v7946 = vadd.f32 0.0, %v7945
      %v7947 = vpop.f32.mrb[0].mxu0
      %7948 = vmatprep.mubr.bf16.mxu0 0
      %7949 = vmatmul.mubr.bf16.gmra.mrb[0].mxu0 %v7807
      %v7950 = vpop.f32.mrb[0].mxu0
      %v7951 = vadd.f32 0.0, %v7950
      %v7952 = vpop.f32.mrb[0].mxu0
      %v7953 = vpop.f32.mrb[0].mxu0
      %v7954 = vadd.f32 0.0, %v7953
      %v7955 = vpop.f32.mrb[0].mxu0
      %7956 = vmatprep.mubr.bf16.mxu0 0
      %7957 = vmatmul.mubr.bf16.gmra.mrb[0].mxu0 %v7808
      %v7958 = vpop.f32.mrb[0].mxu0
      %v7959 = vadd.f32 0.0, %v7958
      %v7960 = vpop.f32.mrb[0].mxu0
      %v7961 = vpop.f32.mrb[0].mxu0
      %v7962 = vadd.f32 0.0, %v7961
      %v7963 = vpop.f32.mrb[0].mxu0
      %7964 = vmatprep.mubr.bf16.mxu0 0
      %7965 = vmatmul.mubr.bf16.gmra.mrb[0].mxu0 %v7809
      %v7966 = vpop.f32.mrb[0].mxu0
      %v7967 = vadd.f32 0.0, %v7966
      %v7968 = vpop.f32.mrb[0].mxu0
      %v7969 = vpop.f32.mrb[0].mxu0
      %v7970 = vadd.f32 0.0, %v7969
      %v7971 = vpop.f32.mrb[0].mxu0
      %7972 = vmatprep.mubr.bf16.mxu0 0
      %7973 = vmatmul.mubr.bf16.gmra.mrb[0].mxu0 %v7810
      %v7974 = vpop.f32.mrb[0].mxu0
      %v7975 = vadd.f32 0.0, %v7974
      %v7976 = vpop.f32.mrb[0].mxu0
      %v7977 = vpop.f32.mrb[0].mxu0
      %v7978 = vadd.f32 0.0, %v7977
      %v7979 = vpop.f32.mrb[0].mxu0
      %7980 = vmatprep.mubr.bf16.mxu0 0
      %7981 = vmatmul.mubr.bf16.gmra.mrb[0].mxu0 %v7811
      %v7982 = vpop.f32.mrb[0].mxu0
      %v7983 = vadd.f32 0.0, %v7982
      %v7984 = vpop.f32.mrb[0].mxu0
      %v7985 = vpop.f32.mrb[0].mxu0
      %v7986 = vadd.f32 0.0, %v7985
      %v7987 = vpop.f32.mrb[0].mxu0
      %7988 = vdwg.mxu0
      %v7989 = vld [vmem:[%s55] sm:$0x1]
      %v7991 = vlaneseq
      %v7992 = vshrl.u32 %v7991, 7
      %v7993 = vsub.s32 0, %v7992
      %v7994 = vrot.slane %v7989, %v7993
      %v7996 = vmul.f32 %v7911, %v7994
      %v7997 = vmul.f32 %v7914, %v7994
      %v7998 = vmul.f32 %v7919, %v7994
      %v7999 = vmul.f32 %v7922, %v7994
      %v8000 = vmul.f32 %v7927, %v7994
      %v8001 = vmul.f32 %v7930, %v7994
      %v8002 = vmul.f32 %v7935, %v7994
      %v8003 = vmul.f32 %v7938, %v7994
      %v8004 = vmul.f32 %v7943, %v7994
      %v8005 = vmul.f32 %v7946, %v7994
      %v8006 = vmul.f32 %v7951, %v7994
      %v8007 = vmul.f32 %v7954, %v7994
      %v8008 = vmul.f32 %v7959, %v7994
      %v8009 = vmul.f32 %v7962, %v7994
      %v8010 = vmul.f32 %v7967, %v7994
      %v8011 = vmul.f32 %v7970, %v7994
      %v8012 = vmul.f32 %v7975, %v7994
      %v8013 = vmul.f32 %v7978, %v7994
      %v8014 = vmul.f32 %v7983, %v7994
      %v8015 = vmul.f32 %v7986, %v7994
      %v8016 = vld [vmem:[%s57] sm:$0x1]
      %v8018 = vlaneseq
      %v8019 = vshrl.u32 %v8018, 7
      %v8020 = vsub.s32 0, %v8019
      %v8021 = vrot.slane %v8016, %v8020
      %v8023 = vadd.f32 %v7996, %v8021
      %v8024 = vadd.f32 %v7997, %v8021
      %v8025 = vadd.f32 %v7998, %v8021
      %v8026 = vadd.f32 %v7999, %v8021
      %v8027 = vadd.f32 %v8000, %v8021
      %v8028 = vadd.f32 %v8001, %v8021
      %v8029 = vadd.f32 %v8002, %v8021
      %v8030 = vadd.f32 %v8003, %v8021
      %v8031 = vadd.f32 %v8004, %v8021
      %v8032 = vadd.f32 %v8005, %v8021
      %v8033 = vadd.f32 %v8006, %v8021
      %v8034 = vadd.f32 %v8007, %v8021
      %v8035 = vadd.f32 %v8008, %v8021
      %v8036 = vadd.f32 %v8009, %v8021
      %v8037 = vadd.f32 %v8010, %v8021
      %v8038 = vadd.f32 %v8011, %v8021
      %v8039 = vadd.f32 %v8012, %v8021
      %v8040 = vadd.f32 %v8013, %v8021
      %v8041 = vadd.f32 %v8014, %v8021
      %v8042 = vadd.f32 %v8015, %v8021
      %v8043 = vadd.f32 %v8023, %v6710
      %v8044 = vadd.f32 %v8024, %v6711
      %v8045 = vadd.f32 %v8025, %v6712
      %v8046 = vadd.f32 %v8026, %v6713
      %v8047 = vadd.f32 %v8027, %v6714
      %v8048 = vadd.f32 %v8028, %v6715
      %v8049 = vadd.f32 %v8029, %v6716
      %v8050 = vadd.f32 %v8030, %v6717
      %v8051 = vadd.f32 %v8031, %v6718
      %v8052 = vadd.f32 %v8032, %v6719
      %v8053 = vadd.f32 %v8033, %v6720
      %v8054 = vadd.f32 %v8034, %v6721
      %v8055 = vadd.f32 %v8035, %v6722
      %v8056 = vadd.f32 %v8036, %v6723
      %v8057 = vadd.f32 %v8037, %v6724
      %v8058 = vadd.f32 %v8038, %v6725
      %v8059 = vadd.f32 %v8039, %v6726
      %v8060 = vadd.f32 %v8040, %v6727
      %v8061 = vadd.f32 %v8041, %v6728
      %v8062 = vadd.f32 %v8042, %v6729
      %v8063 = vmul.f32 %v8043, %v1642
      %v8064 = vmul.f32 %v8044, %v1647
      %v8065 = vmul.f32 %v8045, %v1652
      %v8066 = vmul.f32 %v8046, %v1657
      %v8067 = vmul.f32 %v8047, %v1662
      %v8068 = vmul.f32 %v8048, %v1667
      %v8069 = vmul.f32 %v8049, %v1672
      %v8070 = vmul.f32 %v8050, %v1677
      %v8071 = vmul.f32 %v8051, %v1682
      %v8072 = vmul.f32 %v8052, %v1687
      %v8073 = vmul.f32 %v8053, %v1692
      %v8074 = vmul.f32 %v8054, %v1697
      %v8075 = vmul.f32 %v8055, %v1702
      %v8076 = vmul.f32 %v8056, %v1707
      %v8077 = vmul.f32 %v8057, %v1712
      %v8078 = vmul.f32 %v8058, %v1717
      %v8079 = vmul.f32 %v8059, %v1722
      %v8080 = vmul.f32 %v8060, %v1727
      %v8081 = vmul.f32 %v8061, %v1732
      %v8082 = vmul.f32 %v8062, %v1737
      %v8083 = vpack.c.bf16 %v8064, %v8063
      %v8084 = vpack.c.bf16 %v8066, %v8065
      %v8085 = vpack.c.bf16 %v8068, %v8067
      %v8086 = vpack.c.bf16 %v8070, %v8069
      %v8087 = vpack.c.bf16 %v8072, %v8071
      %v8088 = vpack.c.bf16 %v8074, %v8073
      %v8089 = vpack.c.bf16 %v8076, %v8075
      %v8090 = vpack.c.bf16 %v8078, %v8077
      %v8091 = vpack.c.bf16 %v8080, %v8079
      %v8092 = vpack.c.bf16 %v8082, %v8081
      %v8093 = vld [vmem:[%s67] sm:$0xf]
      %v8094 = vld [vmem:[%s67 + $0x4] sm:$0xf]
      %v8095 = vld [vmem:[%s67 + $0x8] sm:$0xf]
      %v8096 = vld [vmem:[%s67 + $0xc] sm:$0xf]
      %v8097 = vld [vmem:[%s67 + $0x10] sm:$0xf]
      %v8098 = vld [vmem:[%s67 + $0x14] sm:$0xf]
      %v8099 = vld [vmem:[%s67 + $0x18] sm:$0xf]
      %v8100 = vld [vmem:[%s67 + $0x1c] sm:$0xf]
      %v8101 = vld [vmem:[%s67 + $0x20] sm:$0xf]
      %v8102 = vld [vmem:[%s67 + $0x24] sm:$0xf]
      %v8103 = vld [vmem:[%s67 + $0x28] sm:$0xf]
      %v8104 = vld [vmem:[%s67 + $0x2c] sm:$0xf]
      %v8105 = vld [vmem:[%s67 + $0x30] sm:$0xf]
      %v8106 = vld [vmem:[%s67 + $0x34] sm:$0xf]
      %v8107 = vld [vmem:[%s67 + $0x38] sm:$0xf]
      %v8108 = vld [vmem:[%s67 + $0x3c] sm:$0xf]
      %v8125 = vunpack.c.l.b16 %v8093
      %v8126 = vunpack.c.l.b16 %v8094
      %v8127 = vunpack.c.l.b16 %v8095
      %v8128 = vunpack.c.l.b16 %v8096
      %v8129 = vunpack.c.l.b16 %v8097
      %v8130 = vunpack.c.l.b16 %v8098
      %v8131 = vunpack.c.l.b16 %v8099
      %v8132 = vunpack.c.l.b16 %v8100
      %v8133 = vunpack.c.l.b16 %v8101
      %v8134 = vunpack.c.l.b16 %v8102
      %v8135 = vunpack.c.l.b16 %v8103
      %v8136 = vunpack.c.l.b16 %v8104
      %v8137 = vunpack.c.l.b16 %v8105
      %v8138 = vunpack.c.l.b16 %v8106
      %v8139 = vunpack.c.l.b16 %v8107
      %v8140 = vunpack.c.l.b16 %v8108
      %v8141 = vpack.c.b16 %v8126, %v8125
      %v8142 = vpack.c.b16 %v8128, %v8127
      %v8143 = vpack.c.b16 %v8130, %v8129
      %v8144 = vpack.c.b16 %v8132, %v8131
      %v8145 = vpack.c.b16 %v8134, %v8133
      %v8146 = vpack.c.b16 %v8136, %v8135
      %v8147 = vpack.c.b16 %v8138, %v8137
      %v8148 = vpack.c.b16 %v8140, %v8139
      %8157 = vmatprep.subr.bf16.mxu0 0
      %8158 = vmatpush1.bf16.msra.mxu0 %v8141
      %8159 = vmatprep.subr.bf16.mxu0 0
      %8160 = vmatpush1.bf16.msra.mxu0 %v8142
      %8161 = vmatprep.subr.bf16.mxu0 0
      %8162 = vmatpush1.bf16.msra.mxu0 %v8143
      %8163 = vmatprep.subr.bf16.mxu0 0
      %8164 = vmatpush1.bf16.msra.mxu0 %v8144
      %8165 = vmatprep.subr.bf16.mxu0 0
      %8166 = vmatpush1.bf16.msra.mxu0 %v8145
      %8167 = vmatprep.subr.bf16.mxu0 0
      %8168 = vmatpush1.bf16.msra.mxu0 %v8146
      %8169 = vmatprep.subr.bf16.mxu0 0
      %8170 = vmatpush1.bf16.msra.mxu0 %v8147
      %8171 = vmatprep.subr.bf16.mxu0 0
      %8172 = vmatpush1.bf16.msra.mxu0 %v8148
      %8173 = vmatprep.subr.bf16.mxu0 0
      %8174 = vmatpush1.bf16.msra.mxu0 0
      %8175 = vmatprep.subr.bf16.mxu0 0
      %8176 = vmatpush1.bf16.msra.mxu0 0
      %8177 = vmatprep.subr.bf16.mxu0 0
      %8178 = vmatpush1.bf16.msra.mxu0 0
      %8179 = vmatprep.subr.bf16.mxu0 0
      %8180 = vmatpush1.bf16.msra.mxu0 0
      %8181 = vmatprep.subr.bf16.mxu0 0
      %8182 = vmatpush1.bf16.msra.mxu0 0
      %8183 = vmatprep.subr.bf16.mxu0 0
      %8184 = vmatpush1.bf16.msra.mxu0 0
      %8185 = vmatprep.subr.bf16.mxu0 0
      %8186 = vmatpush1.bf16.msra.mxu0 0
      %8187 = vmatprep.subr.bf16.mxu0 0
      %8188 = vmatpush1.bf16.msra.mxu0 0
      %8189 = vmatprep.mubr.bf16.mxu0 0
      %8190 = vmatmul.mubr.bf16.gmra.mrb[0].mxu0 %v8083
      %v8191 = vpop.f32.mrb[0].mxu0
      %v8192 = vadd.f32 0.0, %v8191
      %v8193 = vpop.f32.mrb[0].mxu0
      %v8194 = vpop.f32.mrb[0].mxu0
      %v8195 = vadd.f32 0.0, %v8194
      %v8196 = vpop.f32.mrb[0].mxu0
      %8197 = vmatprep.mubr.bf16.mxu0 0
      %8198 = vmatmul.mubr.bf16.gmra.mrb[0].mxu0 %v8084
      %v8199 = vpop.f32.mrb[0].mxu0
      %v8200 = vadd.f32 0.0, %v8199
      %v8201 = vpop.f32.mrb[0].mxu0
      %v8202 = vpop.f32.mrb[0].mxu0
      %v8203 = vadd.f32 0.0, %v8202
      %v8204 = vpop.f32.mrb[0].mxu0
      %8205 = vmatprep.mubr.bf16.mxu0 0
      %8206 = vmatmul.mubr.bf16.gmra.mrb[0].mxu0 %v8085
      %v8207 = vpop.f32.mrb[0].mxu0
      %v8208 = vadd.f32 0.0, %v8207
      %v8209 = vpop.f32.mrb[0].mxu0
      %v8210 = vpop.f32.mrb[0].mxu0
      %v8211 = vadd.f32 0.0, %v8210
      %v8212 = vpop.f32.mrb[0].mxu0
      %8213 = vmatprep.mubr.bf16.mxu0 0
      %8214 = vmatmul.mubr.bf16.gmra.mrb[0].mxu0 %v8086
      %v8215 = vpop.f32.mrb[0].mxu0
      %v8216 = vadd.f32 0.0, %v8215
      %v8217 = vpop.f32.mrb[0].mxu0
      %v8218 = vpop.f32.mrb[0].mxu0
      %v8219 = vadd.f32 0.0, %v8218
      %v8220 = vpop.f32.mrb[0].mxu0
      %8221 = vmatprep.mubr.bf16.mxu0 0
      %8222 = vmatmul.mubr.bf16.gmra.mrb[0].mxu0 %v8087
      %v8223 = vpop.f32.mrb[0].mxu0
      %v8224 = vadd.f32 0.0, %v8223
      %v8225 = vpop.f32.mrb[0].mxu0
      %v8226 = vpop.f32.mrb[0].mxu0
      %v8227 = vadd.f32 0.0, %v8226
      %v8228 = vpop.f32.mrb[0].mxu0
      %8229 = vmatprep.mubr.bf16.mxu0 0
      %8230 = vmatmul.mubr.bf16.gmra.mrb[0].mxu0 %v8088
      %v8231 = vpop.f32.mrb[0].mxu0
      %v8232 = vadd.f32 0.0, %v8231
      %v8233 = vpop.f32.mrb[0].mxu0
      %v8234 = vpop.f32.mrb[0].mxu0
      %v8235 = vadd.f32 0.0, %v8234
      %v8236 = vpop.f32.mrb[0].mxu0
      %8237 = vmatprep.mubr.bf16.mxu0 0
      %8238 = vmatmul.mubr.bf16.gmra.mrb[0].mxu0 %v8089
      %v8239 = vpop.f32.mrb[0].mxu0
      %v8240 = vadd.f32 0.0, %v8239
      %v8241 = vpop.f32.mrb[0].mxu0
      %v8242 = vpop.f32.mrb[0].mxu0
      %v8243 = vadd.f32 0.0, %v8242
      %v8244 = vpop.f32.mrb[0].mxu0
      %8245 = vmatprep.mubr.bf16.mxu0 0
      %8246 = vmatmul.mubr.bf16.gmra.mrb[0].mxu0 %v8090
      %v8247 = vpop.f32.mrb[0].mxu0
      %v8248 = vadd.f32 0.0, %v8247
      %v8249 = vpop.f32.mrb[0].mxu0
      %v8250 = vpop.f32.mrb[0].mxu0
      %v8251 = vadd.f32 0.0, %v8250
      %v8252 = vpop.f32.mrb[0].mxu0
      %8253 = vmatprep.mubr.bf16.mxu0 0
      %8254 = vmatmul.mubr.bf16.gmra.mrb[0].mxu0 %v8091
      %v8255 = vpop.f32.mrb[0].mxu0
      %v8256 = vadd.f32 0.0, %v8255
      %v8257 = vpop.f32.mrb[0].mxu0
      %v8258 = vpop.f32.mrb[0].mxu0
      %v8259 = vadd.f32 0.0, %v8258
      %v8260 = vpop.f32.mrb[0].mxu0
      %8261 = vmatprep.mubr.bf16.mxu0 0
      %8262 = vmatmul.mubr.bf16.gmra.mrb[0].mxu0 %v8092
      %v8263 = vpop.f32.mrb[0].mxu0
      %v8264 = vadd.f32 0.0, %v8263
      %v8265 = vpop.f32.mrb[0].mxu0
      %v8266 = vpop.f32.mrb[0].mxu0
      %v8267 = vadd.f32 0.0, %v8266
      %v8268 = vpop.f32.mrb[0].mxu0
      %8269 = vdwg.mxu0
      %v8270 = vld [vmem:[%s69] sm:$0x1]
      %v8272 = vlaneseq
      %v8273 = vshrl.u32 %v8272, 7
      %v8274 = vsub.s32 0, %v8273
      %v8275 = vrot.slane %v8270, %v8274
      %v8277 = vmul.f32 %v8192, %v8275
      %v8278 = vmul.f32 %v8195, %v8275
      %v8279 = vmul.f32 %v8200, %v8275
      %v8280 = vmul.f32 %v8203, %v8275
      %v8281 = vmul.f32 %v8208, %v8275
      %v8282 = vmul.f32 %v8211, %v8275
      %v8283 = vmul.f32 %v8216, %v8275
      %v8284 = vmul.f32 %v8219, %v8275
      %v8285 = vmul.f32 %v8224, %v8275
      %v8286 = vmul.f32 %v8227, %v8275
      %v8287 = vmul.f32 %v8232, %v8275
      %v8288 = vmul.f32 %v8235, %v8275
      %v8289 = vmul.f32 %v8240, %v8275
      %v8290 = vmul.f32 %v8243, %v8275
      %v8291 = vmul.f32 %v8248, %v8275
      %v8292 = vmul.f32 %v8251, %v8275
      %v8293 = vmul.f32 %v8256, %v8275
      %v8294 = vmul.f32 %v8259, %v8275
      %v8295 = vmul.f32 %v8264, %v8275
      %v8296 = vmul.f32 %v8267, %v8275
      %v8297 = vld [vmem:[%s71] sm:$0x1]
      %v8299 = vlaneseq
      %v8300 = vshrl.u32 %v8299, 7
      %v8301 = vsub.s32 0, %v8300
      %v8302 = vrot.slane %v8297, %v8301
      %v8304 = vadd.f32 %v8277, %v8302
      %v8305 = vadd.f32 %v8278, %v8302
      %v8306 = vadd.f32 %v8279, %v8302
      %v8307 = vadd.f32 %v8280, %v8302
      %v8308 = vadd.f32 %v8281, %v8302
      %v8309 = vadd.f32 %v8282, %v8302
      %v8310 = vadd.f32 %v8283, %v8302
      %v8311 = vadd.f32 %v8284, %v8302
      %v8312 = vadd.f32 %v8285, %v8302
      %v8313 = vadd.f32 %v8286, %v8302
      %v8314 = vadd.f32 %v8287, %v8302
      %v8315 = vadd.f32 %v8288, %v8302
      %v8316 = vadd.f32 %v8289, %v8302
      %v8317 = vadd.f32 %v8290, %v8302
      %v8318 = vadd.f32 %v8291, %v8302
      %v8319 = vadd.f32 %v8292, %v8302
      %v8320 = vadd.f32 %v8293, %v8302
      %v8321 = vadd.f32 %v8294, %v8302
      %v8322 = vadd.f32 %v8295, %v8302
      %v8323 = vadd.f32 %v8296, %v8302
      %v8324 = vxor.u32 %v8304, 2147483648
      %v8325 = vxor.u32 %v8305, 2147483648
      %v8326 = vxor.u32 %v8306, 2147483648
      %v8327 = vxor.u32 %v8307, 2147483648
      %v8328 = vxor.u32 %v8308, 2147483648
      %v8329 = vxor.u32 %v8309, 2147483648
      %v8330 = vxor.u32 %v8310, 2147483648
      %v8331 = vxor.u32 %v8311, 2147483648
      %v8332 = vxor.u32 %v8312, 2147483648
      %v8333 = vxor.u32 %v8313, 2147483648
      %v8334 = vxor.u32 %v8314, 2147483648
      %v8335 = vxor.u32 %v8315, 2147483648
      %v8336 = vxor.u32 %v8316, 2147483648
      %v8337 = vxor.u32 %v8317, 2147483648
      %v8338 = vxor.u32 %v8318, 2147483648
      %v8339 = vxor.u32 %v8319, 2147483648
      %v8340 = vxor.u32 %v8320, 2147483648
      %v8341 = vxor.u32 %v8321, 2147483648
      %v8342 = vxor.u32 %v8322, 2147483648
      %v8343 = vxor.u32 %v8323, 2147483648
      %v8344 = vmul.f32 %v8324, 1.442695
      %v8345 = vpow.pop %v8344
      %v8346 = vmul.f32 %v8325, 1.442695
      %v8347 = vpow.pop %v8346
      %v8348 = vmul.f32 %v8326, 1.442695
      %v8349 = vpow.pop %v8348
      %v8350 = vmul.f32 %v8327, 1.442695
      %v8351 = vpow.pop %v8350
      %v8352 = vmul.f32 %v8328, 1.442695
      %v8353 = vpow.pop %v8352
      %v8354 = vmul.f32 %v8329, 1.442695
      %v8355 = vpow.pop %v8354
      %v8356 = vmul.f32 %v8330, 1.442695
      %v8357 = vpow.pop %v8356
      %v8358 = vmul.f32 %v8331, 1.442695
      %v8359 = vpow.pop %v8358
      %v8360 = vmul.f32 %v8332, 1.442695
      %v8361 = vpow.pop %v8360
      %v8362 = vmul.f32 %v8333, 1.442695
      %v8363 = vpow.pop %v8362
      %v8364 = vmul.f32 %v8334, 1.442695
      %v8365 = vpow.pop %v8364
      %v8366 = vmul.f32 %v8335, 1.442695
      %v8367 = vpow.pop %v8366
      %v8368 = vmul.f32 %v8336, 1.442695
      %v8369 = vpow.pop %v8368
      %v8370 = vmul.f32 %v8337, 1.442695
      %v8371 = vpow.pop %v8370
      %v8372 = vmul.f32 %v8338, 1.442695
      %v8373 = vpow.pop %v8372
      %v8374 = vmul.f32 %v8339, 1.442695
      %v8375 = vpow.pop %v8374
      %v8376 = vmul.f32 %v8340, 1.442695
      %v8377 = vpow.pop %v8376
      %v8378 = vmul.f32 %v8341, 1.442695
      %v8379 = vpow.pop %v8378
      %v8380 = vmul.f32 %v8342, 1.442695
      %v8381 = vpow.pop %v8380
      %v8382 = vmul.f32 %v8343, 1.442695
      %v8383 = vpow.pop %v8382
      %v8384 = vadd.f32 %v8345, 1.0
      %v8385 = vadd.f32 %v8347, 1.0
      %v8386 = vadd.f32 %v8349, 1.0
      %v8387 = vadd.f32 %v8351, 1.0
      %v8388 = vadd.f32 %v8353, 1.0
      %v8389 = vadd.f32 %v8355, 1.0
      %v8390 = vadd.f32 %v8357, 1.0
      %v8391 = vadd.f32 %v8359, 1.0
      %v8392 = vadd.f32 %v8361, 1.0
      %v8393 = vadd.f32 %v8363, 1.0
      %v8394 = vadd.f32 %v8365, 1.0
      %v8395 = vadd.f32 %v8367, 1.0
      %v8396 = vadd.f32 %v8369, 1.0
      %v8397 = vadd.f32 %v8371, 1.0
      %v8398 = vadd.f32 %v8373, 1.0
      %v8399 = vadd.f32 %v8375, 1.0
      %v8400 = vadd.f32 %v8377, 1.0
      %v8401 = vadd.f32 %v8379, 1.0
      %v8402 = vadd.f32 %v8381, 1.0
      %v8403 = vadd.f32 %v8383, 1.0
      %v8404 = vrcp.pop %v8384
      %v8405 = vmul.f32 1.0, %v8404
      %v8406 = vrcp.pop %v8385
      %v8407 = vmul.f32 1.0, %v8406
      %v8408 = vrcp.pop %v8386
      %v8409 = vmul.f32 1.0, %v8408
      %v8410 = vrcp.pop %v8387
      %v8411 = vmul.f32 1.0, %v8410
      %v8412 = vrcp.pop %v8388
      %v8413 = vmul.f32 1.0, %v8412
      %v8414 = vrcp.pop %v8389
      %v8415 = vmul.f32 1.0, %v8414
      %v8416 = vrcp.pop %v8390
      %v8417 = vmul.f32 1.0, %v8416
      %v8418 = vrcp.pop %v8391
      %v8419 = vmul.f32 1.0, %v8418
      %v8420 = vrcp.pop %v8392
      %v8421 = vmul.f32 1.0, %v8420
      %v8422 = vrcp.pop %v8393
      %v8423 = vmul.f32 1.0, %v8422
      %v8424 = vrcp.pop %v8394
      %v8425 = vmul.f32 1.0, %v8424
      %v8426 = vrcp.pop %v8395
      %v8427 = vmul.f32 1.0, %v8426
      %v8428 = vrcp.pop %v8396
      %v8429 = vmul.f32 1.0, %v8428
      %v8430 = vrcp.pop %v8397
      %v8431 = vmul.f32 1.0, %v8430
      %v8432 = vrcp.pop %v8398
      %v8433 = vmul.f32 1.0, %v8432
      %v8434 = vrcp.pop %v8399
      %v8435 = vmul.f32 1.0, %v8434
      %v8436 = vrcp.pop %v8400
      %v8437 = vmul.f32 1.0, %v8436
      %v8438 = vrcp.pop %v8401
      %v8439 = vmul.f32 1.0, %v8438
      %v8440 = vrcp.pop %v8402
      %v8441 = vmul.f32 1.0, %v8440
      %v8442 = vrcp.pop %v8403
      %v8443 = vmul.f32 1.0, %v8442
      %v8444 = vmul.f32 %v8304, %v8405
      %v8445 = vmul.f32 %v8305, %v8407
      %v8446 = vmul.f32 %v8306, %v8409
      %v8447 = vmul.f32 %v8307, %v8411
      %v8448 = vmul.f32 %v8308, %v8413
      %v8449 = vmul.f32 %v8309, %v8415
      %v8450 = vmul.f32 %v8310, %v8417
      %v8451 = vmul.f32 %v8311, %v8419
      %v8452 = vmul.f32 %v8312, %v8421
      %v8453 = vmul.f32 %v8313, %v8423
      %v8454 = vmul.f32 %v8314, %v8425
      %v8455 = vmul.f32 %v8315, %v8427
      %v8456 = vmul.f32 %v8316, %v8429
      %v8457 = vmul.f32 %v8317, %v8431
      %v8458 = vmul.f32 %v8318, %v8433
      %v8459 = vmul.f32 %v8319, %v8435
      %v8460 = vmul.f32 %v8320, %v8437
      %v8461 = vmul.f32 %v8321, %v8439
      %v8462 = vmul.f32 %v8322, %v8441
      %v8463 = vmul.f32 %v8323, %v8443
      %v8464 = vmul.f32 %v8444, %v1642
      %v8465 = vmul.f32 %v8445, %v1647
      %v8466 = vmul.f32 %v8446, %v1652
      %v8467 = vmul.f32 %v8447, %v1657
      %v8468 = vmul.f32 %v8448, %v1662
      %v8469 = vmul.f32 %v8449, %v1667
      %v8470 = vmul.f32 %v8450, %v1672
      %v8471 = vmul.f32 %v8451, %v1677
      %v8472 = vmul.f32 %v8452, %v1682
      %v8473 = vmul.f32 %v8453, %v1687
      %v8474 = vmul.f32 %v8454, %v1692
      %v8475 = vmul.f32 %v8455, %v1697
      %v8476 = vmul.f32 %v8456, %v1702
      %v8477 = vmul.f32 %v8457, %v1707
      %v8478 = vmul.f32 %v8458, %v1712
      %v8479 = vmul.f32 %v8459, %v1717
      %v8480 = vmul.f32 %v8460, %v1722
      %v8481 = vmul.f32 %v8461, %v1727
      %v8482 = vmul.f32 %v8462, %v1732
      %v8483 = vmul.f32 %v8463, %v1737
      %v8484 = vadd.f32 %v8464, %v8465
      %v8485 = vadd.f32 %v8484, %v8466
      %v8486 = vadd.f32 %v8485, %v8467
      %v8487 = vadd.f32 %v8486, %v8468
      %v8488 = vadd.f32 %v8487, %v8469
      %v8489 = vadd.f32 %v8488, %v8470
      %v8490 = vadd.f32 %v8489, %v8471
      %v8491 = vadd.f32 %v8490, %v8472
      %v8492 = vadd.f32 %v8491, %v8473
      %v8493 = vadd.f32 %v8492, %v8474
      %v8494 = vadd.f32 %v8493, %v8475
      %v8495 = vadd.f32 %v8494, %v8476
      %v8496 = vadd.f32 %v8495, %v8477
      %v8497 = vadd.f32 %v8496, %v8478
      %v8498 = vadd.f32 %v8497, %v8479
      %v8499 = vadd.f32 %v8498, %v8480
      %v8500 = vadd.f32 %v8499, %v8481
      %v8501 = vadd.f32 %v8500, %v8482
      %v8502 = vadd.f32 %v8501, %v8483
      %v8503 = vrot.slane %v8502, 4
      %v8504 = vadd.f32 %v8502, %v8503
      %v8505 = vrot.slane %v8504, 2
      %v8506 = vadd.f32 %v8504, %v8505
      %v8507 = vrot.slane %v8506, 1
      %v8508 = vadd.f32 %v8506, %v8507
      %v8509 = vmul.f32 %v8508, 0.015625
      %v8510 = vld [vmem:[%s73] sm:$0x1]
      %v8511 = vmul.f32 %v8509, %v8510
      %vm8512 = vcmask 1040384
      %v8513 = vsel %vm8512, %v8511, 0.0
      %8514 = vadd.xlane.f32.xlu0 %v8513
      %v8515 = vpop.xlane.xlu0 %8514
      %v8516 = vld [vmem:[#allocation5] sm:$0x1]
      %v8517 = vadd.f32 %v8515, %v8516
      %8519 = vset.pattern.permute.xlu0 0
      %8520 = vperm.xlu0 %8519, %v8517
      %v8521 = vpop.permute.xlu0 %8520
      %8523 = vst [vmem:[%s1154] sm:$0x1] %v8521
      %p8524 = scmp.lt.s32.totalorder %s92, 1
      %s8525 = scalar_select %p8524, %s92, 1
      %s8526 = scalar_lea.vmem %s77, %s8525
      // Predicated region
      $region173: #{forward.1} parent=171 // pred_check
        %p8527 = pneg %p913
      $region174: #{forward.1} parent=171 // pred_check_branch
        %8529 = sbr.rel (%p8527) target = $region176
      $region175: #{forward.1} parent=171 // pred_region
        _
      $region176: #{forward.1} parent=171 // pred_fallthru
        _
    $region172: #{forward.1} parent=5 // pred_fallthru
      _
    %p8530 = scmp.le.s32.totalorder 2, %s87
    // Predicated region
    $region177: #{forward.1} parent=5 // pred_check
      %p8531 = pneg %p8530
    $region178: #{forward.1} parent=5 // pred_check_branch
      %8533 = sbr.rel (%p8531) target = $region180
    $region179: #{forward.1} parent=5 // pred_region
      %s8534 = ssub.s32 %s87, 2
      // Predicated region
      $region181: #{forward.1} parent=179 // pred_check
        %p8535 = pneg %p919
      $region182: #{forward.1} parent=179 // pred_check_branch
        %8537 = sbr.rel (%p8535) target = $region184
      $region183: #{forward.1} parent=179 // pred_region
        %p8538 = scmp.lt.s32.totalorder %s93, 1
        %s8539 = scalar_select %p8538, %s93, 1
        %s8540 = scalar_lea.vmem %s77, %s8539
      $region184: #{forward.1} parent=179 // pred_fallthru
        _
    $region180: #{forward.1} parent=5 // pred_fallthru
      _
  $region6: #{forward.1} parent=0 // loop_footer
    %s91 = sadd.s32 1, %s87
  $region7: #{forward.1} parent=0 // loop_footer_branch
    %86 = sbr.rel target = $region3
  $region8: #{forward.1} parent=0 // loop_exit
    _

</llo_original>
